<compile_context>
chip_gen: v7x
topology: tpu7x:2x2x1
jax: 0.10.0
libtpu: 0.0.40
codegen_flags: <defaults>
</compile_context>

<pallas_src>
import jax
import jax.numpy as jnp
from jax.experimental import pallas as pl
from jax.experimental.pallas import tpu as pltpu

HIDDEN = 256       # stands in for hidden_size=768 (Hh=H/2 multiple of 128, as is 768/2)
SEQ = 8
BATCH = 8          # fills the 8-sublane vreg dimension; slices at t*B are tile-aligned
VOCAB = 100


# ----------------------------- fused kernel --------------------------------- #

def fused_kernel(x_ref,
                 wih_e_ref, whh_e_ref, bx_e_ref, bhn_e_ref,
                 wih_d_hbm, whh_d_hbm, bx_d_ref, bhn_d_ref,
                 wcls_ref, bcls_ref,
                 out_ref,
                 enc_out, wih_d_vmem, whh_d_vmem, dma_sem):
    """Encoder bi-GRU -> decoder bi-GRU -> linear classifier, fully fused.

    x_ref        : (S*B, H) bf16 time-major input, natural time order only
    wih_*        : (2, H, 3*Hh) bf16 per-direction gate-fused W_ih (cols r|z|n)
    whh_*        : (2, Hh, 3*Hh) bf16 per-direction gate-fused W_hh
    bx_*         : (2, 1, 3*Hh) f32 folded input biases (b_ih + b_hh for r,z; b_in for n)
    bhn_*        : (2, 1, Hh)  f32 b_hn (stays inside r * (...), PyTorch semantics)
    wcls         : (1, H) f32, bcls : (1, 1) f32
    out_ref      : (B, 128) lane-padded logits (column 0 is the logit)
    enc_out      : (S*B, H) f32 scratch — encoder outputs, fwd in lanes [:Hh],
                   bwd in lanes [Hh:], natural time order (feeds the decoder directly)
    wih_d_vmem / whh_d_vmem / dma_sem : landing buffers + semaphores for the
                   decoder-weight prefetch (overlapped with encoder compute)
    """
    B = out_ref.shape[0]
    SB, H = x_ref.shape
    Hh = whh_e_ref.shape[1]
    S = SB // B

    # --- start decoder-weight DMA now; it hides behind the encoder compute ---
    cp_wih = pltpu.make_async_copy(wih_d_hbm, wih_d_vmem, dma_sem.at[0])
    cp_whh = pltpu.make_async_copy(whh_d_hbm, whh_d_vmem, dma_sem.at[1])
    cp_wih.start()
    cp_whh.start()

    def bigru(x_flat, wih_f, wih_b, whh_f, whh_b, bx_ref, bhn_ref, store=None):
        """Fused fwd+bwd GRU (PyTorch gate semantics r, z, n).

        One gate-fused input projection per direction for ALL steps, then an
        unrolled recurrence with one gate-fused hidden matmul per direction
        per step.  Backward direction consumes its gx rows at reversed
        (static) offsets — no time-reversed copy of the input is needed.
        Returns the final hidden states (h_fwd, h_bwd), each (B, Hh).
        """
        # Hoisted, gate-fused input->hidden projections (one matmul/direction).
        gx_f = jnp.dot(x_flat, wih_f, preferred_element_type=jnp.float32) + bx_ref[0]
        gx_b = jnp.dot(x_flat, wih_b, preferred_element_type=jnp.float32) + bx_ref[1]

        # Hoisted broadcasts (JAX does not CSE broadcast_in_dim in the unroll).
        bhn_f = jnp.broadcast_to(bhn_ref[0], (B, Hh))
        bhn_b = jnp.broadcast_to(bhn_ref[1], (B, Hh))

        h_f = jnp.zeros((B, Hh), jnp.float32)
        h_b = jnp.zeros((B, Hh), jnp.float32)

        def gate_step(h, gx, gh, bhn_bcast):
            r = jax.nn.sigmoid(gx[:, :Hh] + gh[:, :Hh])
            z = jax.nn.sigmoid(gx[:, Hh:2 * Hh] + gh[:, Hh:2 * Hh])
            n = jnp.tanh(gx[:, 2 * Hh:] + r * (gh[:, 2 * Hh:] + bhn_bcast))
            return (1.0 - z) * n + z * h

        # TODO(synk): full unroll is fine at S=8; at production SEQ use
        # lax.fori_loop(..., unroll=4..8) to bound vreg live ranges.
        for t in range(S):
            tb = S - 1 - t
            gh_f = jnp.dot(h_f.astype(jnp.bfloat16), whh_f,
                           preferred_element_type=jnp.float32)
            gh_b = jnp.dot(h_b.astype(jnp.bfloat16), whh_b,
                           preferred_element_type=jnp.float32)
            h_f = gate_step(h_f, gx_f[t * B:(t + 1) * B], gh_f, bhn_f)
            h_b = gate_step(h_b, gx_b[tb * B:(tb + 1) * B], gh_b, bhn_b)
            if store is not None:
                store(t, tb, h_f, h_b)
        return h_f, h_b

    # ---------------- encoder bi-GRU: outputs written into one VMEM slab -----
    def enc_store(tf, tb, h_f, h_b):
        # fwd output belongs to original time tf; bwd output to original time tb.
        enc_out[tf * B:(tf + 1) * B, :Hh] = h_f
        enc_out[tb * B:(tb + 1) * B, Hh:] = h_b

    bigru(x_ref[...],
          wih_e_ref[0], wih_e_ref[1], whh_e_ref[0], whh_e_ref[1],
          bx_e_ref, bhn_e_ref, store=enc_store)

    # ---------------- decoder bi-GRU (weights prefetched above) --------------
    cp_wih.wait()
    cp_whh.wait()
    # TODO(synk): at production H keep enc_out as bf16 to halve scratch VMEM.
    h_f_d, h_b_d = bigru(enc_out[...].astype(jnp.bfloat16),
                         wih_d_vmem[0], wih_d_vmem[1],
                         whh_d_vmem[0], whh_d_vmem[1],
                         bx_d_ref, bhn_d_ref, store=None)
    # (h_f_d, h_b_d) == (gruD_out[:, -1, :Hh], gruD_out[:, 0, Hh:]) — the
    # exact tensors the PyTorch classifier concatenates.

    # ---------------- classifier: VPU multiply + lane reduce (no concat) -----
    logits = (jnp.sum(h_f_d * wcls_ref[:, :Hh], axis=-1, keepdims=True)
              + jnp.sum(h_b_d * wcls_ref[:, Hh:], axis=-1, keepdims=True)
              + bcls_ref[...])                                       # (B, 1)
    out_ref[...] = jnp.broadcast_to(logits, out_ref.shape)           # lane-padded


# ----------------------------- parameter packing ---------------------------- #

def _uniform(key, shape, bound):
    return jax.random.uniform(key, shape, jnp.float32, -bound, bound)


def init_pt_gru(key, input_size, hh):
    """PyTorch-layout bidirectional GRU params (per direction: W_ih, W_hh, b_ih, b_hh)."""
    bound = 1.0 / (hh ** 0.5)
    ks = jax.random.split(key, 8)

    def direction(k4):
        return dict(w_ih=_uniform(k4[0], (3 * hh, input_size), bound),
                    w_hh=_uniform(k4[1], (3 * hh, hh), bound),
                    b_ih=_uniform(k4[2], (3 * hh,), bound),
                    b_hh=_uniform(k4[3], (3 * hh,), bound))

    return dict(fwd=direction(ks[:4]), bwd=direction(ks[4:]))


def pack_bigru(pt, hh):
    """Repack PyTorch GRU params into the fused-kernel layout.

    Per direction the three gate weights are fused column-wise (r|z|n) so the
    kernel issues ONE matmul per direction for the input projection and ONE
    per direction per step for the recurrence.  Matmul weights are bf16.
    """
    def gates_t(w):  # (3*hh, in) -> (in, 3*hh), columns [r | z | n]
        return jnp.concatenate([w[g * hh:(g + 1) * hh].T for g in range(3)], axis=1)

    wih = jnp.stack([gates_t(pt[d]["w_ih"]) for d in ("fwd", "bwd")],
                    axis=0).astype(jnp.bfloat16)                       # (2, in, 3hh)
    whh = jnp.stack([gates_t(pt[d]["w_hh"]) for d in ("fwd", "bwd")],
                    axis=0).astype(jnp.bfloat16)                       # (2, hh, 3hh)

    def fold_bias(d):
        b_ih, b_hh = pt[d]["b_ih"], pt[d]["b_hh"]
        parts = [b_ih[0:hh] + b_hh[0:hh],            # r: both biases fold
                 b_ih[hh:2 * hh] + b_hh[hh:2 * hh],  # z: both biases fold
                 b_ih[2 * hh:3 * hh]]                # n: only b_in folds
        return jnp.concatenate(parts)[None, :]       # (1, 3hh)

    bx = jnp.stack([fold_bias(d) for d in ("fwd", "bwd")], axis=0)     # (2, 1, 3hh)
    bhn = jnp.stack([pt[d]["b_hh"][2 * hh:3 * hh][None, :]
                     for d in ("fwd", "bwd")], axis=0)                 # (2, 1, hh)
    return dict(wih=wih, whh=whh, bx=bx, bhn=bhn)


def init_params(key, H=HIDDEN, vocab=VOCAB, seq=SEQ):
    hh = H // 2
    assert hh % 128 == 0, "keep H/2 a multiple of 128 for lane-aligned gates"
    ks = jax.random.split(key, 8)

    gru_e = pack_bigru(init_pt_gru(ks[0], H, hh), hh)
    gru_d = pack_bigru(init_pt_gru(ks[1], H, hh), hh)

    cls_bound = 1.0 / (H ** 0.5)
    w_cls = _uniform(ks[2], (H, 1), cls_bound)
    b_cls = _uniform(ks[3], (1,), cls_bound)

    return {
        # TODO(synk): deterministic embedding-sum stub standing in for the
        # pretrained ALBERT backbone (AutoModel.from_pretrained).
        "embed": (0.02 * jax.random.normal(ks[4], (vocab, H), jnp.float32),
                  0.02 * jax.random.normal(ks[5], (2, H), jnp.float32),
                  0.02 * jax.random.normal(ks[6], (seq, H), jnp.float32)),
        "gruE": gru_e,
        "gruD": gru_d,
        "wcls": w_cls[:, 0][None, :],     # (1, H) row vector for the VPU reduce
        "bcls": b_cls.reshape(1, 1),
    }


# ----------------------------- forward -------------------------------------- #

def forward(params, input_ids, attn_masks, token_type_ids):
    # TODO(synk): pretrained ALBERT backbone replaced by a deterministic
    # embedding-sum stub producing `sequence_output` of shape (B, S, H).
    tok_emb, type_emb, pos_emb = params["embed"]
    seq = tok_emb[input_ids] + type_emb[token_type_ids] + pos_emb[None, :, :]
    seq = seq * attn_masks[:, :, None].astype(jnp.float32)

    x = jnp.transpose(seq, (1, 0, 2))                    # (S, B, H) time-major
    S, B, H = x.shape
    x_nat = x.reshape(S * B, H).astype(jnp.bfloat16)     # natural order only

    vmem = pl.BlockSpec(memory_space=pltpu.MemorySpace.VMEM)
    hbm = pl.BlockSpec(memory_space=pl.ANY)              # decoder weights: manual DMA
    kE, kD = params["gruE"], params["gruD"]

    out_padded = pl.pallas_call(
        fused_kernel,
        out_shape=jax.ShapeDtypeStruct((B, 128), jnp.float32),
        in_specs=[vmem,                          # x
                  vmem, vmem, vmem, vmem,        # encoder wih, whh, bx, bhn
                  hbm, hbm, vmem, vmem,          # decoder wih/whh stay in HBM
                  vmem, vmem],                   # classifier w, b
        out_specs=vmem,
        scratch_shapes=[
            pltpu.VMEM((S * B, H), jnp.float32),              # encoder output slab
            pltpu.VMEM(kD["wih"].shape, jnp.bfloat16),        # decoder wih landing
            pltpu.VMEM(kD["whh"].shape, jnp.bfloat16),        # decoder whh landing
            pltpu.SemaphoreType.DMA((2,)),
        ],
        compiler_params=pltpu.CompilerParams(
            vmem_limit_bytes=32 * 1024 * 1024),               # above v5e's 16 MiB default
    )(x_nat,
      kE["wih"], kE["whh"], kE["bx"], kE["bhn"],
      kD["wih"], kD["whh"], kD["bx"], kD["bhn"],
      params["wcls"], params["bcls"])

    # dropout(p=0.1) == identity at inference; drop the lane padding.
    return out_padded[:, :1]                     # (B, 1)


# ----------------------------- main ------------------------------------------ #

if __name__ == "__main__":
    key = jax.random.PRNGKey(0)
    pkey, ikey = jax.random.split(key)
    params = init_params(pkey)

    k1, _ = jax.random.split(ikey)
    input_ids = jax.random.randint(k1, (BATCH, SEQ), 0, VOCAB, dtype=jnp.int32)
    token_type_ids = jnp.concatenate(
        [jnp.zeros((BATCH, SEQ // 2), jnp.int32),
         jnp.ones((BATCH, SEQ // 2), jnp.int32)], axis=1)
    attn_masks = jnp.ones((BATCH, SEQ), jnp.int32)

    logits = jax.jit(forward)(params, input_ids, attn_masks, token_type_ids)
    jax.block_until_ready(logits)
    assert logits.shape == (BATCH, 1) and logits.dtype == jnp.float32
    assert bool(jnp.all(jnp.isfinite(logits)))
    print("KERNEL_OK")
</pallas_src>

<mosaic_0001>
module attributes {stable_mosaic.version = 11 : i64} {
  func.func @fused_kernel(%arg0: memref<64x256xbf16, #tpu.memory_space<vmem>>, %arg1: memref<2x256x384xbf16, #tpu.memory_space<vmem>>, %arg2: memref<2x128x384xbf16, #tpu.memory_space<vmem>>, %arg3: memref<2x1x384xf32, #tpu.memory_space<vmem>>, %arg4: memref<2x1x128xf32, #tpu.memory_space<vmem>>, %arg5: memref<2x256x384xbf16, #tpu.memory_space<any>>, %arg6: memref<2x128x384xbf16, #tpu.memory_space<any>>, %arg7: memref<2x1x384xf32, #tpu.memory_space<vmem>>, %arg8: memref<2x1x128xf32, #tpu.memory_space<vmem>>, %arg9: memref<1x256xf32, #tpu.memory_space<vmem>>, %arg10: memref<1x1xf32, #tpu.memory_space<vmem>>, %arg11: memref<8x128xf32, #tpu.memory_space<vmem>>, %arg12: memref<64x256xf32, #tpu.memory_space<vmem>>, %arg13: memref<2x256x384xbf16, #tpu.memory_space<vmem>>, %arg14: memref<2x128x384xbf16, #tpu.memory_space<vmem>>, %arg15: memref<2x!tpu.dma_semaphore, #tpu.memory_space<semaphore_mem>>) attributes {dimension_semantics = [], scalar_prefetch = 0 : i64, scratch_operands = 4 : i64, tpu.core_type = #tpu.core_type<tc>} {
    %c0_i32 = arith.constant 0 : i32
    %0 = tpu.memref_slice %arg15[%c0_i32] : memref<2x!tpu.dma_semaphore, #tpu.memory_space<semaphore_mem>> -> memref<1x!tpu.dma_semaphore, #tpu.memory_space<semaphore_mem>>
    %1 = tpu.memref_squeeze %0 : memref<1x!tpu.dma_semaphore, #tpu.memory_space<semaphore_mem>> -> memref<!tpu.dma_semaphore, #tpu.memory_space<semaphore_mem>>
    tpu.enqueue_dma source(%arg5 : memref<2x256x384xbf16, #tpu.memory_space<any>>) target(%arg13 : memref<2x256x384xbf16, #tpu.memory_space<vmem>>) target_semaphore(%1 : memref<!tpu.dma_semaphore, #tpu.memory_space<semaphore_mem>>)
    %c1_i32 = arith.constant 1 : i32
    %2 = tpu.memref_slice %arg15[%c1_i32] : memref<2x!tpu.dma_semaphore, #tpu.memory_space<semaphore_mem>> -> memref<1x!tpu.dma_semaphore, #tpu.memory_space<semaphore_mem>>
    %3 = tpu.memref_squeeze %2 : memref<1x!tpu.dma_semaphore, #tpu.memory_space<semaphore_mem>> -> memref<!tpu.dma_semaphore, #tpu.memory_space<semaphore_mem>>
    tpu.enqueue_dma source(%arg6 : memref<2x128x384xbf16, #tpu.memory_space<any>>) target(%arg14 : memref<2x128x384xbf16, #tpu.memory_space<vmem>>) target_semaphore(%3 : memref<!tpu.dma_semaphore, #tpu.memory_space<semaphore_mem>>)
    %c0 = arith.constant 0 : index
    %c0_0 = arith.constant 0 : index
    %4 = vector.load %arg0[%c0, %c0_0] : memref<64x256xbf16, #tpu.memory_space<vmem>>, vector<64x256xbf16>
    %c0_1 = arith.constant 0 : index
    %c0_2 = arith.constant 0 : index
    %c0_3 = arith.constant 0 : index
    %5 = vector.load %arg1[%c0_1, %c0_2, %c0_3] : memref<2x256x384xbf16, #tpu.memory_space<vmem>>, vector<1x256x384xbf16>
    %6 = vector.shape_cast %5 : vector<1x256x384xbf16> to vector<256x384xbf16>
    %c1 = arith.constant 1 : index
    %c0_4 = arith.constant 0 : index
    %c0_5 = arith.constant 0 : index
    %7 = vector.load %arg1[%c1, %c0_4, %c0_5] : memref<2x256x384xbf16, #tpu.memory_space<vmem>>, vector<1x256x384xbf16>
    %8 = vector.shape_cast %7 : vector<1x256x384xbf16> to vector<256x384xbf16>
    %c0_6 = arith.constant 0 : index
    %c0_7 = arith.constant 0 : index
    %c0_8 = arith.constant 0 : index
    %9 = vector.load %arg2[%c0_6, %c0_7, %c0_8] : memref<2x128x384xbf16, #tpu.memory_space<vmem>>, vector<1x128x384xbf16>
    %10 = vector.shape_cast %9 : vector<1x128x384xbf16> to vector<128x384xbf16>
    %c1_9 = arith.constant 1 : index
    %c0_10 = arith.constant 0 : index
    %c0_11 = arith.constant 0 : index
    %11 = vector.load %arg2[%c1_9, %c0_10, %c0_11] : memref<2x128x384xbf16, #tpu.memory_space<vmem>>, vector<1x128x384xbf16>
    %12 = vector.shape_cast %11 : vector<1x128x384xbf16> to vector<128x384xbf16>
    %cst = arith.constant dense<0.000000e+00> : vector<64x384xf32>
    %13 = tpu.matmul %4, %6, %cst {dimension_numbers = #tpu.dot_dimension_numbers<[1], [0], [0], [1], [0, 0, 1, 1], [], []>} : vector<64x256xbf16>, vector<256x384xbf16>, vector<64x384xf32> -> vector<64x384xf32>
    %c0_12 = arith.constant 0 : index
    %c0_13 = arith.constant 0 : index
    %c0_14 = arith.constant 0 : index
    %14 = vector.load %arg3[%c0_12, %c0_13, %c0_14] : memref<2x1x384xf32, #tpu.memory_space<vmem>>, vector<1x1x384xf32>
    %15 = vector.shape_cast %14 : vector<1x1x384xf32> to vector<1x384xf32>
    %16 = vector.broadcast %15 : vector<1x384xf32> to vector<64x384xf32>
    %17 = arith.addf %13, %16 : vector<64x384xf32>
    %cst_15 = arith.constant dense<0.000000e+00> : vector<64x384xf32>
    %18 = tpu.matmul %4, %8, %cst_15 {dimension_numbers = #tpu.dot_dimension_numbers<[1], [0], [0], [1], [0, 0, 1, 1], [], []>} : vector<64x256xbf16>, vector<256x384xbf16>, vector<64x384xf32> -> vector<64x384xf32>
    %c1_16 = arith.constant 1 : index
    %c0_17 = arith.constant 0 : index
    %c0_18 = arith.constant 0 : index
    %19 = vector.load %arg3[%c1_16, %c0_17, %c0_18] : memref<2x1x384xf32, #tpu.memory_space<vmem>>, vector<1x1x384xf32>
    %20 = vector.shape_cast %19 : vector<1x1x384xf32> to vector<1x384xf32>
    %21 = vector.broadcast %20 : vector<1x384xf32> to vector<64x384xf32>
    %22 = arith.addf %18, %21 : vector<64x384xf32>
    %c0_19 = arith.constant 0 : index
    %c0_20 = arith.constant 0 : index
    %c0_21 = arith.constant 0 : index
    %23 = vector.load %arg4[%c0_19, %c0_20, %c0_21] : memref<2x1x128xf32, #tpu.memory_space<vmem>>, vector<1x1x128xf32>
    %24 = vector.shape_cast %23 : vector<1x1x128xf32> to vector<1x128xf32>
    %25 = vector.shape_cast %24 : vector<1x128xf32> to vector<1x128xf32>
    %26 = vector.broadcast %25 : vector<1x128xf32> to vector<8x128xf32>
    %c1_22 = arith.constant 1 : index
    %c0_23 = arith.constant 0 : index
    %c0_24 = arith.constant 0 : index
    %27 = vector.load %arg4[%c1_22, %c0_23, %c0_24] : memref<2x1x128xf32, #tpu.memory_space<vmem>>, vector<1x1x128xf32>
    %28 = vector.shape_cast %27 : vector<1x1x128xf32> to vector<1x128xf32>
    %29 = vector.shape_cast %28 : vector<1x128xf32> to vector<1x128xf32>
    %30 = vector.broadcast %29 : vector<1x128xf32> to vector<8x128xf32>
    %cst_25 = arith.constant 0.000000e+00 : f32
    %31 = vector.broadcast %cst_25 : f32 to vector<8x128xf32>
    %cst_26 = arith.constant 0.000000e+00 : f32
    %32 = vector.broadcast %cst_26 : f32 to vector<8x128xf32>
    %33 = arith.truncf %31 : vector<8x128xf32> to vector<8x128xbf16>
    %cst_27 = arith.constant dense<0.000000e+00> : vector<8x384xf32>
    %34 = tpu.matmul %33, %10, %cst_27 {dimension_numbers = #tpu.dot_dimension_numbers<[1], [0], [0], [1], [0, 0, 1, 1], [], []>} : vector<8x128xbf16>, vector<128x384xbf16>, vector<8x384xf32> -> vector<8x384xf32>
    %35 = arith.truncf %32 : vector<8x128xf32> to vector<8x128xbf16>
    %cst_28 = arith.constant dense<0.000000e+00> : vector<8x384xf32>
    %36 = tpu.matmul %35, %12, %cst_28 {dimension_numbers = #tpu.dot_dimension_numbers<[1], [0], [0], [1], [0, 0, 1, 1], [], []>} : vector<8x128xbf16>, vector<128x384xbf16>, vector<8x384xf32> -> vector<8x384xf32>
    %37 = vector.extract_strided_slice %17 {offsets = [0, 0], sizes = [8, 384], strides = [1, 1]} : vector<64x384xf32> to vector<8x384xf32>
    %38 = vector.extract_strided_slice %37 {offsets = [0, 0], sizes = [8, 128], strides = [1, 1]} : vector<8x384xf32> to vector<8x128xf32>
    %39 = vector.extract_strided_slice %34 {offsets = [0, 0], sizes = [8, 128], strides = [1, 1]} : vector<8x384xf32> to vector<8x128xf32>
    %40 = arith.addf %38, %39 : vector<8x128xf32>
    %41 = arith.negf %40 : vector<8x128xf32>
    %42 = math.exp %41 : vector<8x128xf32>
    %cst_29 = arith.constant 1.000000e+00 : f32
    %43 = vector.broadcast %cst_29 : f32 to vector<8x128xf32>
    %44 = arith.addf %43, %42 : vector<8x128xf32>
    %45 = arith.divf %43, %44 : vector<8x128xf32>
    %46 = vector.extract_strided_slice %37 {offsets = [0, 128], sizes = [8, 128], strides = [1, 1]} : vector<8x384xf32> to vector<8x128xf32>
    %47 = vector.extract_strided_slice %34 {offsets = [0, 128], sizes = [8, 128], strides = [1, 1]} : vector<8x384xf32> to vector<8x128xf32>
    %48 = arith.addf %46, %47 : vector<8x128xf32>
    %49 = arith.negf %48 : vector<8x128xf32>
    %50 = math.exp %49 : vector<8x128xf32>
    %cst_30 = arith.constant 1.000000e+00 : f32
    %51 = vector.broadcast %cst_30 : f32 to vector<8x128xf32>
    %52 = arith.addf %51, %50 : vector<8x128xf32>
    %53 = arith.divf %51, %52 : vector<8x128xf32>
    %54 = vector.extract_strided_slice %37 {offsets = [0, 256], sizes = [8, 128], strides = [1, 1]} : vector<8x384xf32> to vector<8x128xf32>
    %55 = vector.extract_strided_slice %34 {offsets = [0, 256], sizes = [8, 128], strides = [1, 1]} : vector<8x384xf32> to vector<8x128xf32>
    %56 = arith.addf %55, %26 : vector<8x128xf32>
    %57 = arith.mulf %45, %56 : vector<8x128xf32>
    %58 = arith.addf %54, %57 : vector<8x128xf32>
    %59 = math.tanh %58 : vector<8x128xf32>
    %cst_31 = arith.constant 1.000000e+00 : f32
    %60 = vector.broadcast %cst_31 : f32 to vector<8x128xf32>
    %61 = arith.subf %60, %53 : vector<8x128xf32>
    %62 = arith.mulf %61, %59 : vector<8x128xf32>
    %63 = arith.mulf %53, %31 : vector<8x128xf32>
    %64 = arith.addf %62, %63 : vector<8x128xf32>
    %65 = vector.extract_strided_slice %22 {offsets = [56, 0], sizes = [8, 384], strides = [1, 1]} : vector<64x384xf32> to vector<8x384xf32>
    %66 = vector.extract_strided_slice %65 {offsets = [0, 0], sizes = [8, 128], strides = [1, 1]} : vector<8x384xf32> to vector<8x128xf32>
    %67 = vector.extract_strided_slice %36 {offsets = [0, 0], sizes = [8, 128], strides = [1, 1]} : vector<8x384xf32> to vector<8x128xf32>
    %68 = arith.addf %66, %67 : vector<8x128xf32>
    %69 = arith.negf %68 : vector<8x128xf32>
    %70 = math.exp %69 : vector<8x128xf32>
    %cst_32 = arith.constant 1.000000e+00 : f32
    %71 = vector.broadcast %cst_32 : f32 to vector<8x128xf32>
    %72 = arith.addf %71, %70 : vector<8x128xf32>
    %73 = arith.divf %71, %72 : vector<8x128xf32>
    %74 = vector.extract_strided_slice %65 {offsets = [0, 128], sizes = [8, 128], strides = [1, 1]} : vector<8x384xf32> to vector<8x128xf32>
    %75 = vector.extract_strided_slice %36 {offsets = [0, 128], sizes = [8, 128], strides = [1, 1]} : vector<8x384xf32> to vector<8x128xf32>
    %76 = arith.addf %74, %75 : vector<8x128xf32>
    %77 = arith.negf %76 : vector<8x128xf32>
    %78 = math.exp %77 : vector<8x128xf32>
    %cst_33 = arith.constant 1.000000e+00 : f32
    %79 = vector.broadcast %cst_33 : f32 to vector<8x128xf32>
    %80 = arith.addf %79, %78 : vector<8x128xf32>
    %81 = arith.divf %79, %80 : vector<8x128xf32>
    %82 = vector.extract_strided_slice %65 {offsets = [0, 256], sizes = [8, 128], strides = [1, 1]} : vector<8x384xf32> to vector<8x128xf32>
    %83 = vector.extract_strided_slice %36 {offsets = [0, 256], sizes = [8, 128], strides = [1, 1]} : vector<8x384xf32> to vector<8x128xf32>
    %84 = arith.addf %83, %30 : vector<8x128xf32>
    %85 = arith.mulf %73, %84 : vector<8x128xf32>
    %86 = arith.addf %82, %85 : vector<8x128xf32>
    %87 = math.tanh %86 : vector<8x128xf32>
    %cst_34 = arith.constant 1.000000e+00 : f32
    %88 = vector.broadcast %cst_34 : f32 to vector<8x128xf32>
    %89 = arith.subf %88, %81 : vector<8x128xf32>
    %90 = arith.mulf %89, %87 : vector<8x128xf32>
    %91 = arith.mulf %81, %32 : vector<8x128xf32>
    %92 = arith.addf %90, %91 : vector<8x128xf32>
    %c0_35 = arith.constant 0 : index
    %c0_36 = arith.constant 0 : index
    %93 = vector.load %arg12[%c0_35, %c0_36] : memref<64x256xf32, #tpu.memory_space<vmem>>, vector<8x128xf32>
    tpu.vector_store %arg12[%c0_35, %c0_36], %64 {strides = array<i32>} : memref<64x256xf32, #tpu.memory_space<vmem>>, vector<8x128xf32>,
    %c56 = arith.constant 56 : index
    %c128 = arith.constant 128 : index
    %94 = vector.load %arg12[%c56, %c128] : memref<64x256xf32, #tpu.memory_space<vmem>>, vector<8x128xf32>
    tpu.vector_store %arg12[%c56, %c128], %92 {strides = array<i32>} : memref<64x256xf32, #tpu.memory_space<vmem>>, vector<8x128xf32>,
    %95 = arith.truncf %64 : vector<8x128xf32> to vector<8x128xbf16>
    %cst_37 = arith.constant dense<0.000000e+00> : vector<8x384xf32>
    %96 = tpu.matmul %95, %10, %cst_37 {dimension_numbers = #tpu.dot_dimension_numbers<[1], [0], [0], [1], [0, 0, 1, 1], [], []>} : vector<8x128xbf16>, vector<128x384xbf16>, vector<8x384xf32> -> vector<8x384xf32>
    %97 = arith.truncf %92 : vector<8x128xf32> to vector<8x128xbf16>
    %cst_38 = arith.constant dense<0.000000e+00> : vector<8x384xf32>
    %98 = tpu.matmul %97, %12, %cst_38 {dimension_numbers = #tpu.dot_dimension_numbers<[1], [0], [0], [1], [0, 0, 1, 1], [], []>} : vector<8x128xbf16>, vector<128x384xbf16>, vector<8x384xf32> -> vector<8x384xf32>
    %99 = vector.extract_strided_slice %17 {offsets = [8, 0], sizes = [8, 384], strides = [1, 1]} : vector<64x384xf32> to vector<8x384xf32>
    %100 = vector.extract_strided_slice %99 {offsets = [0, 0], sizes = [8, 128], strides = [1, 1]} : vector<8x384xf32> to vector<8x128xf32>
    %101 = vector.extract_strided_slice %96 {offsets = [0, 0], sizes = [8, 128], strides = [1, 1]} : vector<8x384xf32> to vector<8x128xf32>
    %102 = arith.addf %100, %101 : vector<8x128xf32>
    %103 = arith.negf %102 : vector<8x128xf32>
    %104 = math.exp %103 : vector<8x128xf32>
    %cst_39 = arith.constant 1.000000e+00 : f32
    %105 = vector.broadcast %cst_39 : f32 to vector<8x128xf32>
    %106 = arith.addf %105, %104 : vector<8x128xf32>
    %107 = arith.divf %105, %106 : vector<8x128xf32>
    %108 = vector.extract_strided_slice %99 {offsets = [0, 128], sizes = [8, 128], strides = [1, 1]} : vector<8x384xf32> to vector<8x128xf32>
    %109 = vector.extract_strided_slice %96 {offsets = [0, 128], sizes = [8, 128], strides = [1, 1]} : vector<8x384xf32> to vector<8x128xf32>
    %110 = arith.addf %108, %109 : vector<8x128xf32>
    %111 = arith.negf %110 : vector<8x128xf32>
    %112 = math.exp %111 : vector<8x128xf32>
    %cst_40 = arith.constant 1.000000e+00 : f32
    %113 = vector.broadcast %cst_40 : f32 to vector<8x128xf32>
    %114 = arith.addf %113, %112 : vector<8x128xf32>
    %115 = arith.divf %113, %114 : vector<8x128xf32>
    %116 = vector.extract_strided_slice %99 {offsets = [0, 256], sizes = [8, 128], strides = [1, 1]} : vector<8x384xf32> to vector<8x128xf32>
    %117 = vector.extract_strided_slice %96 {offsets = [0, 256], sizes = [8, 128], strides = [1, 1]} : vector<8x384xf32> to vector<8x128xf32>
    %118 = arith.addf %117, %26 : vector<8x128xf32>
    %119 = arith.mulf %107, %118 : vector<8x128xf32>
    %120 = arith.addf %116, %119 : vector<8x128xf32>
    %121 = math.tanh %120 : vector<8x128xf32>
    %cst_41 = arith.constant 1.000000e+00 : f32
    %122 = vector.broadcast %cst_41 : f32 to vector<8x128xf32>
    %123 = arith.subf %122, %115 : vector<8x128xf32>
    %124 = arith.mulf %123, %121 : vector<8x128xf32>
    %125 = arith.mulf %115, %64 : vector<8x128xf32>
    %126 = arith.addf %124, %125 : vector<8x128xf32>
    %127 = vector.extract_strided_slice %22 {offsets = [48, 0], sizes = [8, 384], strides = [1, 1]} : vector<64x384xf32> to vector<8x384xf32>
    %128 = vector.extract_strided_slice %127 {offsets = [0, 0], sizes = [8, 128], strides = [1, 1]} : vector<8x384xf32> to vector<8x128xf32>
    %129 = vector.extract_strided_slice %98 {offsets = [0, 0], sizes = [8, 128], strides = [1, 1]} : vector<8x384xf32> to vector<8x128xf32>
    %130 = arith.addf %128, %129 : vector<8x128xf32>
    %131 = arith.negf %130 : vector<8x128xf32>
    %132 = math.exp %131 : vector<8x128xf32>
    %cst_42 = arith.constant 1.000000e+00 : f32
    %133 = vector.broadcast %cst_42 : f32 to vector<8x128xf32>
    %134 = arith.addf %133, %132 : vector<8x128xf32>
    %135 = arith.divf %133, %134 : vector<8x128xf32>
    %136 = vector.extract_strided_slice %127 {offsets = [0, 128], sizes = [8, 128], strides = [1, 1]} : vector<8x384xf32> to vector<8x128xf32>
    %137 = vector.extract_strided_slice %98 {offsets = [0, 128], sizes = [8, 128], strides = [1, 1]} : vector<8x384xf32> to vector<8x128xf32>
    %138 = arith.addf %136, %137 : vector<8x128xf32>
    %139 = arith.negf %138 : vector<8x128xf32>
    %140 = math.exp %139 : vector<8x128xf32>
    %cst_43 = arith.constant 1.000000e+00 : f32
    %141 = vector.broadcast %cst_43 : f32 to vector<8x128xf32>
    %142 = arith.addf %141, %140 : vector<8x128xf32>
    %143 = arith.divf %141, %142 : vector<8x128xf32>
    %144 = vector.extract_strided_slice %127 {offsets = [0, 256], sizes = [8, 128], strides = [1, 1]} : vector<8x384xf32> to vector<8x128xf32>
    %145 = vector.extract_strided_slice %98 {offsets = [0, 256], sizes = [8, 128], strides = [1, 1]} : vector<8x384xf32> to vector<8x128xf32>
    %146 = arith.addf %145, %30 : vector<8x128xf32>
    %147 = arith.mulf %135, %146 : vector<8x128xf32>
    %148 = arith.addf %144, %147 : vector<8x128xf32>
    %149 = math.tanh %148 : vector<8x128xf32>
    %cst_44 = arith.constant 1.000000e+00 : f32
    %150 = vector.broadcast %cst_44 : f32 to vector<8x128xf32>
    %151 = arith.subf %150, %143 : vector<8x128xf32>
    %152 = arith.mulf %151, %149 : vector<8x128xf32>
    %153 = arith.mulf %143, %92 : vector<8x128xf32>
    %154 = arith.addf %152, %153 : vector<8x128xf32>
    %c8 = arith.constant 8 : index
    %c0_45 = arith.constant 0 : index
    %155 = vector.load %arg12[%c8, %c0_45] : memref<64x256xf32, #tpu.memory_space<vmem>>, vector<8x128xf32>
    tpu.vector_store %arg12[%c8, %c0_45], %126 {strides = array<i32>} : memref<64x256xf32, #tpu.memory_space<vmem>>, vector<8x128xf32>,
    %c48 = arith.constant 48 : index
    %c128_46 = arith.constant 128 : index
    %156 = vector.load %arg12[%c48, %c128_46] : memref<64x256xf32, #tpu.memory_space<vmem>>, vector<8x128xf32>
    tpu.vector_store %arg12[%c48, %c128_46], %154 {strides = array<i32>} : memref<64x256xf32, #tpu.memory_space<vmem>>, vector<8x128xf32>,
    %157 = arith.truncf %126 : vector<8x128xf32> to vector<8x128xbf16>
    %cst_47 = arith.constant dense<0.000000e+00> : vector<8x384xf32>
    %158 = tpu.matmul %157, %10, %cst_47 {dimension_numbers = #tpu.dot_dimension_numbers<[1], [0], [0], [1], [0, 0, 1, 1], [], []>} : vector<8x128xbf16>, vector<128x384xbf16>, vector<8x384xf32> -> vector<8x384xf32>
    %159 = arith.truncf %154 : vector<8x128xf32> to vector<8x128xbf16>
    %cst_48 = arith.constant dense<0.000000e+00> : vector<8x384xf32>
    %160 = tpu.matmul %159, %12, %cst_48 {dimension_numbers = #tpu.dot_dimension_numbers<[1], [0], [0], [1], [0, 0, 1, 1], [], []>} : vector<8x128xbf16>, vector<128x384xbf16>, vector<8x384xf32> -> vector<8x384xf32>
    %161 = vector.extract_strided_slice %17 {offsets = [16, 0], sizes = [8, 384], strides = [1, 1]} : vector<64x384xf32> to vector<8x384xf32>
    %162 = vector.extract_strided_slice %161 {offsets = [0, 0], sizes = [8, 128], strides = [1, 1]} : vector<8x384xf32> to vector<8x128xf32>
    %163 = vector.extract_strided_slice %158 {offsets = [0, 0], sizes = [8, 128], strides = [1, 1]} : vector<8x384xf32> to vector<8x128xf32>
    %164 = arith.addf %162, %163 : vector<8x128xf32>
    %165 = arith.negf %164 : vector<8x128xf32>
    %166 = math.exp %165 : vector<8x128xf32>
    %cst_49 = arith.constant 1.000000e+00 : f32
    %167 = vector.broadcast %cst_49 : f32 to vector<8x128xf32>
    %168 = arith.addf %167, %166 : vector<8x128xf32>
    %169 = arith.divf %167, %168 : vector<8x128xf32>
    %170 = vector.extract_strided_slice %161 {offsets = [0, 128], sizes = [8, 128], strides = [1, 1]} : vector<8x384xf32> to vector<8x128xf32>
    %171 = vector.extract_strided_slice %158 {offsets = [0, 128], sizes = [8, 128], strides = [1, 1]} : vector<8x384xf32> to vector<8x128xf32>
    %172 = arith.addf %170, %171 : vector<8x128xf32>
    %173 = arith.negf %172 : vector<8x128xf32>
    %174 = math.exp %173 : vector<8x128xf32>
    %cst_50 = arith.constant 1.000000e+00 : f32
    %175 = vector.broadcast %cst_50 : f32 to vector<8x128xf32>
    %176 = arith.addf %175, %174 : vector<8x128xf32>
    %177 = arith.divf %175, %176 : vector<8x128xf32>
    %178 = vector.extract_strided_slice %161 {offsets = [0, 256], sizes = [8, 128], strides = [1, 1]} : vector<8x384xf32> to vector<8x128xf32>
    %179 = vector.extract_strided_slice %158 {offsets = [0, 256], sizes = [8, 128], strides = [1, 1]} : vector<8x384xf32> to vector<8x128xf32>
    %180 = arith.addf %179, %26 : vector<8x128xf32>
    %181 = arith.mulf %169, %180 : vector<8x128xf32>
    %182 = arith.addf %178, %181 : vector<8x128xf32>
    %183 = math.tanh %182 : vector<8x128xf32>
    %cst_51 = arith.constant 1.000000e+00 : f32
    %184 = vector.broadcast %cst_51 : f32 to vector<8x128xf32>
    %185 = arith.subf %184, %177 : vector<8x128xf32>
    %186 = arith.mulf %185, %183 : vector<8x128xf32>
    %187 = arith.mulf %177, %126 : vector<8x128xf32>
    %188 = arith.addf %186, %187 : vector<8x128xf32>
    %189 = vector.extract_strided_slice %22 {offsets = [40, 0], sizes = [8, 384], strides = [1, 1]} : vector<64x384xf32> to vector<8x384xf32>
    %190 = vector.extract_strided_slice %189 {offsets = [0, 0], sizes = [8, 128], strides = [1, 1]} : vector<8x384xf32> to vector<8x128xf32>
    %191 = vector.extract_strided_slice %160 {offsets = [0, 0], sizes = [8, 128], strides = [1, 1]} : vector<8x384xf32> to vector<8x128xf32>
    %192 = arith.addf %190, %191 : vector<8x128xf32>
    %193 = arith.negf %192 : vector<8x128xf32>
    %194 = math.exp %193 : vector<8x128xf32>
    %cst_52 = arith.constant 1.000000e+00 : f32
    %195 = vector.broadcast %cst_52 : f32 to vector<8x128xf32>
    %196 = arith.addf %195, %194 : vector<8x128xf32>
    %197 = arith.divf %195, %196 : vector<8x128xf32>
    %198 = vector.extract_strided_slice %189 {offsets = [0, 128], sizes = [8, 128], strides = [1, 1]} : vector<8x384xf32> to vector<8x128xf32>
    %199 = vector.extract_strided_slice %160 {offsets = [0, 128], sizes = [8, 128], strides = [1, 1]} : vector<8x384xf32> to vector<8x128xf32>
    %200 = arith.addf %198, %199 : vector<8x128xf32>
    %201 = arith.negf %200 : vector<8x128xf32>
    %202 = math.exp %201 : vector<8x128xf32>
    %cst_53 = arith.constant 1.000000e+00 : f32
    %203 = vector.broadcast %cst_53 : f32 to vector<8x128xf32>
    %204 = arith.addf %203, %202 : vector<8x128xf32>
    %205 = arith.divf %203, %204 : vector<8x128xf32>
    %206 = vector.extract_strided_slice %189 {offsets = [0, 256], sizes = [8, 128], strides = [1, 1]} : vector<8x384xf32> to vector<8x128xf32>
    %207 = vector.extract_strided_slice %160 {offsets = [0, 256], sizes = [8, 128], strides = [1, 1]} : vector<8x384xf32> to vector<8x128xf32>
    %208 = arith.addf %207, %30 : vector<8x128xf32>
    %209 = arith.mulf %197, %208 : vector<8x128xf32>
    %210 = arith.addf %206, %209 : vector<8x128xf32>
    %211 = math.tanh %210 : vector<8x128xf32>
    %cst_54 = arith.constant 1.000000e+00 : f32
    %212 = vector.broadcast %cst_54 : f32 to vector<8x128xf32>
    %213 = arith.subf %212, %205 : vector<8x128xf32>
    %214 = arith.mulf %213, %211 : vector<8x128xf32>
    %215 = arith.mulf %205, %154 : vector<8x128xf32>
    %216 = arith.addf %214, %215 : vector<8x128xf32>
    %c16 = arith.constant 16 : index
    %c0_55 = arith.constant 0 : index
    %217 = vector.load %arg12[%c16, %c0_55] : memref<64x256xf32, #tpu.memory_space<vmem>>, vector<8x128xf32>
    tpu.vector_store %arg12[%c16, %c0_55], %188 {strides = array<i32>} : memref<64x256xf32, #tpu.memory_space<vmem>>, vector<8x128xf32>,
    %c40 = arith.constant 40 : index
    %c128_56 = arith.constant 128 : index
    %218 = vector.load %arg12[%c40, %c128_56] : memref<64x256xf32, #tpu.memory_space<vmem>>, vector<8x128xf32>
    tpu.vector_store %arg12[%c40, %c128_56], %216 {strides = array<i32>} : memref<64x256xf32, #tpu.memory_space<vmem>>, vector<8x128xf32>,
    %219 = arith.truncf %188 : vector<8x128xf32> to vector<8x128xbf16>
    %cst_57 = arith.constant dense<0.000000e+00> : vector<8x384xf32>
    %220 = tpu.matmul %219, %10, %cst_57 {dimension_numbers = #tpu.dot_dimension_numbers<[1], [0], [0], [1], [0, 0, 1, 1], [], []>} : vector<8x128xbf16>, vector<128x384xbf16>, vector<8x384xf32> -> vector<8x384xf32>
    %221 = arith.truncf %216 : vector<8x128xf32> to vector<8x128xbf16>
    %cst_58 = arith.constant dense<0.000000e+00> : vector<8x384xf32>
    %222 = tpu.matmul %221, %12, %cst_58 {dimension_numbers = #tpu.dot_dimension_numbers<[1], [0], [0], [1], [0, 0, 1, 1], [], []>} : vector<8x128xbf16>, vector<128x384xbf16>, vector<8x384xf32> -> vector<8x384xf32>
    %223 = vector.extract_strided_slice %17 {offsets = [24, 0], sizes = [8, 384], strides = [1, 1]} : vector<64x384xf32> to vector<8x384xf32>
    %224 = vector.extract_strided_slice %223 {offsets = [0, 0], sizes = [8, 128], strides = [1, 1]} : vector<8x384xf32> to vector<8x128xf32>
    %225 = vector.extract_strided_slice %220 {offsets = [0, 0], sizes = [8, 128], strides = [1, 1]} : vector<8x384xf32> to vector<8x128xf32>
    %226 = arith.addf %224, %225 : vector<8x128xf32>
    %227 = arith.negf %226 : vector<8x128xf32>
    %228 = math.exp %227 : vector<8x128xf32>
    %cst_59 = arith.constant 1.000000e+00 : f32
    %229 = vector.broadcast %cst_59 : f32 to vector<8x128xf32>
    %230 = arith.addf %229, %228 : vector<8x128xf32>
    %231 = arith.divf %229, %230 : vector<8x128xf32>
    %232 = vector.extract_strided_slice %223 {offsets = [0, 128], sizes = [8, 128], strides = [1, 1]} : vector<8x384xf32> to vector<8x128xf32>
    %233 = vector.extract_strided_slice %220 {offsets = [0, 128], sizes = [8, 128], strides = [1, 1]} : vector<8x384xf32> to vector<8x128xf32>
    %234 = arith.addf %232, %233 : vector<8x128xf32>
    %235 = arith.negf %234 : vector<8x128xf32>
    %236 = math.exp %235 : vector<8x128xf32>
    %cst_60 = arith.constant 1.000000e+00 : f32
    %237 = vector.broadcast %cst_60 : f32 to vector<8x128xf32>
    %238 = arith.addf %237, %236 : vector<8x128xf32>
    %239 = arith.divf %237, %238 : vector<8x128xf32>
    %240 = vector.extract_strided_slice %223 {offsets = [0, 256], sizes = [8, 128], strides = [1, 1]} : vector<8x384xf32> to vector<8x128xf32>
    %241 = vector.extract_strided_slice %220 {offsets = [0, 256], sizes = [8, 128], strides = [1, 1]} : vector<8x384xf32> to vector<8x128xf32>
    %242 = arith.addf %241, %26 : vector<8x128xf32>
    %243 = arith.mulf %231, %242 : vector<8x128xf32>
    %244 = arith.addf %240, %243 : vector<8x128xf32>
    %245 = math.tanh %244 : vector<8x128xf32>
    %cst_61 = arith.constant 1.000000e+00 : f32
    %246 = vector.broadcast %cst_61 : f32 to vector<8x128xf32>
    %247 = arith.subf %246, %239 : vector<8x128xf32>
    %248 = arith.mulf %247, %245 : vector<8x128xf32>
    %249 = arith.mulf %239, %188 : vector<8x128xf32>
    %250 = arith.addf %248, %249 : vector<8x128xf32>
    %251 = vector.extract_strided_slice %22 {offsets = [32, 0], sizes = [8, 384], strides = [1, 1]} : vector<64x384xf32> to vector<8x384xf32>
    %252 = vector.extract_strided_slice %251 {offsets = [0, 0], sizes = [8, 128], strides = [1, 1]} : vector<8x384xf32> to vector<8x128xf32>
    %253 = vector.extract_strided_slice %222 {offsets = [0, 0], sizes = [8, 128], strides = [1, 1]} : vector<8x384xf32> to vector<8x128xf32>
    %254 = arith.addf %252, %253 : vector<8x128xf32>
    %255 = arith.negf %254 : vector<8x128xf32>
    %256 = math.exp %255 : vector<8x128xf32>
    %cst_62 = arith.constant 1.000000e+00 : f32
    %257 = vector.broadcast %cst_62 : f32 to vector<8x128xf32>
    %258 = arith.addf %257, %256 : vector<8x128xf32>
    %259 = arith.divf %257, %258 : vector<8x128xf32>
    %260 = vector.extract_strided_slice %251 {offsets = [0, 128], sizes = [8, 128], strides = [1, 1]} : vector<8x384xf32> to vector<8x128xf32>
    %261 = vector.extract_strided_slice %222 {offsets = [0, 128], sizes = [8, 128], strides = [1, 1]} : vector<8x384xf32> to vector<8x128xf32>
    %262 = arith.addf %260, %261 : vector<8x128xf32>
    %263 = arith.negf %262 : vector<8x128xf32>
    %264 = math.exp %263 : vector<8x128xf32>
    %cst_63 = arith.constant 1.000000e+00 : f32
    %265 = vector.broadcast %cst_63 : f32 to vector<8x128xf32>
    %266 = arith.addf %265, %264 : vector<8x128xf32>
    %267 = arith.divf %265, %266 : vector<8x128xf32>
    %268 = vector.extract_strided_slice %251 {offsets = [0, 256], sizes = [8, 128], strides = [1, 1]} : vector<8x384xf32> to vector<8x128xf32>
    %269 = vector.extract_strided_slice %222 {offsets = [0, 256], sizes = [8, 128], strides = [1, 1]} : vector<8x384xf32> to vector<8x128xf32>
    %270 = arith.addf %269, %30 : vector<8x128xf32>
    %271 = arith.mulf %259, %270 : vector<8x128xf32>
    %272 = arith.addf %268, %271 : vector<8x128xf32>
    %273 = math.tanh %272 : vector<8x128xf32>
    %cst_64 = arith.constant 1.000000e+00 : f32
    %274 = vector.broadcast %cst_64 : f32 to vector<8x128xf32>
    %275 = arith.subf %274, %267 : vector<8x128xf32>
    %276 = arith.mulf %275, %273 : vector<8x128xf32>
    %277 = arith.mulf %267, %216 : vector<8x128xf32>
    %278 = arith.addf %276, %277 : vector<8x128xf32>
    %c24 = arith.constant 24 : index
    %c0_65 = arith.constant 0 : index
    %279 = vector.load %arg12[%c24, %c0_65] : memref<64x256xf32, #tpu.memory_space<vmem>>, vector<8x128xf32>
    tpu.vector_store %arg12[%c24, %c0_65], %250 {strides = array<i32>} : memref<64x256xf32, #tpu.memory_space<vmem>>, vector<8x128xf32>,
    %c32 = arith.constant 32 : index
    %c128_66 = arith.constant 128 : index
    %280 = vector.load %arg12[%c32, %c128_66] : memref<64x256xf32, #tpu.memory_space<vmem>>, vector<8x128xf32>
    tpu.vector_store %arg12[%c32, %c128_66], %278 {strides = array<i32>} : memref<64x256xf32, #tpu.memory_space<vmem>>, vector<8x128xf32>,
    %281 = arith.truncf %250 : vector<8x128xf32> to vector<8x128xbf16>
    %cst_67 = arith.constant dense<0.000000e+00> : vector<8x384xf32>
    %282 = tpu.matmul %281, %10, %cst_67 {dimension_numbers = #tpu.dot_dimension_numbers<[1], [0], [0], [1], [0, 0, 1, 1], [], []>} : vector<8x128xbf16>, vector<128x384xbf16>, vector<8x384xf32> -> vector<8x384xf32>
    %283 = arith.truncf %278 : vector<8x128xf32> to vector<8x128xbf16>
    %cst_68 = arith.constant dense<0.000000e+00> : vector<8x384xf32>
    %284 = tpu.matmul %283, %12, %cst_68 {dimension_numbers = #tpu.dot_dimension_numbers<[1], [0], [0], [1], [0, 0, 1, 1], [], []>} : vector<8x128xbf16>, vector<128x384xbf16>, vector<8x384xf32> -> vector<8x384xf32>
    %285 = vector.extract_strided_slice %17 {offsets = [32, 0], sizes = [8, 384], strides = [1, 1]} : vector<64x384xf32> to vector<8x384xf32>
    %286 = vector.extract_strided_slice %285 {offsets = [0, 0], sizes = [8, 128], strides = [1, 1]} : vector<8x384xf32> to vector<8x128xf32>
    %287 = vector.extract_strided_slice %282 {offsets = [0, 0], sizes = [8, 128], strides = [1, 1]} : vector<8x384xf32> to vector<8x128xf32>
    %288 = arith.addf %286, %287 : vector<8x128xf32>
    %289 = arith.negf %288 : vector<8x128xf32>
    %290 = math.exp %289 : vector<8x128xf32>
    %cst_69 = arith.constant 1.000000e+00 : f32
    %291 = vector.broadcast %cst_69 : f32 to vector<8x128xf32>
    %292 = arith.addf %291, %290 : vector<8x128xf32>
    %293 = arith.divf %291, %292 : vector<8x128xf32>
    %294 = vector.extract_strided_slice %285 {offsets = [0, 128], sizes = [8, 128], strides = [1, 1]} : vector<8x384xf32> to vector<8x128xf32>
    %295 = vector.extract_strided_slice %282 {offsets = [0, 128], sizes = [8, 128], strides = [1, 1]} : vector<8x384xf32> to vector<8x128xf32>
    %296 = arith.addf %294, %295 : vector<8x128xf32>
    %297 = arith.negf %296 : vector<8x128xf32>
    %298 = math.exp %297 : vector<8x128xf32>
    %cst_70 = arith.constant 1.000000e+00 : f32
    %299 = vector.broadcast %cst_70 : f32 to vector<8x128xf32>
    %300 = arith.addf %299, %298 : vector<8x128xf32>
    %301 = arith.divf %299, %300 : vector<8x128xf32>
    %302 = vector.extract_strided_slice %285 {offsets = [0, 256], sizes = [8, 128], strides = [1, 1]} : vector<8x384xf32> to vector<8x128xf32>
    %303 = vector.extract_strided_slice %282 {offsets = [0, 256], sizes = [8, 128], strides = [1, 1]} : vector<8x384xf32> to vector<8x128xf32>
    %304 = arith.addf %303, %26 : vector<8x128xf32>
    %305 = arith.mulf %293, %304 : vector<8x128xf32>
    %306 = arith.addf %302, %305 : vector<8x128xf32>
    %307 = math.tanh %306 : vector<8x128xf32>
    %cst_71 = arith.constant 1.000000e+00 : f32
    %308 = vector.broadcast %cst_71 : f32 to vector<8x128xf32>
    %309 = arith.subf %308, %301 : vector<8x128xf32>
    %310 = arith.mulf %309, %307 : vector<8x128xf32>
    %311 = arith.mulf %301, %250 : vector<8x128xf32>
    %312 = arith.addf %310, %311 : vector<8x128xf32>
    %313 = vector.extract_strided_slice %22 {offsets = [24, 0], sizes = [8, 384], strides = [1, 1]} : vector<64x384xf32> to vector<8x384xf32>
    %314 = vector.extract_strided_slice %313 {offsets = [0, 0], sizes = [8, 128], strides = [1, 1]} : vector<8x384xf32> to vector<8x128xf32>
    %315 = vector.extract_strided_slice %284 {offsets = [0, 0], sizes = [8, 128], strides = [1, 1]} : vector<8x384xf32> to vector<8x128xf32>
    %316 = arith.addf %314, %315 : vector<8x128xf32>
    %317 = arith.negf %316 : vector<8x128xf32>
    %318 = math.exp %317 : vector<8x128xf32>
    %cst_72 = arith.constant 1.000000e+00 : f32
    %319 = vector.broadcast %cst_72 : f32 to vector<8x128xf32>
    %320 = arith.addf %319, %318 : vector<8x128xf32>
    %321 = arith.divf %319, %320 : vector<8x128xf32>
    %322 = vector.extract_strided_slice %313 {offsets = [0, 128], sizes = [8, 128], strides = [1, 1]} : vector<8x384xf32> to vector<8x128xf32>
    %323 = vector.extract_strided_slice %284 {offsets = [0, 128], sizes = [8, 128], strides = [1, 1]} : vector<8x384xf32> to vector<8x128xf32>
    %324 = arith.addf %322, %323 : vector<8x128xf32>
    %325 = arith.negf %324 : vector<8x128xf32>
    %326 = math.exp %325 : vector<8x128xf32>
    %cst_73 = arith.constant 1.000000e+00 : f32
    %327 = vector.broadcast %cst_73 : f32 to vector<8x128xf32>
    %328 = arith.addf %327, %326 : vector<8x128xf32>
    %329 = arith.divf %327, %328 : vector<8x128xf32>
    %330 = vector.extract_strided_slice %313 {offsets = [0, 256], sizes = [8, 128], strides = [1, 1]} : vector<8x384xf32> to vector<8x128xf32>
    %331 = vector.extract_strided_slice %284 {offsets = [0, 256], sizes = [8, 128], strides = [1, 1]} : vector<8x384xf32> to vector<8x128xf32>
    %332 = arith.addf %331, %30 : vector<8x128xf32>
    %333 = arith.mulf %321, %332 : vector<8x128xf32>
    %334 = arith.addf %330, %333 : vector<8x128xf32>
    %335 = math.tanh %334 : vector<8x128xf32>
    %cst_74 = arith.constant 1.000000e+00 : f32
    %336 = vector.broadcast %cst_74 : f32 to vector<8x128xf32>
    %337 = arith.subf %336, %329 : vector<8x128xf32>
    %338 = arith.mulf %337, %335 : vector<8x128xf32>
    %339 = arith.mulf %329, %278 : vector<8x128xf32>
    %340 = arith.addf %338, %339 : vector<8x128xf32>
    %c32_75 = arith.constant 32 : index
    %c0_76 = arith.constant 0 : index
    %341 = vector.load %arg12[%c32_75, %c0_76] : memref<64x256xf32, #tpu.memory_space<vmem>>, vector<8x128xf32>
    tpu.vector_store %arg12[%c32_75, %c0_76], %312 {strides = array<i32>} : memref<64x256xf32, #tpu.memory_space<vmem>>, vector<8x128xf32>,
    %c24_77 = arith.constant 24 : index
    %c128_78 = arith.constant 128 : index
    %342 = vector.load %arg12[%c24_77, %c128_78] : memref<64x256xf32, #tpu.memory_space<vmem>>, vector<8x128xf32>
    tpu.vector_store %arg12[%c24_77, %c128_78], %340 {strides = array<i32>} : memref<64x256xf32, #tpu.memory_space<vmem>>, vector<8x128xf32>,
    %343 = arith.truncf %312 : vector<8x128xf32> to vector<8x128xbf16>
    %cst_79 = arith.constant dense<0.000000e+00> : vector<8x384xf32>
    %344 = tpu.matmul %343, %10, %cst_79 {dimension_numbers = #tpu.dot_dimension_numbers<[1], [0], [0], [1], [0, 0, 1, 1], [], []>} : vector<8x128xbf16>, vector<128x384xbf16>, vector<8x384xf32> -> vector<8x384xf32>
    %345 = arith.truncf %340 : vector<8x128xf32> to vector<8x128xbf16>
    %cst_80 = arith.constant dense<0.000000e+00> : vector<8x384xf32>
    %346 = tpu.matmul %345, %12, %cst_80 {dimension_numbers = #tpu.dot_dimension_numbers<[1], [0], [0], [1], [0, 0, 1, 1], [], []>} : vector<8x128xbf16>, vector<128x384xbf16>, vector<8x384xf32> -> vector<8x384xf32>
    %347 = vector.extract_strided_slice %17 {offsets = [40, 0], sizes = [8, 384], strides = [1, 1]} : vector<64x384xf32> to vector<8x384xf32>
    %348 = vector.extract_strided_slice %347 {offsets = [0, 0], sizes = [8, 128], strides = [1, 1]} : vector<8x384xf32> to vector<8x128xf32>
    %349 = vector.extract_strided_slice %344 {offsets = [0, 0], sizes = [8, 128], strides = [1, 1]} : vector<8x384xf32> to vector<8x128xf32>
    %350 = arith.addf %348, %349 : vector<8x128xf32>
    %351 = arith.negf %350 : vector<8x128xf32>
    %352 = math.exp %351 : vector<8x128xf32>
    %cst_81 = arith.constant 1.000000e+00 : f32
    %353 = vector.broadcast %cst_81 : f32 to vector<8x128xf32>
    %354 = arith.addf %353, %352 : vector<8x128xf32>
    %355 = arith.divf %353, %354 : vector<8x128xf32>
    %356 = vector.extract_strided_slice %347 {offsets = [0, 128], sizes = [8, 128], strides = [1, 1]} : vector<8x384xf32> to vector<8x128xf32>
    %357 = vector.extract_strided_slice %344 {offsets = [0, 128], sizes = [8, 128], strides = [1, 1]} : vector<8x384xf32> to vector<8x128xf32>
    %358 = arith.addf %356, %357 : vector<8x128xf32>
    %359 = arith.negf %358 : vector<8x128xf32>
    %360 = math.exp %359 : vector<8x128xf32>
    %cst_82 = arith.constant 1.000000e+00 : f32
    %361 = vector.broadcast %cst_82 : f32 to vector<8x128xf32>
    %362 = arith.addf %361, %360 : vector<8x128xf32>
    %363 = arith.divf %361, %362 : vector<8x128xf32>
    %364 = vector.extract_strided_slice %347 {offsets = [0, 256], sizes = [8, 128], strides = [1, 1]} : vector<8x384xf32> to vector<8x128xf32>
    %365 = vector.extract_strided_slice %344 {offsets = [0, 256], sizes = [8, 128], strides = [1, 1]} : vector<8x384xf32> to vector<8x128xf32>
    %366 = arith.addf %365, %26 : vector<8x128xf32>
    %367 = arith.mulf %355, %366 : vector<8x128xf32>
    %368 = arith.addf %364, %367 : vector<8x128xf32>
    %369 = math.tanh %368 : vector<8x128xf32>
    %cst_83 = arith.constant 1.000000e+00 : f32
    %370 = vector.broadcast %cst_83 : f32 to vector<8x128xf32>
    %371 = arith.subf %370, %363 : vector<8x128xf32>
    %372 = arith.mulf %371, %369 : vector<8x128xf32>
    %373 = arith.mulf %363, %312 : vector<8x128xf32>
    %374 = arith.addf %372, %373 : vector<8x128xf32>
    %375 = vector.extract_strided_slice %22 {offsets = [16, 0], sizes = [8, 384], strides = [1, 1]} : vector<64x384xf32> to vector<8x384xf32>
    %376 = vector.extract_strided_slice %375 {offsets = [0, 0], sizes = [8, 128], strides = [1, 1]} : vector<8x384xf32> to vector<8x128xf32>
    %377 = vector.extract_strided_slice %346 {offsets = [0, 0], sizes = [8, 128], strides = [1, 1]} : vector<8x384xf32> to vector<8x128xf32>
    %378 = arith.addf %376, %377 : vector<8x128xf32>
    %379 = arith.negf %378 : vector<8x128xf32>
    %380 = math.exp %379 : vector<8x128xf32>
    %cst_84 = arith.constant 1.000000e+00 : f32
    %381 = vector.broadcast %cst_84 : f32 to vector<8x128xf32>
    %382 = arith.addf %381, %380 : vector<8x128xf32>
    %383 = arith.divf %381, %382 : vector<8x128xf32>
    %384 = vector.extract_strided_slice %375 {offsets = [0, 128], sizes = [8, 128], strides = [1, 1]} : vector<8x384xf32> to vector<8x128xf32>
    %385 = vector.extract_strided_slice %346 {offsets = [0, 128], sizes = [8, 128], strides = [1, 1]} : vector<8x384xf32> to vector<8x128xf32>
    %386 = arith.addf %384, %385 : vector<8x128xf32>
    %387 = arith.negf %386 : vector<8x128xf32>
    %388 = math.exp %387 : vector<8x128xf32>
    %cst_85 = arith.constant 1.000000e+00 : f32
    %389 = vector.broadcast %cst_85 : f32 to vector<8x128xf32>
    %390 = arith.addf %389, %388 : vector<8x128xf32>
    %391 = arith.divf %389, %390 : vector<8x128xf32>
    %392 = vector.extract_strided_slice %375 {offsets = [0, 256], sizes = [8, 128], strides = [1, 1]} : vector<8x384xf32> to vector<8x128xf32>
    %393 = vector.extract_strided_slice %346 {offsets = [0, 256], sizes = [8, 128], strides = [1, 1]} : vector<8x384xf32> to vector<8x128xf32>
    %394 = arith.addf %393, %30 : vector<8x128xf32>
    %395 = arith.mulf %383, %394 : vector<8x128xf32>
    %396 = arith.addf %392, %395 : vector<8x128xf32>
    %397 = math.tanh %396 : vector<8x128xf32>
    %cst_86 = arith.constant 1.000000e+00 : f32
    %398 = vector.broadcast %cst_86 : f32 to vector<8x128xf32>
    %399 = arith.subf %398, %391 : vector<8x128xf32>
    %400 = arith.mulf %399, %397 : vector<8x128xf32>
    %401 = arith.mulf %391, %340 : vector<8x128xf32>
    %402 = arith.addf %400, %401 : vector<8x128xf32>
    %c40_87 = arith.constant 40 : index
    %c0_88 = arith.constant 0 : index
    %403 = vector.load %arg12[%c40_87, %c0_88] : memref<64x256xf32, #tpu.memory_space<vmem>>, vector<8x128xf32>
    tpu.vector_store %arg12[%c40_87, %c0_88], %374 {strides = array<i32>} : memref<64x256xf32, #tpu.memory_space<vmem>>, vector<8x128xf32>,
    %c16_89 = arith.constant 16 : index
    %c128_90 = arith.constant 128 : index
    %404 = vector.load %arg12[%c16_89, %c128_90] : memref<64x256xf32, #tpu.memory_space<vmem>>, vector<8x128xf32>
    tpu.vector_store %arg12[%c16_89, %c128_90], %402 {strides = array<i32>} : memref<64x256xf32, #tpu.memory_space<vmem>>, vector<8x128xf32>,
    %405 = arith.truncf %374 : vector<8x128xf32> to vector<8x128xbf16>
    %cst_91 = arith.constant dense<0.000000e+00> : vector<8x384xf32>
    %406 = tpu.matmul %405, %10, %cst_91 {dimension_numbers = #tpu.dot_dimension_numbers<[1], [0], [0], [1], [0, 0, 1, 1], [], []>} : vector<8x128xbf16>, vector<128x384xbf16>, vector<8x384xf32> -> vector<8x384xf32>
    %407 = arith.truncf %402 : vector<8x128xf32> to vector<8x128xbf16>
    %cst_92 = arith.constant dense<0.000000e+00> : vector<8x384xf32>
    %408 = tpu.matmul %407, %12, %cst_92 {dimension_numbers = #tpu.dot_dimension_numbers<[1], [0], [0], [1], [0, 0, 1, 1], [], []>} : vector<8x128xbf16>, vector<128x384xbf16>, vector<8x384xf32> -> vector<8x384xf32>
    %409 = vector.extract_strided_slice %17 {offsets = [48, 0], sizes = [8, 384], strides = [1, 1]} : vector<64x384xf32> to vector<8x384xf32>
    %410 = vector.extract_strided_slice %409 {offsets = [0, 0], sizes = [8, 128], strides = [1, 1]} : vector<8x384xf32> to vector<8x128xf32>
    %411 = vector.extract_strided_slice %406 {offsets = [0, 0], sizes = [8, 128], strides = [1, 1]} : vector<8x384xf32> to vector<8x128xf32>
    %412 = arith.addf %410, %411 : vector<8x128xf32>
    %413 = arith.negf %412 : vector<8x128xf32>
    %414 = math.exp %413 : vector<8x128xf32>
    %cst_93 = arith.constant 1.000000e+00 : f32
    %415 = vector.broadcast %cst_93 : f32 to vector<8x128xf32>
    %416 = arith.addf %415, %414 : vector<8x128xf32>
    %417 = arith.divf %415, %416 : vector<8x128xf32>
    %418 = vector.extract_strided_slice %409 {offsets = [0, 128], sizes = [8, 128], strides = [1, 1]} : vector<8x384xf32> to vector<8x128xf32>
    %419 = vector.extract_strided_slice %406 {offsets = [0, 128], sizes = [8, 128], strides = [1, 1]} : vector<8x384xf32> to vector<8x128xf32>
    %420 = arith.addf %418, %419 : vector<8x128xf32>
    %421 = arith.negf %420 : vector<8x128xf32>
    %422 = math.exp %421 : vector<8x128xf32>
    %cst_94 = arith.constant 1.000000e+00 : f32
    %423 = vector.broadcast %cst_94 : f32 to vector<8x128xf32>
    %424 = arith.addf %423, %422 : vector<8x128xf32>
    %425 = arith.divf %423, %424 : vector<8x128xf32>
    %426 = vector.extract_strided_slice %409 {offsets = [0, 256], sizes = [8, 128], strides = [1, 1]} : vector<8x384xf32> to vector<8x128xf32>
    %427 = vector.extract_strided_slice %406 {offsets = [0, 256], sizes = [8, 128], strides = [1, 1]} : vector<8x384xf32> to vector<8x128xf32>
    %428 = arith.addf %427, %26 : vector<8x128xf32>
    %429 = arith.mulf %417, %428 : vector<8x128xf32>
    %430 = arith.addf %426, %429 : vector<8x128xf32>
    %431 = math.tanh %430 : vector<8x128xf32>
    %cst_95 = arith.constant 1.000000e+00 : f32
    %432 = vector.broadcast %cst_95 : f32 to vector<8x128xf32>
    %433 = arith.subf %432, %425 : vector<8x128xf32>
    %434 = arith.mulf %433, %431 : vector<8x128xf32>
    %435 = arith.mulf %425, %374 : vector<8x128xf32>
    %436 = arith.addf %434, %435 : vector<8x128xf32>
    %437 = vector.extract_strided_slice %22 {offsets = [8, 0], sizes = [8, 384], strides = [1, 1]} : vector<64x384xf32> to vector<8x384xf32>
    %438 = vector.extract_strided_slice %437 {offsets = [0, 0], sizes = [8, 128], strides = [1, 1]} : vector<8x384xf32> to vector<8x128xf32>
    %439 = vector.extract_strided_slice %408 {offsets = [0, 0], sizes = [8, 128], strides = [1, 1]} : vector<8x384xf32> to vector<8x128xf32>
    %440 = arith.addf %438, %439 : vector<8x128xf32>
    %441 = arith.negf %440 : vector<8x128xf32>
    %442 = math.exp %441 : vector<8x128xf32>
    %cst_96 = arith.constant 1.000000e+00 : f32
    %443 = vector.broadcast %cst_96 : f32 to vector<8x128xf32>
    %444 = arith.addf %443, %442 : vector<8x128xf32>
    %445 = arith.divf %443, %444 : vector<8x128xf32>
    %446 = vector.extract_strided_slice %437 {offsets = [0, 128], sizes = [8, 128], strides = [1, 1]} : vector<8x384xf32> to vector<8x128xf32>
    %447 = vector.extract_strided_slice %408 {offsets = [0, 128], sizes = [8, 128], strides = [1, 1]} : vector<8x384xf32> to vector<8x128xf32>
    %448 = arith.addf %446, %447 : vector<8x128xf32>
    %449 = arith.negf %448 : vector<8x128xf32>
    %450 = math.exp %449 : vector<8x128xf32>
    %cst_97 = arith.constant 1.000000e+00 : f32
    %451 = vector.broadcast %cst_97 : f32 to vector<8x128xf32>
    %452 = arith.addf %451, %450 : vector<8x128xf32>
    %453 = arith.divf %451, %452 : vector<8x128xf32>
    %454 = vector.extract_strided_slice %437 {offsets = [0, 256], sizes = [8, 128], strides = [1, 1]} : vector<8x384xf32> to vector<8x128xf32>
    %455 = vector.extract_strided_slice %408 {offsets = [0, 256], sizes = [8, 128], strides = [1, 1]} : vector<8x384xf32> to vector<8x128xf32>
    %456 = arith.addf %455, %30 : vector<8x128xf32>
    %457 = arith.mulf %445, %456 : vector<8x128xf32>
    %458 = arith.addf %454, %457 : vector<8x128xf32>
    %459 = math.tanh %458 : vector<8x128xf32>
    %cst_98 = arith.constant 1.000000e+00 : f32
    %460 = vector.broadcast %cst_98 : f32 to vector<8x128xf32>
    %461 = arith.subf %460, %453 : vector<8x128xf32>
    %462 = arith.mulf %461, %459 : vector<8x128xf32>
    %463 = arith.mulf %453, %402 : vector<8x128xf32>
    %464 = arith.addf %462, %463 : vector<8x128xf32>
    %c48_99 = arith.constant 48 : index
    %c0_100 = arith.constant 0 : index
    %465 = vector.load %arg12[%c48_99, %c0_100] : memref<64x256xf32, #tpu.memory_space<vmem>>, vector<8x128xf32>
    tpu.vector_store %arg12[%c48_99, %c0_100], %436 {strides = array<i32>} : memref<64x256xf32, #tpu.memory_space<vmem>>, vector<8x128xf32>,
    %c8_101 = arith.constant 8 : index
    %c128_102 = arith.constant 128 : index
    %466 = vector.load %arg12[%c8_101, %c128_102] : memref<64x256xf32, #tpu.memory_space<vmem>>, vector<8x128xf32>
    tpu.vector_store %arg12[%c8_101, %c128_102], %464 {strides = array<i32>} : memref<64x256xf32, #tpu.memory_space<vmem>>, vector<8x128xf32>,
    %467 = arith.truncf %436 : vector<8x128xf32> to vector<8x128xbf16>
    %cst_103 = arith.constant dense<0.000000e+00> : vector<8x384xf32>
    %468 = tpu.matmul %467, %10, %cst_103 {dimension_numbers = #tpu.dot_dimension_numbers<[1], [0], [0], [1], [0, 0, 1, 1], [], []>} : vector<8x128xbf16>, vector<128x384xbf16>, vector<8x384xf32> -> vector<8x384xf32>
    %469 = arith.truncf %464 : vector<8x128xf32> to vector<8x128xbf16>
    %cst_104 = arith.constant dense<0.000000e+00> : vector<8x384xf32>
    %470 = tpu.matmul %469, %12, %cst_104 {dimension_numbers = #tpu.dot_dimension_numbers<[1], [0], [0], [1], [0, 0, 1, 1], [], []>} : vector<8x128xbf16>, vector<128x384xbf16>, vector<8x384xf32> -> vector<8x384xf32>
    %471 = vector.extract_strided_slice %17 {offsets = [56, 0], sizes = [8, 384], strides = [1, 1]} : vector<64x384xf32> to vector<8x384xf32>
    %472 = vector.extract_strided_slice %471 {offsets = [0, 0], sizes = [8, 128], strides = [1, 1]} : vector<8x384xf32> to vector<8x128xf32>
    %473 = vector.extract_strided_slice %468 {offsets = [0, 0], sizes = [8, 128], strides = [1, 1]} : vector<8x384xf32> to vector<8x128xf32>
    %474 = arith.addf %472, %473 : vector<8x128xf32>
    %475 = arith.negf %474 : vector<8x128xf32>
    %476 = math.exp %475 : vector<8x128xf32>
    %cst_105 = arith.constant 1.000000e+00 : f32
    %477 = vector.broadcast %cst_105 : f32 to vector<8x128xf32>
    %478 = arith.addf %477, %476 : vector<8x128xf32>
    %479 = arith.divf %477, %478 : vector<8x128xf32>
    %480 = vector.extract_strided_slice %471 {offsets = [0, 128], sizes = [8, 128], strides = [1, 1]} : vector<8x384xf32> to vector<8x128xf32>
    %481 = vector.extract_strided_slice %468 {offsets = [0, 128], sizes = [8, 128], strides = [1, 1]} : vector<8x384xf32> to vector<8x128xf32>
    %482 = arith.addf %480, %481 : vector<8x128xf32>
    %483 = arith.negf %482 : vector<8x128xf32>
    %484 = math.exp %483 : vector<8x128xf32>
    %cst_106 = arith.constant 1.000000e+00 : f32
    %485 = vector.broadcast %cst_106 : f32 to vector<8x128xf32>
    %486 = arith.addf %485, %484 : vector<8x128xf32>
    %487 = arith.divf %485, %486 : vector<8x128xf32>
    %488 = vector.extract_strided_slice %471 {offsets = [0, 256], sizes = [8, 128], strides = [1, 1]} : vector<8x384xf32> to vector<8x128xf32>
    %489 = vector.extract_strided_slice %468 {offsets = [0, 256], sizes = [8, 128], strides = [1, 1]} : vector<8x384xf32> to vector<8x128xf32>
    %490 = arith.addf %489, %26 : vector<8x128xf32>
    %491 = arith.mulf %479, %490 : vector<8x128xf32>
    %492 = arith.addf %488, %491 : vector<8x128xf32>
    %493 = math.tanh %492 : vector<8x128xf32>
    %cst_107 = arith.constant 1.000000e+00 : f32
    %494 = vector.broadcast %cst_107 : f32 to vector<8x128xf32>
    %495 = arith.subf %494, %487 : vector<8x128xf32>
    %496 = arith.mulf %495, %493 : vector<8x128xf32>
    %497 = arith.mulf %487, %436 : vector<8x128xf32>
    %498 = arith.addf %496, %497 : vector<8x128xf32>
    %499 = vector.extract_strided_slice %22 {offsets = [0, 0], sizes = [8, 384], strides = [1, 1]} : vector<64x384xf32> to vector<8x384xf32>
    %500 = vector.extract_strided_slice %499 {offsets = [0, 0], sizes = [8, 128], strides = [1, 1]} : vector<8x384xf32> to vector<8x128xf32>
    %501 = vector.extract_strided_slice %470 {offsets = [0, 0], sizes = [8, 128], strides = [1, 1]} : vector<8x384xf32> to vector<8x128xf32>
    %502 = arith.addf %500, %501 : vector<8x128xf32>
    %503 = arith.negf %502 : vector<8x128xf32>
    %504 = math.exp %503 : vector<8x128xf32>
    %cst_108 = arith.constant 1.000000e+00 : f32
    %505 = vector.broadcast %cst_108 : f32 to vector<8x128xf32>
    %506 = arith.addf %505, %504 : vector<8x128xf32>
    %507 = arith.divf %505, %506 : vector<8x128xf32>
    %508 = vector.extract_strided_slice %499 {offsets = [0, 128], sizes = [8, 128], strides = [1, 1]} : vector<8x384xf32> to vector<8x128xf32>
    %509 = vector.extract_strided_slice %470 {offsets = [0, 128], sizes = [8, 128], strides = [1, 1]} : vector<8x384xf32> to vector<8x128xf32>
    %510 = arith.addf %508, %509 : vector<8x128xf32>
    %511 = arith.negf %510 : vector<8x128xf32>
    %512 = math.exp %511 : vector<8x128xf32>
    %cst_109 = arith.constant 1.000000e+00 : f32
    %513 = vector.broadcast %cst_109 : f32 to vector<8x128xf32>
    %514 = arith.addf %513, %512 : vector<8x128xf32>
    %515 = arith.divf %513, %514 : vector<8x128xf32>
    %516 = vector.extract_strided_slice %499 {offsets = [0, 256], sizes = [8, 128], strides = [1, 1]} : vector<8x384xf32> to vector<8x128xf32>
    %517 = vector.extract_strided_slice %470 {offsets = [0, 256], sizes = [8, 128], strides = [1, 1]} : vector<8x384xf32> to vector<8x128xf32>
    %518 = arith.addf %517, %30 : vector<8x128xf32>
    %519 = arith.mulf %507, %518 : vector<8x128xf32>
    %520 = arith.addf %516, %519 : vector<8x128xf32>
    %521 = math.tanh %520 : vector<8x128xf32>
    %cst_110 = arith.constant 1.000000e+00 : f32
    %522 = vector.broadcast %cst_110 : f32 to vector<8x128xf32>
    %523 = arith.subf %522, %515 : vector<8x128xf32>
    %524 = arith.mulf %523, %521 : vector<8x128xf32>
    %525 = arith.mulf %515, %464 : vector<8x128xf32>
    %526 = arith.addf %524, %525 : vector<8x128xf32>
    %c56_111 = arith.constant 56 : index
    %c0_112 = arith.constant 0 : index
    %527 = vector.load %arg12[%c56_111, %c0_112] : memref<64x256xf32, #tpu.memory_space<vmem>>, vector<8x128xf32>
    tpu.vector_store %arg12[%c56_111, %c0_112], %498 {strides = array<i32>} : memref<64x256xf32, #tpu.memory_space<vmem>>, vector<8x128xf32>,
    %c0_113 = arith.constant 0 : index
    %c128_114 = arith.constant 128 : index
    %528 = vector.load %arg12[%c0_113, %c128_114] : memref<64x256xf32, #tpu.memory_space<vmem>>, vector<8x128xf32>
    tpu.vector_store %arg12[%c0_113, %c128_114], %526 {strides = array<i32>} : memref<64x256xf32, #tpu.memory_space<vmem>>, vector<8x128xf32>,
    %c0_i32_115 = arith.constant 0 : i32
    %529 = tpu.memref_slice %arg15[%c0_i32_115] : memref<2x!tpu.dma_semaphore, #tpu.memory_space<semaphore_mem>> -> memref<1x!tpu.dma_semaphore, #tpu.memory_space<semaphore_mem>>
    %530 = tpu.memref_squeeze %529 : memref<1x!tpu.dma_semaphore, #tpu.memory_space<semaphore_mem>> -> memref<!tpu.dma_semaphore, #tpu.memory_space<semaphore_mem>>
    tpu.wait_dma2 semaphore(%530 : memref<!tpu.dma_semaphore, #tpu.memory_space<semaphore_mem>>) src(%arg5 : memref<2x256x384xbf16, #tpu.memory_space<any>>) dst(%arg13 : memref<2x256x384xbf16, #tpu.memory_space<vmem>>)
    %c1_i32_116 = arith.constant 1 : i32
    %531 = tpu.memref_slice %arg15[%c1_i32_116] : memref<2x!tpu.dma_semaphore, #tpu.memory_space<semaphore_mem>> -> memref<1x!tpu.dma_semaphore, #tpu.memory_space<semaphore_mem>>
    %532 = tpu.memref_squeeze %531 : memref<1x!tpu.dma_semaphore, #tpu.memory_space<semaphore_mem>> -> memref<!tpu.dma_semaphore, #tpu.memory_space<semaphore_mem>>
    tpu.wait_dma2 semaphore(%532 : memref<!tpu.dma_semaphore, #tpu.memory_space<semaphore_mem>>) src(%arg6 : memref<2x128x384xbf16, #tpu.memory_space<any>>) dst(%arg14 : memref<2x128x384xbf16, #tpu.memory_space<vmem>>)
    %c0_117 = arith.constant 0 : index
    %c0_118 = arith.constant 0 : index
    %533 = vector.load %arg12[%c0_117, %c0_118] : memref<64x256xf32, #tpu.memory_space<vmem>>, vector<64x256xf32>
    %534 = arith.truncf %533 : vector<64x256xf32> to vector<64x256xbf16>
    %c0_119 = arith.constant 0 : index
    %c0_120 = arith.constant 0 : index
    %c0_121 = arith.constant 0 : index
    %535 = vector.load %arg13[%c0_119, %c0_120, %c0_121] : memref<2x256x384xbf16, #tpu.memory_space<vmem>>, vector<1x256x384xbf16>
    %536 = vector.shape_cast %535 : vector<1x256x384xbf16> to vector<256x384xbf16>
    %c1_122 = arith.constant 1 : index
    %c0_123 = arith.constant 0 : index
    %c0_124 = arith.constant 0 : index
    %537 = vector.load %arg13[%c1_122, %c0_123, %c0_124] : memref<2x256x384xbf16, #tpu.memory_space<vmem>>, vector<1x256x384xbf16>
    %538 = vector.shape_cast %537 : vector<1x256x384xbf16> to vector<256x384xbf16>
    %c0_125 = arith.constant 0 : index
    %c0_126 = arith.constant 0 : index
    %c0_127 = arith.constant 0 : index
    %539 = vector.load %arg14[%c0_125, %c0_126, %c0_127] : memref<2x128x384xbf16, #tpu.memory_space<vmem>>, vector<1x128x384xbf16>
    %540 = vector.shape_cast %539 : vector<1x128x384xbf16> to vector<128x384xbf16>
    %c1_128 = arith.constant 1 : index
    %c0_129 = arith.constant 0 : index
    %c0_130 = arith.constant 0 : index
    %541 = vector.load %arg14[%c1_128, %c0_129, %c0_130] : memref<2x128x384xbf16, #tpu.memory_space<vmem>>, vector<1x128x384xbf16>
    %542 = vector.shape_cast %541 : vector<1x128x384xbf16> to vector<128x384xbf16>
    %cst_131 = arith.constant dense<0.000000e+00> : vector<64x384xf32>
    %543 = tpu.matmul %534, %536, %cst_131 {dimension_numbers = #tpu.dot_dimension_numbers<[1], [0], [0], [1], [0, 0, 1, 1], [], []>} : vector<64x256xbf16>, vector<256x384xbf16>, vector<64x384xf32> -> vector<64x384xf32>
    %c0_132 = arith.constant 0 : index
    %c0_133 = arith.constant 0 : index
    %c0_134 = arith.constant 0 : index
    %544 = vector.load %arg7[%c0_132, %c0_133, %c0_134] : memref<2x1x384xf32, #tpu.memory_space<vmem>>, vector<1x1x384xf32>
    %545 = vector.shape_cast %544 : vector<1x1x384xf32> to vector<1x384xf32>
    %546 = vector.broadcast %545 : vector<1x384xf32> to vector<64x384xf32>
    %547 = arith.addf %543, %546 : vector<64x384xf32>
    %cst_135 = arith.constant dense<0.000000e+00> : vector<64x384xf32>
    %548 = tpu.matmul %534, %538, %cst_135 {dimension_numbers = #tpu.dot_dimension_numbers<[1], [0], [0], [1], [0, 0, 1, 1], [], []>} : vector<64x256xbf16>, vector<256x384xbf16>, vector<64x384xf32> -> vector<64x384xf32>
    %c1_136 = arith.constant 1 : index
    %c0_137 = arith.constant 0 : index
    %c0_138 = arith.constant 0 : index
    %549 = vector.load %arg7[%c1_136, %c0_137, %c0_138] : memref<2x1x384xf32, #tpu.memory_space<vmem>>, vector<1x1x384xf32>
    %550 = vector.shape_cast %549 : vector<1x1x384xf32> to vector<1x384xf32>
    %551 = vector.broadcast %550 : vector<1x384xf32> to vector<64x384xf32>
    %552 = arith.addf %548, %551 : vector<64x384xf32>
    %c0_139 = arith.constant 0 : index
    %c0_140 = arith.constant 0 : index
    %c0_141 = arith.constant 0 : index
    %553 = vector.load %arg8[%c0_139, %c0_140, %c0_141] : memref<2x1x128xf32, #tpu.memory_space<vmem>>, vector<1x1x128xf32>
    %554 = vector.shape_cast %553 : vector<1x1x128xf32> to vector<1x128xf32>
    %555 = vector.shape_cast %554 : vector<1x128xf32> to vector<1x128xf32>
    %556 = vector.broadcast %555 : vector<1x128xf32> to vector<8x128xf32>
    %c1_142 = arith.constant 1 : index
    %c0_143 = arith.constant 0 : index
    %c0_144 = arith.constant 0 : index
    %557 = vector.load %arg8[%c1_142, %c0_143, %c0_144] : memref<2x1x128xf32, #tpu.memory_space<vmem>>, vector<1x1x128xf32>
    %558 = vector.shape_cast %557 : vector<1x1x128xf32> to vector<1x128xf32>
    %559 = vector.shape_cast %558 : vector<1x128xf32> to vector<1x128xf32>
    %560 = vector.broadcast %559 : vector<1x128xf32> to vector<8x128xf32>
    %cst_145 = arith.constant 0.000000e+00 : f32
    %561 = vector.broadcast %cst_145 : f32 to vector<8x128xf32>
    %cst_146 = arith.constant 0.000000e+00 : f32
    %562 = vector.broadcast %cst_146 : f32 to vector<8x128xf32>
    %563 = arith.truncf %561 : vector<8x128xf32> to vector<8x128xbf16>
    %cst_147 = arith.constant dense<0.000000e+00> : vector<8x384xf32>
    %564 = tpu.matmul %563, %540, %cst_147 {dimension_numbers = #tpu.dot_dimension_numbers<[1], [0], [0], [1], [0, 0, 1, 1], [], []>} : vector<8x128xbf16>, vector<128x384xbf16>, vector<8x384xf32> -> vector<8x384xf32>
    %565 = arith.truncf %562 : vector<8x128xf32> to vector<8x128xbf16>
    %cst_148 = arith.constant dense<0.000000e+00> : vector<8x384xf32>
    %566 = tpu.matmul %565, %542, %cst_148 {dimension_numbers = #tpu.dot_dimension_numbers<[1], [0], [0], [1], [0, 0, 1, 1], [], []>} : vector<8x128xbf16>, vector<128x384xbf16>, vector<8x384xf32> -> vector<8x384xf32>
    %567 = vector.extract_strided_slice %547 {offsets = [0, 0], sizes = [8, 384], strides = [1, 1]} : vector<64x384xf32> to vector<8x384xf32>
    %568 = vector.extract_strided_slice %567 {offsets = [0, 0], sizes = [8, 128], strides = [1, 1]} : vector<8x384xf32> to vector<8x128xf32>
    %569 = vector.extract_strided_slice %564 {offsets = [0, 0], sizes = [8, 128], strides = [1, 1]} : vector<8x384xf32> to vector<8x128xf32>
    %570 = arith.addf %568, %569 : vector<8x128xf32>
    %571 = arith.negf %570 : vector<8x128xf32>
    %572 = math.exp %571 : vector<8x128xf32>
    %cst_149 = arith.constant 1.000000e+00 : f32
    %573 = vector.broadcast %cst_149 : f32 to vector<8x128xf32>
    %574 = arith.addf %573, %572 : vector<8x128xf32>
    %575 = arith.divf %573, %574 : vector<8x128xf32>
    %576 = vector.extract_strided_slice %567 {offsets = [0, 128], sizes = [8, 128], strides = [1, 1]} : vector<8x384xf32> to vector<8x128xf32>
    %577 = vector.extract_strided_slice %564 {offsets = [0, 128], sizes = [8, 128], strides = [1, 1]} : vector<8x384xf32> to vector<8x128xf32>
    %578 = arith.addf %576, %577 : vector<8x128xf32>
    %579 = arith.negf %578 : vector<8x128xf32>
    %580 = math.exp %579 : vector<8x128xf32>
    %cst_150 = arith.constant 1.000000e+00 : f32
    %581 = vector.broadcast %cst_150 : f32 to vector<8x128xf32>
    %582 = arith.addf %581, %580 : vector<8x128xf32>
    %583 = arith.divf %581, %582 : vector<8x128xf32>
    %584 = vector.extract_strided_slice %567 {offsets = [0, 256], sizes = [8, 128], strides = [1, 1]} : vector<8x384xf32> to vector<8x128xf32>
    %585 = vector.extract_strided_slice %564 {offsets = [0, 256], sizes = [8, 128], strides = [1, 1]} : vector<8x384xf32> to vector<8x128xf32>
    %586 = arith.addf %585, %556 : vector<8x128xf32>
    %587 = arith.mulf %575, %586 : vector<8x128xf32>
    %588 = arith.addf %584, %587 : vector<8x128xf32>
    %589 = math.tanh %588 : vector<8x128xf32>
    %cst_151 = arith.constant 1.000000e+00 : f32
    %590 = vector.broadcast %cst_151 : f32 to vector<8x128xf32>
    %591 = arith.subf %590, %583 : vector<8x128xf32>
    %592 = arith.mulf %591, %589 : vector<8x128xf32>
    %593 = arith.mulf %583, %561 : vector<8x128xf32>
    %594 = arith.addf %592, %593 : vector<8x128xf32>
    %595 = vector.extract_strided_slice %552 {offsets = [56, 0], sizes = [8, 384], strides = [1, 1]} : vector<64x384xf32> to vector<8x384xf32>
    %596 = vector.extract_strided_slice %595 {offsets = [0, 0], sizes = [8, 128], strides = [1, 1]} : vector<8x384xf32> to vector<8x128xf32>
    %597 = vector.extract_strided_slice %566 {offsets = [0, 0], sizes = [8, 128], strides = [1, 1]} : vector<8x384xf32> to vector<8x128xf32>
    %598 = arith.addf %596, %597 : vector<8x128xf32>
    %599 = arith.negf %598 : vector<8x128xf32>
    %600 = math.exp %599 : vector<8x128xf32>
    %cst_152 = arith.constant 1.000000e+00 : f32
    %601 = vector.broadcast %cst_152 : f32 to vector<8x128xf32>
    %602 = arith.addf %601, %600 : vector<8x128xf32>
    %603 = arith.divf %601, %602 : vector<8x128xf32>
    %604 = vector.extract_strided_slice %595 {offsets = [0, 128], sizes = [8, 128], strides = [1, 1]} : vector<8x384xf32> to vector<8x128xf32>
    %605 = vector.extract_strided_slice %566 {offsets = [0, 128], sizes = [8, 128], strides = [1, 1]} : vector<8x384xf32> to vector<8x128xf32>
    %606 = arith.addf %604, %605 : vector<8x128xf32>
    %607 = arith.negf %606 : vector<8x128xf32>
    %608 = math.exp %607 : vector<8x128xf32>
    %cst_153 = arith.constant 1.000000e+00 : f32
    %609 = vector.broadcast %cst_153 : f32 to vector<8x128xf32>
    %610 = arith.addf %609, %608 : vector<8x128xf32>
    %611 = arith.divf %609, %610 : vector<8x128xf32>
    %612 = vector.extract_strided_slice %595 {offsets = [0, 256], sizes = [8, 128], strides = [1, 1]} : vector<8x384xf32> to vector<8x128xf32>
    %613 = vector.extract_strided_slice %566 {offsets = [0, 256], sizes = [8, 128], strides = [1, 1]} : vector<8x384xf32> to vector<8x128xf32>
    %614 = arith.addf %613, %560 : vector<8x128xf32>
    %615 = arith.mulf %603, %614 : vector<8x128xf32>
    %616 = arith.addf %612, %615 : vector<8x128xf32>
    %617 = math.tanh %616 : vector<8x128xf32>
    %cst_154 = arith.constant 1.000000e+00 : f32
    %618 = vector.broadcast %cst_154 : f32 to vector<8x128xf32>
    %619 = arith.subf %618, %611 : vector<8x128xf32>
    %620 = arith.mulf %619, %617 : vector<8x128xf32>
    %621 = arith.mulf %611, %562 : vector<8x128xf32>
    %622 = arith.addf %620, %621 : vector<8x128xf32>
    %623 = arith.truncf %594 : vector<8x128xf32> to vector<8x128xbf16>
    %cst_155 = arith.constant dense<0.000000e+00> : vector<8x384xf32>
    %624 = tpu.matmul %623, %540, %cst_155 {dimension_numbers = #tpu.dot_dimension_numbers<[1], [0], [0], [1], [0, 0, 1, 1], [], []>} : vector<8x128xbf16>, vector<128x384xbf16>, vector<8x384xf32> -> vector<8x384xf32>
    %625 = arith.truncf %622 : vector<8x128xf32> to vector<8x128xbf16>
    %cst_156 = arith.constant dense<0.000000e+00> : vector<8x384xf32>
    %626 = tpu.matmul %625, %542, %cst_156 {dimension_numbers = #tpu.dot_dimension_numbers<[1], [0], [0], [1], [0, 0, 1, 1], [], []>} : vector<8x128xbf16>, vector<128x384xbf16>, vector<8x384xf32> -> vector<8x384xf32>
    %627 = vector.extract_strided_slice %547 {offsets = [8, 0], sizes = [8, 384], strides = [1, 1]} : vector<64x384xf32> to vector<8x384xf32>
    %628 = vector.extract_strided_slice %627 {offsets = [0, 0], sizes = [8, 128], strides = [1, 1]} : vector<8x384xf32> to vector<8x128xf32>
    %629 = vector.extract_strided_slice %624 {offsets = [0, 0], sizes = [8, 128], strides = [1, 1]} : vector<8x384xf32> to vector<8x128xf32>
    %630 = arith.addf %628, %629 : vector<8x128xf32>
    %631 = arith.negf %630 : vector<8x128xf32>
    %632 = math.exp %631 : vector<8x128xf32>
    %cst_157 = arith.constant 1.000000e+00 : f32
    %633 = vector.broadcast %cst_157 : f32 to vector<8x128xf32>
    %634 = arith.addf %633, %632 : vector<8x128xf32>
    %635 = arith.divf %633, %634 : vector<8x128xf32>
    %636 = vector.extract_strided_slice %627 {offsets = [0, 128], sizes = [8, 128], strides = [1, 1]} : vector<8x384xf32> to vector<8x128xf32>
    %637 = vector.extract_strided_slice %624 {offsets = [0, 128], sizes = [8, 128], strides = [1, 1]} : vector<8x384xf32> to vector<8x128xf32>
    %638 = arith.addf %636, %637 : vector<8x128xf32>
    %639 = arith.negf %638 : vector<8x128xf32>
    %640 = math.exp %639 : vector<8x128xf32>
    %cst_158 = arith.constant 1.000000e+00 : f32
    %641 = vector.broadcast %cst_158 : f32 to vector<8x128xf32>
    %642 = arith.addf %641, %640 : vector<8x128xf32>
    %643 = arith.divf %641, %642 : vector<8x128xf32>
    %644 = vector.extract_strided_slice %627 {offsets = [0, 256], sizes = [8, 128], strides = [1, 1]} : vector<8x384xf32> to vector<8x128xf32>
    %645 = vector.extract_strided_slice %624 {offsets = [0, 256], sizes = [8, 128], strides = [1, 1]} : vector<8x384xf32> to vector<8x128xf32>
    %646 = arith.addf %645, %556 : vector<8x128xf32>
    %647 = arith.mulf %635, %646 : vector<8x128xf32>
    %648 = arith.addf %644, %647 : vector<8x128xf32>
    %649 = math.tanh %648 : vector<8x128xf32>
    %cst_159 = arith.constant 1.000000e+00 : f32
    %650 = vector.broadcast %cst_159 : f32 to vector<8x128xf32>
    %651 = arith.subf %650, %643 : vector<8x128xf32>
    %652 = arith.mulf %651, %649 : vector<8x128xf32>
    %653 = arith.mulf %643, %594 : vector<8x128xf32>
    %654 = arith.addf %652, %653 : vector<8x128xf32>
    %655 = vector.extract_strided_slice %552 {offsets = [48, 0], sizes = [8, 384], strides = [1, 1]} : vector<64x384xf32> to vector<8x384xf32>
    %656 = vector.extract_strided_slice %655 {offsets = [0, 0], sizes = [8, 128], strides = [1, 1]} : vector<8x384xf32> to vector<8x128xf32>
    %657 = vector.extract_strided_slice %626 {offsets = [0, 0], sizes = [8, 128], strides = [1, 1]} : vector<8x384xf32> to vector<8x128xf32>
    %658 = arith.addf %656, %657 : vector<8x128xf32>
    %659 = arith.negf %658 : vector<8x128xf32>
    %660 = math.exp %659 : vector<8x128xf32>
    %cst_160 = arith.constant 1.000000e+00 : f32
    %661 = vector.broadcast %cst_160 : f32 to vector<8x128xf32>
    %662 = arith.addf %661, %660 : vector<8x128xf32>
    %663 = arith.divf %661, %662 : vector<8x128xf32>
    %664 = vector.extract_strided_slice %655 {offsets = [0, 128], sizes = [8, 128], strides = [1, 1]} : vector<8x384xf32> to vector<8x128xf32>
    %665 = vector.extract_strided_slice %626 {offsets = [0, 128], sizes = [8, 128], strides = [1, 1]} : vector<8x384xf32> to vector<8x128xf32>
    %666 = arith.addf %664, %665 : vector<8x128xf32>
    %667 = arith.negf %666 : vector<8x128xf32>
    %668 = math.exp %667 : vector<8x128xf32>
    %cst_161 = arith.constant 1.000000e+00 : f32
    %669 = vector.broadcast %cst_161 : f32 to vector<8x128xf32>
    %670 = arith.addf %669, %668 : vector<8x128xf32>
    %671 = arith.divf %669, %670 : vector<8x128xf32>
    %672 = vector.extract_strided_slice %655 {offsets = [0, 256], sizes = [8, 128], strides = [1, 1]} : vector<8x384xf32> to vector<8x128xf32>
    %673 = vector.extract_strided_slice %626 {offsets = [0, 256], sizes = [8, 128], strides = [1, 1]} : vector<8x384xf32> to vector<8x128xf32>
    %674 = arith.addf %673, %560 : vector<8x128xf32>
    %675 = arith.mulf %663, %674 : vector<8x128xf32>
    %676 = arith.addf %672, %675 : vector<8x128xf32>
    %677 = math.tanh %676 : vector<8x128xf32>
    %cst_162 = arith.constant 1.000000e+00 : f32
    %678 = vector.broadcast %cst_162 : f32 to vector<8x128xf32>
    %679 = arith.subf %678, %671 : vector<8x128xf32>
    %680 = arith.mulf %679, %677 : vector<8x128xf32>
    %681 = arith.mulf %671, %622 : vector<8x128xf32>
    %682 = arith.addf %680, %681 : vector<8x128xf32>
    %683 = arith.truncf %654 : vector<8x128xf32> to vector<8x128xbf16>
    %cst_163 = arith.constant dense<0.000000e+00> : vector<8x384xf32>
    %684 = tpu.matmul %683, %540, %cst_163 {dimension_numbers = #tpu.dot_dimension_numbers<[1], [0], [0], [1], [0, 0, 1, 1], [], []>} : vector<8x128xbf16>, vector<128x384xbf16>, vector<8x384xf32> -> vector<8x384xf32>
    %685 = arith.truncf %682 : vector<8x128xf32> to vector<8x128xbf16>
    %cst_164 = arith.constant dense<0.000000e+00> : vector<8x384xf32>
    %686 = tpu.matmul %685, %542, %cst_164 {dimension_numbers = #tpu.dot_dimension_numbers<[1], [0], [0], [1], [0, 0, 1, 1], [], []>} : vector<8x128xbf16>, vector<128x384xbf16>, vector<8x384xf32> -> vector<8x384xf32>
    %687 = vector.extract_strided_slice %547 {offsets = [16, 0], sizes = [8, 384], strides = [1, 1]} : vector<64x384xf32> to vector<8x384xf32>
    %688 = vector.extract_strided_slice %687 {offsets = [0, 0], sizes = [8, 128], strides = [1, 1]} : vector<8x384xf32> to vector<8x128xf32>
    %689 = vector.extract_strided_slice %684 {offsets = [0, 0], sizes = [8, 128], strides = [1, 1]} : vector<8x384xf32> to vector<8x128xf32>
    %690 = arith.addf %688, %689 : vector<8x128xf32>
    %691 = arith.negf %690 : vector<8x128xf32>
    %692 = math.exp %691 : vector<8x128xf32>
    %cst_165 = arith.constant 1.000000e+00 : f32
    %693 = vector.broadcast %cst_165 : f32 to vector<8x128xf32>
    %694 = arith.addf %693, %692 : vector<8x128xf32>
    %695 = arith.divf %693, %694 : vector<8x128xf32>
    %696 = vector.extract_strided_slice %687 {offsets = [0, 128], sizes = [8, 128], strides = [1, 1]} : vector<8x384xf32> to vector<8x128xf32>
    %697 = vector.extract_strided_slice %684 {offsets = [0, 128], sizes = [8, 128], strides = [1, 1]} : vector<8x384xf32> to vector<8x128xf32>
    %698 = arith.addf %696, %697 : vector<8x128xf32>
    %699 = arith.negf %698 : vector<8x128xf32>
    %700 = math.exp %699 : vector<8x128xf32>
    %cst_166 = arith.constant 1.000000e+00 : f32
    %701 = vector.broadcast %cst_166 : f32 to vector<8x128xf32>
    %702 = arith.addf %701, %700 : vector<8x128xf32>
    %703 = arith.divf %701, %702 : vector<8x128xf32>
    %704 = vector.extract_strided_slice %687 {offsets = [0, 256], sizes = [8, 128], strides = [1, 1]} : vector<8x384xf32> to vector<8x128xf32>
    %705 = vector.extract_strided_slice %684 {offsets = [0, 256], sizes = [8, 128], strides = [1, 1]} : vector<8x384xf32> to vector<8x128xf32>
    %706 = arith.addf %705, %556 : vector<8x128xf32>
    %707 = arith.mulf %695, %706 : vector<8x128xf32>
    %708 = arith.addf %704, %707 : vector<8x128xf32>
    %709 = math.tanh %708 : vector<8x128xf32>
    %cst_167 = arith.constant 1.000000e+00 : f32
    %710 = vector.broadcast %cst_167 : f32 to vector<8x128xf32>
    %711 = arith.subf %710, %703 : vector<8x128xf32>
    %712 = arith.mulf %711, %709 : vector<8x128xf32>
    %713 = arith.mulf %703, %654 : vector<8x128xf32>
    %714 = arith.addf %712, %713 : vector<8x128xf32>
    %715 = vector.extract_strided_slice %552 {offsets = [40, 0], sizes = [8, 384], strides = [1, 1]} : vector<64x384xf32> to vector<8x384xf32>
    %716 = vector.extract_strided_slice %715 {offsets = [0, 0], sizes = [8, 128], strides = [1, 1]} : vector<8x384xf32> to vector<8x128xf32>
    %717 = vector.extract_strided_slice %686 {offsets = [0, 0], sizes = [8, 128], strides = [1, 1]} : vector<8x384xf32> to vector<8x128xf32>
    %718 = arith.addf %716, %717 : vector<8x128xf32>
    %719 = arith.negf %718 : vector<8x128xf32>
    %720 = math.exp %719 : vector<8x128xf32>
    %cst_168 = arith.constant 1.000000e+00 : f32
    %721 = vector.broadcast %cst_168 : f32 to vector<8x128xf32>
    %722 = arith.addf %721, %720 : vector<8x128xf32>
    %723 = arith.divf %721, %722 : vector<8x128xf32>
    %724 = vector.extract_strided_slice %715 {offsets = [0, 128], sizes = [8, 128], strides = [1, 1]} : vector<8x384xf32> to vector<8x128xf32>
    %725 = vector.extract_strided_slice %686 {offsets = [0, 128], sizes = [8, 128], strides = [1, 1]} : vector<8x384xf32> to vector<8x128xf32>
    %726 = arith.addf %724, %725 : vector<8x128xf32>
    %727 = arith.negf %726 : vector<8x128xf32>
    %728 = math.exp %727 : vector<8x128xf32>
    %cst_169 = arith.constant 1.000000e+00 : f32
    %729 = vector.broadcast %cst_169 : f32 to vector<8x128xf32>
    %730 = arith.addf %729, %728 : vector<8x128xf32>
    %731 = arith.divf %729, %730 : vector<8x128xf32>
    %732 = vector.extract_strided_slice %715 {offsets = [0, 256], sizes = [8, 128], strides = [1, 1]} : vector<8x384xf32> to vector<8x128xf32>
    %733 = vector.extract_strided_slice %686 {offsets = [0, 256], sizes = [8, 128], strides = [1, 1]} : vector<8x384xf32> to vector<8x128xf32>
    %734 = arith.addf %733, %560 : vector<8x128xf32>
    %735 = arith.mulf %723, %734 : vector<8x128xf32>
    %736 = arith.addf %732, %735 : vector<8x128xf32>
    %737 = math.tanh %736 : vector<8x128xf32>
    %cst_170 = arith.constant 1.000000e+00 : f32
    %738 = vector.broadcast %cst_170 : f32 to vector<8x128xf32>
    %739 = arith.subf %738, %731 : vector<8x128xf32>
    %740 = arith.mulf %739, %737 : vector<8x128xf32>
    %741 = arith.mulf %731, %682 : vector<8x128xf32>
    %742 = arith.addf %740, %741 : vector<8x128xf32>
    %743 = arith.truncf %714 : vector<8x128xf32> to vector<8x128xbf16>
    %cst_171 = arith.constant dense<0.000000e+00> : vector<8x384xf32>
    %744 = tpu.matmul %743, %540, %cst_171 {dimension_numbers = #tpu.dot_dimension_numbers<[1], [0], [0], [1], [0, 0, 1, 1], [], []>} : vector<8x128xbf16>, vector<128x384xbf16>, vector<8x384xf32> -> vector<8x384xf32>
    %745 = arith.truncf %742 : vector<8x128xf32> to vector<8x128xbf16>
    %cst_172 = arith.constant dense<0.000000e+00> : vector<8x384xf32>
    %746 = tpu.matmul %745, %542, %cst_172 {dimension_numbers = #tpu.dot_dimension_numbers<[1], [0], [0], [1], [0, 0, 1, 1], [], []>} : vector<8x128xbf16>, vector<128x384xbf16>, vector<8x384xf32> -> vector<8x384xf32>
    %747 = vector.extract_strided_slice %547 {offsets = [24, 0], sizes = [8, 384], strides = [1, 1]} : vector<64x384xf32> to vector<8x384xf32>
    %748 = vector.extract_strided_slice %747 {offsets = [0, 0], sizes = [8, 128], strides = [1, 1]} : vector<8x384xf32> to vector<8x128xf32>
    %749 = vector.extract_strided_slice %744 {offsets = [0, 0], sizes = [8, 128], strides = [1, 1]} : vector<8x384xf32> to vector<8x128xf32>
    %750 = arith.addf %748, %749 : vector<8x128xf32>
    %751 = arith.negf %750 : vector<8x128xf32>
    %752 = math.exp %751 : vector<8x128xf32>
    %cst_173 = arith.constant 1.000000e+00 : f32
    %753 = vector.broadcast %cst_173 : f32 to vector<8x128xf32>
    %754 = arith.addf %753, %752 : vector<8x128xf32>
    %755 = arith.divf %753, %754 : vector<8x128xf32>
    %756 = vector.extract_strided_slice %747 {offsets = [0, 128], sizes = [8, 128], strides = [1, 1]} : vector<8x384xf32> to vector<8x128xf32>
    %757 = vector.extract_strided_slice %744 {offsets = [0, 128], sizes = [8, 128], strides = [1, 1]} : vector<8x384xf32> to vector<8x128xf32>
    %758 = arith.addf %756, %757 : vector<8x128xf32>
    %759 = arith.negf %758 : vector<8x128xf32>
    %760 = math.exp %759 : vector<8x128xf32>
    %cst_174 = arith.constant 1.000000e+00 : f32
    %761 = vector.broadcast %cst_174 : f32 to vector<8x128xf32>
    %762 = arith.addf %761, %760 : vector<8x128xf32>
    %763 = arith.divf %761, %762 : vector<8x128xf32>
    %764 = vector.extract_strided_slice %747 {offsets = [0, 256], sizes = [8, 128], strides = [1, 1]} : vector<8x384xf32> to vector<8x128xf32>
    %765 = vector.extract_strided_slice %744 {offsets = [0, 256], sizes = [8, 128], strides = [1, 1]} : vector<8x384xf32> to vector<8x128xf32>
    %766 = arith.addf %765, %556 : vector<8x128xf32>
    %767 = arith.mulf %755, %766 : vector<8x128xf32>
    %768 = arith.addf %764, %767 : vector<8x128xf32>
    %769 = math.tanh %768 : vector<8x128xf32>
    %cst_175 = arith.constant 1.000000e+00 : f32
    %770 = vector.broadcast %cst_175 : f32 to vector<8x128xf32>
    %771 = arith.subf %770, %763 : vector<8x128xf32>
    %772 = arith.mulf %771, %769 : vector<8x128xf32>
    %773 = arith.mulf %763, %714 : vector<8x128xf32>
    %774 = arith.addf %772, %773 : vector<8x128xf32>
    %775 = vector.extract_strided_slice %552 {offsets = [32, 0], sizes = [8, 384], strides = [1, 1]} : vector<64x384xf32> to vector<8x384xf32>
    %776 = vector.extract_strided_slice %775 {offsets = [0, 0], sizes = [8, 128], strides = [1, 1]} : vector<8x384xf32> to vector<8x128xf32>
    %777 = vector.extract_strided_slice %746 {offsets = [0, 0], sizes = [8, 128], strides = [1, 1]} : vector<8x384xf32> to vector<8x128xf32>
    %778 = arith.addf %776, %777 : vector<8x128xf32>
    %779 = arith.negf %778 : vector<8x128xf32>
    %780 = math.exp %779 : vector<8x128xf32>
    %cst_176 = arith.constant 1.000000e+00 : f32
    %781 = vector.broadcast %cst_176 : f32 to vector<8x128xf32>
    %782 = arith.addf %781, %780 : vector<8x128xf32>
    %783 = arith.divf %781, %782 : vector<8x128xf32>
    %784 = vector.extract_strided_slice %775 {offsets = [0, 128], sizes = [8, 128], strides = [1, 1]} : vector<8x384xf32> to vector<8x128xf32>
    %785 = vector.extract_strided_slice %746 {offsets = [0, 128], sizes = [8, 128], strides = [1, 1]} : vector<8x384xf32> to vector<8x128xf32>
    %786 = arith.addf %784, %785 : vector<8x128xf32>
    %787 = arith.negf %786 : vector<8x128xf32>
    %788 = math.exp %787 : vector<8x128xf32>
    %cst_177 = arith.constant 1.000000e+00 : f32
    %789 = vector.broadcast %cst_177 : f32 to vector<8x128xf32>
    %790 = arith.addf %789, %788 : vector<8x128xf32>
    %791 = arith.divf %789, %790 : vector<8x128xf32>
    %792 = vector.extract_strided_slice %775 {offsets = [0, 256], sizes = [8, 128], strides = [1, 1]} : vector<8x384xf32> to vector<8x128xf32>
    %793 = vector.extract_strided_slice %746 {offsets = [0, 256], sizes = [8, 128], strides = [1, 1]} : vector<8x384xf32> to vector<8x128xf32>
    %794 = arith.addf %793, %560 : vector<8x128xf32>
    %795 = arith.mulf %783, %794 : vector<8x128xf32>
    %796 = arith.addf %792, %795 : vector<8x128xf32>
    %797 = math.tanh %796 : vector<8x128xf32>
    %cst_178 = arith.constant 1.000000e+00 : f32
    %798 = vector.broadcast %cst_178 : f32 to vector<8x128xf32>
    %799 = arith.subf %798, %791 : vector<8x128xf32>
    %800 = arith.mulf %799, %797 : vector<8x128xf32>
    %801 = arith.mulf %791, %742 : vector<8x128xf32>
    %802 = arith.addf %800, %801 : vector<8x128xf32>
    %803 = arith.truncf %774 : vector<8x128xf32> to vector<8x128xbf16>
    %cst_179 = arith.constant dense<0.000000e+00> : vector<8x384xf32>
    %804 = tpu.matmul %803, %540, %cst_179 {dimension_numbers = #tpu.dot_dimension_numbers<[1], [0], [0], [1], [0, 0, 1, 1], [], []>} : vector<8x128xbf16>, vector<128x384xbf16>, vector<8x384xf32> -> vector<8x384xf32>
    %805 = arith.truncf %802 : vector<8x128xf32> to vector<8x128xbf16>
    %cst_180 = arith.constant dense<0.000000e+00> : vector<8x384xf32>
    %806 = tpu.matmul %805, %542, %cst_180 {dimension_numbers = #tpu.dot_dimension_numbers<[1], [0], [0], [1], [0, 0, 1, 1], [], []>} : vector<8x128xbf16>, vector<128x384xbf16>, vector<8x384xf32> -> vector<8x384xf32>
    %807 = vector.extract_strided_slice %547 {offsets = [32, 0], sizes = [8, 384], strides = [1, 1]} : vector<64x384xf32> to vector<8x384xf32>
    %808 = vector.extract_strided_slice %807 {offsets = [0, 0], sizes = [8, 128], strides = [1, 1]} : vector<8x384xf32> to vector<8x128xf32>
    %809 = vector.extract_strided_slice %804 {offsets = [0, 0], sizes = [8, 128], strides = [1, 1]} : vector<8x384xf32> to vector<8x128xf32>
    %810 = arith.addf %808, %809 : vector<8x128xf32>
    %811 = arith.negf %810 : vector<8x128xf32>
    %812 = math.exp %811 : vector<8x128xf32>
    %cst_181 = arith.constant 1.000000e+00 : f32
    %813 = vector.broadcast %cst_181 : f32 to vector<8x128xf32>
    %814 = arith.addf %813, %812 : vector<8x128xf32>
    %815 = arith.divf %813, %814 : vector<8x128xf32>
    %816 = vector.extract_strided_slice %807 {offsets = [0, 128], sizes = [8, 128], strides = [1, 1]} : vector<8x384xf32> to vector<8x128xf32>
    %817 = vector.extract_strided_slice %804 {offsets = [0, 128], sizes = [8, 128], strides = [1, 1]} : vector<8x384xf32> to vector<8x128xf32>
    %818 = arith.addf %816, %817 : vector<8x128xf32>
    %819 = arith.negf %818 : vector<8x128xf32>
    %820 = math.exp %819 : vector<8x128xf32>
    %cst_182 = arith.constant 1.000000e+00 : f32
    %821 = vector.broadcast %cst_182 : f32 to vector<8x128xf32>
    %822 = arith.addf %821, %820 : vector<8x128xf32>
    %823 = arith.divf %821, %822 : vector<8x128xf32>
    %824 = vector.extract_strided_slice %807 {offsets = [0, 256], sizes = [8, 128], strides = [1, 1]} : vector<8x384xf32> to vector<8x128xf32>
    %825 = vector.extract_strided_slice %804 {offsets = [0, 256], sizes = [8, 128], strides = [1, 1]} : vector<8x384xf32> to vector<8x128xf32>
    %826 = arith.addf %825, %556 : vector<8x128xf32>
    %827 = arith.mulf %815, %826 : vector<8x128xf32>
    %828 = arith.addf %824, %827 : vector<8x128xf32>
    %829 = math.tanh %828 : vector<8x128xf32>
    %cst_183 = arith.constant 1.000000e+00 : f32
    %830 = vector.broadcast %cst_183 : f32 to vector<8x128xf32>
    %831 = arith.subf %830, %823 : vector<8x128xf32>
    %832 = arith.mulf %831, %829 : vector<8x128xf32>
    %833 = arith.mulf %823, %774 : vector<8x128xf32>
    %834 = arith.addf %832, %833 : vector<8x128xf32>
    %835 = vector.extract_strided_slice %552 {offsets = [24, 0], sizes = [8, 384], strides = [1, 1]} : vector<64x384xf32> to vector<8x384xf32>
    %836 = vector.extract_strided_slice %835 {offsets = [0, 0], sizes = [8, 128], strides = [1, 1]} : vector<8x384xf32> to vector<8x128xf32>
    %837 = vector.extract_strided_slice %806 {offsets = [0, 0], sizes = [8, 128], strides = [1, 1]} : vector<8x384xf32> to vector<8x128xf32>
    %838 = arith.addf %836, %837 : vector<8x128xf32>
    %839 = arith.negf %838 : vector<8x128xf32>
    %840 = math.exp %839 : vector<8x128xf32>
    %cst_184 = arith.constant 1.000000e+00 : f32
    %841 = vector.broadcast %cst_184 : f32 to vector<8x128xf32>
    %842 = arith.addf %841, %840 : vector<8x128xf32>
    %843 = arith.divf %841, %842 : vector<8x128xf32>
    %844 = vector.extract_strided_slice %835 {offsets = [0, 128], sizes = [8, 128], strides = [1, 1]} : vector<8x384xf32> to vector<8x128xf32>
    %845 = vector.extract_strided_slice %806 {offsets = [0, 128], sizes = [8, 128], strides = [1, 1]} : vector<8x384xf32> to vector<8x128xf32>
    %846 = arith.addf %844, %845 : vector<8x128xf32>
    %847 = arith.negf %846 : vector<8x128xf32>
    %848 = math.exp %847 : vector<8x128xf32>
    %cst_185 = arith.constant 1.000000e+00 : f32
    %849 = vector.broadcast %cst_185 : f32 to vector<8x128xf32>
    %850 = arith.addf %849, %848 : vector<8x128xf32>
    %851 = arith.divf %849, %850 : vector<8x128xf32>
    %852 = vector.extract_strided_slice %835 {offsets = [0, 256], sizes = [8, 128], strides = [1, 1]} : vector<8x384xf32> to vector<8x128xf32>
    %853 = vector.extract_strided_slice %806 {offsets = [0, 256], sizes = [8, 128], strides = [1, 1]} : vector<8x384xf32> to vector<8x128xf32>
    %854 = arith.addf %853, %560 : vector<8x128xf32>
    %855 = arith.mulf %843, %854 : vector<8x128xf32>
    %856 = arith.addf %852, %855 : vector<8x128xf32>
    %857 = math.tanh %856 : vector<8x128xf32>
    %cst_186 = arith.constant 1.000000e+00 : f32
    %858 = vector.broadcast %cst_186 : f32 to vector<8x128xf32>
    %859 = arith.subf %858, %851 : vector<8x128xf32>
    %860 = arith.mulf %859, %857 : vector<8x128xf32>
    %861 = arith.mulf %851, %802 : vector<8x128xf32>
    %862 = arith.addf %860, %861 : vector<8x128xf32>
    %863 = arith.truncf %834 : vector<8x128xf32> to vector<8x128xbf16>
    %cst_187 = arith.constant dense<0.000000e+00> : vector<8x384xf32>
    %864 = tpu.matmul %863, %540, %cst_187 {dimension_numbers = #tpu.dot_dimension_numbers<[1], [0], [0], [1], [0, 0, 1, 1], [], []>} : vector<8x128xbf16>, vector<128x384xbf16>, vector<8x384xf32> -> vector<8x384xf32>
    %865 = arith.truncf %862 : vector<8x128xf32> to vector<8x128xbf16>
    %cst_188 = arith.constant dense<0.000000e+00> : vector<8x384xf32>
    %866 = tpu.matmul %865, %542, %cst_188 {dimension_numbers = #tpu.dot_dimension_numbers<[1], [0], [0], [1], [0, 0, 1, 1], [], []>} : vector<8x128xbf16>, vector<128x384xbf16>, vector<8x384xf32> -> vector<8x384xf32>
    %867 = vector.extract_strided_slice %547 {offsets = [40, 0], sizes = [8, 384], strides = [1, 1]} : vector<64x384xf32> to vector<8x384xf32>
    %868 = vector.extract_strided_slice %867 {offsets = [0, 0], sizes = [8, 128], strides = [1, 1]} : vector<8x384xf32> to vector<8x128xf32>
    %869 = vector.extract_strided_slice %864 {offsets = [0, 0], sizes = [8, 128], strides = [1, 1]} : vector<8x384xf32> to vector<8x128xf32>
    %870 = arith.addf %868, %869 : vector<8x128xf32>
    %871 = arith.negf %870 : vector<8x128xf32>
    %872 = math.exp %871 : vector<8x128xf32>
    %cst_189 = arith.constant 1.000000e+00 : f32
    %873 = vector.broadcast %cst_189 : f32 to vector<8x128xf32>
    %874 = arith.addf %873, %872 : vector<8x128xf32>
    %875 = arith.divf %873, %874 : vector<8x128xf32>
    %876 = vector.extract_strided_slice %867 {offsets = [0, 128], sizes = [8, 128], strides = [1, 1]} : vector<8x384xf32> to vector<8x128xf32>
    %877 = vector.extract_strided_slice %864 {offsets = [0, 128], sizes = [8, 128], strides = [1, 1]} : vector<8x384xf32> to vector<8x128xf32>
    %878 = arith.addf %876, %877 : vector<8x128xf32>
    %879 = arith.negf %878 : vector<8x128xf32>
    %880 = math.exp %879 : vector<8x128xf32>
    %cst_190 = arith.constant 1.000000e+00 : f32
    %881 = vector.broadcast %cst_190 : f32 to vector<8x128xf32>
    %882 = arith.addf %881, %880 : vector<8x128xf32>
    %883 = arith.divf %881, %882 : vector<8x128xf32>
    %884 = vector.extract_strided_slice %867 {offsets = [0, 256], sizes = [8, 128], strides = [1, 1]} : vector<8x384xf32> to vector<8x128xf32>
    %885 = vector.extract_strided_slice %864 {offsets = [0, 256], sizes = [8, 128], strides = [1, 1]} : vector<8x384xf32> to vector<8x128xf32>
    %886 = arith.addf %885, %556 : vector<8x128xf32>
    %887 = arith.mulf %875, %886 : vector<8x128xf32>
    %888 = arith.addf %884, %887 : vector<8x128xf32>
    %889 = math.tanh %888 : vector<8x128xf32>
    %cst_191 = arith.constant 1.000000e+00 : f32
    %890 = vector.broadcast %cst_191 : f32 to vector<8x128xf32>
    %891 = arith.subf %890, %883 : vector<8x128xf32>
    %892 = arith.mulf %891, %889 : vector<8x128xf32>
    %893 = arith.mulf %883, %834 : vector<8x128xf32>
    %894 = arith.addf %892, %893 : vector<8x128xf32>
    %895 = vector.extract_strided_slice %552 {offsets = [16, 0], sizes = [8, 384], strides = [1, 1]} : vector<64x384xf32> to vector<8x384xf32>
    %896 = vector.extract_strided_slice %895 {offsets = [0, 0], sizes = [8, 128], strides = [1, 1]} : vector<8x384xf32> to vector<8x128xf32>
    %897 = vector.extract_strided_slice %866 {offsets = [0, 0], sizes = [8, 128], strides = [1, 1]} : vector<8x384xf32> to vector<8x128xf32>
    %898 = arith.addf %896, %897 : vector<8x128xf32>
    %899 = arith.negf %898 : vector<8x128xf32>
    %900 = math.exp %899 : vector<8x128xf32>
    %cst_192 = arith.constant 1.000000e+00 : f32
    %901 = vector.broadcast %cst_192 : f32 to vector<8x128xf32>
    %902 = arith.addf %901, %900 : vector<8x128xf32>
    %903 = arith.divf %901, %902 : vector<8x128xf32>
    %904 = vector.extract_strided_slice %895 {offsets = [0, 128], sizes = [8, 128], strides = [1, 1]} : vector<8x384xf32> to vector<8x128xf32>
    %905 = vector.extract_strided_slice %866 {offsets = [0, 128], sizes = [8, 128], strides = [1, 1]} : vector<8x384xf32> to vector<8x128xf32>
    %906 = arith.addf %904, %905 : vector<8x128xf32>
    %907 = arith.negf %906 : vector<8x128xf32>
    %908 = math.exp %907 : vector<8x128xf32>
    %cst_193 = arith.constant 1.000000e+00 : f32
    %909 = vector.broadcast %cst_193 : f32 to vector<8x128xf32>
    %910 = arith.addf %909, %908 : vector<8x128xf32>
    %911 = arith.divf %909, %910 : vector<8x128xf32>
    %912 = vector.extract_strided_slice %895 {offsets = [0, 256], sizes = [8, 128], strides = [1, 1]} : vector<8x384xf32> to vector<8x128xf32>
    %913 = vector.extract_strided_slice %866 {offsets = [0, 256], sizes = [8, 128], strides = [1, 1]} : vector<8x384xf32> to vector<8x128xf32>
    %914 = arith.addf %913, %560 : vector<8x128xf32>
    %915 = arith.mulf %903, %914 : vector<8x128xf32>
    %916 = arith.addf %912, %915 : vector<8x128xf32>
    %917 = math.tanh %916 : vector<8x128xf32>
    %cst_194 = arith.constant 1.000000e+00 : f32
    %918 = vector.broadcast %cst_194 : f32 to vector<8x128xf32>
    %919 = arith.subf %918, %911 : vector<8x128xf32>
    %920 = arith.mulf %919, %917 : vector<8x128xf32>
    %921 = arith.mulf %911, %862 : vector<8x128xf32>
    %922 = arith.addf %920, %921 : vector<8x128xf32>
    %923 = arith.truncf %894 : vector<8x128xf32> to vector<8x128xbf16>
    %cst_195 = arith.constant dense<0.000000e+00> : vector<8x384xf32>
    %924 = tpu.matmul %923, %540, %cst_195 {dimension_numbers = #tpu.dot_dimension_numbers<[1], [0], [0], [1], [0, 0, 1, 1], [], []>} : vector<8x128xbf16>, vector<128x384xbf16>, vector<8x384xf32> -> vector<8x384xf32>
    %925 = arith.truncf %922 : vector<8x128xf32> to vector<8x128xbf16>
    %cst_196 = arith.constant dense<0.000000e+00> : vector<8x384xf32>
    %926 = tpu.matmul %925, %542, %cst_196 {dimension_numbers = #tpu.dot_dimension_numbers<[1], [0], [0], [1], [0, 0, 1, 1], [], []>} : vector<8x128xbf16>, vector<128x384xbf16>, vector<8x384xf32> -> vector<8x384xf32>
    %927 = vector.extract_strided_slice %547 {offsets = [48, 0], sizes = [8, 384], strides = [1, 1]} : vector<64x384xf32> to vector<8x384xf32>
    %928 = vector.extract_strided_slice %927 {offsets = [0, 0], sizes = [8, 128], strides = [1, 1]} : vector<8x384xf32> to vector<8x128xf32>
    %929 = vector.extract_strided_slice %924 {offsets = [0, 0], sizes = [8, 128], strides = [1, 1]} : vector<8x384xf32> to vector<8x128xf32>
    %930 = arith.addf %928, %929 : vector<8x128xf32>
    %931 = arith.negf %930 : vector<8x128xf32>
    %932 = math.exp %931 : vector<8x128xf32>
    %cst_197 = arith.constant 1.000000e+00 : f32
    %933 = vector.broadcast %cst_197 : f32 to vector<8x128xf32>
    %934 = arith.addf %933, %932 : vector<8x128xf32>
    %935 = arith.divf %933, %934 : vector<8x128xf32>
    %936 = vector.extract_strided_slice %927 {offsets = [0, 128], sizes = [8, 128], strides = [1, 1]} : vector<8x384xf32> to vector<8x128xf32>
    %937 = vector.extract_strided_slice %924 {offsets = [0, 128], sizes = [8, 128], strides = [1, 1]} : vector<8x384xf32> to vector<8x128xf32>
    %938 = arith.addf %936, %937 : vector<8x128xf32>
    %939 = arith.negf %938 : vector<8x128xf32>
    %940 = math.exp %939 : vector<8x128xf32>
    %cst_198 = arith.constant 1.000000e+00 : f32
    %941 = vector.broadcast %cst_198 : f32 to vector<8x128xf32>
    %942 = arith.addf %941, %940 : vector<8x128xf32>
    %943 = arith.divf %941, %942 : vector<8x128xf32>
    %944 = vector.extract_strided_slice %927 {offsets = [0, 256], sizes = [8, 128], strides = [1, 1]} : vector<8x384xf32> to vector<8x128xf32>
    %945 = vector.extract_strided_slice %924 {offsets = [0, 256], sizes = [8, 128], strides = [1, 1]} : vector<8x384xf32> to vector<8x128xf32>
    %946 = arith.addf %945, %556 : vector<8x128xf32>
    %947 = arith.mulf %935, %946 : vector<8x128xf32>
    %948 = arith.addf %944, %947 : vector<8x128xf32>
    %949 = math.tanh %948 : vector<8x128xf32>
    %cst_199 = arith.constant 1.000000e+00 : f32
    %950 = vector.broadcast %cst_199 : f32 to vector<8x128xf32>
    %951 = arith.subf %950, %943 : vector<8x128xf32>
    %952 = arith.mulf %951, %949 : vector<8x128xf32>
    %953 = arith.mulf %943, %894 : vector<8x128xf32>
    %954 = arith.addf %952, %953 : vector<8x128xf32>
    %955 = vector.extract_strided_slice %552 {offsets = [8, 0], sizes = [8, 384], strides = [1, 1]} : vector<64x384xf32> to vector<8x384xf32>
    %956 = vector.extract_strided_slice %955 {offsets = [0, 0], sizes = [8, 128], strides = [1, 1]} : vector<8x384xf32> to vector<8x128xf32>
    %957 = vector.extract_strided_slice %926 {offsets = [0, 0], sizes = [8, 128], strides = [1, 1]} : vector<8x384xf32> to vector<8x128xf32>
    %958 = arith.addf %956, %957 : vector<8x128xf32>
    %959 = arith.negf %958 : vector<8x128xf32>
    %960 = math.exp %959 : vector<8x128xf32>
    %cst_200 = arith.constant 1.000000e+00 : f32
    %961 = vector.broadcast %cst_200 : f32 to vector<8x128xf32>
    %962 = arith.addf %961, %960 : vector<8x128xf32>
    %963 = arith.divf %961, %962 : vector<8x128xf32>
    %964 = vector.extract_strided_slice %955 {offsets = [0, 128], sizes = [8, 128], strides = [1, 1]} : vector<8x384xf32> to vector<8x128xf32>
    %965 = vector.extract_strided_slice %926 {offsets = [0, 128], sizes = [8, 128], strides = [1, 1]} : vector<8x384xf32> to vector<8x128xf32>
    %966 = arith.addf %964, %965 : vector<8x128xf32>
    %967 = arith.negf %966 : vector<8x128xf32>
    %968 = math.exp %967 : vector<8x128xf32>
    %cst_201 = arith.constant 1.000000e+00 : f32
    %969 = vector.broadcast %cst_201 : f32 to vector<8x128xf32>
    %970 = arith.addf %969, %968 : vector<8x128xf32>
    %971 = arith.divf %969, %970 : vector<8x128xf32>
    %972 = vector.extract_strided_slice %955 {offsets = [0, 256], sizes = [8, 128], strides = [1, 1]} : vector<8x384xf32> to vector<8x128xf32>
    %973 = vector.extract_strided_slice %926 {offsets = [0, 256], sizes = [8, 128], strides = [1, 1]} : vector<8x384xf32> to vector<8x128xf32>
    %974 = arith.addf %973, %560 : vector<8x128xf32>
    %975 = arith.mulf %963, %974 : vector<8x128xf32>
    %976 = arith.addf %972, %975 : vector<8x128xf32>
    %977 = math.tanh %976 : vector<8x128xf32>
    %cst_202 = arith.constant 1.000000e+00 : f32
    %978 = vector.broadcast %cst_202 : f32 to vector<8x128xf32>
    %979 = arith.subf %978, %971 : vector<8x128xf32>
    %980 = arith.mulf %979, %977 : vector<8x128xf32>
    %981 = arith.mulf %971, %922 : vector<8x128xf32>
    %982 = arith.addf %980, %981 : vector<8x128xf32>
    %983 = arith.truncf %954 : vector<8x128xf32> to vector<8x128xbf16>
    %cst_203 = arith.constant dense<0.000000e+00> : vector<8x384xf32>
    %984 = tpu.matmul %983, %540, %cst_203 {dimension_numbers = #tpu.dot_dimension_numbers<[1], [0], [0], [1], [0, 0, 1, 1], [], []>} : vector<8x128xbf16>, vector<128x384xbf16>, vector<8x384xf32> -> vector<8x384xf32>
    %985 = arith.truncf %982 : vector<8x128xf32> to vector<8x128xbf16>
    %cst_204 = arith.constant dense<0.000000e+00> : vector<8x384xf32>
    %986 = tpu.matmul %985, %542, %cst_204 {dimension_numbers = #tpu.dot_dimension_numbers<[1], [0], [0], [1], [0, 0, 1, 1], [], []>} : vector<8x128xbf16>, vector<128x384xbf16>, vector<8x384xf32> -> vector<8x384xf32>
    %987 = vector.extract_strided_slice %547 {offsets = [56, 0], sizes = [8, 384], strides = [1, 1]} : vector<64x384xf32> to vector<8x384xf32>
    %988 = vector.extract_strided_slice %987 {offsets = [0, 0], sizes = [8, 128], strides = [1, 1]} : vector<8x384xf32> to vector<8x128xf32>
    %989 = vector.extract_strided_slice %984 {offsets = [0, 0], sizes = [8, 128], strides = [1, 1]} : vector<8x384xf32> to vector<8x128xf32>
    %990 = arith.addf %988, %989 : vector<8x128xf32>
    %991 = arith.negf %990 : vector<8x128xf32>
    %992 = math.exp %991 : vector<8x128xf32>
    %cst_205 = arith.constant 1.000000e+00 : f32
    %993 = vector.broadcast %cst_205 : f32 to vector<8x128xf32>
    %994 = arith.addf %993, %992 : vector<8x128xf32>
    %995 = arith.divf %993, %994 : vector<8x128xf32>
    %996 = vector.extract_strided_slice %987 {offsets = [0, 128], sizes = [8, 128], strides = [1, 1]} : vector<8x384xf32> to vector<8x128xf32>
    %997 = vector.extract_strided_slice %984 {offsets = [0, 128], sizes = [8, 128], strides = [1, 1]} : vector<8x384xf32> to vector<8x128xf32>
    %998 = arith.addf %996, %997 : vector<8x128xf32>
    %999 = arith.negf %998 : vector<8x128xf32>
    %1000 = math.exp %999 : vector<8x128xf32>
    %cst_206 = arith.constant 1.000000e+00 : f32
    %1001 = vector.broadcast %cst_206 : f32 to vector<8x128xf32>
    %1002 = arith.addf %1001, %1000 : vector<8x128xf32>
    %1003 = arith.divf %1001, %1002 : vector<8x128xf32>
    %1004 = vector.extract_strided_slice %987 {offsets = [0, 256], sizes = [8, 128], strides = [1, 1]} : vector<8x384xf32> to vector<8x128xf32>
    %1005 = vector.extract_strided_slice %984 {offsets = [0, 256], sizes = [8, 128], strides = [1, 1]} : vector<8x384xf32> to vector<8x128xf32>
    %1006 = arith.addf %1005, %556 : vector<8x128xf32>
    %1007 = arith.mulf %995, %1006 : vector<8x128xf32>
    %1008 = arith.addf %1004, %1007 : vector<8x128xf32>
    %1009 = math.tanh %1008 : vector<8x128xf32>
    %cst_207 = arith.constant 1.000000e+00 : f32
    %1010 = vector.broadcast %cst_207 : f32 to vector<8x128xf32>
    %1011 = arith.subf %1010, %1003 : vector<8x128xf32>
    %1012 = arith.mulf %1011, %1009 : vector<8x128xf32>
    %1013 = arith.mulf %1003, %954 : vector<8x128xf32>
    %1014 = arith.addf %1012, %1013 : vector<8x128xf32>
    %1015 = vector.extract_strided_slice %552 {offsets = [0, 0], sizes = [8, 384], strides = [1, 1]} : vector<64x384xf32> to vector<8x384xf32>
    %1016 = vector.extract_strided_slice %1015 {offsets = [0, 0], sizes = [8, 128], strides = [1, 1]} : vector<8x384xf32> to vector<8x128xf32>
    %1017 = vector.extract_strided_slice %986 {offsets = [0, 0], sizes = [8, 128], strides = [1, 1]} : vector<8x384xf32> to vector<8x128xf32>
    %1018 = arith.addf %1016, %1017 : vector<8x128xf32>
    %1019 = arith.negf %1018 : vector<8x128xf32>
    %1020 = math.exp %1019 : vector<8x128xf32>
    %cst_208 = arith.constant 1.000000e+00 : f32
    %1021 = vector.broadcast %cst_208 : f32 to vector<8x128xf32>
    %1022 = arith.addf %1021, %1020 : vector<8x128xf32>
    %1023 = arith.divf %1021, %1022 : vector<8x128xf32>
    %1024 = vector.extract_strided_slice %1015 {offsets = [0, 128], sizes = [8, 128], strides = [1, 1]} : vector<8x384xf32> to vector<8x128xf32>
    %1025 = vector.extract_strided_slice %986 {offsets = [0, 128], sizes = [8, 128], strides = [1, 1]} : vector<8x384xf32> to vector<8x128xf32>
    %1026 = arith.addf %1024, %1025 : vector<8x128xf32>
    %1027 = arith.negf %1026 : vector<8x128xf32>
    %1028 = math.exp %1027 : vector<8x128xf32>
    %cst_209 = arith.constant 1.000000e+00 : f32
    %1029 = vector.broadcast %cst_209 : f32 to vector<8x128xf32>
    %1030 = arith.addf %1029, %1028 : vector<8x128xf32>
    %1031 = arith.divf %1029, %1030 : vector<8x128xf32>
    %1032 = vector.extract_strided_slice %1015 {offsets = [0, 256], sizes = [8, 128], strides = [1, 1]} : vector<8x384xf32> to vector<8x128xf32>
    %1033 = vector.extract_strided_slice %986 {offsets = [0, 256], sizes = [8, 128], strides = [1, 1]} : vector<8x384xf32> to vector<8x128xf32>
    %1034 = arith.addf %1033, %560 : vector<8x128xf32>
    %1035 = arith.mulf %1023, %1034 : vector<8x128xf32>
    %1036 = arith.addf %1032, %1035 : vector<8x128xf32>
    %1037 = math.tanh %1036 : vector<8x128xf32>
    %cst_210 = arith.constant 1.000000e+00 : f32
    %1038 = vector.broadcast %cst_210 : f32 to vector<8x128xf32>
    %1039 = arith.subf %1038, %1031 : vector<8x128xf32>
    %1040 = arith.mulf %1039, %1037 : vector<8x128xf32>
    %1041 = arith.mulf %1031, %982 : vector<8x128xf32>
    %1042 = arith.addf %1040, %1041 : vector<8x128xf32>
    %c0_211 = arith.constant 0 : index
    %c0_212 = arith.constant 0 : index
    %1043 = vector.load %arg9[%c0_211, %c0_212] : memref<1x256xf32, #tpu.memory_space<vmem>>, vector<1x128xf32>
    %1044 = vector.broadcast %1043 : vector<1x128xf32> to vector<8x128xf32>
    %1045 = arith.mulf %1014, %1044 : vector<8x128xf32>
    %cst_213 = arith.constant dense<0.000000e+00> : vector<8xf32>
    %1046 = vector.multi_reduction <add>, %1045, %cst_213 [1] : vector<8x128xf32> to vector<8xf32>
    %1047 = vector.shape_cast %1046 : vector<8xf32> to vector<8x1xf32>
    %c0_214 = arith.constant 0 : index
    %c128_215 = arith.constant 128 : index
    %1048 = vector.load %arg9[%c0_214, %c128_215] : memref<1x256xf32, #tpu.memory_space<vmem>>, vector<1x128xf32>
    %1049 = vector.broadcast %1048 : vector<1x128xf32> to vector<8x128xf32>
    %1050 = arith.mulf %1042, %1049 : vector<8x128xf32>
    %cst_216 = arith.constant dense<0.000000e+00> : vector<8xf32>
    %1051 = vector.multi_reduction <add>, %1050, %cst_216 [1] : vector<8x128xf32> to vector<8xf32>
    %1052 = vector.shape_cast %1051 : vector<8xf32> to vector<8x1xf32>
    %1053 = arith.addf %1047, %1052 : vector<8x1xf32>
    %c0_217 = arith.constant 0 : index
    %c0_218 = arith.constant 0 : index
    %1054 = vector.load %arg10[%c0_217, %c0_218] : memref<1x1xf32, #tpu.memory_space<vmem>>, vector<1x1xf32>
    %1055 = vector.broadcast %1054 : vector<1x1xf32> to vector<8x1xf32>
    %1056 = arith.addf %1053, %1055 : vector<8x1xf32>
    %1057 = vector.shape_cast %1056 : vector<8x1xf32> to vector<8x1xf32>
    %1058 = vector.broadcast %1057 : vector<8x1xf32> to vector<8x128xf32>
    %c0_219 = arith.constant 0 : index
    %c0_220 = arith.constant 0 : index
    %1059 = vector.load %arg11[%c0_219, %c0_220] : memref<8x128xf32, #tpu.memory_space<vmem>>, vector<8x128xf32>
    tpu.vector_store %arg11[%c0_219, %c0_220], %1058 {strides = array<i32>} : memref<8x128xf32, #tpu.memory_space<vmem>>, vector<8x128xf32>,
    return
  }
}

</mosaic_0001>

<llo_original>
// kernel: forward.1
$region0: #{forward.1}
  #allocation0 [shape = 'u32[]', space=smem, size = 0x4, offset = 0x4, fixed_abs, tag = 'smem constant byte address 0x4 - core index']
  #allocation1 [shape = 'u32[144,128]{1,0:T(1,128)}', space=vmem, size = 0x12000, scoped, tag = 'internal scratch']
  #allocation2 [shape = 'f32[64,256]{1,0:T(8,128)}', space=vmem, size = 0x10000, scoped, tag = 'scratch operand']
  #allocation3 [shape = 'bf16[2,256,384]{2,1,0:T(16,128)(2,1)}', space=vmem, size = 0x60000, scoped, tag = 'scratch operand']
  #allocation4 [shape = 'bf16[2,128,384]{2,1,0:T(16,128)(2,1)}', space=vmem, size = 0x30000, scoped, tag = 'scratch operand']
  #allocation5 [shape = 's32[2]{0}', space=sflag, size = 0x8, scoped, tag = 'scratch operand']
  #allocation6 [shape = 'f32[1,1]{1,0:T(1,128)S(1)}', space=vmem, size = 0x200, scoped, tag = 'scoped memory for forward.1']
  #allocation7 [shape = 's32[]', space=sflag, size = 0x4, offset = 0, fixed_abs, tag = 'sflag constant byte address 0x0 - dummy sync flag']
  #allocation8 [shape = 's32[]', space=sflag, size = 0x4, offset = 0, fixed_abs, tag = 'sflag constant byte address 0x0 - dummy sync flag']
  %s0 = inlined_call_operand.vmem [shape: bf16[64,256], index: 0, kind: input, shape index: {}]
  %s1 = inlined_call_operand.vmem [shape: bf16[2,256,384], index: 1, kind: input, shape index: {}]
  %s2 = inlined_call_operand.vmem [shape: bf16[2,128,384], index: 2, kind: input, shape index: {}]
  %s3 = inlined_call_operand.vmem [shape: f32[2,1,384], index: 3, kind: input, shape index: {}]
  %s4 = inlined_call_operand.vmem [shape: f32[2,1,128], index: 4, kind: input, shape index: {}]
  %s5 = inlined_call_operand.vmem [shape: bf16[2,256,384], index: 5, kind: input, shape index: {}]
  %s6 = inlined_call_operand.vmem [shape: bf16[2,128,384], index: 6, kind: input, shape index: {}]
  %s7 = inlined_call_operand.vmem [shape: f32[2,1,384], index: 7, kind: input, shape index: {}]
  %s8 = inlined_call_operand.vmem [shape: f32[2,1,128], index: 8, kind: input, shape index: {}]
  %s9 = inlined_call_operand.vmem [shape: f32[1,256], index: 9, kind: input, shape index: {}]
  %s10 = inlined_call_operand.<no memory space> [shape: f32[1,1], index: 10, kind: input, shape index: {}]
  %s11 = inlined_call_operand.vmem [shape: f32[8,128], index: 11, kind: output, shape index: {}]
  %s12 = sld [smem:[#allocation0]]
  $region120: #{forward.1} parent=0
    _
  %s14 = ssub.s32 1, %s12
  %s15 = scalar_select 0, %s14, %s12
  %v16 = vstv %s10
  %17 = vst [vmem:[#allocation6] sm:$0x1] %v16
  // Predicated region
  $region2: #{forward.1} parent=0 // pred_check
    _
  $region3: #{forward.1} parent=0 // pred_check_branch
    %19 = sbr.rel (0) target = $region5
  $region4: #{forward.1} parent=0 // pred_region
    _
  $region5: #{forward.1} parent=0 // pred_fallthru
    _
  // Predicated region
  $region6: #{forward.1} parent=0 // pred_check
    _
  $region7: #{forward.1} parent=0 // pred_check_branch
    %21 = sbr.rel (0) target = $region9
  $region8: #{forward.1} parent=0 // pred_region
    _
  $region9: #{forward.1} parent=0 // pred_fallthru
    _
  // Predicated region
  $region10: #{forward.1} parent=0 // pred_check
    _
  $region11: #{forward.1} parent=0 // pred_check_branch
    %23 = sbr.rel (0) target = $region13
  $region12: #{forward.1} parent=0 // pred_region
    _
  $region13: #{forward.1} parent=0 // pred_fallthru
    _
  // Predicated region
  $region14: #{forward.1} parent=0 // pred_check
    _
  $region15: #{forward.1} parent=0 // pred_check_branch
    %25 = sbr.rel (0) target = $region17
  $region16: #{forward.1} parent=0 // pred_region
    _
  $region17: #{forward.1} parent=0 // pred_fallthru
    _
  // Predicated region
  $region18: #{forward.1} parent=0 // pred_check
    _
  $region19: #{forward.1} parent=0 // pred_check_branch
    %27 = sbr.rel (0) target = $region21
  $region20: #{forward.1} parent=0 // pred_region
    _
  $region21: #{forward.1} parent=0 // pred_fallthru
    _
  // Predicated region
  $region22: #{forward.1} parent=0 // pred_check
    _
  $region23: #{forward.1} parent=0 // pred_check_branch
    %29 = sbr.rel (0) target = $region25
  $region24: #{forward.1} parent=0 // pred_region
    _
  $region25: #{forward.1} parent=0 // pred_fallthru
    _
  // Predicated region
  $region26: #{forward.1} parent=0 // pred_check
    _
  $region27: #{forward.1} parent=0 // pred_check_branch
    %31 = sbr.rel (0) target = $region29
  $region28: #{forward.1} parent=0 // pred_region
    _
  $region29: #{forward.1} parent=0 // pred_fallthru
    _
  // Predicated region
  $region30: #{forward.1} parent=0 // pred_check
    _
  $region31: #{forward.1} parent=0 // pred_check_branch
    %33 = sbr.rel (0) target = $region33
  $region32: #{forward.1} parent=0 // pred_region
    _
  $region33: #{forward.1} parent=0 // pred_fallthru
    _
  // Predicated region
  $region34: #{forward.1} parent=0 // pred_check
    _
  $region35: #{forward.1} parent=0 // pred_check_branch
    %35 = sbr.rel (0) target = $region37
  $region36: #{forward.1} parent=0 // pred_region
    _
  $region37: #{forward.1} parent=0 // pred_fallthru
    _
  %p38 = scmp.lt.u32.totalorder 4, 8
  %p39 = pneg %p38
  // Predicated region
  $region38: #{forward.1} parent=0 // pred_check
    _
  $region39: #{forward.1} parent=0 // pred_check_branch
    %41 = sbr.rel (%p38) target = $region41
  $region40: #{forward.1} parent=0 // pred_region
    %s438 = sand.u32 4, 7
    %p439 = scmp.eq.s32.totalorder %s438, 0
    %p440 = pneg %p439
    // Predicated region
    $region53: #{forward.1} parent=40 // pred_check
      _
    $region54: #{forward.1} parent=40 // pred_check_branch
      %442 = sbr.rel (%p439) target = $region56
    $region55: #{forward.1} parent=40 // pred_region
      %s443 = sand.u32 4, 7
      %s444 = ssub.s32 4, %s443
      %s445 = scalar_lea.vmem %s5, %s444
      %s446 = ssub.s32 4, %s443
      %s447 = scalar_lea.vmem [#allocation3], %s446
      loop: start=0, step=1, limit=1
      $region57: #{forward.1} parent=55 // loop_pre_header
        _
      $region58: #{forward.1} parent=55 // loop_header
        %s449 = sphi 0, %s453
        %p450 = scmp.ge.s32.totalorder %s449, 1
        %s454 = sphi %s5, %s5
        %s455 = sphi [#allocation3], [#allocation3]
      $region59: #{forward.1} parent=55 // loop_header_branch
        %452 = sbr.rel (%p450) target = $region63
      $region60: #{forward.1} parent=55 // loop_body
        _
      $region61: #{forward.1} parent=55 // loop_footer
        %s453 = sadd.s32 1, %s449
      $region62: #{forward.1} parent=55 // loop_footer_branch
        %448 = sbr.rel target = $region58
      $region63: #{forward.1} parent=55 // loop_exit
        _
      %s456 = sshllo.u32 0, %s443
      loop: start=0, step=1, limit=1
      $region64: #{forward.1} parent=55 // loop_pre_header
        _
      $region65: #{forward.1} parent=55 // loop_header
        %s458 = sphi 0, %s462
        %p459 = scmp.ge.s32.totalorder %s458, 1
        %s463 = sphi %s445, %s445
        %s464 = sphi %s447, %s447
      $region66: #{forward.1} parent=55 // loop_header_branch
        %461 = sbr.rel (%p459) target = $region70
      $region67: #{forward.1} parent=55 // loop_body
        %v465 = vld [vmem:[%s463] sm:%s456]
        %466 = vst [vmem:[%s464] sm:%s456] %v465
        %v467 = vld [vmem:[%s463 + $0xc] sm:%s456]
        %468 = vst [vmem:[%s464 + $0x4] sm:%s456] %v467
        %v469 = vld [vmem:[%s463 + $0x4] sm:%s456]
        %470 = vst [vmem:[%s464 + $0x8] sm:%s456] %v469
        %v471 = vld [vmem:[%s463 + $0x10] sm:%s456]
        %472 = vst [vmem:[%s464 + $0xc] sm:%s456] %v471
        %v473 = vld [vmem:[%s463 + $0x8] sm:%s456]
        %474 = vst [vmem:[%s464 + $0x10] sm:%s456] %v473
        %v475 = vld [vmem:[%s463 + $0x14] sm:%s456]
        %476 = vst [vmem:[%s464 + $0x14] sm:%s456] %v475
        %v477 = vld [vmem:[%s463 + $0x18] sm:%s456]
        %478 = vst [vmem:[%s464 + $0x18] sm:%s456] %v477
        %v479 = vld [vmem:[%s463 + $0x24] sm:%s456]
        %480 = vst [vmem:[%s464 + $0x1c] sm:%s456] %v479
        %v481 = vld [vmem:[%s463 + $0x1c] sm:%s456]
        %482 = vst [vmem:[%s464 + $0x20] sm:%s456] %v481
        %v483 = vld [vmem:[%s463 + $0x28] sm:%s456]
        %484 = vst [vmem:[%s464 + $0x24] sm:%s456] %v483
        %v485 = vld [vmem:[%s463 + $0x20] sm:%s456]
        %486 = vst [vmem:[%s464 + $0x28] sm:%s456] %v485
        %v487 = vld [vmem:[%s463 + $0x2c] sm:%s456]
        %488 = vst [vmem:[%s464 + $0x2c] sm:%s456] %v487
        %v489 = vld [vmem:[%s463 + $0x30] sm:%s456]
        %490 = vst [vmem:[%s464 + $0x30] sm:%s456] %v489
        %v491 = vld [vmem:[%s463 + $0x3c] sm:%s456]
        %492 = vst [vmem:[%s464 + $0x34] sm:%s456] %v491
        %v493 = vld [vmem:[%s463 + $0x34] sm:%s456]
        %494 = vst [vmem:[%s464 + $0x38] sm:%s456] %v493
        %v495 = vld [vmem:[%s463 + $0x40] sm:%s456]
        %496 = vst [vmem:[%s464 + $0x3c] sm:%s456] %v495
        %v497 = vld [vmem:[%s463 + $0x38] sm:%s456]
        %498 = vst [vmem:[%s464 + $0x40] sm:%s456] %v497
        %v499 = vld [vmem:[%s463 + $0x44] sm:%s456]
        %500 = vst [vmem:[%s464 + $0x44] sm:%s456] %v499
        %v501 = vld [vmem:[%s463 + $0x48] sm:%s456]
        %502 = vst [vmem:[%s464 + $0x48] sm:%s456] %v501
        %v503 = vld [vmem:[%s463 + $0x54] sm:%s456]
        %504 = vst [vmem:[%s464 + $0x4c] sm:%s456] %v503
        %v505 = vld [vmem:[%s463 + $0x4c] sm:%s456]
        %506 = vst [vmem:[%s464 + $0x50] sm:%s456] %v505
        %v507 = vld [vmem:[%s463 + $0x58] sm:%s456]
        %508 = vst [vmem:[%s464 + $0x54] sm:%s456] %v507
        %v509 = vld [vmem:[%s463 + $0x50] sm:%s456]
        %510 = vst [vmem:[%s464 + $0x58] sm:%s456] %v509
        %v511 = vld [vmem:[%s463 + $0x5c] sm:%s456]
        %512 = vst [vmem:[%s464 + $0x5c] sm:%s456] %v511
        %v513 = vld [vmem:[%s463 + $0x60] sm:%s456]
        %514 = vst [vmem:[%s464 + $0x60] sm:%s456] %v513
        %v515 = vld [vmem:[%s463 + $0x6c] sm:%s456]
        %516 = vst [vmem:[%s464 + $0x64] sm:%s456] %v515
        %v517 = vld [vmem:[%s463 + $0x64] sm:%s456]
        %518 = vst [vmem:[%s464 + $0x68] sm:%s456] %v517
        %v519 = vld [vmem:[%s463 + $0x70] sm:%s456]
        %520 = vst [vmem:[%s464 + $0x6c] sm:%s456] %v519
        %v521 = vld [vmem:[%s463 + $0x68] sm:%s456]
        %522 = vst [vmem:[%s464 + $0x70] sm:%s456] %v521
        %v523 = vld [vmem:[%s463 + $0x74] sm:%s456]
        %524 = vst [vmem:[%s464 + $0x74] sm:%s456] %v523
        %v525 = vld [vmem:[%s463 + $0x78] sm:%s456]
        %526 = vst [vmem:[%s464 + $0x78] sm:%s456] %v525
        %v527 = vld [vmem:[%s463 + $0x84] sm:%s456]
        %528 = vst [vmem:[%s464 + $0x7c] sm:%s456] %v527
        %v529 = vld [vmem:[%s463 + $0x7c] sm:%s456]
        %530 = vst [vmem:[%s464 + $0x80] sm:%s456] %v529
        %v531 = vld [vmem:[%s463 + $0x88] sm:%s456]
        %532 = vst [vmem:[%s464 + $0x84] sm:%s456] %v531
        %v533 = vld [vmem:[%s463 + $0x80] sm:%s456]
        %534 = vst [vmem:[%s464 + $0x88] sm:%s456] %v533
        %v535 = vld [vmem:[%s463 + $0x8c] sm:%s456]
        %536 = vst [vmem:[%s464 + $0x8c] sm:%s456] %v535
        %v537 = vld [vmem:[%s463 + $0x90] sm:%s456]
        %538 = vst [vmem:[%s464 + $0x90] sm:%s456] %v537
        %v539 = vld [vmem:[%s463 + $0x9c] sm:%s456]
        %540 = vst [vmem:[%s464 + $0x94] sm:%s456] %v539
        %v541 = vld [vmem:[%s463 + $0x94] sm:%s456]
        %542 = vst [vmem:[%s464 + $0x98] sm:%s456] %v541
        %v543 = vld [vmem:[%s463 + $0xa0] sm:%s456]
        %544 = vst [vmem:[%s464 + $0x9c] sm:%s456] %v543
        %v545 = vld [vmem:[%s463 + $0x98] sm:%s456]
        %546 = vst [vmem:[%s464 + $0xa0] sm:%s456] %v545
        %v547 = vld [vmem:[%s463 + $0xa4] sm:%s456]
        %548 = vst [vmem:[%s464 + $0xa4] sm:%s456] %v547
        %v549 = vld [vmem:[%s463 + $0xa8] sm:%s456]
        %550 = vst [vmem:[%s464 + $0xa8] sm:%s456] %v549
        %v551 = vld [vmem:[%s463 + $0xb4] sm:%s456]
        %552 = vst [vmem:[%s464 + $0xac] sm:%s456] %v551
        %v553 = vld [vmem:[%s463 + $0xac] sm:%s456]
        %554 = vst [vmem:[%s464 + $0xb0] sm:%s456] %v553
        %v555 = vld [vmem:[%s463 + $0xb8] sm:%s456]
        %556 = vst [vmem:[%s464 + $0xb4] sm:%s456] %v555
        %v557 = vld [vmem:[%s463 + $0xb0] sm:%s456]
        %558 = vst [vmem:[%s464 + $0xb8] sm:%s456] %v557
        %v559 = vld [vmem:[%s463 + $0xbc] sm:%s456]
        %560 = vst [vmem:[%s464 + $0xbc] sm:%s456] %v559
        %v561 = vld [vmem:[%s463 + $0xc0] sm:%s456]
        %562 = vst [vmem:[%s464 + $0xc0] sm:%s456] %v561
        %v563 = vld [vmem:[%s463 + $0xcc] sm:%s456]
        %564 = vst [vmem:[%s464 + $0xc4] sm:%s456] %v563
        %v565 = vld [vmem:[%s463 + $0xc4] sm:%s456]
        %566 = vst [vmem:[%s464 + $0xc8] sm:%s456] %v565
        %v567 = vld [vmem:[%s463 + $0xd0] sm:%s456]
        %568 = vst [vmem:[%s464 + $0xcc] sm:%s456] %v567
        %v569 = vld [vmem:[%s463 + $0xc8] sm:%s456]
        %570 = vst [vmem:[%s464 + $0xd0] sm:%s456] %v569
        %v571 = vld [vmem:[%s463 + $0xd4] sm:%s456]
        %572 = vst [vmem:[%s464 + $0xd4] sm:%s456] %v571
        %v573 = vld [vmem:[%s463 + $0xd8] sm:%s456]
        %574 = vst [vmem:[%s464 + $0xd8] sm:%s456] %v573
        %v575 = vld [vmem:[%s463 + $0xe4] sm:%s456]
        %576 = vst [vmem:[%s464 + $0xdc] sm:%s456] %v575
        %v577 = vld [vmem:[%s463 + $0xdc] sm:%s456]
        %578 = vst [vmem:[%s464 + $0xe0] sm:%s456] %v577
        %v579 = vld [vmem:[%s463 + $0xe8] sm:%s456]
        %580 = vst [vmem:[%s464 + $0xe4] sm:%s456] %v579
        %v581 = vld [vmem:[%s463 + $0xe0] sm:%s456]
        %582 = vst [vmem:[%s464 + $0xe8] sm:%s456] %v581
        %v583 = vld [vmem:[%s463 + $0xec] sm:%s456]
        %584 = vst [vmem:[%s464 + $0xec] sm:%s456] %v583
        %v585 = vld [vmem:[%s463 + $0xf0] sm:%s456]
        %586 = vst [vmem:[%s464 + $0xf0] sm:%s456] %v585
        %v587 = vld [vmem:[%s463 + $0xfc] sm:%s456]
        %588 = vst [vmem:[%s464 + $0xf4] sm:%s456] %v587
        %v589 = vld [vmem:[%s463 + $0xf4] sm:%s456]
        %590 = vst [vmem:[%s464 + $0xf8] sm:%s456] %v589
        %v591 = vld [vmem:[%s463 + $0x100] sm:%s456]
        %592 = vst [vmem:[%s464 + $0xfc] sm:%s456] %v591
        %v593 = vld [vmem:[%s463 + $0xf8] sm:%s456]
        %594 = vst [vmem:[%s464 + $0x100] sm:%s456] %v593
        %v595 = vld [vmem:[%s463 + $0x104] sm:%s456]
        %596 = vst [vmem:[%s464 + $0x104] sm:%s456] %v595
        %v597 = vld [vmem:[%s463 + $0x108] sm:%s456]
        %598 = vst [vmem:[%s464 + $0x108] sm:%s456] %v597
        %v599 = vld [vmem:[%s463 + $0x114] sm:%s456]
        %600 = vst [vmem:[%s464 + $0x10c] sm:%s456] %v599
        %v601 = vld [vmem:[%s463 + $0x10c] sm:%s456]
        %602 = vst [vmem:[%s464 + $0x110] sm:%s456] %v601
        %v603 = vld [vmem:[%s463 + $0x118] sm:%s456]
        %604 = vst [vmem:[%s464 + $0x114] sm:%s456] %v603
        %v605 = vld [vmem:[%s463 + $0x110] sm:%s456]
        %606 = vst [vmem:[%s464 + $0x118] sm:%s456] %v605
        %v607 = vld [vmem:[%s463 + $0x11c] sm:%s456]
        %608 = vst [vmem:[%s464 + $0x11c] sm:%s456] %v607
        %v609 = vld [vmem:[%s463 + $0x120] sm:%s456]
        %610 = vst [vmem:[%s464 + $0x120] sm:%s456] %v609
        %v611 = vld [vmem:[%s463 + $0x12c] sm:%s456]
        %612 = vst [vmem:[%s464 + $0x124] sm:%s456] %v611
        %v613 = vld [vmem:[%s463 + $0x124] sm:%s456]
        %614 = vst [vmem:[%s464 + $0x128] sm:%s456] %v613
        %v615 = vld [vmem:[%s463 + $0x130] sm:%s456]
        %616 = vst [vmem:[%s464 + $0x12c] sm:%s456] %v615
        %v617 = vld [vmem:[%s463 + $0x128] sm:%s456]
        %618 = vst [vmem:[%s464 + $0x130] sm:%s456] %v617
        %v619 = vld [vmem:[%s463 + $0x134] sm:%s456]
        %620 = vst [vmem:[%s464 + $0x134] sm:%s456] %v619
        %v621 = vld [vmem:[%s463 + $0x138] sm:%s456]
        %622 = vst [vmem:[%s464 + $0x138] sm:%s456] %v621
        %v623 = vld [vmem:[%s463 + $0x144] sm:%s456]
        %624 = vst [vmem:[%s464 + $0x13c] sm:%s456] %v623
        %v625 = vld [vmem:[%s463 + $0x13c] sm:%s456]
        %626 = vst [vmem:[%s464 + $0x140] sm:%s456] %v625
        %v627 = vld [vmem:[%s463 + $0x148] sm:%s456]
        %628 = vst [vmem:[%s464 + $0x144] sm:%s456] %v627
        %v629 = vld [vmem:[%s463 + $0x140] sm:%s456]
        %630 = vst [vmem:[%s464 + $0x148] sm:%s456] %v629
        %v631 = vld [vmem:[%s463 + $0x14c] sm:%s456]
        %632 = vst [vmem:[%s464 + $0x14c] sm:%s456] %v631
        %v633 = vld [vmem:[%s463 + $0x150] sm:%s456]
        %634 = vst [vmem:[%s464 + $0x150] sm:%s456] %v633
        %v635 = vld [vmem:[%s463 + $0x15c] sm:%s456]
        %636 = vst [vmem:[%s464 + $0x154] sm:%s456] %v635
        %v637 = vld [vmem:[%s463 + $0x154] sm:%s456]
        %638 = vst [vmem:[%s464 + $0x158] sm:%s456] %v637
        %v639 = vld [vmem:[%s463 + $0x160] sm:%s456]
        %640 = vst [vmem:[%s464 + $0x15c] sm:%s456] %v639
        %v641 = vld [vmem:[%s463 + $0x158] sm:%s456]
        %642 = vst [vmem:[%s464 + $0x160] sm:%s456] %v641
        %v643 = vld [vmem:[%s463 + $0x164] sm:%s456]
        %644 = vst [vmem:[%s464 + $0x164] sm:%s456] %v643
        %v645 = vld [vmem:[%s463 + $0x168] sm:%s456]
        %646 = vst [vmem:[%s464 + $0x168] sm:%s456] %v645
        %v647 = vld [vmem:[%s463 + $0x174] sm:%s456]
        %648 = vst [vmem:[%s464 + $0x16c] sm:%s456] %v647
        %v649 = vld [vmem:[%s463 + $0x16c] sm:%s456]
        %650 = vst [vmem:[%s464 + $0x170] sm:%s456] %v649
        %v651 = vld [vmem:[%s463 + $0x178] sm:%s456]
        %652 = vst [vmem:[%s464 + $0x174] sm:%s456] %v651
        %v653 = vld [vmem:[%s463 + $0x170] sm:%s456]
        %654 = vst [vmem:[%s464 + $0x178] sm:%s456] %v653
        %v655 = vld [vmem:[%s463 + $0x17c] sm:%s456]
        %656 = vst [vmem:[%s464 + $0x17c] sm:%s456] %v655
        %v657 = vld [vmem:[%s463 + $0x180] sm:%s456]
        %658 = vst [vmem:[%s464 + $0x180] sm:%s456] %v657
        %v659 = vld [vmem:[%s463 + $0x18c] sm:%s456]
        %660 = vst [vmem:[%s464 + $0x184] sm:%s456] %v659
        %v661 = vld [vmem:[%s463 + $0x184] sm:%s456]
        %662 = vst [vmem:[%s464 + $0x188] sm:%s456] %v661
        %v663 = vld [vmem:[%s463 + $0x190] sm:%s456]
        %664 = vst [vmem:[%s464 + $0x18c] sm:%s456] %v663
        %v665 = vld [vmem:[%s463 + $0x188] sm:%s456]
        %666 = vst [vmem:[%s464 + $0x190] sm:%s456] %v665
        %v667 = vld [vmem:[%s463 + $0x194] sm:%s456]
        %668 = vst [vmem:[%s464 + $0x194] sm:%s456] %v667
        %v669 = vld [vmem:[%s463 + $0x198] sm:%s456]
        %670 = vst [vmem:[%s464 + $0x198] sm:%s456] %v669
        %v671 = vld [vmem:[%s463 + $0x1a4] sm:%s456]
        %672 = vst [vmem:[%s464 + $0x19c] sm:%s456] %v671
        %v673 = vld [vmem:[%s463 + $0x19c] sm:%s456]
        %674 = vst [vmem:[%s464 + $0x1a0] sm:%s456] %v673
        %v675 = vld [vmem:[%s463 + $0x1a8] sm:%s456]
        %676 = vst [vmem:[%s464 + $0x1a4] sm:%s456] %v675
        %v677 = vld [vmem:[%s463 + $0x1a0] sm:%s456]
        %678 = vst [vmem:[%s464 + $0x1a8] sm:%s456] %v677
        %v679 = vld [vmem:[%s463 + $0x1ac] sm:%s456]
        %680 = vst [vmem:[%s464 + $0x1ac] sm:%s456] %v679
        %v681 = vld [vmem:[%s463 + $0x1b0] sm:%s456]
        %682 = vst [vmem:[%s464 + $0x1b0] sm:%s456] %v681
        %v683 = vld [vmem:[%s463 + $0x1bc] sm:%s456]
        %684 = vst [vmem:[%s464 + $0x1b4] sm:%s456] %v683
        %v685 = vld [vmem:[%s463 + $0x1b4] sm:%s456]
        %686 = vst [vmem:[%s464 + $0x1b8] sm:%s456] %v685
        %v687 = vld [vmem:[%s463 + $0x1c0] sm:%s456]
        %688 = vst [vmem:[%s464 + $0x1bc] sm:%s456] %v687
        %v689 = vld [vmem:[%s463 + $0x1b8] sm:%s456]
        %690 = vst [vmem:[%s464 + $0x1c0] sm:%s456] %v689
        %v691 = vld [vmem:[%s463 + $0x1c4] sm:%s456]
        %692 = vst [vmem:[%s464 + $0x1c4] sm:%s456] %v691
        %v693 = vld [vmem:[%s463 + $0x1c8] sm:%s456]
        %694 = vst [vmem:[%s464 + $0x1c8] sm:%s456] %v693
        %v695 = vld [vmem:[%s463 + $0x1d4] sm:%s456]
        %696 = vst [vmem:[%s464 + $0x1cc] sm:%s456] %v695
        %v697 = vld [vmem:[%s463 + $0x1cc] sm:%s456]
        %698 = vst [vmem:[%s464 + $0x1d0] sm:%s456] %v697
        %v699 = vld [vmem:[%s463 + $0x1d8] sm:%s456]
        %700 = vst [vmem:[%s464 + $0x1d4] sm:%s456] %v699
        %v701 = vld [vmem:[%s463 + $0x1d0] sm:%s456]
        %702 = vst [vmem:[%s464 + $0x1d8] sm:%s456] %v701
        %v703 = vld [vmem:[%s463 + $0x1dc] sm:%s456]
        %704 = vst [vmem:[%s464 + $0x1dc] sm:%s456] %v703
        %v705 = vld [vmem:[%s463 + $0x1e0] sm:%s456]
        %706 = vst [vmem:[%s464 + $0x1e0] sm:%s456] %v705
        %v707 = vld [vmem:[%s463 + $0x1ec] sm:%s456]
        %708 = vst [vmem:[%s464 + $0x1e4] sm:%s456] %v707
        %v709 = vld [vmem:[%s463 + $0x1e4] sm:%s456]
        %710 = vst [vmem:[%s464 + $0x1e8] sm:%s456] %v709
        %v711 = vld [vmem:[%s463 + $0x1f0] sm:%s456]
        %712 = vst [vmem:[%s464 + $0x1ec] sm:%s456] %v711
        %v713 = vld [vmem:[%s463 + $0x1e8] sm:%s456]
        %714 = vst [vmem:[%s464 + $0x1f0] sm:%s456] %v713
        %v715 = vld [vmem:[%s463 + $0x1f4] sm:%s456]
        %716 = vst [vmem:[%s464 + $0x1f4] sm:%s456] %v715
        %v717 = vld [vmem:[%s463 + $0x1f8] sm:%s456]
        %718 = vst [vmem:[%s464 + $0x1f8] sm:%s456] %v717
        %v719 = vld [vmem:[%s463 + $0x204] sm:%s456]
        %720 = vst [vmem:[%s464 + $0x1fc] sm:%s456] %v719
        %v721 = vld [vmem:[%s463 + $0x1fc] sm:%s456]
        %722 = vst [vmem:[%s464 + $0x200] sm:%s456] %v721
        %v723 = vld [vmem:[%s463 + $0x208] sm:%s456]
        %724 = vst [vmem:[%s464 + $0x204] sm:%s456] %v723
        %v725 = vld [vmem:[%s463 + $0x200] sm:%s456]
        %726 = vst [vmem:[%s464 + $0x208] sm:%s456] %v725
        %v727 = vld [vmem:[%s463 + $0x20c] sm:%s456]
        %728 = vst [vmem:[%s464 + $0x20c] sm:%s456] %v727
        %v729 = vld [vmem:[%s463 + $0x210] sm:%s456]
        %730 = vst [vmem:[%s464 + $0x210] sm:%s456] %v729
        %v731 = vld [vmem:[%s463 + $0x21c] sm:%s456]
        %732 = vst [vmem:[%s464 + $0x214] sm:%s456] %v731
        %v733 = vld [vmem:[%s463 + $0x214] sm:%s456]
        %734 = vst [vmem:[%s464 + $0x218] sm:%s456] %v733
        %v735 = vld [vmem:[%s463 + $0x220] sm:%s456]
        %736 = vst [vmem:[%s464 + $0x21c] sm:%s456] %v735
        %v737 = vld [vmem:[%s463 + $0x218] sm:%s456]
        %738 = vst [vmem:[%s464 + $0x220] sm:%s456] %v737
        %v739 = vld [vmem:[%s463 + $0x224] sm:%s456]
        %740 = vst [vmem:[%s464 + $0x224] sm:%s456] %v739
        %v741 = vld [vmem:[%s463 + $0x228] sm:%s456]
        %742 = vst [vmem:[%s464 + $0x228] sm:%s456] %v741
        %v743 = vld [vmem:[%s463 + $0x234] sm:%s456]
        %744 = vst [vmem:[%s464 + $0x22c] sm:%s456] %v743
        %v745 = vld [vmem:[%s463 + $0x22c] sm:%s456]
        %746 = vst [vmem:[%s464 + $0x230] sm:%s456] %v745
        %v747 = vld [vmem:[%s463 + $0x238] sm:%s456]
        %748 = vst [vmem:[%s464 + $0x234] sm:%s456] %v747
        %v749 = vld [vmem:[%s463 + $0x230] sm:%s456]
        %750 = vst [vmem:[%s464 + $0x238] sm:%s456] %v749
        %v751 = vld [vmem:[%s463 + $0x23c] sm:%s456]
        %752 = vst [vmem:[%s464 + $0x23c] sm:%s456] %v751
        %v753 = vld [vmem:[%s463 + $0x240] sm:%s456]
        %754 = vst [vmem:[%s464 + $0x240] sm:%s456] %v753
        %v755 = vld [vmem:[%s463 + $0x24c] sm:%s456]
        %756 = vst [vmem:[%s464 + $0x244] sm:%s456] %v755
        %v757 = vld [vmem:[%s463 + $0x244] sm:%s456]
        %758 = vst [vmem:[%s464 + $0x248] sm:%s456] %v757
        %v759 = vld [vmem:[%s463 + $0x250] sm:%s456]
        %760 = vst [vmem:[%s464 + $0x24c] sm:%s456] %v759
        %v761 = vld [vmem:[%s463 + $0x248] sm:%s456]
        %762 = vst [vmem:[%s464 + $0x250] sm:%s456] %v761
        %v763 = vld [vmem:[%s463 + $0x254] sm:%s456]
        %764 = vst [vmem:[%s464 + $0x254] sm:%s456] %v763
        %v765 = vld [vmem:[%s463 + $0x258] sm:%s456]
        %766 = vst [vmem:[%s464 + $0x258] sm:%s456] %v765
        %v767 = vld [vmem:[%s463 + $0x264] sm:%s456]
        %768 = vst [vmem:[%s464 + $0x25c] sm:%s456] %v767
        %v769 = vld [vmem:[%s463 + $0x25c] sm:%s456]
        %770 = vst [vmem:[%s464 + $0x260] sm:%s456] %v769
        %v771 = vld [vmem:[%s463 + $0x268] sm:%s456]
        %772 = vst [vmem:[%s464 + $0x264] sm:%s456] %v771
        %v773 = vld [vmem:[%s463 + $0x260] sm:%s456]
        %774 = vst [vmem:[%s464 + $0x268] sm:%s456] %v773
        %v775 = vld [vmem:[%s463 + $0x26c] sm:%s456]
        %776 = vst [vmem:[%s464 + $0x26c] sm:%s456] %v775
        %v777 = vld [vmem:[%s463 + $0x270] sm:%s456]
        %778 = vst [vmem:[%s464 + $0x270] sm:%s456] %v777
        %v779 = vld [vmem:[%s463 + $0x27c] sm:%s456]
        %780 = vst [vmem:[%s464 + $0x274] sm:%s456] %v779
        %v781 = vld [vmem:[%s463 + $0x274] sm:%s456]
        %782 = vst [vmem:[%s464 + $0x278] sm:%s456] %v781
        %v783 = vld [vmem:[%s463 + $0x280] sm:%s456]
        %784 = vst [vmem:[%s464 + $0x27c] sm:%s456] %v783
        %v785 = vld [vmem:[%s463 + $0x278] sm:%s456]
        %786 = vst [vmem:[%s464 + $0x280] sm:%s456] %v785
        %v787 = vld [vmem:[%s463 + $0x284] sm:%s456]
        %788 = vst [vmem:[%s464 + $0x284] sm:%s456] %v787
        %v789 = vld [vmem:[%s463 + $0x288] sm:%s456]
        %790 = vst [vmem:[%s464 + $0x288] sm:%s456] %v789
        %v791 = vld [vmem:[%s463 + $0x294] sm:%s456]
        %792 = vst [vmem:[%s464 + $0x28c] sm:%s456] %v791
        %v793 = vld [vmem:[%s463 + $0x28c] sm:%s456]
        %794 = vst [vmem:[%s464 + $0x290] sm:%s456] %v793
        %v795 = vld [vmem:[%s463 + $0x298] sm:%s456]
        %796 = vst [vmem:[%s464 + $0x294] sm:%s456] %v795
        %v797 = vld [vmem:[%s463 + $0x290] sm:%s456]
        %798 = vst [vmem:[%s464 + $0x298] sm:%s456] %v797
        %v799 = vld [vmem:[%s463 + $0x29c] sm:%s456]
        %800 = vst [vmem:[%s464 + $0x29c] sm:%s456] %v799
        %v801 = vld [vmem:[%s463 + $0x2a0] sm:%s456]
        %802 = vst [vmem:[%s464 + $0x2a0] sm:%s456] %v801
        %v803 = vld [vmem:[%s463 + $0x2ac] sm:%s456]
        %804 = vst [vmem:[%s464 + $0x2a4] sm:%s456] %v803
        %v805 = vld [vmem:[%s463 + $0x2a4] sm:%s456]
        %806 = vst [vmem:[%s464 + $0x2a8] sm:%s456] %v805
        %v807 = vld [vmem:[%s463 + $0x2b0] sm:%s456]
        %808 = vst [vmem:[%s464 + $0x2ac] sm:%s456] %v807
        %v809 = vld [vmem:[%s463 + $0x2a8] sm:%s456]
        %810 = vst [vmem:[%s464 + $0x2b0] sm:%s456] %v809
        %v811 = vld [vmem:[%s463 + $0x2b4] sm:%s456]
        %812 = vst [vmem:[%s464 + $0x2b4] sm:%s456] %v811
        %v813 = vld [vmem:[%s463 + $0x2b8] sm:%s456]
        %814 = vst [vmem:[%s464 + $0x2b8] sm:%s456] %v813
        %v815 = vld [vmem:[%s463 + $0x2c4] sm:%s456]
        %816 = vst [vmem:[%s464 + $0x2bc] sm:%s456] %v815
        %v817 = vld [vmem:[%s463 + $0x2bc] sm:%s456]
        %818 = vst [vmem:[%s464 + $0x2c0] sm:%s456] %v817
        %v819 = vld [vmem:[%s463 + $0x2c8] sm:%s456]
        %820 = vst [vmem:[%s464 + $0x2c4] sm:%s456] %v819
        %v821 = vld [vmem:[%s463 + $0x2c0] sm:%s456]
        %822 = vst [vmem:[%s464 + $0x2c8] sm:%s456] %v821
        %v823 = vld [vmem:[%s463 + $0x2cc] sm:%s456]
        %824 = vst [vmem:[%s464 + $0x2cc] sm:%s456] %v823
        %v825 = vld [vmem:[%s463 + $0x2d0] sm:%s456]
        %826 = vst [vmem:[%s464 + $0x2d0] sm:%s456] %v825
        %v827 = vld [vmem:[%s463 + $0x2dc] sm:%s456]
        %828 = vst [vmem:[%s464 + $0x2d4] sm:%s456] %v827
        %v829 = vld [vmem:[%s463 + $0x2d4] sm:%s456]
        %830 = vst [vmem:[%s464 + $0x2d8] sm:%s456] %v829
        %v831 = vld [vmem:[%s463 + $0x2e0] sm:%s456]
        %832 = vst [vmem:[%s464 + $0x2dc] sm:%s456] %v831
        %v833 = vld [vmem:[%s463 + $0x2d8] sm:%s456]
        %834 = vst [vmem:[%s464 + $0x2e0] sm:%s456] %v833
        %v835 = vld [vmem:[%s463 + $0x2e4] sm:%s456]
        %836 = vst [vmem:[%s464 + $0x2e4] sm:%s456] %v835
        %v837 = vld [vmem:[%s463 + $0x2e8] sm:%s456]
        %838 = vst [vmem:[%s464 + $0x2e8] sm:%s456] %v837
        %v839 = vld [vmem:[%s463 + $0x2f4] sm:%s456]
        %840 = vst [vmem:[%s464 + $0x2ec] sm:%s456] %v839
        %v841 = vld [vmem:[%s463 + $0x2ec] sm:%s456]
        %842 = vst [vmem:[%s464 + $0x2f0] sm:%s456] %v841
        %v843 = vld [vmem:[%s463 + $0x2f8] sm:%s456]
        %844 = vst [vmem:[%s464 + $0x2f4] sm:%s456] %v843
        %v845 = vld [vmem:[%s463 + $0x2f0] sm:%s456]
        %846 = vst [vmem:[%s464 + $0x2f8] sm:%s456] %v845
        %v847 = vld [vmem:[%s463 + $0x2fc] sm:%s456]
        %848 = vst [vmem:[%s464 + $0x2fc] sm:%s456] %v847
      $region68: #{forward.1} parent=55 // loop_footer
        %s462 = sadd.s32 1, %s458
      $region69: #{forward.1} parent=55 // loop_footer_branch
        %457 = sbr.rel target = $region65
      $region70: #{forward.1} parent=55 // loop_exit
        _
    $region56: #{forward.1} parent=40 // pred_fallthru
      _
  $region41: #{forward.1} parent=0 // pred_fallthru
    _
  // Predicated region
  $region42: #{forward.1} parent=0 // pred_check
    %p42 = pneg %p38
  $region43: #{forward.1} parent=0 // pred_check_branch
    %44 = sbr.rel (%p42) target = $region45
  $region44: #{forward.1} parent=0 // pred_region
    %s45 = sshllo.u32 0, 4
    loop: start=0, step=1, limit=1
    $region46: #{forward.1} parent=44 // loop_pre_header
      _
    $region47: #{forward.1} parent=44 // loop_header
      %s47 = sphi 0, %s51
      %p48 = scmp.ge.s32.totalorder %s47, 1
      %s52 = sphi %s5, %s5
      %s53 = sphi [#allocation3], [#allocation3]
    $region48: #{forward.1} parent=44 // loop_header_branch
      %50 = sbr.rel (%p48) target = $region52
    $region49: #{forward.1} parent=44 // loop_body
      %v54 = vld [vmem:[%s52] sm:%s45]
      %55 = vst [vmem:[%s53] sm:%s45] %v54
      %v56 = vld [vmem:[%s52 + $0xc] sm:%s45]
      %57 = vst [vmem:[%s53 + $0x4] sm:%s45] %v56
      %v58 = vld [vmem:[%s52 + $0x4] sm:%s45]
      %59 = vst [vmem:[%s53 + $0x8] sm:%s45] %v58
      %v60 = vld [vmem:[%s52 + $0x10] sm:%s45]
      %61 = vst [vmem:[%s53 + $0xc] sm:%s45] %v60
      %v62 = vld [vmem:[%s52 + $0x8] sm:%s45]
      %63 = vst [vmem:[%s53 + $0x10] sm:%s45] %v62
      %v64 = vld [vmem:[%s52 + $0x14] sm:%s45]
      %65 = vst [vmem:[%s53 + $0x14] sm:%s45] %v64
      %v66 = vld [vmem:[%s52 + $0x18] sm:%s45]
      %67 = vst [vmem:[%s53 + $0x18] sm:%s45] %v66
      %v68 = vld [vmem:[%s52 + $0x24] sm:%s45]
      %69 = vst [vmem:[%s53 + $0x1c] sm:%s45] %v68
      %v70 = vld [vmem:[%s52 + $0x1c] sm:%s45]
      %71 = vst [vmem:[%s53 + $0x20] sm:%s45] %v70
      %v72 = vld [vmem:[%s52 + $0x28] sm:%s45]
      %73 = vst [vmem:[%s53 + $0x24] sm:%s45] %v72
      %v74 = vld [vmem:[%s52 + $0x20] sm:%s45]
      %75 = vst [vmem:[%s53 + $0x28] sm:%s45] %v74
      %v76 = vld [vmem:[%s52 + $0x2c] sm:%s45]
      %77 = vst [vmem:[%s53 + $0x2c] sm:%s45] %v76
      %v78 = vld [vmem:[%s52 + $0x30] sm:%s45]
      %79 = vst [vmem:[%s53 + $0x30] sm:%s45] %v78
      %v80 = vld [vmem:[%s52 + $0x3c] sm:%s45]
      %81 = vst [vmem:[%s53 + $0x34] sm:%s45] %v80
      %v82 = vld [vmem:[%s52 + $0x34] sm:%s45]
      %83 = vst [vmem:[%s53 + $0x38] sm:%s45] %v82
      %v84 = vld [vmem:[%s52 + $0x40] sm:%s45]
      %85 = vst [vmem:[%s53 + $0x3c] sm:%s45] %v84
      %v86 = vld [vmem:[%s52 + $0x38] sm:%s45]
      %87 = vst [vmem:[%s53 + $0x40] sm:%s45] %v86
      %v88 = vld [vmem:[%s52 + $0x44] sm:%s45]
      %89 = vst [vmem:[%s53 + $0x44] sm:%s45] %v88
      %v90 = vld [vmem:[%s52 + $0x48] sm:%s45]
      %91 = vst [vmem:[%s53 + $0x48] sm:%s45] %v90
      %v92 = vld [vmem:[%s52 + $0x54] sm:%s45]
      %93 = vst [vmem:[%s53 + $0x4c] sm:%s45] %v92
      %v94 = vld [vmem:[%s52 + $0x4c] sm:%s45]
      %95 = vst [vmem:[%s53 + $0x50] sm:%s45] %v94
      %v96 = vld [vmem:[%s52 + $0x58] sm:%s45]
      %97 = vst [vmem:[%s53 + $0x54] sm:%s45] %v96
      %v98 = vld [vmem:[%s52 + $0x50] sm:%s45]
      %99 = vst [vmem:[%s53 + $0x58] sm:%s45] %v98
      %v100 = vld [vmem:[%s52 + $0x5c] sm:%s45]
      %101 = vst [vmem:[%s53 + $0x5c] sm:%s45] %v100
      %v102 = vld [vmem:[%s52 + $0x60] sm:%s45]
      %103 = vst [vmem:[%s53 + $0x60] sm:%s45] %v102
      %v104 = vld [vmem:[%s52 + $0x6c] sm:%s45]
      %105 = vst [vmem:[%s53 + $0x64] sm:%s45] %v104
      %v106 = vld [vmem:[%s52 + $0x64] sm:%s45]
      %107 = vst [vmem:[%s53 + $0x68] sm:%s45] %v106
      %v108 = vld [vmem:[%s52 + $0x70] sm:%s45]
      %109 = vst [vmem:[%s53 + $0x6c] sm:%s45] %v108
      %v110 = vld [vmem:[%s52 + $0x68] sm:%s45]
      %111 = vst [vmem:[%s53 + $0x70] sm:%s45] %v110
      %v112 = vld [vmem:[%s52 + $0x74] sm:%s45]
      %113 = vst [vmem:[%s53 + $0x74] sm:%s45] %v112
      %v114 = vld [vmem:[%s52 + $0x78] sm:%s45]
      %115 = vst [vmem:[%s53 + $0x78] sm:%s45] %v114
      %v116 = vld [vmem:[%s52 + $0x84] sm:%s45]
      %117 = vst [vmem:[%s53 + $0x7c] sm:%s45] %v116
      %v118 = vld [vmem:[%s52 + $0x7c] sm:%s45]
      %119 = vst [vmem:[%s53 + $0x80] sm:%s45] %v118
      %v120 = vld [vmem:[%s52 + $0x88] sm:%s45]
      %121 = vst [vmem:[%s53 + $0x84] sm:%s45] %v120
      %v122 = vld [vmem:[%s52 + $0x80] sm:%s45]
      %123 = vst [vmem:[%s53 + $0x88] sm:%s45] %v122
      %v124 = vld [vmem:[%s52 + $0x8c] sm:%s45]
      %125 = vst [vmem:[%s53 + $0x8c] sm:%s45] %v124
      %v126 = vld [vmem:[%s52 + $0x90] sm:%s45]
      %127 = vst [vmem:[%s53 + $0x90] sm:%s45] %v126
      %v128 = vld [vmem:[%s52 + $0x9c] sm:%s45]
      %129 = vst [vmem:[%s53 + $0x94] sm:%s45] %v128
      %v130 = vld [vmem:[%s52 + $0x94] sm:%s45]
      %131 = vst [vmem:[%s53 + $0x98] sm:%s45] %v130
      %v132 = vld [vmem:[%s52 + $0xa0] sm:%s45]
      %133 = vst [vmem:[%s53 + $0x9c] sm:%s45] %v132
      %v134 = vld [vmem:[%s52 + $0x98] sm:%s45]
      %135 = vst [vmem:[%s53 + $0xa0] sm:%s45] %v134
      %v136 = vld [vmem:[%s52 + $0xa4] sm:%s45]
      %137 = vst [vmem:[%s53 + $0xa4] sm:%s45] %v136
      %v138 = vld [vmem:[%s52 + $0xa8] sm:%s45]
      %139 = vst [vmem:[%s53 + $0xa8] sm:%s45] %v138
      %v140 = vld [vmem:[%s52 + $0xb4] sm:%s45]
      %141 = vst [vmem:[%s53 + $0xac] sm:%s45] %v140
      %v142 = vld [vmem:[%s52 + $0xac] sm:%s45]
      %143 = vst [vmem:[%s53 + $0xb0] sm:%s45] %v142
      %v144 = vld [vmem:[%s52 + $0xb8] sm:%s45]
      %145 = vst [vmem:[%s53 + $0xb4] sm:%s45] %v144
      %v146 = vld [vmem:[%s52 + $0xb0] sm:%s45]
      %147 = vst [vmem:[%s53 + $0xb8] sm:%s45] %v146
      %v148 = vld [vmem:[%s52 + $0xbc] sm:%s45]
      %149 = vst [vmem:[%s53 + $0xbc] sm:%s45] %v148
      %v150 = vld [vmem:[%s52 + $0xc0] sm:%s45]
      %151 = vst [vmem:[%s53 + $0xc0] sm:%s45] %v150
      %v152 = vld [vmem:[%s52 + $0xcc] sm:%s45]
      %153 = vst [vmem:[%s53 + $0xc4] sm:%s45] %v152
      %v154 = vld [vmem:[%s52 + $0xc4] sm:%s45]
      %155 = vst [vmem:[%s53 + $0xc8] sm:%s45] %v154
      %v156 = vld [vmem:[%s52 + $0xd0] sm:%s45]
      %157 = vst [vmem:[%s53 + $0xcc] sm:%s45] %v156
      %v158 = vld [vmem:[%s52 + $0xc8] sm:%s45]
      %159 = vst [vmem:[%s53 + $0xd0] sm:%s45] %v158
      %v160 = vld [vmem:[%s52 + $0xd4] sm:%s45]
      %161 = vst [vmem:[%s53 + $0xd4] sm:%s45] %v160
      %v162 = vld [vmem:[%s52 + $0xd8] sm:%s45]
      %163 = vst [vmem:[%s53 + $0xd8] sm:%s45] %v162
      %v164 = vld [vmem:[%s52 + $0xe4] sm:%s45]
      %165 = vst [vmem:[%s53 + $0xdc] sm:%s45] %v164
      %v166 = vld [vmem:[%s52 + $0xdc] sm:%s45]
      %167 = vst [vmem:[%s53 + $0xe0] sm:%s45] %v166
      %v168 = vld [vmem:[%s52 + $0xe8] sm:%s45]
      %169 = vst [vmem:[%s53 + $0xe4] sm:%s45] %v168
      %v170 = vld [vmem:[%s52 + $0xe0] sm:%s45]
      %171 = vst [vmem:[%s53 + $0xe8] sm:%s45] %v170
      %v172 = vld [vmem:[%s52 + $0xec] sm:%s45]
      %173 = vst [vmem:[%s53 + $0xec] sm:%s45] %v172
      %v174 = vld [vmem:[%s52 + $0xf0] sm:%s45]
      %175 = vst [vmem:[%s53 + $0xf0] sm:%s45] %v174
      %v176 = vld [vmem:[%s52 + $0xfc] sm:%s45]
      %177 = vst [vmem:[%s53 + $0xf4] sm:%s45] %v176
      %v178 = vld [vmem:[%s52 + $0xf4] sm:%s45]
      %179 = vst [vmem:[%s53 + $0xf8] sm:%s45] %v178
      %v180 = vld [vmem:[%s52 + $0x100] sm:%s45]
      %181 = vst [vmem:[%s53 + $0xfc] sm:%s45] %v180
      %v182 = vld [vmem:[%s52 + $0xf8] sm:%s45]
      %183 = vst [vmem:[%s53 + $0x100] sm:%s45] %v182
      %v184 = vld [vmem:[%s52 + $0x104] sm:%s45]
      %185 = vst [vmem:[%s53 + $0x104] sm:%s45] %v184
      %v186 = vld [vmem:[%s52 + $0x108] sm:%s45]
      %187 = vst [vmem:[%s53 + $0x108] sm:%s45] %v186
      %v188 = vld [vmem:[%s52 + $0x114] sm:%s45]
      %189 = vst [vmem:[%s53 + $0x10c] sm:%s45] %v188
      %v190 = vld [vmem:[%s52 + $0x10c] sm:%s45]
      %191 = vst [vmem:[%s53 + $0x110] sm:%s45] %v190
      %v192 = vld [vmem:[%s52 + $0x118] sm:%s45]
      %193 = vst [vmem:[%s53 + $0x114] sm:%s45] %v192
      %v194 = vld [vmem:[%s52 + $0x110] sm:%s45]
      %195 = vst [vmem:[%s53 + $0x118] sm:%s45] %v194
      %v196 = vld [vmem:[%s52 + $0x11c] sm:%s45]
      %197 = vst [vmem:[%s53 + $0x11c] sm:%s45] %v196
      %v198 = vld [vmem:[%s52 + $0x120] sm:%s45]
      %199 = vst [vmem:[%s53 + $0x120] sm:%s45] %v198
      %v200 = vld [vmem:[%s52 + $0x12c] sm:%s45]
      %201 = vst [vmem:[%s53 + $0x124] sm:%s45] %v200
      %v202 = vld [vmem:[%s52 + $0x124] sm:%s45]
      %203 = vst [vmem:[%s53 + $0x128] sm:%s45] %v202
      %v204 = vld [vmem:[%s52 + $0x130] sm:%s45]
      %205 = vst [vmem:[%s53 + $0x12c] sm:%s45] %v204
      %v206 = vld [vmem:[%s52 + $0x128] sm:%s45]
      %207 = vst [vmem:[%s53 + $0x130] sm:%s45] %v206
      %v208 = vld [vmem:[%s52 + $0x134] sm:%s45]
      %209 = vst [vmem:[%s53 + $0x134] sm:%s45] %v208
      %v210 = vld [vmem:[%s52 + $0x138] sm:%s45]
      %211 = vst [vmem:[%s53 + $0x138] sm:%s45] %v210
      %v212 = vld [vmem:[%s52 + $0x144] sm:%s45]
      %213 = vst [vmem:[%s53 + $0x13c] sm:%s45] %v212
      %v214 = vld [vmem:[%s52 + $0x13c] sm:%s45]
      %215 = vst [vmem:[%s53 + $0x140] sm:%s45] %v214
      %v216 = vld [vmem:[%s52 + $0x148] sm:%s45]
      %217 = vst [vmem:[%s53 + $0x144] sm:%s45] %v216
      %v218 = vld [vmem:[%s52 + $0x140] sm:%s45]
      %219 = vst [vmem:[%s53 + $0x148] sm:%s45] %v218
      %v220 = vld [vmem:[%s52 + $0x14c] sm:%s45]
      %221 = vst [vmem:[%s53 + $0x14c] sm:%s45] %v220
      %v222 = vld [vmem:[%s52 + $0x150] sm:%s45]
      %223 = vst [vmem:[%s53 + $0x150] sm:%s45] %v222
      %v224 = vld [vmem:[%s52 + $0x15c] sm:%s45]
      %225 = vst [vmem:[%s53 + $0x154] sm:%s45] %v224
      %v226 = vld [vmem:[%s52 + $0x154] sm:%s45]
      %227 = vst [vmem:[%s53 + $0x158] sm:%s45] %v226
      %v228 = vld [vmem:[%s52 + $0x160] sm:%s45]
      %229 = vst [vmem:[%s53 + $0x15c] sm:%s45] %v228
      %v230 = vld [vmem:[%s52 + $0x158] sm:%s45]
      %231 = vst [vmem:[%s53 + $0x160] sm:%s45] %v230
      %v232 = vld [vmem:[%s52 + $0x164] sm:%s45]
      %233 = vst [vmem:[%s53 + $0x164] sm:%s45] %v232
      %v234 = vld [vmem:[%s52 + $0x168] sm:%s45]
      %235 = vst [vmem:[%s53 + $0x168] sm:%s45] %v234
      %v236 = vld [vmem:[%s52 + $0x174] sm:%s45]
      %237 = vst [vmem:[%s53 + $0x16c] sm:%s45] %v236
      %v238 = vld [vmem:[%s52 + $0x16c] sm:%s45]
      %239 = vst [vmem:[%s53 + $0x170] sm:%s45] %v238
      %v240 = vld [vmem:[%s52 + $0x178] sm:%s45]
      %241 = vst [vmem:[%s53 + $0x174] sm:%s45] %v240
      %v242 = vld [vmem:[%s52 + $0x170] sm:%s45]
      %243 = vst [vmem:[%s53 + $0x178] sm:%s45] %v242
      %v244 = vld [vmem:[%s52 + $0x17c] sm:%s45]
      %245 = vst [vmem:[%s53 + $0x17c] sm:%s45] %v244
      %v246 = vld [vmem:[%s52 + $0x180] sm:%s45]
      %247 = vst [vmem:[%s53 + $0x180] sm:%s45] %v246
      %v248 = vld [vmem:[%s52 + $0x18c] sm:%s45]
      %249 = vst [vmem:[%s53 + $0x184] sm:%s45] %v248
      %v250 = vld [vmem:[%s52 + $0x184] sm:%s45]
      %251 = vst [vmem:[%s53 + $0x188] sm:%s45] %v250
      %v252 = vld [vmem:[%s52 + $0x190] sm:%s45]
      %253 = vst [vmem:[%s53 + $0x18c] sm:%s45] %v252
      %v254 = vld [vmem:[%s52 + $0x188] sm:%s45]
      %255 = vst [vmem:[%s53 + $0x190] sm:%s45] %v254
      %v256 = vld [vmem:[%s52 + $0x194] sm:%s45]
      %257 = vst [vmem:[%s53 + $0x194] sm:%s45] %v256
      %v258 = vld [vmem:[%s52 + $0x198] sm:%s45]
      %259 = vst [vmem:[%s53 + $0x198] sm:%s45] %v258
      %v260 = vld [vmem:[%s52 + $0x1a4] sm:%s45]
      %261 = vst [vmem:[%s53 + $0x19c] sm:%s45] %v260
      %v262 = vld [vmem:[%s52 + $0x19c] sm:%s45]
      %263 = vst [vmem:[%s53 + $0x1a0] sm:%s45] %v262
      %v264 = vld [vmem:[%s52 + $0x1a8] sm:%s45]
      %265 = vst [vmem:[%s53 + $0x1a4] sm:%s45] %v264
      %v266 = vld [vmem:[%s52 + $0x1a0] sm:%s45]
      %267 = vst [vmem:[%s53 + $0x1a8] sm:%s45] %v266
      %v268 = vld [vmem:[%s52 + $0x1ac] sm:%s45]
      %269 = vst [vmem:[%s53 + $0x1ac] sm:%s45] %v268
      %v270 = vld [vmem:[%s52 + $0x1b0] sm:%s45]
      %271 = vst [vmem:[%s53 + $0x1b0] sm:%s45] %v270
      %v272 = vld [vmem:[%s52 + $0x1bc] sm:%s45]
      %273 = vst [vmem:[%s53 + $0x1b4] sm:%s45] %v272
      %v274 = vld [vmem:[%s52 + $0x1b4] sm:%s45]
      %275 = vst [vmem:[%s53 + $0x1b8] sm:%s45] %v274
      %v276 = vld [vmem:[%s52 + $0x1c0] sm:%s45]
      %277 = vst [vmem:[%s53 + $0x1bc] sm:%s45] %v276
      %v278 = vld [vmem:[%s52 + $0x1b8] sm:%s45]
      %279 = vst [vmem:[%s53 + $0x1c0] sm:%s45] %v278
      %v280 = vld [vmem:[%s52 + $0x1c4] sm:%s45]
      %281 = vst [vmem:[%s53 + $0x1c4] sm:%s45] %v280
      %v282 = vld [vmem:[%s52 + $0x1c8] sm:%s45]
      %283 = vst [vmem:[%s53 + $0x1c8] sm:%s45] %v282
      %v284 = vld [vmem:[%s52 + $0x1d4] sm:%s45]
      %285 = vst [vmem:[%s53 + $0x1cc] sm:%s45] %v284
      %v286 = vld [vmem:[%s52 + $0x1cc] sm:%s45]
      %287 = vst [vmem:[%s53 + $0x1d0] sm:%s45] %v286
      %v288 = vld [vmem:[%s52 + $0x1d8] sm:%s45]
      %289 = vst [vmem:[%s53 + $0x1d4] sm:%s45] %v288
      %v290 = vld [vmem:[%s52 + $0x1d0] sm:%s45]
      %291 = vst [vmem:[%s53 + $0x1d8] sm:%s45] %v290
      %v292 = vld [vmem:[%s52 + $0x1dc] sm:%s45]
      %293 = vst [vmem:[%s53 + $0x1dc] sm:%s45] %v292
      %v294 = vld [vmem:[%s52 + $0x1e0] sm:%s45]
      %295 = vst [vmem:[%s53 + $0x1e0] sm:%s45] %v294
      %v296 = vld [vmem:[%s52 + $0x1ec] sm:%s45]
      %297 = vst [vmem:[%s53 + $0x1e4] sm:%s45] %v296
      %v298 = vld [vmem:[%s52 + $0x1e4] sm:%s45]
      %299 = vst [vmem:[%s53 + $0x1e8] sm:%s45] %v298
      %v300 = vld [vmem:[%s52 + $0x1f0] sm:%s45]
      %301 = vst [vmem:[%s53 + $0x1ec] sm:%s45] %v300
      %v302 = vld [vmem:[%s52 + $0x1e8] sm:%s45]
      %303 = vst [vmem:[%s53 + $0x1f0] sm:%s45] %v302
      %v304 = vld [vmem:[%s52 + $0x1f4] sm:%s45]
      %305 = vst [vmem:[%s53 + $0x1f4] sm:%s45] %v304
      %v306 = vld [vmem:[%s52 + $0x1f8] sm:%s45]
      %307 = vst [vmem:[%s53 + $0x1f8] sm:%s45] %v306
      %v308 = vld [vmem:[%s52 + $0x204] sm:%s45]
      %309 = vst [vmem:[%s53 + $0x1fc] sm:%s45] %v308
      %v310 = vld [vmem:[%s52 + $0x1fc] sm:%s45]
      %311 = vst [vmem:[%s53 + $0x200] sm:%s45] %v310
      %v312 = vld [vmem:[%s52 + $0x208] sm:%s45]
      %313 = vst [vmem:[%s53 + $0x204] sm:%s45] %v312
      %v314 = vld [vmem:[%s52 + $0x200] sm:%s45]
      %315 = vst [vmem:[%s53 + $0x208] sm:%s45] %v314
      %v316 = vld [vmem:[%s52 + $0x20c] sm:%s45]
      %317 = vst [vmem:[%s53 + $0x20c] sm:%s45] %v316
      %v318 = vld [vmem:[%s52 + $0x210] sm:%s45]
      %319 = vst [vmem:[%s53 + $0x210] sm:%s45] %v318
      %v320 = vld [vmem:[%s52 + $0x21c] sm:%s45]
      %321 = vst [vmem:[%s53 + $0x214] sm:%s45] %v320
      %v322 = vld [vmem:[%s52 + $0x214] sm:%s45]
      %323 = vst [vmem:[%s53 + $0x218] sm:%s45] %v322
      %v324 = vld [vmem:[%s52 + $0x220] sm:%s45]
      %325 = vst [vmem:[%s53 + $0x21c] sm:%s45] %v324
      %v326 = vld [vmem:[%s52 + $0x218] sm:%s45]
      %327 = vst [vmem:[%s53 + $0x220] sm:%s45] %v326
      %v328 = vld [vmem:[%s52 + $0x224] sm:%s45]
      %329 = vst [vmem:[%s53 + $0x224] sm:%s45] %v328
      %v330 = vld [vmem:[%s52 + $0x228] sm:%s45]
      %331 = vst [vmem:[%s53 + $0x228] sm:%s45] %v330
      %v332 = vld [vmem:[%s52 + $0x234] sm:%s45]
      %333 = vst [vmem:[%s53 + $0x22c] sm:%s45] %v332
      %v334 = vld [vmem:[%s52 + $0x22c] sm:%s45]
      %335 = vst [vmem:[%s53 + $0x230] sm:%s45] %v334
      %v336 = vld [vmem:[%s52 + $0x238] sm:%s45]
      %337 = vst [vmem:[%s53 + $0x234] sm:%s45] %v336
      %v338 = vld [vmem:[%s52 + $0x230] sm:%s45]
      %339 = vst [vmem:[%s53 + $0x238] sm:%s45] %v338
      %v340 = vld [vmem:[%s52 + $0x23c] sm:%s45]
      %341 = vst [vmem:[%s53 + $0x23c] sm:%s45] %v340
      %v342 = vld [vmem:[%s52 + $0x240] sm:%s45]
      %343 = vst [vmem:[%s53 + $0x240] sm:%s45] %v342
      %v344 = vld [vmem:[%s52 + $0x24c] sm:%s45]
      %345 = vst [vmem:[%s53 + $0x244] sm:%s45] %v344
      %v346 = vld [vmem:[%s52 + $0x244] sm:%s45]
      %347 = vst [vmem:[%s53 + $0x248] sm:%s45] %v346
      %v348 = vld [vmem:[%s52 + $0x250] sm:%s45]
      %349 = vst [vmem:[%s53 + $0x24c] sm:%s45] %v348
      %v350 = vld [vmem:[%s52 + $0x248] sm:%s45]
      %351 = vst [vmem:[%s53 + $0x250] sm:%s45] %v350
      %v352 = vld [vmem:[%s52 + $0x254] sm:%s45]
      %353 = vst [vmem:[%s53 + $0x254] sm:%s45] %v352
      %v354 = vld [vmem:[%s52 + $0x258] sm:%s45]
      %355 = vst [vmem:[%s53 + $0x258] sm:%s45] %v354
      %v356 = vld [vmem:[%s52 + $0x264] sm:%s45]
      %357 = vst [vmem:[%s53 + $0x25c] sm:%s45] %v356
      %v358 = vld [vmem:[%s52 + $0x25c] sm:%s45]
      %359 = vst [vmem:[%s53 + $0x260] sm:%s45] %v358
      %v360 = vld [vmem:[%s52 + $0x268] sm:%s45]
      %361 = vst [vmem:[%s53 + $0x264] sm:%s45] %v360
      %v362 = vld [vmem:[%s52 + $0x260] sm:%s45]
      %363 = vst [vmem:[%s53 + $0x268] sm:%s45] %v362
      %v364 = vld [vmem:[%s52 + $0x26c] sm:%s45]
      %365 = vst [vmem:[%s53 + $0x26c] sm:%s45] %v364
      %v366 = vld [vmem:[%s52 + $0x270] sm:%s45]
      %367 = vst [vmem:[%s53 + $0x270] sm:%s45] %v366
      %v368 = vld [vmem:[%s52 + $0x27c] sm:%s45]
      %369 = vst [vmem:[%s53 + $0x274] sm:%s45] %v368
      %v370 = vld [vmem:[%s52 + $0x274] sm:%s45]
      %371 = vst [vmem:[%s53 + $0x278] sm:%s45] %v370
      %v372 = vld [vmem:[%s52 + $0x280] sm:%s45]
      %373 = vst [vmem:[%s53 + $0x27c] sm:%s45] %v372
      %v374 = vld [vmem:[%s52 + $0x278] sm:%s45]
      %375 = vst [vmem:[%s53 + $0x280] sm:%s45] %v374
      %v376 = vld [vmem:[%s52 + $0x284] sm:%s45]
      %377 = vst [vmem:[%s53 + $0x284] sm:%s45] %v376
      %v378 = vld [vmem:[%s52 + $0x288] sm:%s45]
      %379 = vst [vmem:[%s53 + $0x288] sm:%s45] %v378
      %v380 = vld [vmem:[%s52 + $0x294] sm:%s45]
      %381 = vst [vmem:[%s53 + $0x28c] sm:%s45] %v380
      %v382 = vld [vmem:[%s52 + $0x28c] sm:%s45]
      %383 = vst [vmem:[%s53 + $0x290] sm:%s45] %v382
      %v384 = vld [vmem:[%s52 + $0x298] sm:%s45]
      %385 = vst [vmem:[%s53 + $0x294] sm:%s45] %v384
      %v386 = vld [vmem:[%s52 + $0x290] sm:%s45]
      %387 = vst [vmem:[%s53 + $0x298] sm:%s45] %v386
      %v388 = vld [vmem:[%s52 + $0x29c] sm:%s45]
      %389 = vst [vmem:[%s53 + $0x29c] sm:%s45] %v388
      %v390 = vld [vmem:[%s52 + $0x2a0] sm:%s45]
      %391 = vst [vmem:[%s53 + $0x2a0] sm:%s45] %v390
      %v392 = vld [vmem:[%s52 + $0x2ac] sm:%s45]
      %393 = vst [vmem:[%s53 + $0x2a4] sm:%s45] %v392
      %v394 = vld [vmem:[%s52 + $0x2a4] sm:%s45]
      %395 = vst [vmem:[%s53 + $0x2a8] sm:%s45] %v394
      %v396 = vld [vmem:[%s52 + $0x2b0] sm:%s45]
      %397 = vst [vmem:[%s53 + $0x2ac] sm:%s45] %v396
      %v398 = vld [vmem:[%s52 + $0x2a8] sm:%s45]
      %399 = vst [vmem:[%s53 + $0x2b0] sm:%s45] %v398
      %v400 = vld [vmem:[%s52 + $0x2b4] sm:%s45]
      %401 = vst [vmem:[%s53 + $0x2b4] sm:%s45] %v400
      %v402 = vld [vmem:[%s52 + $0x2b8] sm:%s45]
      %403 = vst [vmem:[%s53 + $0x2b8] sm:%s45] %v402
      %v404 = vld [vmem:[%s52 + $0x2c4] sm:%s45]
      %405 = vst [vmem:[%s53 + $0x2bc] sm:%s45] %v404
      %v406 = vld [vmem:[%s52 + $0x2bc] sm:%s45]
      %407 = vst [vmem:[%s53 + $0x2c0] sm:%s45] %v406
      %v408 = vld [vmem:[%s52 + $0x2c8] sm:%s45]
      %409 = vst [vmem:[%s53 + $0x2c4] sm:%s45] %v408
      %v410 = vld [vmem:[%s52 + $0x2c0] sm:%s45]
      %411 = vst [vmem:[%s53 + $0x2c8] sm:%s45] %v410
      %v412 = vld [vmem:[%s52 + $0x2cc] sm:%s45]
      %413 = vst [vmem:[%s53 + $0x2cc] sm:%s45] %v412
      %v414 = vld [vmem:[%s52 + $0x2d0] sm:%s45]
      %415 = vst [vmem:[%s53 + $0x2d0] sm:%s45] %v414
      %v416 = vld [vmem:[%s52 + $0x2dc] sm:%s45]
      %417 = vst [vmem:[%s53 + $0x2d4] sm:%s45] %v416
      %v418 = vld [vmem:[%s52 + $0x2d4] sm:%s45]
      %419 = vst [vmem:[%s53 + $0x2d8] sm:%s45] %v418
      %v420 = vld [vmem:[%s52 + $0x2e0] sm:%s45]
      %421 = vst [vmem:[%s53 + $0x2dc] sm:%s45] %v420
      %v422 = vld [vmem:[%s52 + $0x2d8] sm:%s45]
      %423 = vst [vmem:[%s53 + $0x2e0] sm:%s45] %v422
      %v424 = vld [vmem:[%s52 + $0x2e4] sm:%s45]
      %425 = vst [vmem:[%s53 + $0x2e4] sm:%s45] %v424
      %v426 = vld [vmem:[%s52 + $0x2e8] sm:%s45]
      %427 = vst [vmem:[%s53 + $0x2e8] sm:%s45] %v426
      %v428 = vld [vmem:[%s52 + $0x2f4] sm:%s45]
      %429 = vst [vmem:[%s53 + $0x2ec] sm:%s45] %v428
      %v430 = vld [vmem:[%s52 + $0x2ec] sm:%s45]
      %431 = vst [vmem:[%s53 + $0x2f0] sm:%s45] %v430
      %v432 = vld [vmem:[%s52 + $0x2f8] sm:%s45]
      %433 = vst [vmem:[%s53 + $0x2f4] sm:%s45] %v432
      %v434 = vld [vmem:[%s52 + $0x2f0] sm:%s45]
      %435 = vst [vmem:[%s53 + $0x2f8] sm:%s45] %v434
      %v436 = vld [vmem:[%s52 + $0x2fc] sm:%s45]
      %437 = vst [vmem:[%s53 + $0x2fc] sm:%s45] %v436
    $region50: #{forward.1} parent=44 // loop_footer
      %s51 = sadd.s32 1, %s47
    $region51: #{forward.1} parent=44 // loop_footer_branch
      %46 = sbr.rel target = $region47
    $region52: #{forward.1} parent=44 // loop_exit
      _
  $region45: #{forward.1} parent=0 // pred_fallthru
    _
  // Predicated region
  $region71: #{forward.1} parent=0 // pred_check
    _
  $region72: #{forward.1} parent=0 // pred_check_branch
    %851 = sbr.rel (0) target = $region74
  $region73: #{forward.1} parent=0 // pred_region
    %852 = vsyncadd [#allocation5], 12288
  $region74: #{forward.1} parent=0 // pred_fallthru
    _
  %s853 = scalar_lea.sflag [#allocation5], 1
  %p855 = scmp.lt.u32.totalorder 4, 8
  %p856 = pneg %p855
  // Predicated region
  $region75: #{forward.1} parent=0 // pred_check
    _
  $region76: #{forward.1} parent=0 // pred_check_branch
    %858 = sbr.rel (%p855) target = $region78
  $region77: #{forward.1} parent=0 // pred_region
    %s1063 = sand.u32 4, 7
    %p1064 = scmp.eq.s32.totalorder %s1063, 0
    %p1065 = pneg %p1064
    // Predicated region
    $region90: #{forward.1} parent=77 // pred_check
      _
    $region91: #{forward.1} parent=77 // pred_check_branch
      %1067 = sbr.rel (%p1064) target = $region93
    $region92: #{forward.1} parent=77 // pred_region
      %s1068 = sand.u32 4, 7
      %s1069 = ssub.s32 4, %s1068
      %s1070 = scalar_lea.vmem %s6, %s1069
      %s1071 = ssub.s32 4, %s1068
      %s1072 = scalar_lea.vmem [#allocation4], %s1071
      loop: start=0, step=1, limit=1
      $region94: #{forward.1} parent=92 // loop_pre_header
        _
      $region95: #{forward.1} parent=92 // loop_header
        %s1074 = sphi 0, %s1078
        %p1075 = scmp.ge.s32.totalorder %s1074, 1
        %s1079 = sphi %s6, %s6
        %s1080 = sphi [#allocation4], [#allocation4]
      $region96: #{forward.1} parent=92 // loop_header_branch
        %1077 = sbr.rel (%p1075) target = $region100
      $region97: #{forward.1} parent=92 // loop_body
        _
      $region98: #{forward.1} parent=92 // loop_footer
        %s1078 = sadd.s32 1, %s1074
      $region99: #{forward.1} parent=92 // loop_footer_branch
        %1073 = sbr.rel target = $region95
      $region100: #{forward.1} parent=92 // loop_exit
        _
      %s1081 = sshllo.u32 0, %s1068
      loop: start=0, step=1, limit=1
      $region101: #{forward.1} parent=92 // loop_pre_header
        _
      $region102: #{forward.1} parent=92 // loop_header
        %s1083 = sphi 0, %s1087
        %p1084 = scmp.ge.s32.totalorder %s1083, 1
        %s1088 = sphi %s1070, %s1070
        %s1089 = sphi %s1072, %s1072
      $region103: #{forward.1} parent=92 // loop_header_branch
        %1086 = sbr.rel (%p1084) target = $region107
      $region104: #{forward.1} parent=92 // loop_body
        %v1090 = vld [vmem:[%s1088] sm:%s1081]
        %1091 = vst [vmem:[%s1089] sm:%s1081] %v1090
        %v1092 = vld [vmem:[%s1088 + $0xc] sm:%s1081]
        %1093 = vst [vmem:[%s1089 + $0x4] sm:%s1081] %v1092
        %v1094 = vld [vmem:[%s1088 + $0x4] sm:%s1081]
        %1095 = vst [vmem:[%s1089 + $0x8] sm:%s1081] %v1094
        %v1096 = vld [vmem:[%s1088 + $0x10] sm:%s1081]
        %1097 = vst [vmem:[%s1089 + $0xc] sm:%s1081] %v1096
        %v1098 = vld [vmem:[%s1088 + $0x8] sm:%s1081]
        %1099 = vst [vmem:[%s1089 + $0x10] sm:%s1081] %v1098
        %v1100 = vld [vmem:[%s1088 + $0x14] sm:%s1081]
        %1101 = vst [vmem:[%s1089 + $0x14] sm:%s1081] %v1100
        %v1102 = vld [vmem:[%s1088 + $0x18] sm:%s1081]
        %1103 = vst [vmem:[%s1089 + $0x18] sm:%s1081] %v1102
        %v1104 = vld [vmem:[%s1088 + $0x24] sm:%s1081]
        %1105 = vst [vmem:[%s1089 + $0x1c] sm:%s1081] %v1104
        %v1106 = vld [vmem:[%s1088 + $0x1c] sm:%s1081]
        %1107 = vst [vmem:[%s1089 + $0x20] sm:%s1081] %v1106
        %v1108 = vld [vmem:[%s1088 + $0x28] sm:%s1081]
        %1109 = vst [vmem:[%s1089 + $0x24] sm:%s1081] %v1108
        %v1110 = vld [vmem:[%s1088 + $0x20] sm:%s1081]
        %1111 = vst [vmem:[%s1089 + $0x28] sm:%s1081] %v1110
        %v1112 = vld [vmem:[%s1088 + $0x2c] sm:%s1081]
        %1113 = vst [vmem:[%s1089 + $0x2c] sm:%s1081] %v1112
        %v1114 = vld [vmem:[%s1088 + $0x30] sm:%s1081]
        %1115 = vst [vmem:[%s1089 + $0x30] sm:%s1081] %v1114
        %v1116 = vld [vmem:[%s1088 + $0x3c] sm:%s1081]
        %1117 = vst [vmem:[%s1089 + $0x34] sm:%s1081] %v1116
        %v1118 = vld [vmem:[%s1088 + $0x34] sm:%s1081]
        %1119 = vst [vmem:[%s1089 + $0x38] sm:%s1081] %v1118
        %v1120 = vld [vmem:[%s1088 + $0x40] sm:%s1081]
        %1121 = vst [vmem:[%s1089 + $0x3c] sm:%s1081] %v1120
        %v1122 = vld [vmem:[%s1088 + $0x38] sm:%s1081]
        %1123 = vst [vmem:[%s1089 + $0x40] sm:%s1081] %v1122
        %v1124 = vld [vmem:[%s1088 + $0x44] sm:%s1081]
        %1125 = vst [vmem:[%s1089 + $0x44] sm:%s1081] %v1124
        %v1126 = vld [vmem:[%s1088 + $0x48] sm:%s1081]
        %1127 = vst [vmem:[%s1089 + $0x48] sm:%s1081] %v1126
        %v1128 = vld [vmem:[%s1088 + $0x54] sm:%s1081]
        %1129 = vst [vmem:[%s1089 + $0x4c] sm:%s1081] %v1128
        %v1130 = vld [vmem:[%s1088 + $0x4c] sm:%s1081]
        %1131 = vst [vmem:[%s1089 + $0x50] sm:%s1081] %v1130
        %v1132 = vld [vmem:[%s1088 + $0x58] sm:%s1081]
        %1133 = vst [vmem:[%s1089 + $0x54] sm:%s1081] %v1132
        %v1134 = vld [vmem:[%s1088 + $0x50] sm:%s1081]
        %1135 = vst [vmem:[%s1089 + $0x58] sm:%s1081] %v1134
        %v1136 = vld [vmem:[%s1088 + $0x5c] sm:%s1081]
        %1137 = vst [vmem:[%s1089 + $0x5c] sm:%s1081] %v1136
        %v1138 = vld [vmem:[%s1088 + $0x60] sm:%s1081]
        %1139 = vst [vmem:[%s1089 + $0x60] sm:%s1081] %v1138
        %v1140 = vld [vmem:[%s1088 + $0x6c] sm:%s1081]
        %1141 = vst [vmem:[%s1089 + $0x64] sm:%s1081] %v1140
        %v1142 = vld [vmem:[%s1088 + $0x64] sm:%s1081]
        %1143 = vst [vmem:[%s1089 + $0x68] sm:%s1081] %v1142
        %v1144 = vld [vmem:[%s1088 + $0x70] sm:%s1081]
        %1145 = vst [vmem:[%s1089 + $0x6c] sm:%s1081] %v1144
        %v1146 = vld [vmem:[%s1088 + $0x68] sm:%s1081]
        %1147 = vst [vmem:[%s1089 + $0x70] sm:%s1081] %v1146
        %v1148 = vld [vmem:[%s1088 + $0x74] sm:%s1081]
        %1149 = vst [vmem:[%s1089 + $0x74] sm:%s1081] %v1148
        %v1150 = vld [vmem:[%s1088 + $0x78] sm:%s1081]
        %1151 = vst [vmem:[%s1089 + $0x78] sm:%s1081] %v1150
        %v1152 = vld [vmem:[%s1088 + $0x84] sm:%s1081]
        %1153 = vst [vmem:[%s1089 + $0x7c] sm:%s1081] %v1152
        %v1154 = vld [vmem:[%s1088 + $0x7c] sm:%s1081]
        %1155 = vst [vmem:[%s1089 + $0x80] sm:%s1081] %v1154
        %v1156 = vld [vmem:[%s1088 + $0x88] sm:%s1081]
        %1157 = vst [vmem:[%s1089 + $0x84] sm:%s1081] %v1156
        %v1158 = vld [vmem:[%s1088 + $0x80] sm:%s1081]
        %1159 = vst [vmem:[%s1089 + $0x88] sm:%s1081] %v1158
        %v1160 = vld [vmem:[%s1088 + $0x8c] sm:%s1081]
        %1161 = vst [vmem:[%s1089 + $0x8c] sm:%s1081] %v1160
        %v1162 = vld [vmem:[%s1088 + $0x90] sm:%s1081]
        %1163 = vst [vmem:[%s1089 + $0x90] sm:%s1081] %v1162
        %v1164 = vld [vmem:[%s1088 + $0x9c] sm:%s1081]
        %1165 = vst [vmem:[%s1089 + $0x94] sm:%s1081] %v1164
        %v1166 = vld [vmem:[%s1088 + $0x94] sm:%s1081]
        %1167 = vst [vmem:[%s1089 + $0x98] sm:%s1081] %v1166
        %v1168 = vld [vmem:[%s1088 + $0xa0] sm:%s1081]
        %1169 = vst [vmem:[%s1089 + $0x9c] sm:%s1081] %v1168
        %v1170 = vld [vmem:[%s1088 + $0x98] sm:%s1081]
        %1171 = vst [vmem:[%s1089 + $0xa0] sm:%s1081] %v1170
        %v1172 = vld [vmem:[%s1088 + $0xa4] sm:%s1081]
        %1173 = vst [vmem:[%s1089 + $0xa4] sm:%s1081] %v1172
        %v1174 = vld [vmem:[%s1088 + $0xa8] sm:%s1081]
        %1175 = vst [vmem:[%s1089 + $0xa8] sm:%s1081] %v1174
        %v1176 = vld [vmem:[%s1088 + $0xb4] sm:%s1081]
        %1177 = vst [vmem:[%s1089 + $0xac] sm:%s1081] %v1176
        %v1178 = vld [vmem:[%s1088 + $0xac] sm:%s1081]
        %1179 = vst [vmem:[%s1089 + $0xb0] sm:%s1081] %v1178
        %v1180 = vld [vmem:[%s1088 + $0xb8] sm:%s1081]
        %1181 = vst [vmem:[%s1089 + $0xb4] sm:%s1081] %v1180
        %v1182 = vld [vmem:[%s1088 + $0xb0] sm:%s1081]
        %1183 = vst [vmem:[%s1089 + $0xb8] sm:%s1081] %v1182
        %v1184 = vld [vmem:[%s1088 + $0xbc] sm:%s1081]
        %1185 = vst [vmem:[%s1089 + $0xbc] sm:%s1081] %v1184
        %v1186 = vld [vmem:[%s1088 + $0xc0] sm:%s1081]
        %1187 = vst [vmem:[%s1089 + $0xc0] sm:%s1081] %v1186
        %v1188 = vld [vmem:[%s1088 + $0xcc] sm:%s1081]
        %1189 = vst [vmem:[%s1089 + $0xc4] sm:%s1081] %v1188
        %v1190 = vld [vmem:[%s1088 + $0xc4] sm:%s1081]
        %1191 = vst [vmem:[%s1089 + $0xc8] sm:%s1081] %v1190
        %v1192 = vld [vmem:[%s1088 + $0xd0] sm:%s1081]
        %1193 = vst [vmem:[%s1089 + $0xcc] sm:%s1081] %v1192
        %v1194 = vld [vmem:[%s1088 + $0xc8] sm:%s1081]
        %1195 = vst [vmem:[%s1089 + $0xd0] sm:%s1081] %v1194
        %v1196 = vld [vmem:[%s1088 + $0xd4] sm:%s1081]
        %1197 = vst [vmem:[%s1089 + $0xd4] sm:%s1081] %v1196
        %v1198 = vld [vmem:[%s1088 + $0xd8] sm:%s1081]
        %1199 = vst [vmem:[%s1089 + $0xd8] sm:%s1081] %v1198
        %v1200 = vld [vmem:[%s1088 + $0xe4] sm:%s1081]
        %1201 = vst [vmem:[%s1089 + $0xdc] sm:%s1081] %v1200
        %v1202 = vld [vmem:[%s1088 + $0xdc] sm:%s1081]
        %1203 = vst [vmem:[%s1089 + $0xe0] sm:%s1081] %v1202
        %v1204 = vld [vmem:[%s1088 + $0xe8] sm:%s1081]
        %1205 = vst [vmem:[%s1089 + $0xe4] sm:%s1081] %v1204
        %v1206 = vld [vmem:[%s1088 + $0xe0] sm:%s1081]
        %1207 = vst [vmem:[%s1089 + $0xe8] sm:%s1081] %v1206
        %v1208 = vld [vmem:[%s1088 + $0xec] sm:%s1081]
        %1209 = vst [vmem:[%s1089 + $0xec] sm:%s1081] %v1208
        %v1210 = vld [vmem:[%s1088 + $0xf0] sm:%s1081]
        %1211 = vst [vmem:[%s1089 + $0xf0] sm:%s1081] %v1210
        %v1212 = vld [vmem:[%s1088 + $0xfc] sm:%s1081]
        %1213 = vst [vmem:[%s1089 + $0xf4] sm:%s1081] %v1212
        %v1214 = vld [vmem:[%s1088 + $0xf4] sm:%s1081]
        %1215 = vst [vmem:[%s1089 + $0xf8] sm:%s1081] %v1214
        %v1216 = vld [vmem:[%s1088 + $0x100] sm:%s1081]
        %1217 = vst [vmem:[%s1089 + $0xfc] sm:%s1081] %v1216
        %v1218 = vld [vmem:[%s1088 + $0xf8] sm:%s1081]
        %1219 = vst [vmem:[%s1089 + $0x100] sm:%s1081] %v1218
        %v1220 = vld [vmem:[%s1088 + $0x104] sm:%s1081]
        %1221 = vst [vmem:[%s1089 + $0x104] sm:%s1081] %v1220
        %v1222 = vld [vmem:[%s1088 + $0x108] sm:%s1081]
        %1223 = vst [vmem:[%s1089 + $0x108] sm:%s1081] %v1222
        %v1224 = vld [vmem:[%s1088 + $0x114] sm:%s1081]
        %1225 = vst [vmem:[%s1089 + $0x10c] sm:%s1081] %v1224
        %v1226 = vld [vmem:[%s1088 + $0x10c] sm:%s1081]
        %1227 = vst [vmem:[%s1089 + $0x110] sm:%s1081] %v1226
        %v1228 = vld [vmem:[%s1088 + $0x118] sm:%s1081]
        %1229 = vst [vmem:[%s1089 + $0x114] sm:%s1081] %v1228
        %v1230 = vld [vmem:[%s1088 + $0x110] sm:%s1081]
        %1231 = vst [vmem:[%s1089 + $0x118] sm:%s1081] %v1230
        %v1232 = vld [vmem:[%s1088 + $0x11c] sm:%s1081]
        %1233 = vst [vmem:[%s1089 + $0x11c] sm:%s1081] %v1232
        %v1234 = vld [vmem:[%s1088 + $0x120] sm:%s1081]
        %1235 = vst [vmem:[%s1089 + $0x120] sm:%s1081] %v1234
        %v1236 = vld [vmem:[%s1088 + $0x12c] sm:%s1081]
        %1237 = vst [vmem:[%s1089 + $0x124] sm:%s1081] %v1236
        %v1238 = vld [vmem:[%s1088 + $0x124] sm:%s1081]
        %1239 = vst [vmem:[%s1089 + $0x128] sm:%s1081] %v1238
        %v1240 = vld [vmem:[%s1088 + $0x130] sm:%s1081]
        %1241 = vst [vmem:[%s1089 + $0x12c] sm:%s1081] %v1240
        %v1242 = vld [vmem:[%s1088 + $0x128] sm:%s1081]
        %1243 = vst [vmem:[%s1089 + $0x130] sm:%s1081] %v1242
        %v1244 = vld [vmem:[%s1088 + $0x134] sm:%s1081]
        %1245 = vst [vmem:[%s1089 + $0x134] sm:%s1081] %v1244
        %v1246 = vld [vmem:[%s1088 + $0x138] sm:%s1081]
        %1247 = vst [vmem:[%s1089 + $0x138] sm:%s1081] %v1246
        %v1248 = vld [vmem:[%s1088 + $0x144] sm:%s1081]
        %1249 = vst [vmem:[%s1089 + $0x13c] sm:%s1081] %v1248
        %v1250 = vld [vmem:[%s1088 + $0x13c] sm:%s1081]
        %1251 = vst [vmem:[%s1089 + $0x140] sm:%s1081] %v1250
        %v1252 = vld [vmem:[%s1088 + $0x148] sm:%s1081]
        %1253 = vst [vmem:[%s1089 + $0x144] sm:%s1081] %v1252
        %v1254 = vld [vmem:[%s1088 + $0x140] sm:%s1081]
        %1255 = vst [vmem:[%s1089 + $0x148] sm:%s1081] %v1254
        %v1256 = vld [vmem:[%s1088 + $0x14c] sm:%s1081]
        %1257 = vst [vmem:[%s1089 + $0x14c] sm:%s1081] %v1256
        %v1258 = vld [vmem:[%s1088 + $0x150] sm:%s1081]
        %1259 = vst [vmem:[%s1089 + $0x150] sm:%s1081] %v1258
        %v1260 = vld [vmem:[%s1088 + $0x15c] sm:%s1081]
        %1261 = vst [vmem:[%s1089 + $0x154] sm:%s1081] %v1260
        %v1262 = vld [vmem:[%s1088 + $0x154] sm:%s1081]
        %1263 = vst [vmem:[%s1089 + $0x158] sm:%s1081] %v1262
        %v1264 = vld [vmem:[%s1088 + $0x160] sm:%s1081]
        %1265 = vst [vmem:[%s1089 + $0x15c] sm:%s1081] %v1264
        %v1266 = vld [vmem:[%s1088 + $0x158] sm:%s1081]
        %1267 = vst [vmem:[%s1089 + $0x160] sm:%s1081] %v1266
        %v1268 = vld [vmem:[%s1088 + $0x164] sm:%s1081]
        %1269 = vst [vmem:[%s1089 + $0x164] sm:%s1081] %v1268
        %v1270 = vld [vmem:[%s1088 + $0x168] sm:%s1081]
        %1271 = vst [vmem:[%s1089 + $0x168] sm:%s1081] %v1270
        %v1272 = vld [vmem:[%s1088 + $0x174] sm:%s1081]
        %1273 = vst [vmem:[%s1089 + $0x16c] sm:%s1081] %v1272
        %v1274 = vld [vmem:[%s1088 + $0x16c] sm:%s1081]
        %1275 = vst [vmem:[%s1089 + $0x170] sm:%s1081] %v1274
        %v1276 = vld [vmem:[%s1088 + $0x178] sm:%s1081]
        %1277 = vst [vmem:[%s1089 + $0x174] sm:%s1081] %v1276
        %v1278 = vld [vmem:[%s1088 + $0x170] sm:%s1081]
        %1279 = vst [vmem:[%s1089 + $0x178] sm:%s1081] %v1278
        %v1280 = vld [vmem:[%s1088 + $0x17c] sm:%s1081]
        %1281 = vst [vmem:[%s1089 + $0x17c] sm:%s1081] %v1280
      $region105: #{forward.1} parent=92 // loop_footer
        %s1087 = sadd.s32 1, %s1083
      $region106: #{forward.1} parent=92 // loop_footer_branch
        %1082 = sbr.rel target = $region102
      $region107: #{forward.1} parent=92 // loop_exit
        _
    $region93: #{forward.1} parent=77 // pred_fallthru
      _
  $region78: #{forward.1} parent=0 // pred_fallthru
    _
  // Predicated region
  $region79: #{forward.1} parent=0 // pred_check
    %p859 = pneg %p855
  $region80: #{forward.1} parent=0 // pred_check_branch
    %861 = sbr.rel (%p859) target = $region82
  $region81: #{forward.1} parent=0 // pred_region
    %s862 = sshllo.u32 0, 4
    loop: start=0, step=1, limit=1
    $region83: #{forward.1} parent=81 // loop_pre_header
      _
    $region84: #{forward.1} parent=81 // loop_header
      %s864 = sphi 0, %s868
      %p865 = scmp.ge.s32.totalorder %s864, 1
      %s869 = sphi %s6, %s6
      %s870 = sphi [#allocation4], [#allocation4]
    $region85: #{forward.1} parent=81 // loop_header_branch
      %867 = sbr.rel (%p865) target = $region89
    $region86: #{forward.1} parent=81 // loop_body
      %v871 = vld [vmem:[%s869] sm:%s862]
      %872 = vst [vmem:[%s870] sm:%s862] %v871
      %v873 = vld [vmem:[%s869 + $0xc] sm:%s862]
      %874 = vst [vmem:[%s870 + $0x4] sm:%s862] %v873
      %v875 = vld [vmem:[%s869 + $0x4] sm:%s862]
      %876 = vst [vmem:[%s870 + $0x8] sm:%s862] %v875
      %v877 = vld [vmem:[%s869 + $0x10] sm:%s862]
      %878 = vst [vmem:[%s870 + $0xc] sm:%s862] %v877
      %v879 = vld [vmem:[%s869 + $0x8] sm:%s862]
      %880 = vst [vmem:[%s870 + $0x10] sm:%s862] %v879
      %v881 = vld [vmem:[%s869 + $0x14] sm:%s862]
      %882 = vst [vmem:[%s870 + $0x14] sm:%s862] %v881
      %v883 = vld [vmem:[%s869 + $0x18] sm:%s862]
      %884 = vst [vmem:[%s870 + $0x18] sm:%s862] %v883
      %v885 = vld [vmem:[%s869 + $0x24] sm:%s862]
      %886 = vst [vmem:[%s870 + $0x1c] sm:%s862] %v885
      %v887 = vld [vmem:[%s869 + $0x1c] sm:%s862]
      %888 = vst [vmem:[%s870 + $0x20] sm:%s862] %v887
      %v889 = vld [vmem:[%s869 + $0x28] sm:%s862]
      %890 = vst [vmem:[%s870 + $0x24] sm:%s862] %v889
      %v891 = vld [vmem:[%s869 + $0x20] sm:%s862]
      %892 = vst [vmem:[%s870 + $0x28] sm:%s862] %v891
      %v893 = vld [vmem:[%s869 + $0x2c] sm:%s862]
      %894 = vst [vmem:[%s870 + $0x2c] sm:%s862] %v893
      %v895 = vld [vmem:[%s869 + $0x30] sm:%s862]
      %896 = vst [vmem:[%s870 + $0x30] sm:%s862] %v895
      %v897 = vld [vmem:[%s869 + $0x3c] sm:%s862]
      %898 = vst [vmem:[%s870 + $0x34] sm:%s862] %v897
      %v899 = vld [vmem:[%s869 + $0x34] sm:%s862]
      %900 = vst [vmem:[%s870 + $0x38] sm:%s862] %v899
      %v901 = vld [vmem:[%s869 + $0x40] sm:%s862]
      %902 = vst [vmem:[%s870 + $0x3c] sm:%s862] %v901
      %v903 = vld [vmem:[%s869 + $0x38] sm:%s862]
      %904 = vst [vmem:[%s870 + $0x40] sm:%s862] %v903
      %v905 = vld [vmem:[%s869 + $0x44] sm:%s862]
      %906 = vst [vmem:[%s870 + $0x44] sm:%s862] %v905
      %v907 = vld [vmem:[%s869 + $0x48] sm:%s862]
      %908 = vst [vmem:[%s870 + $0x48] sm:%s862] %v907
      %v909 = vld [vmem:[%s869 + $0x54] sm:%s862]
      %910 = vst [vmem:[%s870 + $0x4c] sm:%s862] %v909
      %v911 = vld [vmem:[%s869 + $0x4c] sm:%s862]
      %912 = vst [vmem:[%s870 + $0x50] sm:%s862] %v911
      %v913 = vld [vmem:[%s869 + $0x58] sm:%s862]
      %914 = vst [vmem:[%s870 + $0x54] sm:%s862] %v913
      %v915 = vld [vmem:[%s869 + $0x50] sm:%s862]
      %916 = vst [vmem:[%s870 + $0x58] sm:%s862] %v915
      %v917 = vld [vmem:[%s869 + $0x5c] sm:%s862]
      %918 = vst [vmem:[%s870 + $0x5c] sm:%s862] %v917
      %v919 = vld [vmem:[%s869 + $0x60] sm:%s862]
      %920 = vst [vmem:[%s870 + $0x60] sm:%s862] %v919
      %v921 = vld [vmem:[%s869 + $0x6c] sm:%s862]
      %922 = vst [vmem:[%s870 + $0x64] sm:%s862] %v921
      %v923 = vld [vmem:[%s869 + $0x64] sm:%s862]
      %924 = vst [vmem:[%s870 + $0x68] sm:%s862] %v923
      %v925 = vld [vmem:[%s869 + $0x70] sm:%s862]
      %926 = vst [vmem:[%s870 + $0x6c] sm:%s862] %v925
      %v927 = vld [vmem:[%s869 + $0x68] sm:%s862]
      %928 = vst [vmem:[%s870 + $0x70] sm:%s862] %v927
      %v929 = vld [vmem:[%s869 + $0x74] sm:%s862]
      %930 = vst [vmem:[%s870 + $0x74] sm:%s862] %v929
      %v931 = vld [vmem:[%s869 + $0x78] sm:%s862]
      %932 = vst [vmem:[%s870 + $0x78] sm:%s862] %v931
      %v933 = vld [vmem:[%s869 + $0x84] sm:%s862]
      %934 = vst [vmem:[%s870 + $0x7c] sm:%s862] %v933
      %v935 = vld [vmem:[%s869 + $0x7c] sm:%s862]
      %936 = vst [vmem:[%s870 + $0x80] sm:%s862] %v935
      %v937 = vld [vmem:[%s869 + $0x88] sm:%s862]
      %938 = vst [vmem:[%s870 + $0x84] sm:%s862] %v937
      %v939 = vld [vmem:[%s869 + $0x80] sm:%s862]
      %940 = vst [vmem:[%s870 + $0x88] sm:%s862] %v939
      %v941 = vld [vmem:[%s869 + $0x8c] sm:%s862]
      %942 = vst [vmem:[%s870 + $0x8c] sm:%s862] %v941
      %v943 = vld [vmem:[%s869 + $0x90] sm:%s862]
      %944 = vst [vmem:[%s870 + $0x90] sm:%s862] %v943
      %v945 = vld [vmem:[%s869 + $0x9c] sm:%s862]
      %946 = vst [vmem:[%s870 + $0x94] sm:%s862] %v945
      %v947 = vld [vmem:[%s869 + $0x94] sm:%s862]
      %948 = vst [vmem:[%s870 + $0x98] sm:%s862] %v947
      %v949 = vld [vmem:[%s869 + $0xa0] sm:%s862]
      %950 = vst [vmem:[%s870 + $0x9c] sm:%s862] %v949
      %v951 = vld [vmem:[%s869 + $0x98] sm:%s862]
      %952 = vst [vmem:[%s870 + $0xa0] sm:%s862] %v951
      %v953 = vld [vmem:[%s869 + $0xa4] sm:%s862]
      %954 = vst [vmem:[%s870 + $0xa4] sm:%s862] %v953
      %v955 = vld [vmem:[%s869 + $0xa8] sm:%s862]
      %956 = vst [vmem:[%s870 + $0xa8] sm:%s862] %v955
      %v957 = vld [vmem:[%s869 + $0xb4] sm:%s862]
      %958 = vst [vmem:[%s870 + $0xac] sm:%s862] %v957
      %v959 = vld [vmem:[%s869 + $0xac] sm:%s862]
      %960 = vst [vmem:[%s870 + $0xb0] sm:%s862] %v959
      %v961 = vld [vmem:[%s869 + $0xb8] sm:%s862]
      %962 = vst [vmem:[%s870 + $0xb4] sm:%s862] %v961
      %v963 = vld [vmem:[%s869 + $0xb0] sm:%s862]
      %964 = vst [vmem:[%s870 + $0xb8] sm:%s862] %v963
      %v965 = vld [vmem:[%s869 + $0xbc] sm:%s862]
      %966 = vst [vmem:[%s870 + $0xbc] sm:%s862] %v965
      %v967 = vld [vmem:[%s869 + $0xc0] sm:%s862]
      %968 = vst [vmem:[%s870 + $0xc0] sm:%s862] %v967
      %v969 = vld [vmem:[%s869 + $0xcc] sm:%s862]
      %970 = vst [vmem:[%s870 + $0xc4] sm:%s862] %v969
      %v971 = vld [vmem:[%s869 + $0xc4] sm:%s862]
      %972 = vst [vmem:[%s870 + $0xc8] sm:%s862] %v971
      %v973 = vld [vmem:[%s869 + $0xd0] sm:%s862]
      %974 = vst [vmem:[%s870 + $0xcc] sm:%s862] %v973
      %v975 = vld [vmem:[%s869 + $0xc8] sm:%s862]
      %976 = vst [vmem:[%s870 + $0xd0] sm:%s862] %v975
      %v977 = vld [vmem:[%s869 + $0xd4] sm:%s862]
      %978 = vst [vmem:[%s870 + $0xd4] sm:%s862] %v977
      %v979 = vld [vmem:[%s869 + $0xd8] sm:%s862]
      %980 = vst [vmem:[%s870 + $0xd8] sm:%s862] %v979
      %v981 = vld [vmem:[%s869 + $0xe4] sm:%s862]
      %982 = vst [vmem:[%s870 + $0xdc] sm:%s862] %v981
      %v983 = vld [vmem:[%s869 + $0xdc] sm:%s862]
      %984 = vst [vmem:[%s870 + $0xe0] sm:%s862] %v983
      %v985 = vld [vmem:[%s869 + $0xe8] sm:%s862]
      %986 = vst [vmem:[%s870 + $0xe4] sm:%s862] %v985
      %v987 = vld [vmem:[%s869 + $0xe0] sm:%s862]
      %988 = vst [vmem:[%s870 + $0xe8] sm:%s862] %v987
      %v989 = vld [vmem:[%s869 + $0xec] sm:%s862]
      %990 = vst [vmem:[%s870 + $0xec] sm:%s862] %v989
      %v991 = vld [vmem:[%s869 + $0xf0] sm:%s862]
      %992 = vst [vmem:[%s870 + $0xf0] sm:%s862] %v991
      %v993 = vld [vmem:[%s869 + $0xfc] sm:%s862]
      %994 = vst [vmem:[%s870 + $0xf4] sm:%s862] %v993
      %v995 = vld [vmem:[%s869 + $0xf4] sm:%s862]
      %996 = vst [vmem:[%s870 + $0xf8] sm:%s862] %v995
      %v997 = vld [vmem:[%s869 + $0x100] sm:%s862]
      %998 = vst [vmem:[%s870 + $0xfc] sm:%s862] %v997
      %v999 = vld [vmem:[%s869 + $0xf8] sm:%s862]
      %1000 = vst [vmem:[%s870 + $0x100] sm:%s862] %v999
      %v1001 = vld [vmem:[%s869 + $0x104] sm:%s862]
      %1002 = vst [vmem:[%s870 + $0x104] sm:%s862] %v1001
      %v1003 = vld [vmem:[%s869 + $0x108] sm:%s862]
      %1004 = vst [vmem:[%s870 + $0x108] sm:%s862] %v1003
      %v1005 = vld [vmem:[%s869 + $0x114] sm:%s862]
      %1006 = vst [vmem:[%s870 + $0x10c] sm:%s862] %v1005
      %v1007 = vld [vmem:[%s869 + $0x10c] sm:%s862]
      %1008 = vst [vmem:[%s870 + $0x110] sm:%s862] %v1007
      %v1009 = vld [vmem:[%s869 + $0x118] sm:%s862]
      %1010 = vst [vmem:[%s870 + $0x114] sm:%s862] %v1009
      %v1011 = vld [vmem:[%s869 + $0x110] sm:%s862]
      %1012 = vst [vmem:[%s870 + $0x118] sm:%s862] %v1011
      %v1013 = vld [vmem:[%s869 + $0x11c] sm:%s862]
      %1014 = vst [vmem:[%s870 + $0x11c] sm:%s862] %v1013
      %v1015 = vld [vmem:[%s869 + $0x120] sm:%s862]
      %1016 = vst [vmem:[%s870 + $0x120] sm:%s862] %v1015
      %v1017 = vld [vmem:[%s869 + $0x12c] sm:%s862]
      %1018 = vst [vmem:[%s870 + $0x124] sm:%s862] %v1017
      %v1019 = vld [vmem:[%s869 + $0x124] sm:%s862]
      %1020 = vst [vmem:[%s870 + $0x128] sm:%s862] %v1019
      %v1021 = vld [vmem:[%s869 + $0x130] sm:%s862]
      %1022 = vst [vmem:[%s870 + $0x12c] sm:%s862] %v1021
      %v1023 = vld [vmem:[%s869 + $0x128] sm:%s862]
      %1024 = vst [vmem:[%s870 + $0x130] sm:%s862] %v1023
      %v1025 = vld [vmem:[%s869 + $0x134] sm:%s862]
      %1026 = vst [vmem:[%s870 + $0x134] sm:%s862] %v1025
      %v1027 = vld [vmem:[%s869 + $0x138] sm:%s862]
      %1028 = vst [vmem:[%s870 + $0x138] sm:%s862] %v1027
      %v1029 = vld [vmem:[%s869 + $0x144] sm:%s862]
      %1030 = vst [vmem:[%s870 + $0x13c] sm:%s862] %v1029
      %v1031 = vld [vmem:[%s869 + $0x13c] sm:%s862]
      %1032 = vst [vmem:[%s870 + $0x140] sm:%s862] %v1031
      %v1033 = vld [vmem:[%s869 + $0x148] sm:%s862]
      %1034 = vst [vmem:[%s870 + $0x144] sm:%s862] %v1033
      %v1035 = vld [vmem:[%s869 + $0x140] sm:%s862]
      %1036 = vst [vmem:[%s870 + $0x148] sm:%s862] %v1035
      %v1037 = vld [vmem:[%s869 + $0x14c] sm:%s862]
      %1038 = vst [vmem:[%s870 + $0x14c] sm:%s862] %v1037
      %v1039 = vld [vmem:[%s869 + $0x150] sm:%s862]
      %1040 = vst [vmem:[%s870 + $0x150] sm:%s862] %v1039
      %v1041 = vld [vmem:[%s869 + $0x15c] sm:%s862]
      %1042 = vst [vmem:[%s870 + $0x154] sm:%s862] %v1041
      %v1043 = vld [vmem:[%s869 + $0x154] sm:%s862]
      %1044 = vst [vmem:[%s870 + $0x158] sm:%s862] %v1043
      %v1045 = vld [vmem:[%s869 + $0x160] sm:%s862]
      %1046 = vst [vmem:[%s870 + $0x15c] sm:%s862] %v1045
      %v1047 = vld [vmem:[%s869 + $0x158] sm:%s862]
      %1048 = vst [vmem:[%s870 + $0x160] sm:%s862] %v1047
      %v1049 = vld [vmem:[%s869 + $0x164] sm:%s862]
      %1050 = vst [vmem:[%s870 + $0x164] sm:%s862] %v1049
      %v1051 = vld [vmem:[%s869 + $0x168] sm:%s862]
      %1052 = vst [vmem:[%s870 + $0x168] sm:%s862] %v1051
      %v1053 = vld [vmem:[%s869 + $0x174] sm:%s862]
      %1054 = vst [vmem:[%s870 + $0x16c] sm:%s862] %v1053
      %v1055 = vld [vmem:[%s869 + $0x16c] sm:%s862]
      %1056 = vst [vmem:[%s870 + $0x170] sm:%s862] %v1055
      %v1057 = vld [vmem:[%s869 + $0x178] sm:%s862]
      %1058 = vst [vmem:[%s870 + $0x174] sm:%s862] %v1057
      %v1059 = vld [vmem:[%s869 + $0x170] sm:%s862]
      %1060 = vst [vmem:[%s870 + $0x178] sm:%s862] %v1059
      %v1061 = vld [vmem:[%s869 + $0x17c] sm:%s862]
      %1062 = vst [vmem:[%s870 + $0x17c] sm:%s862] %v1061
    $region87: #{forward.1} parent=81 // loop_footer
      %s868 = sadd.s32 1, %s864
    $region88: #{forward.1} parent=81 // loop_footer_branch
      %863 = sbr.rel target = $region84
    $region89: #{forward.1} parent=81 // loop_exit
      _
  $region82: #{forward.1} parent=0 // pred_fallthru
    _
  // Predicated region
  $region108: #{forward.1} parent=0 // pred_check
    _
  $region109: #{forward.1} parent=0 // pred_check_branch
    %1284 = sbr.rel (0) target = $region111
  $region110: #{forward.1} parent=0 // pred_region
    %1285 = vsyncadd %s853, 6144
  $region111: #{forward.1} parent=0 // pred_fallthru
    _
  %v1286 = vld [vmem:[%s0] sm:$0xff]
  %v1287 = vld [vmem:[%s0 + $0x8] sm:$0xff]
  %v1288 = vld [vmem:[%s0 + $0x10] sm:$0xff]
  %v1289 = vld [vmem:[%s0 + $0x18] sm:$0xff]
  %v1290 = vld [vmem:[%s0 + $0x20] sm:$0xff]
  %v1291 = vld [vmem:[%s0 + $0x28] sm:$0xff]
  %v1292 = vld [vmem:[%s0 + $0x30] sm:$0xff]
  %v1293 = vld [vmem:[%s0 + $0x38] sm:$0xff]
  %v1294 = vld [vmem:[%s1] sm:$0xff]
  %v1295 = vld [vmem:[%s1 + $0x8] sm:$0xf]
  %v1296 = vld [vmem:[%s1 + $0xc] sm:$0xff]
  %v1297 = vld [vmem:[%s1 + $0x14] sm:$0xf]
  %v1298 = vld [vmem:[%s1 + $0x18] sm:$0xff]
  %v1299 = vld [vmem:[%s1 + $0x20] sm:$0xf]
  %v1300 = vld [vmem:[%s1 + $0x24] sm:$0xff]
  %v1301 = vld [vmem:[%s1 + $0x2c] sm:$0xf]
  %v1302 = vld [vmem:[%s1 + $0x30] sm:$0xff]
  %v1303 = vld [vmem:[%s1 + $0x38] sm:$0xf]
  %v1304 = vld [vmem:[%s1 + $0x3c] sm:$0xff]
  %v1305 = vld [vmem:[%s1 + $0x44] sm:$0xf]
  %v1306 = vld [vmem:[%s1 + $0x48] sm:$0xff]
  %v1307 = vld [vmem:[%s1 + $0x50] sm:$0xf]
  %v1308 = vld [vmem:[%s1 + $0x54] sm:$0xff]
  %v1309 = vld [vmem:[%s1 + $0x5c] sm:$0xf]
  %v1310 = vld [vmem:[%s1 + $0x60] sm:$0xff]
  %v1311 = vld [vmem:[%s1 + $0x68] sm:$0xf]
  %v1312 = vld [vmem:[%s1 + $0x6c] sm:$0xff]
  %v1313 = vld [vmem:[%s1 + $0x74] sm:$0xf]
  %v1314 = vld [vmem:[%s1 + $0x78] sm:$0xff]
  %v1315 = vld [vmem:[%s1 + $0x80] sm:$0xf]
  %v1316 = vld [vmem:[%s1 + $0x84] sm:$0xff]
  %v1317 = vld [vmem:[%s1 + $0x8c] sm:$0xf]
  %v1318 = vld [vmem:[%s1 + $0x90] sm:$0xff]
  %v1319 = vld [vmem:[%s1 + $0x98] sm:$0xf]
  %v1320 = vld [vmem:[%s1 + $0x9c] sm:$0xff]
  %v1321 = vld [vmem:[%s1 + $0xa4] sm:$0xf]
  %v1322 = vld [vmem:[%s1 + $0xa8] sm:$0xff]
  %v1323 = vld [vmem:[%s1 + $0xb0] sm:$0xf]
  %v1324 = vld [vmem:[%s1 + $0xb4] sm:$0xff]
  %v1325 = vld [vmem:[%s1 + $0xbc] sm:$0xf]
  %v1326 = vld [vmem:[%s1 + $0xc0] sm:$0xff]
  %v1327 = vld [vmem:[%s1 + $0xc8] sm:$0xf]
  %v1328 = vld [vmem:[%s1 + $0xcc] sm:$0xff]
  %v1329 = vld [vmem:[%s1 + $0xd4] sm:$0xf]
  %v1330 = vld [vmem:[%s1 + $0xd8] sm:$0xff]
  %v1331 = vld [vmem:[%s1 + $0xe0] sm:$0xf]
  %v1332 = vld [vmem:[%s1 + $0xe4] sm:$0xff]
  %v1333 = vld [vmem:[%s1 + $0xec] sm:$0xf]
  %v1334 = vld [vmem:[%s1 + $0xf0] sm:$0xff]
  %v1335 = vld [vmem:[%s1 + $0xf8] sm:$0xf]
  %v1336 = vld [vmem:[%s1 + $0xfc] sm:$0xff]
  %v1337 = vld [vmem:[%s1 + $0x104] sm:$0xf]
  %v1338 = vld [vmem:[%s1 + $0x108] sm:$0xff]
  %v1339 = vld [vmem:[%s1 + $0x110] sm:$0xf]
  %v1340 = vld [vmem:[%s1 + $0x114] sm:$0xff]
  %v1341 = vld [vmem:[%s1 + $0x11c] sm:$0xf]
  %v1342 = vld [vmem:[%s1 + $0x120] sm:$0xff]
  %v1343 = vld [vmem:[%s1 + $0x128] sm:$0xf]
  %v1344 = vld [vmem:[%s1 + $0x12c] sm:$0xff]
  %v1345 = vld [vmem:[%s1 + $0x134] sm:$0xf]
  %v1346 = vld [vmem:[%s1 + $0x138] sm:$0xff]
  %v1347 = vld [vmem:[%s1 + $0x140] sm:$0xf]
  %v1348 = vld [vmem:[%s1 + $0x144] sm:$0xff]
  %v1349 = vld [vmem:[%s1 + $0x14c] sm:$0xf]
  %v1350 = vld [vmem:[%s1 + $0x150] sm:$0xff]
  %v1351 = vld [vmem:[%s1 + $0x158] sm:$0xf]
  %v1352 = vld [vmem:[%s1 + $0x15c] sm:$0xff]
  %v1353 = vld [vmem:[%s1 + $0x164] sm:$0xf]
  %v1354 = vld [vmem:[%s1 + $0x168] sm:$0xff]
  %v1355 = vld [vmem:[%s1 + $0x170] sm:$0xf]
  %v1356 = vld [vmem:[%s1 + $0x174] sm:$0xff]
  %v1357 = vld [vmem:[%s1 + $0x17c] sm:$0xf]
  %s1358 = scalar_lea.vmem %s1, 384
  %v1359 = vld [vmem:[%s1358] sm:$0xff]
  %v1360 = vld [vmem:[%s1358 + $0x8] sm:$0xf]
  %v1361 = vld [vmem:[%s1358 + $0xc] sm:$0xff]
  %v1362 = vld [vmem:[%s1358 + $0x14] sm:$0xf]
  %v1363 = vld [vmem:[%s1358 + $0x18] sm:$0xff]
  %v1364 = vld [vmem:[%s1358 + $0x20] sm:$0xf]
  %v1365 = vld [vmem:[%s1358 + $0x24] sm:$0xff]
  %v1366 = vld [vmem:[%s1358 + $0x2c] sm:$0xf]
  %v1367 = vld [vmem:[%s1358 + $0x30] sm:$0xff]
  %v1368 = vld [vmem:[%s1358 + $0x38] sm:$0xf]
  %v1369 = vld [vmem:[%s1358 + $0x3c] sm:$0xff]
  %v1370 = vld [vmem:[%s1358 + $0x44] sm:$0xf]
  %v1371 = vld [vmem:[%s1358 + $0x48] sm:$0xff]
  %v1372 = vld [vmem:[%s1358 + $0x50] sm:$0xf]
  %v1373 = vld [vmem:[%s1358 + $0x54] sm:$0xff]
  %v1374 = vld [vmem:[%s1358 + $0x5c] sm:$0xf]
  %v1375 = vld [vmem:[%s1358 + $0x60] sm:$0xff]
  %v1376 = vld [vmem:[%s1358 + $0x68] sm:$0xf]
  %v1377 = vld [vmem:[%s1358 + $0x6c] sm:$0xff]
  %v1378 = vld [vmem:[%s1358 + $0x74] sm:$0xf]
  %v1379 = vld [vmem:[%s1358 + $0x78] sm:$0xff]
  %v1380 = vld [vmem:[%s1358 + $0x80] sm:$0xf]
  %v1381 = vld [vmem:[%s1358 + $0x84] sm:$0xff]
  %v1382 = vld [vmem:[%s1358 + $0x8c] sm:$0xf]
  %v1383 = vld [vmem:[%s1358 + $0x90] sm:$0xff]
  %v1384 = vld [vmem:[%s1358 + $0x98] sm:$0xf]
  %v1385 = vld [vmem:[%s1358 + $0x9c] sm:$0xff]
  %v1386 = vld [vmem:[%s1358 + $0xa4] sm:$0xf]
  %v1387 = vld [vmem:[%s1358 + $0xa8] sm:$0xff]
  %v1388 = vld [vmem:[%s1358 + $0xb0] sm:$0xf]
  %v1389 = vld [vmem:[%s1358 + $0xb4] sm:$0xff]
  %v1390 = vld [vmem:[%s1358 + $0xbc] sm:$0xf]
  %v1391 = vld [vmem:[%s1358 + $0xc0] sm:$0xff]
  %v1392 = vld [vmem:[%s1358 + $0xc8] sm:$0xf]
  %v1393 = vld [vmem:[%s1358 + $0xcc] sm:$0xff]
  %v1394 = vld [vmem:[%s1358 + $0xd4] sm:$0xf]
  %v1395 = vld [vmem:[%s1358 + $0xd8] sm:$0xff]
  %v1396 = vld [vmem:[%s1358 + $0xe0] sm:$0xf]
  %v1397 = vld [vmem:[%s1358 + $0xe4] sm:$0xff]
  %v1398 = vld [vmem:[%s1358 + $0xec] sm:$0xf]
  %v1399 = vld [vmem:[%s1358 + $0xf0] sm:$0xff]
  %v1400 = vld [vmem:[%s1358 + $0xf8] sm:$0xf]
  %v1401 = vld [vmem:[%s1358 + $0xfc] sm:$0xff]
  %v1402 = vld [vmem:[%s1358 + $0x104] sm:$0xf]
  %v1403 = vld [vmem:[%s1358 + $0x108] sm:$0xff]
  %v1404 = vld [vmem:[%s1358 + $0x110] sm:$0xf]
  %v1405 = vld [vmem:[%s1358 + $0x114] sm:$0xff]
  %v1406 = vld [vmem:[%s1358 + $0x11c] sm:$0xf]
  %v1407 = vld [vmem:[%s1358 + $0x120] sm:$0xff]
  %v1408 = vld [vmem:[%s1358 + $0x128] sm:$0xf]
  %v1409 = vld [vmem:[%s1358 + $0x12c] sm:$0xff]
  %v1410 = vld [vmem:[%s1358 + $0x134] sm:$0xf]
  %v1411 = vld [vmem:[%s1358 + $0x138] sm:$0xff]
  %v1412 = vld [vmem:[%s1358 + $0x140] sm:$0xf]
  %v1413 = vld [vmem:[%s1358 + $0x144] sm:$0xff]
  %v1414 = vld [vmem:[%s1358 + $0x14c] sm:$0xf]
  %v1415 = vld [vmem:[%s1358 + $0x150] sm:$0xff]
  %v1416 = vld [vmem:[%s1358 + $0x158] sm:$0xf]
  %v1417 = vld [vmem:[%s1358 + $0x15c] sm:$0xff]
  %v1418 = vld [vmem:[%s1358 + $0x164] sm:$0xf]
  %v1419 = vld [vmem:[%s1358 + $0x168] sm:$0xff]
  %v1420 = vld [vmem:[%s1358 + $0x170] sm:$0xf]
  %v1421 = vld [vmem:[%s1358 + $0x174] sm:$0xff]
  %v1422 = vld [vmem:[%s1358 + $0x17c] sm:$0xf]
  %v1423 = vld [vmem:[%s2] sm:$0xff]
  %v1424 = vld [vmem:[%s2 + $0x8] sm:$0xf]
  %v1425 = vld [vmem:[%s2 + $0xc] sm:$0xff]
  %v1426 = vld [vmem:[%s2 + $0x14] sm:$0xf]
  %v1427 = vld [vmem:[%s2 + $0x18] sm:$0xff]
  %v1428 = vld [vmem:[%s2 + $0x20] sm:$0xf]
  %v1429 = vld [vmem:[%s2 + $0x24] sm:$0xff]
  %v1430 = vld [vmem:[%s2 + $0x2c] sm:$0xf]
  %v1431 = vld [vmem:[%s2 + $0x30] sm:$0xff]
  %v1432 = vld [vmem:[%s2 + $0x38] sm:$0xf]
  %v1433 = vld [vmem:[%s2 + $0x3c] sm:$0xff]
  %v1434 = vld [vmem:[%s2 + $0x44] sm:$0xf]
  %v1435 = vld [vmem:[%s2 + $0x48] sm:$0xff]
  %v1436 = vld [vmem:[%s2 + $0x50] sm:$0xf]
  %v1437 = vld [vmem:[%s2 + $0x54] sm:$0xff]
  %v1438 = vld [vmem:[%s2 + $0x5c] sm:$0xf]
  %v1439 = vld [vmem:[%s2 + $0x60] sm:$0xff]
  %v1440 = vld [vmem:[%s2 + $0x68] sm:$0xf]
  %v1441 = vld [vmem:[%s2 + $0x6c] sm:$0xff]
  %v1442 = vld [vmem:[%s2 + $0x74] sm:$0xf]
  %v1443 = vld [vmem:[%s2 + $0x78] sm:$0xff]
  %v1444 = vld [vmem:[%s2 + $0x80] sm:$0xf]
  %v1445 = vld [vmem:[%s2 + $0x84] sm:$0xff]
  %v1446 = vld [vmem:[%s2 + $0x8c] sm:$0xf]
  %v1447 = vld [vmem:[%s2 + $0x90] sm:$0xff]
  %v1448 = vld [vmem:[%s2 + $0x98] sm:$0xf]
  %v1449 = vld [vmem:[%s2 + $0x9c] sm:$0xff]
  %v1450 = vld [vmem:[%s2 + $0xa4] sm:$0xf]
  %v1451 = vld [vmem:[%s2 + $0xa8] sm:$0xff]
  %v1452 = vld [vmem:[%s2 + $0xb0] sm:$0xf]
  %v1453 = vld [vmem:[%s2 + $0xb4] sm:$0xff]
  %v1454 = vld [vmem:[%s2 + $0xbc] sm:$0xf]
  %s1455 = scalar_lea.vmem %s2, 192
  %v1456 = vld [vmem:[%s1455] sm:$0xff]
  %v1457 = vld [vmem:[%s1455 + $0x8] sm:$0xf]
  %v1458 = vld [vmem:[%s1455 + $0xc] sm:$0xff]
  %v1459 = vld [vmem:[%s1455 + $0x14] sm:$0xf]
  %v1460 = vld [vmem:[%s1455 + $0x18] sm:$0xff]
  %v1461 = vld [vmem:[%s1455 + $0x20] sm:$0xf]
  %v1462 = vld [vmem:[%s1455 + $0x24] sm:$0xff]
  %v1463 = vld [vmem:[%s1455 + $0x2c] sm:$0xf]
  %v1464 = vld [vmem:[%s1455 + $0x30] sm:$0xff]
  %v1465 = vld [vmem:[%s1455 + $0x38] sm:$0xf]
  %v1466 = vld [vmem:[%s1455 + $0x3c] sm:$0xff]
  %v1467 = vld [vmem:[%s1455 + $0x44] sm:$0xf]
  %v1468 = vld [vmem:[%s1455 + $0x48] sm:$0xff]
  %v1469 = vld [vmem:[%s1455 + $0x50] sm:$0xf]
  %v1470 = vld [vmem:[%s1455 + $0x54] sm:$0xff]
  %v1471 = vld [vmem:[%s1455 + $0x5c] sm:$0xf]
  %v1472 = vld [vmem:[%s1455 + $0x60] sm:$0xff]
  %v1473 = vld [vmem:[%s1455 + $0x68] sm:$0xf]
  %v1474 = vld [vmem:[%s1455 + $0x6c] sm:$0xff]
  %v1475 = vld [vmem:[%s1455 + $0x74] sm:$0xf]
  %v1476 = vld [vmem:[%s1455 + $0x78] sm:$0xff]
  %v1477 = vld [vmem:[%s1455 + $0x80] sm:$0xf]
  %v1478 = vld [vmem:[%s1455 + $0x84] sm:$0xff]
  %v1479 = vld [vmem:[%s1455 + $0x8c] sm:$0xf]
  %v1480 = vld [vmem:[%s1455 + $0x90] sm:$0xff]
  %v1481 = vld [vmem:[%s1455 + $0x98] sm:$0xf]
  %v1482 = vld [vmem:[%s1455 + $0x9c] sm:$0xff]
  %v1483 = vld [vmem:[%s1455 + $0xa4] sm:$0xf]
  %v1484 = vld [vmem:[%s1455 + $0xa8] sm:$0xff]
  %v1485 = vld [vmem:[%s1455 + $0xb0] sm:$0xf]
  %v1486 = vld [vmem:[%s1455 + $0xb4] sm:$0xff]
  %v1487 = vld [vmem:[%s1455 + $0xbc] sm:$0xf]
  %v1488 = vld [vmem:[%s3] sm:$0x7]
  %v1490 = vlaneseq
  %v1491 = vshrl.u32 %v1490, 7
  %v1492 = vsub.s32 0, %v1491
  %v1493 = vrot.slane %v1488, %v1492
  %v1494 = vlaneseq
  %v1495 = vshrl.u32 %v1494, 7
  %v1496 = vsub.s32 1, %v1495
  %v1497 = vrot.slane %v1488, %v1496
  %v1498 = vlaneseq
  %v1499 = vshrl.u32 %v1498, 7
  %v1500 = vsub.s32 2, %v1499
  %v1501 = vrot.slane %v1488, %v1500
  %v1513 = vunpack.c.l.b16 %v1286
  %v1514 = vunpack.c.h.b16 %v1286
  %v1515 = vunpack.c.l.b16 %v1287
  %v1516 = vunpack.c.h.b16 %v1287
  %v1517 = vunpack.c.l.b16 %v1288
  %v1518 = vunpack.c.h.b16 %v1288
  %v1519 = vunpack.c.l.b16 %v1289
  %v1520 = vunpack.c.h.b16 %v1289
  %v1521 = vunpack.c.l.b16 %v1290
  %v1522 = vunpack.c.h.b16 %v1290
  %v1523 = vunpack.c.l.b16 %v1291
  %v1524 = vunpack.c.h.b16 %v1291
  %v1525 = vunpack.c.l.b16 %v1292
  %v1526 = vunpack.c.h.b16 %v1292
  %v1527 = vunpack.c.l.b16 %v1293
  %v1528 = vunpack.c.h.b16 %v1293
  %v1529 = vpack.c.b16 %v1515, %v1513
  %v1530 = vpack.c.b16 %v1516, %v1514
  %v1531 = vpack.c.b16 %v1519, %v1517
  %v1532 = vpack.c.b16 %v1520, %v1518
  %v1533 = vpack.c.b16 %v1523, %v1521
  %v1534 = vpack.c.b16 %v1524, %v1522
  %v1535 = vpack.c.b16 %v1527, %v1525
  %v1536 = vpack.c.b16 %v1528, %v1526
  %v1609 = vunpack.c.l.b16 %v1294
  %v1610 = vunpack.c.h.b16 %v1294
  %v1611 = vunpack.c.l.b16 %v1295
  %v1612 = vunpack.c.l.b16 %v1296
  %v1613 = vunpack.c.h.b16 %v1296
  %v1614 = vunpack.c.l.b16 %v1297
  %v1615 = vunpack.c.l.b16 %v1298
  %v1616 = vunpack.c.h.b16 %v1298
  %v1617 = vunpack.c.l.b16 %v1299
  %v1618 = vunpack.c.l.b16 %v1300
  %v1619 = vunpack.c.h.b16 %v1300
  %v1620 = vunpack.c.l.b16 %v1301
  %v1621 = vunpack.c.l.b16 %v1302
  %v1622 = vunpack.c.h.b16 %v1302
  %v1623 = vunpack.c.l.b16 %v1303
  %v1624 = vunpack.c.l.b16 %v1304
  %v1625 = vunpack.c.h.b16 %v1304
  %v1626 = vunpack.c.l.b16 %v1305
  %v1627 = vunpack.c.l.b16 %v1306
  %v1628 = vunpack.c.h.b16 %v1306
  %v1629 = vunpack.c.l.b16 %v1307
  %v1630 = vunpack.c.l.b16 %v1308
  %v1631 = vunpack.c.h.b16 %v1308
  %v1632 = vunpack.c.l.b16 %v1309
  %v1633 = vunpack.c.l.b16 %v1310
  %v1634 = vunpack.c.h.b16 %v1310
  %v1635 = vunpack.c.l.b16 %v1311
  %v1636 = vunpack.c.l.b16 %v1312
  %v1637 = vunpack.c.h.b16 %v1312
  %v1638 = vunpack.c.l.b16 %v1313
  %v1639 = vunpack.c.l.b16 %v1314
  %v1640 = vunpack.c.h.b16 %v1314
  %v1641 = vunpack.c.l.b16 %v1315
  %v1642 = vunpack.c.l.b16 %v1316
  %v1643 = vunpack.c.h.b16 %v1316
  %v1644 = vunpack.c.l.b16 %v1317
  %v1645 = vunpack.c.l.b16 %v1318
  %v1646 = vunpack.c.h.b16 %v1318
  %v1647 = vunpack.c.l.b16 %v1319
  %v1648 = vunpack.c.l.b16 %v1320
  %v1649 = vunpack.c.h.b16 %v1320
  %v1650 = vunpack.c.l.b16 %v1321
  %v1651 = vunpack.c.l.b16 %v1322
  %v1652 = vunpack.c.h.b16 %v1322
  %v1653 = vunpack.c.l.b16 %v1323
  %v1654 = vunpack.c.l.b16 %v1324
  %v1655 = vunpack.c.h.b16 %v1324
  %v1656 = vunpack.c.l.b16 %v1325
  %v1657 = vunpack.c.l.b16 %v1326
  %v1658 = vunpack.c.h.b16 %v1326
  %v1659 = vunpack.c.l.b16 %v1327
  %v1660 = vunpack.c.l.b16 %v1328
  %v1661 = vunpack.c.h.b16 %v1328
  %v1662 = vunpack.c.l.b16 %v1329
  %v1663 = vunpack.c.l.b16 %v1330
  %v1664 = vunpack.c.h.b16 %v1330
  %v1665 = vunpack.c.l.b16 %v1331
  %v1666 = vunpack.c.l.b16 %v1332
  %v1667 = vunpack.c.h.b16 %v1332
  %v1668 = vunpack.c.l.b16 %v1333
  %v1669 = vunpack.c.l.b16 %v1334
  %v1670 = vunpack.c.h.b16 %v1334
  %v1671 = vunpack.c.l.b16 %v1335
  %v1672 = vunpack.c.l.b16 %v1336
  %v1673 = vunpack.c.h.b16 %v1336
  %v1674 = vunpack.c.l.b16 %v1337
  %v1675 = vunpack.c.l.b16 %v1338
  %v1676 = vunpack.c.h.b16 %v1338
  %v1677 = vunpack.c.l.b16 %v1339
  %v1678 = vunpack.c.l.b16 %v1340
  %v1679 = vunpack.c.h.b16 %v1340
  %v1680 = vunpack.c.l.b16 %v1341
  %v1681 = vunpack.c.l.b16 %v1342
  %v1682 = vunpack.c.h.b16 %v1342
  %v1683 = vunpack.c.l.b16 %v1343
  %v1684 = vunpack.c.l.b16 %v1344
  %v1685 = vunpack.c.h.b16 %v1344
  %v1686 = vunpack.c.l.b16 %v1345
  %v1687 = vunpack.c.l.b16 %v1346
  %v1688 = vunpack.c.h.b16 %v1346
  %v1689 = vunpack.c.l.b16 %v1347
  %v1690 = vunpack.c.l.b16 %v1348
  %v1691 = vunpack.c.h.b16 %v1348
  %v1692 = vunpack.c.l.b16 %v1349
  %v1693 = vunpack.c.l.b16 %v1350
  %v1694 = vunpack.c.h.b16 %v1350
  %v1695 = vunpack.c.l.b16 %v1351
  %v1696 = vunpack.c.l.b16 %v1352
  %v1697 = vunpack.c.h.b16 %v1352
  %v1698 = vunpack.c.l.b16 %v1353
  %v1699 = vunpack.c.l.b16 %v1354
  %v1700 = vunpack.c.h.b16 %v1354
  %v1701 = vunpack.c.l.b16 %v1355
  %v1702 = vunpack.c.l.b16 %v1356
  %v1703 = vunpack.c.h.b16 %v1356
  %v1704 = vunpack.c.l.b16 %v1357
  %v1705 = vpack.c.b16 %v1612, %v1609
  %v1706 = vpack.c.b16 %v1613, %v1610
  %v1707 = vpack.c.b16 %v1614, %v1611
  %v1708 = vpack.c.b16 %v1618, %v1615
  %v1709 = vpack.c.b16 %v1619, %v1616
  %v1710 = vpack.c.b16 %v1620, %v1617
  %v1711 = vpack.c.b16 %v1624, %v1621
  %v1712 = vpack.c.b16 %v1625, %v1622
  %v1713 = vpack.c.b16 %v1626, %v1623
  %v1714 = vpack.c.b16 %v1630, %v1627
  %v1715 = vpack.c.b16 %v1631, %v1628
  %v1716 = vpack.c.b16 %v1632, %v1629
  %v1717 = vpack.c.b16 %v1636, %v1633
  %v1718 = vpack.c.b16 %v1637, %v1634
  %v1719 = vpack.c.b16 %v1638, %v1635
  %v1720 = vpack.c.b16 %v1642, %v1639
  %v1721 = vpack.c.b16 %v1643, %v1640
  %v1722 = vpack.c.b16 %v1644, %v1641
  %v1723 = vpack.c.b16 %v1648, %v1645
  %v1724 = vpack.c.b16 %v1649, %v1646
  %v1725 = vpack.c.b16 %v1650, %v1647
  %v1726 = vpack.c.b16 %v1654, %v1651
  %v1727 = vpack.c.b16 %v1655, %v1652
  %v1728 = vpack.c.b16 %v1656, %v1653
  %v1729 = vpack.c.b16 %v1660, %v1657
  %v1730 = vpack.c.b16 %v1661, %v1658
  %v1731 = vpack.c.b16 %v1662, %v1659
  %v1732 = vpack.c.b16 %v1666, %v1663
  %v1733 = vpack.c.b16 %v1667, %v1664
  %v1734 = vpack.c.b16 %v1668, %v1665
  %v1735 = vpack.c.b16 %v1672, %v1669
  %v1736 = vpack.c.b16 %v1673, %v1670
  %v1737 = vpack.c.b16 %v1674, %v1671
  %v1738 = vpack.c.b16 %v1678, %v1675
  %v1739 = vpack.c.b16 %v1679, %v1676
  %v1740 = vpack.c.b16 %v1680, %v1677
  %v1741 = vpack.c.b16 %v1684, %v1681
  %v1742 = vpack.c.b16 %v1685, %v1682
  %v1743 = vpack.c.b16 %v1686, %v1683
  %v1744 = vpack.c.b16 %v1690, %v1687
  %v1745 = vpack.c.b16 %v1691, %v1688
  %v1746 = vpack.c.b16 %v1692, %v1689
  %v1747 = vpack.c.b16 %v1696, %v1693
  %v1748 = vpack.c.b16 %v1697, %v1694
  %v1749 = vpack.c.b16 %v1698, %v1695
  %v1750 = vpack.c.b16 %v1702, %v1699
  %v1751 = vpack.c.b16 %v1703, %v1700
  %v1752 = vpack.c.b16 %v1704, %v1701
  %1801 = vmatprep.subr.bf16.mxu0 %v1706
  %1802 = vmatpush1.bf16.msra.mxu0 %v1705
  %1803 = vmatprep.subr.bf16.mxu0 %v1709
  %1804 = vmatpush1.bf16.msra.mxu0 %v1708
  %1805 = vmatprep.subr.bf16.mxu0 %v1712
  %1806 = vmatpush1.bf16.msra.mxu0 %v1711
  %1807 = vmatprep.subr.bf16.mxu0 %v1715
  %1808 = vmatpush1.bf16.msra.mxu0 %v1714
  %1809 = vmatprep.subr.bf16.mxu0 %v1718
  %1810 = vmatpush1.bf16.msra.mxu0 %v1717
  %1811 = vmatprep.subr.bf16.mxu0 %v1721
  %1812 = vmatpush1.bf16.msra.mxu0 %v1720
  %1813 = vmatprep.subr.bf16.mxu0 %v1724
  %1814 = vmatpush1.bf16.msra.mxu0 %v1723
  %1815 = vmatprep.subr.bf16.mxu0 %v1727
  %1816 = vmatpush1.bf16.msra.mxu0 %v1726
  %1817 = vmatprep.subr.bf16.mxu0 %v1730
  %1818 = vmatpush1.bf16.msra.mxu0 %v1729
  %1819 = vmatprep.subr.bf16.mxu0 %v1733
  %1820 = vmatpush1.bf16.msra.mxu0 %v1732
  %1821 = vmatprep.subr.bf16.mxu0 %v1736
  %1822 = vmatpush1.bf16.msra.mxu0 %v1735
  %1823 = vmatprep.subr.bf16.mxu0 %v1739
  %1824 = vmatpush1.bf16.msra.mxu0 %v1738
  %1825 = vmatprep.subr.bf16.mxu0 %v1742
  %1826 = vmatpush1.bf16.msra.mxu0 %v1741
  %1827 = vmatprep.subr.bf16.mxu0 %v1745
  %1828 = vmatpush1.bf16.msra.mxu0 %v1744
  %1829 = vmatprep.subr.bf16.mxu0 %v1748
  %1830 = vmatpush1.bf16.msra.mxu0 %v1747
  %1831 = vmatprep.subr.bf16.mxu0 %v1751
  %1832 = vmatpush1.bf16.msra.mxu0 %v1750
  %1833 = vmatprep.mubr.bf16.mxu0 %v1530
  %1834 = vmatmul.mubr.bf16.gmra.mrb[0].mxu0 %v1529
  %v1835 = vpop.f32.mrb[0].mxu0
  %v1836 = vadd.f32 %v1493, %v1835
  %v1837 = vpop.f32.mrb[0].mxu0
  %v1838 = vadd.f32 %v1497, %v1837
  %v1839 = vpop.f32.mrb[0].mxu0
  %v1840 = vadd.f32 %v1493, %v1839
  %v1841 = vpop.f32.mrb[0].mxu0
  %v1842 = vadd.f32 %v1497, %v1841
  %1843 = vmatprep.mubr.bf16.mxu0 %v1532
  %1844 = vmatmul.mubr.bf16.gmra.mrb[0].mxu0 %v1531
  %v1845 = vpop.f32.mrb[0].mxu0
  %v1846 = vadd.f32 %v1493, %v1845
  %v1847 = vpop.f32.mrb[0].mxu0
  %v1848 = vadd.f32 %v1497, %v1847
  %v1849 = vpop.f32.mrb[0].mxu0
  %v1850 = vadd.f32 %v1493, %v1849
  %v1851 = vpop.f32.mrb[0].mxu0
  %v1852 = vadd.f32 %v1497, %v1851
  %1853 = vmatprep.mubr.bf16.mxu0 %v1534
  %1854 = vmatmul.mubr.bf16.gmra.mrb[0].mxu0 %v1533
  %v1855 = vpop.f32.mrb[0].mxu0
  %v1856 = vadd.f32 %v1493, %v1855
  %v1857 = vpop.f32.mrb[0].mxu0
  %v1858 = vadd.f32 %v1497, %v1857
  %v1859 = vpop.f32.mrb[0].mxu0
  %v1860 = vadd.f32 %v1493, %v1859
  %v1861 = vpop.f32.mrb[0].mxu0
  %v1862 = vadd.f32 %v1497, %v1861
  %1863 = vmatprep.mubr.bf16.mxu0 %v1536
  %1864 = vmatmul.mubr.bf16.gmra.mrb[0].mxu0 %v1535
  %v1865 = vpop.f32.mrb[0].mxu0
  %v1866 = vadd.f32 %v1493, %v1865
  %v1867 = vpop.f32.mrb[0].mxu0
  %v1868 = vadd.f32 %v1497, %v1867
  %v1869 = vpop.f32.mrb[0].mxu0
  %v1870 = vadd.f32 %v1493, %v1869
  %v1871 = vpop.f32.mrb[0].mxu0
  %v1872 = vadd.f32 %v1497, %v1871
  %1873 = vdwg.mxu0
  %1874 = vmatprep.subr.bf16.mxu0 0
  %1875 = vmatpush1.bf16.msra.mxu0 %v1707
  %1876 = vmatprep.subr.bf16.mxu0 0
  %1877 = vmatpush1.bf16.msra.mxu0 %v1710
  %1878 = vmatprep.subr.bf16.mxu0 0
  %1879 = vmatpush1.bf16.msra.mxu0 %v1713
  %1880 = vmatprep.subr.bf16.mxu0 0
  %1881 = vmatpush1.bf16.msra.mxu0 %v1716
  %1882 = vmatprep.subr.bf16.mxu0 0
  %1883 = vmatpush1.bf16.msra.mxu0 %v1719
  %1884 = vmatprep.subr.bf16.mxu0 0
  %1885 = vmatpush1.bf16.msra.mxu0 %v1722
  %1886 = vmatprep.subr.bf16.mxu0 0
  %1887 = vmatpush1.bf16.msra.mxu0 %v1725
  %1888 = vmatprep.subr.bf16.mxu0 0
  %1889 = vmatpush1.bf16.msra.mxu0 %v1728
  %1890 = vmatprep.subr.bf16.mxu0 0
  %1891 = vmatpush1.bf16.msra.mxu0 %v1731
  %1892 = vmatprep.subr.bf16.mxu0 0
  %1893 = vmatpush1.bf16.msra.mxu0 %v1734
  %1894 = vmatprep.subr.bf16.mxu0 0
  %1895 = vmatpush1.bf16.msra.mxu0 %v1737
  %1896 = vmatprep.subr.bf16.mxu0 0
  %1897 = vmatpush1.bf16.msra.mxu0 %v1740
  %1898 = vmatprep.subr.bf16.mxu0 0
  %1899 = vmatpush1.bf16.msra.mxu0 %v1743
  %1900 = vmatprep.subr.bf16.mxu0 0
  %1901 = vmatpush1.bf16.msra.mxu0 %v1746
  %1902 = vmatprep.subr.bf16.mxu0 0
  %1903 = vmatpush1.bf16.msra.mxu0 %v1749
  %1904 = vmatprep.subr.bf16.mxu0 0
  %1905 = vmatpush1.bf16.msra.mxu0 %v1752
  %1906 = vmatprep.mubr.bf16.mxu0 %v1530
  %1907 = vmatmul.mubr.bf16.gmra.mrb[0].mxu0 %v1529
  %v1908 = vpop.f32.mrb[0].mxu0
  %v1909 = vadd.f32 %v1501, %v1908
  %v1910 = vpop.f32.mrb[0].mxu0
  %v1911 = vpop.f32.mrb[0].mxu0
  %v1912 = vadd.f32 %v1501, %v1911
  %v1913 = vpop.f32.mrb[0].mxu0
  %1914 = vmatprep.mubr.bf16.mxu0 %v1532
  %1915 = vmatmul.mubr.bf16.gmra.mrb[0].mxu0 %v1531
  %v1916 = vpop.f32.mrb[0].mxu0
  %v1917 = vadd.f32 %v1501, %v1916
  %v1918 = vpop.f32.mrb[0].mxu0
  %v1919 = vpop.f32.mrb[0].mxu0
  %v1920 = vadd.f32 %v1501, %v1919
  %v1921 = vpop.f32.mrb[0].mxu0
  %1922 = vmatprep.mubr.bf16.mxu0 %v1534
  %1923 = vmatmul.mubr.bf16.gmra.mrb[0].mxu0 %v1533
  %v1924 = vpop.f32.mrb[0].mxu0
  %v1925 = vadd.f32 %v1501, %v1924
  %v1926 = vpop.f32.mrb[0].mxu0
  %v1927 = vpop.f32.mrb[0].mxu0
  %v1928 = vadd.f32 %v1501, %v1927
  %v1929 = vpop.f32.mrb[0].mxu0
  %1930 = vmatprep.mubr.bf16.mxu0 %v1536
  %1931 = vmatmul.mubr.bf16.gmra.mrb[0].mxu0 %v1535
  %v1932 = vpop.f32.mrb[0].mxu0
  %v1933 = vadd.f32 %v1501, %v1932
  %v1934 = vpop.f32.mrb[0].mxu0
  %v1935 = vpop.f32.mrb[0].mxu0
  %v1936 = vadd.f32 %v1501, %v1935
  %v1937 = vpop.f32.mrb[0].mxu0
  %1938 = vdwg.mxu0
  %s1939 = scalar_lea.vmem %s3, 3
  %v1940 = vld [vmem:[%s1939] sm:$0x7]
  %v1942 = vlaneseq
  %v1943 = vshrl.u32 %v1942, 7
  %v1944 = vsub.s32 0, %v1943
  %v1945 = vrot.slane %v1940, %v1944
  %v1946 = vlaneseq
  %v1947 = vshrl.u32 %v1946, 7
  %v1948 = vsub.s32 1, %v1947
  %v1949 = vrot.slane %v1940, %v1948
  %v1950 = vlaneseq
  %v1951 = vshrl.u32 %v1950, 7
  %v1952 = vsub.s32 2, %v1951
  %v1953 = vrot.slane %v1940, %v1952
  %v2021 = vunpack.c.l.b16 %v1359
  %v2022 = vunpack.c.h.b16 %v1359
  %v2023 = vunpack.c.l.b16 %v1360
  %v2024 = vunpack.c.l.b16 %v1361
  %v2025 = vunpack.c.h.b16 %v1361
  %v2026 = vunpack.c.l.b16 %v1362
  %v2027 = vunpack.c.l.b16 %v1363
  %v2028 = vunpack.c.h.b16 %v1363
  %v2029 = vunpack.c.l.b16 %v1364
  %v2030 = vunpack.c.l.b16 %v1365
  %v2031 = vunpack.c.h.b16 %v1365
  %v2032 = vunpack.c.l.b16 %v1366
  %v2033 = vunpack.c.l.b16 %v1367
  %v2034 = vunpack.c.h.b16 %v1367
  %v2035 = vunpack.c.l.b16 %v1368
  %v2036 = vunpack.c.l.b16 %v1369
  %v2037 = vunpack.c.h.b16 %v1369
  %v2038 = vunpack.c.l.b16 %v1370
  %v2039 = vunpack.c.l.b16 %v1371
  %v2040 = vunpack.c.h.b16 %v1371
  %v2041 = vunpack.c.l.b16 %v1372
  %v2042 = vunpack.c.l.b16 %v1373
  %v2043 = vunpack.c.h.b16 %v1373
  %v2044 = vunpack.c.l.b16 %v1374
  %v2045 = vunpack.c.l.b16 %v1375
  %v2046 = vunpack.c.h.b16 %v1375
  %v2047 = vunpack.c.l.b16 %v1376
  %v2048 = vunpack.c.l.b16 %v1377
  %v2049 = vunpack.c.h.b16 %v1377
  %v2050 = vunpack.c.l.b16 %v1378
  %v2051 = vunpack.c.l.b16 %v1379
  %v2052 = vunpack.c.h.b16 %v1379
  %v2053 = vunpack.c.l.b16 %v1380
  %v2054 = vunpack.c.l.b16 %v1381
  %v2055 = vunpack.c.h.b16 %v1381
  %v2056 = vunpack.c.l.b16 %v1382
  %v2057 = vunpack.c.l.b16 %v1383
  %v2058 = vunpack.c.h.b16 %v1383
  %v2059 = vunpack.c.l.b16 %v1384
  %v2060 = vunpack.c.l.b16 %v1385
  %v2061 = vunpack.c.h.b16 %v1385
  %v2062 = vunpack.c.l.b16 %v1386
  %v2063 = vunpack.c.l.b16 %v1387
  %v2064 = vunpack.c.h.b16 %v1387
  %v2065 = vunpack.c.l.b16 %v1388
  %v2066 = vunpack.c.l.b16 %v1389
  %v2067 = vunpack.c.h.b16 %v1389
  %v2068 = vunpack.c.l.b16 %v1390
  %v2069 = vunpack.c.l.b16 %v1391
  %v2070 = vunpack.c.h.b16 %v1391
  %v2071 = vunpack.c.l.b16 %v1392
  %v2072 = vunpack.c.l.b16 %v1393
  %v2073 = vunpack.c.h.b16 %v1393
  %v2074 = vunpack.c.l.b16 %v1394
  %v2075 = vunpack.c.l.b16 %v1395
  %v2076 = vunpack.c.h.b16 %v1395
  %v2077 = vunpack.c.l.b16 %v1396
  %v2078 = vunpack.c.l.b16 %v1397
  %v2079 = vunpack.c.h.b16 %v1397
  %v2080 = vunpack.c.l.b16 %v1398
  %v2081 = vunpack.c.l.b16 %v1399
  %v2082 = vunpack.c.h.b16 %v1399
  %v2083 = vunpack.c.l.b16 %v1400
  %v2084 = vunpack.c.l.b16 %v1401
  %v2085 = vunpack.c.h.b16 %v1401
  %v2086 = vunpack.c.l.b16 %v1402
  %v2087 = vunpack.c.l.b16 %v1403
  %v2088 = vunpack.c.h.b16 %v1403
  %v2089 = vunpack.c.l.b16 %v1404
  %v2090 = vunpack.c.l.b16 %v1405
  %v2091 = vunpack.c.h.b16 %v1405
  %v2092 = vunpack.c.l.b16 %v1406
  %v2093 = vunpack.c.l.b16 %v1407
  %v2094 = vunpack.c.h.b16 %v1407
  %v2095 = vunpack.c.l.b16 %v1408
  %v2096 = vunpack.c.l.b16 %v1409
  %v2097 = vunpack.c.h.b16 %v1409
  %v2098 = vunpack.c.l.b16 %v1410
  %v2099 = vunpack.c.l.b16 %v1411
  %v2100 = vunpack.c.h.b16 %v1411
  %v2101 = vunpack.c.l.b16 %v1412
  %v2102 = vunpack.c.l.b16 %v1413
  %v2103 = vunpack.c.h.b16 %v1413
  %v2104 = vunpack.c.l.b16 %v1414
  %v2105 = vunpack.c.l.b16 %v1415
  %v2106 = vunpack.c.h.b16 %v1415
  %v2107 = vunpack.c.l.b16 %v1416
  %v2108 = vunpack.c.l.b16 %v1417
  %v2109 = vunpack.c.h.b16 %v1417
  %v2110 = vunpack.c.l.b16 %v1418
  %v2111 = vunpack.c.l.b16 %v1419
  %v2112 = vunpack.c.h.b16 %v1419
  %v2113 = vunpack.c.l.b16 %v1420
  %v2114 = vunpack.c.l.b16 %v1421
  %v2115 = vunpack.c.h.b16 %v1421
  %v2116 = vunpack.c.l.b16 %v1422
  %v2117 = vpack.c.b16 %v2024, %v2021
  %v2118 = vpack.c.b16 %v2025, %v2022
  %v2119 = vpack.c.b16 %v2026, %v2023
  %v2120 = vpack.c.b16 %v2030, %v2027
  %v2121 = vpack.c.b16 %v2031, %v2028
  %v2122 = vpack.c.b16 %v2032, %v2029
  %v2123 = vpack.c.b16 %v2036, %v2033
  %v2124 = vpack.c.b16 %v2037, %v2034
  %v2125 = vpack.c.b16 %v2038, %v2035
  %v2126 = vpack.c.b16 %v2042, %v2039
  %v2127 = vpack.c.b16 %v2043, %v2040
  %v2128 = vpack.c.b16 %v2044, %v2041
  %v2129 = vpack.c.b16 %v2048, %v2045
  %v2130 = vpack.c.b16 %v2049, %v2046
  %v2131 = vpack.c.b16 %v2050, %v2047
  %v2132 = vpack.c.b16 %v2054, %v2051
  %v2133 = vpack.c.b16 %v2055, %v2052
  %v2134 = vpack.c.b16 %v2056, %v2053
  %v2135 = vpack.c.b16 %v2060, %v2057
  %v2136 = vpack.c.b16 %v2061, %v2058
  %v2137 = vpack.c.b16 %v2062, %v2059
  %v2138 = vpack.c.b16 %v2066, %v2063
  %v2139 = vpack.c.b16 %v2067, %v2064
  %v2140 = vpack.c.b16 %v2068, %v2065
  %v2141 = vpack.c.b16 %v2072, %v2069
  %v2142 = vpack.c.b16 %v2073, %v2070
  %v2143 = vpack.c.b16 %v2074, %v2071
  %v2144 = vpack.c.b16 %v2078, %v2075
  %v2145 = vpack.c.b16 %v2079, %v2076
  %v2146 = vpack.c.b16 %v2080, %v2077
  %v2147 = vpack.c.b16 %v2084, %v2081
  %v2148 = vpack.c.b16 %v2085, %v2082
  %v2149 = vpack.c.b16 %v2086, %v2083
  %v2150 = vpack.c.b16 %v2090, %v2087
  %v2151 = vpack.c.b16 %v2091, %v2088
  %v2152 = vpack.c.b16 %v2092, %v2089
  %v2153 = vpack.c.b16 %v2096, %v2093
  %v2154 = vpack.c.b16 %v2097, %v2094
  %v2155 = vpack.c.b16 %v2098, %v2095
  %v2156 = vpack.c.b16 %v2102, %v2099
  %v2157 = vpack.c.b16 %v2103, %v2100
  %v2158 = vpack.c.b16 %v2104, %v2101
  %v2159 = vpack.c.b16 %v2108, %v2105
  %v2160 = vpack.c.b16 %v2109, %v2106
  %v2161 = vpack.c.b16 %v2110, %v2107
  %v2162 = vpack.c.b16 %v2114, %v2111
  %v2163 = vpack.c.b16 %v2115, %v2112
  %v2164 = vpack.c.b16 %v2116, %v2113
  %2213 = vmatprep.subr.bf16.mxu0 %v2118
  %2214 = vmatpush1.bf16.msra.mxu0 %v2117
  %2215 = vmatprep.subr.bf16.mxu0 %v2121
  %2216 = vmatpush1.bf16.msra.mxu0 %v2120
  %2217 = vmatprep.subr.bf16.mxu0 %v2124
  %2218 = vmatpush1.bf16.msra.mxu0 %v2123
  %2219 = vmatprep.subr.bf16.mxu0 %v2127
  %2220 = vmatpush1.bf16.msra.mxu0 %v2126
  %2221 = vmatprep.subr.bf16.mxu0 %v2130
  %2222 = vmatpush1.bf16.msra.mxu0 %v2129
  %2223 = vmatprep.subr.bf16.mxu0 %v2133
  %2224 = vmatpush1.bf16.msra.mxu0 %v2132
  %2225 = vmatprep.subr.bf16.mxu0 %v2136
  %2226 = vmatpush1.bf16.msra.mxu0 %v2135
  %2227 = vmatprep.subr.bf16.mxu0 %v2139
  %2228 = vmatpush1.bf16.msra.mxu0 %v2138
  %2229 = vmatprep.subr.bf16.mxu0 %v2142
  %2230 = vmatpush1.bf16.msra.mxu0 %v2141
  %2231 = vmatprep.subr.bf16.mxu0 %v2145
  %2232 = vmatpush1.bf16.msra.mxu0 %v2144
  %2233 = vmatprep.subr.bf16.mxu0 %v2148
  %2234 = vmatpush1.bf16.msra.mxu0 %v2147
  %2235 = vmatprep.subr.bf16.mxu0 %v2151
  %2236 = vmatpush1.bf16.msra.mxu0 %v2150
  %2237 = vmatprep.subr.bf16.mxu0 %v2154
  %2238 = vmatpush1.bf16.msra.mxu0 %v2153
  %2239 = vmatprep.subr.bf16.mxu0 %v2157
  %2240 = vmatpush1.bf16.msra.mxu0 %v2156
  %2241 = vmatprep.subr.bf16.mxu0 %v2160
  %2242 = vmatpush1.bf16.msra.mxu0 %v2159
  %2243 = vmatprep.subr.bf16.mxu0 %v2163
  %2244 = vmatpush1.bf16.msra.mxu0 %v2162
  %2245 = vmatprep.mubr.bf16.mxu0 %v1530
  %2246 = vmatmul.mubr.bf16.gmra.mrb[0].mxu0 %v1529
  %v2247 = vpop.f32.mrb[0].mxu0
  %v2248 = vadd.f32 %v1945, %v2247
  %v2249 = vpop.f32.mrb[0].mxu0
  %v2250 = vadd.f32 %v1949, %v2249
  %v2251 = vpop.f32.mrb[0].mxu0
  %v2252 = vadd.f32 %v1945, %v2251
  %v2253 = vpop.f32.mrb[0].mxu0
  %v2254 = vadd.f32 %v1949, %v2253
  %2255 = vmatprep.mubr.bf16.mxu0 %v1532
  %2256 = vmatmul.mubr.bf16.gmra.mrb[0].mxu0 %v1531
  %v2257 = vpop.f32.mrb[0].mxu0
  %v2258 = vadd.f32 %v1945, %v2257
  %v2259 = vpop.f32.mrb[0].mxu0
  %v2260 = vadd.f32 %v1949, %v2259
  %v2261 = vpop.f32.mrb[0].mxu0
  %v2262 = vadd.f32 %v1945, %v2261
  %v2263 = vpop.f32.mrb[0].mxu0
  %v2264 = vadd.f32 %v1949, %v2263
  %2265 = vmatprep.mubr.bf16.mxu0 %v1534
  %2266 = vmatmul.mubr.bf16.gmra.mrb[0].mxu0 %v1533
  %v2267 = vpop.f32.mrb[0].mxu0
  %v2268 = vadd.f32 %v1945, %v2267
  %v2269 = vpop.f32.mrb[0].mxu0
  %v2270 = vadd.f32 %v1949, %v2269
  %v2271 = vpop.f32.mrb[0].mxu0
  %v2272 = vadd.f32 %v1945, %v2271
  %v2273 = vpop.f32.mrb[0].mxu0
  %v2274 = vadd.f32 %v1949, %v2273
  %2275 = vmatprep.mubr.bf16.mxu0 %v1536
  %2276 = vmatmul.mubr.bf16.gmra.mrb[0].mxu0 %v1535
  %v2277 = vpop.f32.mrb[0].mxu0
  %v2278 = vadd.f32 %v1945, %v2277
  %v2279 = vpop.f32.mrb[0].mxu0
  %v2280 = vadd.f32 %v1949, %v2279
  %v2281 = vpop.f32.mrb[0].mxu0
  %v2282 = vadd.f32 %v1945, %v2281
  %v2283 = vpop.f32.mrb[0].mxu0
  %v2284 = vadd.f32 %v1949, %v2283
  %2285 = vdwg.mxu0
  %2286 = vmatprep.subr.bf16.mxu0 0
  %2287 = vmatpush1.bf16.msra.mxu0 %v2119
  %2288 = vmatprep.subr.bf16.mxu0 0
  %2289 = vmatpush1.bf16.msra.mxu0 %v2122
  %2290 = vmatprep.subr.bf16.mxu0 0
  %2291 = vmatpush1.bf16.msra.mxu0 %v2125
  %2292 = vmatprep.subr.bf16.mxu0 0
  %2293 = vmatpush1.bf16.msra.mxu0 %v2128
  %2294 = vmatprep.subr.bf16.mxu0 0
  %2295 = vmatpush1.bf16.msra.mxu0 %v2131
  %2296 = vmatprep.subr.bf16.mxu0 0
  %2297 = vmatpush1.bf16.msra.mxu0 %v2134
  %2298 = vmatprep.subr.bf16.mxu0 0
  %2299 = vmatpush1.bf16.msra.mxu0 %v2137
  %2300 = vmatprep.subr.bf16.mxu0 0
  %2301 = vmatpush1.bf16.msra.mxu0 %v2140
  %2302 = vmatprep.subr.bf16.mxu0 0
  %2303 = vmatpush1.bf16.msra.mxu0 %v2143
  %2304 = vmatprep.subr.bf16.mxu0 0
  %2305 = vmatpush1.bf16.msra.mxu0 %v2146
  %2306 = vmatprep.subr.bf16.mxu0 0
  %2307 = vmatpush1.bf16.msra.mxu0 %v2149
  %2308 = vmatprep.subr.bf16.mxu0 0
  %2309 = vmatpush1.bf16.msra.mxu0 %v2152
  %2310 = vmatprep.subr.bf16.mxu0 0
  %2311 = vmatpush1.bf16.msra.mxu0 %v2155
  %2312 = vmatprep.subr.bf16.mxu0 0
  %2313 = vmatpush1.bf16.msra.mxu0 %v2158
  %2314 = vmatprep.subr.bf16.mxu0 0
  %2315 = vmatpush1.bf16.msra.mxu0 %v2161
  %2316 = vmatprep.subr.bf16.mxu0 0
  %2317 = vmatpush1.bf16.msra.mxu0 %v2164
  %2318 = vmatprep.mubr.bf16.mxu0 %v1530
  %2319 = vmatmul.mubr.bf16.gmra.mrb[0].mxu0 %v1529
  %v2320 = vpop.f32.mrb[0].mxu0
  %v2321 = vadd.f32 %v1953, %v2320
  %v2322 = vpop.f32.mrb[0].mxu0
  %v2323 = vpop.f32.mrb[0].mxu0
  %v2324 = vadd.f32 %v1953, %v2323
  %v2325 = vpop.f32.mrb[0].mxu0
  %2326 = vmatprep.mubr.bf16.mxu0 %v1532
  %2327 = vmatmul.mubr.bf16.gmra.mrb[0].mxu0 %v1531
  %v2328 = vpop.f32.mrb[0].mxu0
  %v2329 = vadd.f32 %v1953, %v2328
  %v2330 = vpop.f32.mrb[0].mxu0
  %v2331 = vpop.f32.mrb[0].mxu0
  %v2332 = vadd.f32 %v1953, %v2331
  %v2333 = vpop.f32.mrb[0].mxu0
  %2334 = vmatprep.mubr.bf16.mxu0 %v1534
  %2335 = vmatmul.mubr.bf16.gmra.mrb[0].mxu0 %v1533
  %v2336 = vpop.f32.mrb[0].mxu0
  %v2337 = vadd.f32 %v1953, %v2336
  %v2338 = vpop.f32.mrb[0].mxu0
  %v2339 = vpop.f32.mrb[0].mxu0
  %v2340 = vadd.f32 %v1953, %v2339
  %v2341 = vpop.f32.mrb[0].mxu0
  %2342 = vmatprep.mubr.bf16.mxu0 %v1536
  %2343 = vmatmul.mubr.bf16.gmra.mrb[0].mxu0 %v1535
  %v2344 = vpop.f32.mrb[0].mxu0
  %v2345 = vadd.f32 %v1953, %v2344
  %v2346 = vpop.f32.mrb[0].mxu0
  %v2347 = vpop.f32.mrb[0].mxu0
  %v2348 = vadd.f32 %v1953, %v2347
  %v2349 = vpop.f32.mrb[0].mxu0
  %2350 = vdwg.mxu0
  %v2351 = vld [vmem:[%s4] sm:$0x1]
  %v2353 = vlaneseq
  %v2354 = vshrl.u32 %v2353, 7
  %v2355 = vsub.s32 0, %v2354
  %v2356 = vrot.slane %v2351, %v2355
  %s2358 = scalar_lea.vmem %s4, 1
  %v2359 = vld [vmem:[%s2358] sm:$0x1]
  %v2361 = vlaneseq
  %v2362 = vshrl.u32 %v2361, 7
  %v2363 = vsub.s32 0, %v2362
  %v2364 = vrot.slane %v2359, %v2363
  %v2398 = vunpack.c.l.b16 %v1423
  %v2399 = vunpack.c.h.b16 %v1423
  %v2400 = vunpack.c.l.b16 %v1424
  %v2401 = vunpack.c.l.b16 %v1425
  %v2402 = vunpack.c.h.b16 %v1425
  %v2403 = vunpack.c.l.b16 %v1426
  %v2404 = vunpack.c.l.b16 %v1427
  %v2405 = vunpack.c.h.b16 %v1427
  %v2406 = vunpack.c.l.b16 %v1428
  %v2407 = vunpack.c.l.b16 %v1429
  %v2408 = vunpack.c.h.b16 %v1429
  %v2409 = vunpack.c.l.b16 %v1430
  %v2410 = vunpack.c.l.b16 %v1431
  %v2411 = vunpack.c.h.b16 %v1431
  %v2412 = vunpack.c.l.b16 %v1432
  %v2413 = vunpack.c.l.b16 %v1433
  %v2414 = vunpack.c.h.b16 %v1433
  %v2415 = vunpack.c.l.b16 %v1434
  %v2416 = vunpack.c.l.b16 %v1435
  %v2417 = vunpack.c.h.b16 %v1435
  %v2418 = vunpack.c.l.b16 %v1436
  %v2419 = vunpack.c.l.b16 %v1437
  %v2420 = vunpack.c.h.b16 %v1437
  %v2421 = vunpack.c.l.b16 %v1438
  %v2422 = vunpack.c.l.b16 %v1439
  %v2423 = vunpack.c.h.b16 %v1439
  %v2424 = vunpack.c.l.b16 %v1440
  %v2425 = vunpack.c.l.b16 %v1441
  %v2426 = vunpack.c.h.b16 %v1441
  %v2427 = vunpack.c.l.b16 %v1442
  %v2428 = vunpack.c.l.b16 %v1443
  %v2429 = vunpack.c.h.b16 %v1443
  %v2430 = vunpack.c.l.b16 %v1444
  %v2431 = vunpack.c.l.b16 %v1445
  %v2432 = vunpack.c.h.b16 %v1445
  %v2433 = vunpack.c.l.b16 %v1446
  %v2434 = vunpack.c.l.b16 %v1447
  %v2435 = vunpack.c.h.b16 %v1447
  %v2436 = vunpack.c.l.b16 %v1448
  %v2437 = vunpack.c.l.b16 %v1449
  %v2438 = vunpack.c.h.b16 %v1449
  %v2439 = vunpack.c.l.b16 %v1450
  %v2440 = vunpack.c.l.b16 %v1451
  %v2441 = vunpack.c.h.b16 %v1451
  %v2442 = vunpack.c.l.b16 %v1452
  %v2443 = vunpack.c.l.b16 %v1453
  %v2444 = vunpack.c.h.b16 %v1453
  %v2445 = vunpack.c.l.b16 %v1454
  %v2446 = vpack.c.b16 %v2401, %v2398
  %v2447 = vpack.c.b16 %v2402, %v2399
  %v2448 = vpack.c.b16 %v2403, %v2400
  %v2449 = vpack.c.b16 %v2407, %v2404
  %v2450 = vpack.c.b16 %v2408, %v2405
  %v2451 = vpack.c.b16 %v2409, %v2406
  %v2452 = vpack.c.b16 %v2413, %v2410
  %v2453 = vpack.c.b16 %v2414, %v2411
  %v2454 = vpack.c.b16 %v2415, %v2412
  %v2455 = vpack.c.b16 %v2419, %v2416
  %v2456 = vpack.c.b16 %v2420, %v2417
  %v2457 = vpack.c.b16 %v2421, %v2418
  %v2458 = vpack.c.b16 %v2425, %v2422
  %v2459 = vpack.c.b16 %v2426, %v2423
  %v2460 = vpack.c.b16 %v2427, %v2424
  %v2461 = vpack.c.b16 %v2431, %v2428
  %v2462 = vpack.c.b16 %v2432, %v2429
  %v2463 = vpack.c.b16 %v2433, %v2430
  %v2464 = vpack.c.b16 %v2437, %v2434
  %v2465 = vpack.c.b16 %v2438, %v2435
  %v2466 = vpack.c.b16 %v2439, %v2436
  %v2467 = vpack.c.b16 %v2443, %v2440
  %v2468 = vpack.c.b16 %v2444, %v2441
  %v2469 = vpack.c.b16 %v2445, %v2442
  %2494 = vmatprep.subr.bf16.mxu0 %v2447
  %2495 = vmatpush1.bf16.msra.mxu0 %v2446
  %2496 = vmatprep.subr.bf16.mxu0 %v2450
  %2497 = vmatpush1.bf16.msra.mxu0 %v2449
  %2498 = vmatprep.subr.bf16.mxu0 %v2453
  %2499 = vmatpush1.bf16.msra.mxu0 %v2452
  %2500 = vmatprep.subr.bf16.mxu0 %v2456
  %2501 = vmatpush1.bf16.msra.mxu0 %v2455
  %2502 = vmatprep.subr.bf16.mxu0 %v2459
  %2503 = vmatpush1.bf16.msra.mxu0 %v2458
  %2504 = vmatprep.subr.bf16.mxu0 %v2462
  %2505 = vmatpush1.bf16.msra.mxu0 %v2461
  %2506 = vmatprep.subr.bf16.mxu0 %v2465
  %2507 = vmatpush1.bf16.msra.mxu0 %v2464
  %2508 = vmatprep.subr.bf16.mxu0 %v2468
  %2509 = vmatpush1.bf16.msra.mxu0 %v2467
  %2510 = vmatprep.subr.bf16.mxu0 0
  %2511 = vmatpush1.bf16.msra.mxu0 0
  %2512 = vmatprep.subr.bf16.mxu0 0
  %2513 = vmatpush1.bf16.msra.mxu0 0
  %2514 = vmatprep.subr.bf16.mxu0 0
  %2515 = vmatpush1.bf16.msra.mxu0 0
  %2516 = vmatprep.subr.bf16.mxu0 0
  %2517 = vmatpush1.bf16.msra.mxu0 0
  %2518 = vmatprep.subr.bf16.mxu0 0
  %2519 = vmatpush1.bf16.msra.mxu0 0
  %2520 = vmatprep.subr.bf16.mxu0 0
  %2521 = vmatpush1.bf16.msra.mxu0 0
  %2522 = vmatprep.subr.bf16.mxu0 0
  %2523 = vmatpush1.bf16.msra.mxu0 0
  %2524 = vmatprep.subr.bf16.mxu0 0
  %2525 = vmatpush1.bf16.msra.mxu0 0
  %2526 = vmatprep.mubr.bf16.mxu0 0
  %2527 = vmatmul.mubr.bf16.gmra.mrb[0].mxu0 0
  %v2528 = vpop.f32.mrb[0].mxu0
  %v2529 = vadd.f32 0.0, %v2528
  %v2530 = vpop.f32.mrb[0].mxu0
  %v2531 = vadd.f32 0.0, %v2530
  %v2532 = vpop.f32.mrb[0].mxu0
  %v2533 = vpop.f32.mrb[0].mxu0
  %2534 = vdwg.mxu0
  %2535 = vmatprep.subr.bf16.mxu0 0
  %2536 = vmatpush1.bf16.msra.mxu0 %v2448
  %2537 = vmatprep.subr.bf16.mxu0 0
  %2538 = vmatpush1.bf16.msra.mxu0 %v2451
  %2539 = vmatprep.subr.bf16.mxu0 0
  %2540 = vmatpush1.bf16.msra.mxu0 %v2454
  %2541 = vmatprep.subr.bf16.mxu0 0
  %2542 = vmatpush1.bf16.msra.mxu0 %v2457
  %2543 = vmatprep.subr.bf16.mxu0 0
  %2544 = vmatpush1.bf16.msra.mxu0 %v2460
  %2545 = vmatprep.subr.bf16.mxu0 0
  %2546 = vmatpush1.bf16.msra.mxu0 %v2463
  %2547 = vmatprep.subr.bf16.mxu0 0
  %2548 = vmatpush1.bf16.msra.mxu0 %v2466
  %2549 = vmatprep.subr.bf16.mxu0 0
  %2550 = vmatpush1.bf16.msra.mxu0 %v2469
  %2551 = vmatprep.subr.bf16.mxu0 0
  %2552 = vmatpush1.bf16.msra.mxu0 0
  %2553 = vmatprep.subr.bf16.mxu0 0
  %2554 = vmatpush1.bf16.msra.mxu0 0
  %2555 = vmatprep.subr.bf16.mxu0 0
  %2556 = vmatpush1.bf16.msra.mxu0 0
  %2557 = vmatprep.subr.bf16.mxu0 0
  %2558 = vmatpush1.bf16.msra.mxu0 0
  %2559 = vmatprep.subr.bf16.mxu0 0
  %2560 = vmatpush1.bf16.msra.mxu0 0
  %2561 = vmatprep.subr.bf16.mxu0 0
  %2562 = vmatpush1.bf16.msra.mxu0 0
  %2563 = vmatprep.subr.bf16.mxu0 0
  %2564 = vmatpush1.bf16.msra.mxu0 0
  %2565 = vmatprep.subr.bf16.mxu0 0
  %2566 = vmatpush1.bf16.msra.mxu0 0
  %2567 = vmatprep.mubr.bf16.mxu0 0
  %2568 = vmatmul.mubr.bf16.gmra.mrb[0].mxu0 0
  %v2569 = vpop.f32.mrb[0].mxu0
  %v2570 = vadd.f32 0.0, %v2569
  %v2571 = vpop.f32.mrb[0].mxu0
  %v2572 = vpop.f32.mrb[0].mxu0
  %v2573 = vpop.f32.mrb[0].mxu0
  %2574 = vdwg.mxu0
  %v2607 = vunpack.c.l.b16 %v1456
  %v2608 = vunpack.c.h.b16 %v1456
  %v2609 = vunpack.c.l.b16 %v1457
  %v2610 = vunpack.c.l.b16 %v1458
  %v2611 = vunpack.c.h.b16 %v1458
  %v2612 = vunpack.c.l.b16 %v1459
  %v2613 = vunpack.c.l.b16 %v1460
  %v2614 = vunpack.c.h.b16 %v1460
  %v2615 = vunpack.c.l.b16 %v1461
  %v2616 = vunpack.c.l.b16 %v1462
  %v2617 = vunpack.c.h.b16 %v1462
  %v2618 = vunpack.c.l.b16 %v1463
  %v2619 = vunpack.c.l.b16 %v1464
  %v2620 = vunpack.c.h.b16 %v1464
  %v2621 = vunpack.c.l.b16 %v1465
  %v2622 = vunpack.c.l.b16 %v1466
  %v2623 = vunpack.c.h.b16 %v1466
  %v2624 = vunpack.c.l.b16 %v1467
  %v2625 = vunpack.c.l.b16 %v1468
  %v2626 = vunpack.c.h.b16 %v1468
  %v2627 = vunpack.c.l.b16 %v1469
  %v2628 = vunpack.c.l.b16 %v1470
  %v2629 = vunpack.c.h.b16 %v1470
  %v2630 = vunpack.c.l.b16 %v1471
  %v2631 = vunpack.c.l.b16 %v1472
  %v2632 = vunpack.c.h.b16 %v1472
  %v2633 = vunpack.c.l.b16 %v1473
  %v2634 = vunpack.c.l.b16 %v1474
  %v2635 = vunpack.c.h.b16 %v1474
  %v2636 = vunpack.c.l.b16 %v1475
  %v2637 = vunpack.c.l.b16 %v1476
  %v2638 = vunpack.c.h.b16 %v1476
  %v2639 = vunpack.c.l.b16 %v1477
  %v2640 = vunpack.c.l.b16 %v1478
  %v2641 = vunpack.c.h.b16 %v1478
  %v2642 = vunpack.c.l.b16 %v1479
  %v2643 = vunpack.c.l.b16 %v1480
  %v2644 = vunpack.c.h.b16 %v1480
  %v2645 = vunpack.c.l.b16 %v1481
  %v2646 = vunpack.c.l.b16 %v1482
  %v2647 = vunpack.c.h.b16 %v1482
  %v2648 = vunpack.c.l.b16 %v1483
  %v2649 = vunpack.c.l.b16 %v1484
  %v2650 = vunpack.c.h.b16 %v1484
  %v2651 = vunpack.c.l.b16 %v1485
  %v2652 = vunpack.c.l.b16 %v1486
  %v2653 = vunpack.c.h.b16 %v1486
  %v2654 = vunpack.c.l.b16 %v1487
  %v2655 = vpack.c.b16 %v2610, %v2607
  %v2656 = vpack.c.b16 %v2611, %v2608
  %v2657 = vpack.c.b16 %v2612, %v2609
  %v2658 = vpack.c.b16 %v2616, %v2613
  %v2659 = vpack.c.b16 %v2617, %v2614
  %v2660 = vpack.c.b16 %v2618, %v2615
  %v2661 = vpack.c.b16 %v2622, %v2619
  %v2662 = vpack.c.b16 %v2623, %v2620
  %v2663 = vpack.c.b16 %v2624, %v2621
  %v2664 = vpack.c.b16 %v2628, %v2625
  %v2665 = vpack.c.b16 %v2629, %v2626
  %v2666 = vpack.c.b16 %v2630, %v2627
  %v2667 = vpack.c.b16 %v2634, %v2631
  %v2668 = vpack.c.b16 %v2635, %v2632
  %v2669 = vpack.c.b16 %v2636, %v2633
  %v2670 = vpack.c.b16 %v2640, %v2637
  %v2671 = vpack.c.b16 %v2641, %v2638
  %v2672 = vpack.c.b16 %v2642, %v2639
  %v2673 = vpack.c.b16 %v2646, %v2643
  %v2674 = vpack.c.b16 %v2647, %v2644
  %v2675 = vpack.c.b16 %v2648, %v2645
  %v2676 = vpack.c.b16 %v2652, %v2649
  %v2677 = vpack.c.b16 %v2653, %v2650
  %v2678 = vpack.c.b16 %v2654, %v2651
  %2703 = vmatprep.subr.bf16.mxu0 %v2656
  %2704 = vmatpush1.bf16.msra.mxu0 %v2655
  %2705 = vmatprep.subr.bf16.mxu0 %v2659
  %2706 = vmatpush1.bf16.msra.mxu0 %v2658
  %2707 = vmatprep.subr.bf16.mxu0 %v2662
  %2708 = vmatpush1.bf16.msra.mxu0 %v2661
  %2709 = vmatprep.subr.bf16.mxu0 %v2665
  %2710 = vmatpush1.bf16.msra.mxu0 %v2664
  %2711 = vmatprep.subr.bf16.mxu0 %v2668
  %2712 = vmatpush1.bf16.msra.mxu0 %v2667
  %2713 = vmatprep.subr.bf16.mxu0 %v2671
  %2714 = vmatpush1.bf16.msra.mxu0 %v2670
  %2715 = vmatprep.subr.bf16.mxu0 %v2674
  %2716 = vmatpush1.bf16.msra.mxu0 %v2673
  %2717 = vmatprep.subr.bf16.mxu0 %v2677
  %2718 = vmatpush1.bf16.msra.mxu0 %v2676
  %2719 = vmatprep.subr.bf16.mxu0 0
  %2720 = vmatpush1.bf16.msra.mxu0 0
  %2721 = vmatprep.subr.bf16.mxu0 0
  %2722 = vmatpush1.bf16.msra.mxu0 0
  %2723 = vmatprep.subr.bf16.mxu0 0
  %2724 = vmatpush1.bf16.msra.mxu0 0
  %2725 = vmatprep.subr.bf16.mxu0 0
  %2726 = vmatpush1.bf16.msra.mxu0 0
  %2727 = vmatprep.subr.bf16.mxu0 0
  %2728 = vmatpush1.bf16.msra.mxu0 0
  %2729 = vmatprep.subr.bf16.mxu0 0
  %2730 = vmatpush1.bf16.msra.mxu0 0
  %2731 = vmatprep.subr.bf16.mxu0 0
  %2732 = vmatpush1.bf16.msra.mxu0 0
  %2733 = vmatprep.subr.bf16.mxu0 0
  %2734 = vmatpush1.bf16.msra.mxu0 0
  %2735 = vmatprep.mubr.bf16.mxu0 0
  %2736 = vmatmul.mubr.bf16.gmra.mrb[0].mxu0 0
  %v2737 = vpop.f32.mrb[0].mxu0
  %v2738 = vadd.f32 0.0, %v2737
  %v2739 = vpop.f32.mrb[0].mxu0
  %v2740 = vadd.f32 0.0, %v2739
  %v2741 = vpop.f32.mrb[0].mxu0
  %v2742 = vpop.f32.mrb[0].mxu0
  %2743 = vdwg.mxu0
  %2744 = vmatprep.subr.bf16.mxu0 0
  %2745 = vmatpush1.bf16.msra.mxu0 %v2657
  %2746 = vmatprep.subr.bf16.mxu0 0
  %2747 = vmatpush1.bf16.msra.mxu0 %v2660
  %2748 = vmatprep.subr.bf16.mxu0 0
  %2749 = vmatpush1.bf16.msra.mxu0 %v2663
  %2750 = vmatprep.subr.bf16.mxu0 0
  %2751 = vmatpush1.bf16.msra.mxu0 %v2666
  %2752 = vmatprep.subr.bf16.mxu0 0
  %2753 = vmatpush1.bf16.msra.mxu0 %v2669
  %2754 = vmatprep.subr.bf16.mxu0 0
  %2755 = vmatpush1.bf16.msra.mxu0 %v2672
  %2756 = vmatprep.subr.bf16.mxu0 0
  %2757 = vmatpush1.bf16.msra.mxu0 %v2675
  %2758 = vmatprep.subr.bf16.mxu0 0
  %2759 = vmatpush1.bf16.msra.mxu0 %v2678
  %2760 = vmatprep.subr.bf16.mxu0 0
  %2761 = vmatpush1.bf16.msra.mxu0 0
  %2762 = vmatprep.subr.bf16.mxu0 0
  %2763 = vmatpush1.bf16.msra.mxu0 0
  %2764 = vmatprep.subr.bf16.mxu0 0
  %2765 = vmatpush1.bf16.msra.mxu0 0
  %2766 = vmatprep.subr.bf16.mxu0 0
  %2767 = vmatpush1.bf16.msra.mxu0 0
  %2768 = vmatprep.subr.bf16.mxu0 0
  %2769 = vmatpush1.bf16.msra.mxu0 0
  %2770 = vmatprep.subr.bf16.mxu0 0
  %2771 = vmatpush1.bf16.msra.mxu0 0
  %2772 = vmatprep.subr.bf16.mxu0 0
  %2773 = vmatpush1.bf16.msra.mxu0 0
  %2774 = vmatprep.subr.bf16.mxu0 0
  %2775 = vmatpush1.bf16.msra.mxu0 0
  %2776 = vmatprep.mubr.bf16.mxu0 0
  %2777 = vmatmul.mubr.bf16.gmra.mrb[0].mxu0 0
  %v2778 = vpop.f32.mrb[0].mxu0
  %v2779 = vadd.f32 0.0, %v2778
  %v2780 = vpop.f32.mrb[0].mxu0
  %v2781 = vpop.f32.mrb[0].mxu0
  %v2782 = vpop.f32.mrb[0].mxu0
  %2783 = vdwg.mxu0
  %v2784 = vadd.f32 %v1836, %v2529
  %v2785 = vxor.u32 %v2784, 2147483648
  %v2786 = vmul.f32 %v2785, 1.442695
  %v2787 = vpow.pop %v2786
  %v2788 = vadd.f32 %v2787, 1.0
  %v2789 = vrcp.pop %v2788
  %v2790 = vmul.f32 1.0, %v2789
  %v2791 = vadd.f32 %v1838, %v2531
  %v2792 = vxor.u32 %v2791, 2147483648
  %v2793 = vmul.f32 %v2792, 1.442695
  %v2794 = vpow.pop %v2793
  %v2795 = vadd.f32 %v2794, 1.0
  %v2796 = vrcp.pop %v2795
  %v2797 = vmul.f32 1.0, %v2796
  %v2798 = vadd.f32 %v2570, %v2356
  %v2799 = vmul.f32 %v2790, %v2798
  %v2800 = vadd.f32 %v1909, %v2799
  %v2801 = vtanh.pop %v2800
  %v2802 = vsub.f32 1.0, %v2797
  %v2803 = vmul.f32 %v2802, %v2801
  %v2804 = vmul.f32 %v2797, 0.0
  %v2805 = vadd.f32 %v2803, %v2804
  %v2806 = vadd.f32 %v2282, %v2738
  %v2807 = vxor.u32 %v2806, 2147483648
  %v2808 = vmul.f32 %v2807, 1.442695
  %v2809 = vpow.pop %v2808
  %v2810 = vadd.f32 %v2809, 1.0
  %v2811 = vrcp.pop %v2810
  %v2812 = vmul.f32 1.0, %v2811
  %v2813 = vadd.f32 %v2284, %v2740
  %v2814 = vxor.u32 %v2813, 2147483648
  %v2815 = vmul.f32 %v2814, 1.442695
  %v2816 = vpow.pop %v2815
  %v2817 = vadd.f32 %v2816, 1.0
  %v2818 = vrcp.pop %v2817
  %v2819 = vmul.f32 1.0, %v2818
  %v2820 = vadd.f32 %v2779, %v2364
  %v2821 = vmul.f32 %v2812, %v2820
  %v2822 = vadd.f32 %v2348, %v2821
  %v2823 = vtanh.pop %v2822
  %v2824 = vsub.f32 1.0, %v2819
  %v2825 = vmul.f32 %v2824, %v2823
  %v2826 = vmul.f32 %v2819, 0.0
  %v2827 = vadd.f32 %v2825, %v2826
  %2828 = vst [vmem:[#allocation2] sm:$0xff] %v2805
  %2829 = vst [vmem:[#allocation2 + $0x78] sm:$0xff] %v2827
  %v2830 = vpack.c.bf16 %v2805, %v2805
  %2831 = vmatprep.subr.bf16.mxu0 %v2447
  %2832 = vmatpush1.bf16.msra.mxu0 %v2446
  %2833 = vmatprep.subr.bf16.mxu0 %v2450
  %2834 = vmatpush1.bf16.msra.mxu0 %v2449
  %2835 = vmatprep.subr.bf16.mxu0 %v2453
  %2836 = vmatpush1.bf16.msra.mxu0 %v2452
  %2837 = vmatprep.subr.bf16.mxu0 %v2456
  %2838 = vmatpush1.bf16.msra.mxu0 %v2455
  %2839 = vmatprep.subr.bf16.mxu0 %v2459
  %2840 = vmatpush1.bf16.msra.mxu0 %v2458
  %2841 = vmatprep.subr.bf16.mxu0 %v2462
  %2842 = vmatpush1.bf16.msra.mxu0 %v2461
  %2843 = vmatprep.subr.bf16.mxu0 %v2465
  %2844 = vmatpush1.bf16.msra.mxu0 %v2464
  %2845 = vmatprep.subr.bf16.mxu0 %v2468
  %2846 = vmatpush1.bf16.msra.mxu0 %v2467
  %2847 = vmatprep.subr.bf16.mxu0 0
  %2848 = vmatpush1.bf16.msra.mxu0 0
  %2849 = vmatprep.subr.bf16.mxu0 0
  %2850 = vmatpush1.bf16.msra.mxu0 0
  %2851 = vmatprep.subr.bf16.mxu0 0
  %2852 = vmatpush1.bf16.msra.mxu0 0
  %2853 = vmatprep.subr.bf16.mxu0 0
  %2854 = vmatpush1.bf16.msra.mxu0 0
  %2855 = vmatprep.subr.bf16.mxu0 0
  %2856 = vmatpush1.bf16.msra.mxu0 0
  %2857 = vmatprep.subr.bf16.mxu0 0
  %2858 = vmatpush1.bf16.msra.mxu0 0
  %2859 = vmatprep.subr.bf16.mxu0 0
  %2860 = vmatpush1.bf16.msra.mxu0 0
  %2861 = vmatprep.subr.bf16.mxu0 0
  %2862 = vmatpush1.bf16.msra.mxu0 0
  %2863 = vmatprep.mubr.bf16.mxu0 0
  %2864 = vmatmul.mubr.bf16.gmra.mrb[0].mxu0 %v2830
  %v2865 = vpop.f32.mrb[0].mxu0
  %v2866 = vadd.f32 0.0, %v2865
  %v2867 = vpop.f32.mrb[0].mxu0
  %v2868 = vadd.f32 0.0, %v2867
  %v2869 = vpop.f32.mrb[0].mxu0
  %v2870 = vpop.f32.mrb[0].mxu0
  %2871 = vdwg.mxu0
  %2872 = vmatprep.subr.bf16.mxu0 0
  %2873 = vmatpush1.bf16.msra.mxu0 %v2448
  %2874 = vmatprep.subr.bf16.mxu0 0
  %2875 = vmatpush1.bf16.msra.mxu0 %v2451
  %2876 = vmatprep.subr.bf16.mxu0 0
  %2877 = vmatpush1.bf16.msra.mxu0 %v2454
  %2878 = vmatprep.subr.bf16.mxu0 0
  %2879 = vmatpush1.bf16.msra.mxu0 %v2457
  %2880 = vmatprep.subr.bf16.mxu0 0
  %2881 = vmatpush1.bf16.msra.mxu0 %v2460
  %2882 = vmatprep.subr.bf16.mxu0 0
  %2883 = vmatpush1.bf16.msra.mxu0 %v2463
  %2884 = vmatprep.subr.bf16.mxu0 0
  %2885 = vmatpush1.bf16.msra.mxu0 %v2466
  %2886 = vmatprep.subr.bf16.mxu0 0
  %2887 = vmatpush1.bf16.msra.mxu0 %v2469
  %2888 = vmatprep.subr.bf16.mxu0 0
  %2889 = vmatpush1.bf16.msra.mxu0 0
  %2890 = vmatprep.subr.bf16.mxu0 0
  %2891 = vmatpush1.bf16.msra.mxu0 0
  %2892 = vmatprep.subr.bf16.mxu0 0
  %2893 = vmatpush1.bf16.msra.mxu0 0
  %2894 = vmatprep.subr.bf16.mxu0 0
  %2895 = vmatpush1.bf16.msra.mxu0 0
  %2896 = vmatprep.subr.bf16.mxu0 0
  %2897 = vmatpush1.bf16.msra.mxu0 0
  %2898 = vmatprep.subr.bf16.mxu0 0
  %2899 = vmatpush1.bf16.msra.mxu0 0
  %2900 = vmatprep.subr.bf16.mxu0 0
  %2901 = vmatpush1.bf16.msra.mxu0 0
  %2902 = vmatprep.subr.bf16.mxu0 0
  %2903 = vmatpush1.bf16.msra.mxu0 0
  %2904 = vmatprep.mubr.bf16.mxu0 0
  %2905 = vmatmul.mubr.bf16.gmra.mrb[0].mxu0 %v2830
  %v2906 = vpop.f32.mrb[0].mxu0
  %v2907 = vadd.f32 0.0, %v2906
  %v2908 = vpop.f32.mrb[0].mxu0
  %v2909 = vpop.f32.mrb[0].mxu0
  %v2910 = vpop.f32.mrb[0].mxu0
  %2911 = vdwg.mxu0
  %v2912 = vpack.c.bf16 %v2827, %v2827
  %2913 = vmatprep.subr.bf16.mxu0 %v2656
  %2914 = vmatpush1.bf16.msra.mxu0 %v2655
  %2915 = vmatprep.subr.bf16.mxu0 %v2659
  %2916 = vmatpush1.bf16.msra.mxu0 %v2658
  %2917 = vmatprep.subr.bf16.mxu0 %v2662
  %2918 = vmatpush1.bf16.msra.mxu0 %v2661
  %2919 = vmatprep.subr.bf16.mxu0 %v2665
  %2920 = vmatpush1.bf16.msra.mxu0 %v2664
  %2921 = vmatprep.subr.bf16.mxu0 %v2668
  %2922 = vmatpush1.bf16.msra.mxu0 %v2667
  %2923 = vmatprep.subr.bf16.mxu0 %v2671
  %2924 = vmatpush1.bf16.msra.mxu0 %v2670
  %2925 = vmatprep.subr.bf16.mxu0 %v2674
  %2926 = vmatpush1.bf16.msra.mxu0 %v2673
  %2927 = vmatprep.subr.bf16.mxu0 %v2677
  %2928 = vmatpush1.bf16.msra.mxu0 %v2676
  %2929 = vmatprep.subr.bf16.mxu0 0
  %2930 = vmatpush1.bf16.msra.mxu0 0
  %2931 = vmatprep.subr.bf16.mxu0 0
  %2932 = vmatpush1.bf16.msra.mxu0 0
  %2933 = vmatprep.subr.bf16.mxu0 0
  %2934 = vmatpush1.bf16.msra.mxu0 0
  %2935 = vmatprep.subr.bf16.mxu0 0
  %2936 = vmatpush1.bf16.msra.mxu0 0
  %2937 = vmatprep.subr.bf16.mxu0 0
  %2938 = vmatpush1.bf16.msra.mxu0 0
  %2939 = vmatprep.subr.bf16.mxu0 0
  %2940 = vmatpush1.bf16.msra.mxu0 0
  %2941 = vmatprep.subr.bf16.mxu0 0
  %2942 = vmatpush1.bf16.msra.mxu0 0
  %2943 = vmatprep.subr.bf16.mxu0 0
  %2944 = vmatpush1.bf16.msra.mxu0 0
  %2945 = vmatprep.mubr.bf16.mxu0 0
  %2946 = vmatmul.mubr.bf16.gmra.mrb[0].mxu0 %v2912
  %v2947 = vpop.f32.mrb[0].mxu0
  %v2948 = vadd.f32 0.0, %v2947
  %v2949 = vpop.f32.mrb[0].mxu0
  %v2950 = vadd.f32 0.0, %v2949
  %v2951 = vpop.f32.mrb[0].mxu0
  %v2952 = vpop.f32.mrb[0].mxu0
  %2953 = vdwg.mxu0
  %2954 = vmatprep.subr.bf16.mxu0 0
  %2955 = vmatpush1.bf16.msra.mxu0 %v2657
  %2956 = vmatprep.subr.bf16.mxu0 0
  %2957 = vmatpush1.bf16.msra.mxu0 %v2660
  %2958 = vmatprep.subr.bf16.mxu0 0
  %2959 = vmatpush1.bf16.msra.mxu0 %v2663
  %2960 = vmatprep.subr.bf16.mxu0 0
  %2961 = vmatpush1.bf16.msra.mxu0 %v2666
  %2962 = vmatprep.subr.bf16.mxu0 0
  %2963 = vmatpush1.bf16.msra.mxu0 %v2669
  %2964 = vmatprep.subr.bf16.mxu0 0
  %2965 = vmatpush1.bf16.msra.mxu0 %v2672
  %2966 = vmatprep.subr.bf16.mxu0 0
  %2967 = vmatpush1.bf16.msra.mxu0 %v2675
  %2968 = vmatprep.subr.bf16.mxu0 0
  %2969 = vmatpush1.bf16.msra.mxu0 %v2678
  %2970 = vmatprep.subr.bf16.mxu0 0
  %2971 = vmatpush1.bf16.msra.mxu0 0
  %2972 = vmatprep.subr.bf16.mxu0 0
  %2973 = vmatpush1.bf16.msra.mxu0 0
  %2974 = vmatprep.subr.bf16.mxu0 0
  %2975 = vmatpush1.bf16.msra.mxu0 0
  %2976 = vmatprep.subr.bf16.mxu0 0
  %2977 = vmatpush1.bf16.msra.mxu0 0
  %2978 = vmatprep.subr.bf16.mxu0 0
  %2979 = vmatpush1.bf16.msra.mxu0 0
  %2980 = vmatprep.subr.bf16.mxu0 0
  %2981 = vmatpush1.bf16.msra.mxu0 0
  %2982 = vmatprep.subr.bf16.mxu0 0
  %2983 = vmatpush1.bf16.msra.mxu0 0
  %2984 = vmatprep.subr.bf16.mxu0 0
  %2985 = vmatpush1.bf16.msra.mxu0 0
  %2986 = vmatprep.mubr.bf16.mxu0 0
  %2987 = vmatmul.mubr.bf16.gmra.mrb[0].mxu0 %v2912
  %v2988 = vpop.f32.mrb[0].mxu0
  %v2989 = vadd.f32 0.0, %v2988
  %v2990 = vpop.f32.mrb[0].mxu0
  %v2991 = vpop.f32.mrb[0].mxu0
  %v2992 = vpop.f32.mrb[0].mxu0
  %2993 = vdwg.mxu0
  %v2994 = vadd.f32 %v1840, %v2866
  %v2995 = vxor.u32 %v2994, 2147483648
  %v2996 = vmul.f32 %v2995, 1.442695
  %v2997 = vpow.pop %v2996
  %v2998 = vadd.f32 %v2997, 1.0
  %v2999 = vrcp.pop %v2998
  %v3000 = vmul.f32 1.0, %v2999
  %v3001 = vadd.f32 %v1842, %v2868
  %v3002 = vxor.u32 %v3001, 2147483648
  %v3003 = vmul.f32 %v3002, 1.442695
  %v3004 = vpow.pop %v3003
  %v3005 = vadd.f32 %v3004, 1.0
  %v3006 = vrcp.pop %v3005
  %v3007 = vmul.f32 1.0, %v3006
  %v3008 = vadd.f32 %v2907, %v2356
  %v3009 = vmul.f32 %v3000, %v3008
  %v3010 = vadd.f32 %v1912, %v3009
  %v3011 = vtanh.pop %v3010
  %v3012 = vsub.f32 1.0, %v3007
  %v3013 = vmul.f32 %v3012, %v3011
  %v3014 = vmul.f32 %v3007, %v2805
  %v3015 = vadd.f32 %v3013, %v3014
  %v3016 = vadd.f32 %v2278, %v2948
  %v3017 = vxor.u32 %v3016, 2147483648
  %v3018 = vmul.f32 %v3017, 1.442695
  %v3019 = vpow.pop %v3018
  %v3020 = vadd.f32 %v3019, 1.0
  %v3021 = vrcp.pop %v3020
  %v3022 = vmul.f32 1.0, %v3021
  %v3023 = vadd.f32 %v2280, %v2950
  %v3024 = vxor.u32 %v3023, 2147483648
  %v3025 = vmul.f32 %v3024, 1.442695
  %v3026 = vpow.pop %v3025
  %v3027 = vadd.f32 %v3026, 1.0
  %v3028 = vrcp.pop %v3027
  %v3029 = vmul.f32 1.0, %v3028
  %v3030 = vadd.f32 %v2989, %v2364
  %v3031 = vmul.f32 %v3022, %v3030
  %v3032 = vadd.f32 %v2345, %v3031
  %v3033 = vtanh.pop %v3032
  %v3034 = vsub.f32 1.0, %v3029
  %v3035 = vmul.f32 %v3034, %v3033
  %v3036 = vmul.f32 %v3029, %v2827
  %v3037 = vadd.f32 %v3035, %v3036
  %3038 = vst [vmem:[#allocation2 + $0x10] sm:$0xff] %v3015
  %3039 = vst [vmem:[#allocation2 + $0x68] sm:$0xff] %v3037
  %v3040 = vpack.c.bf16 %v3015, %v3015
  %3041 = vmatprep.subr.bf16.mxu0 %v2447
  %3042 = vmatpush1.bf16.msra.mxu0 %v2446
  %3043 = vmatprep.subr.bf16.mxu0 %v2450
  %3044 = vmatpush1.bf16.msra.mxu0 %v2449
  %3045 = vmatprep.subr.bf16.mxu0 %v2453
  %3046 = vmatpush1.bf16.msra.mxu0 %v2452
  %3047 = vmatprep.subr.bf16.mxu0 %v2456
  %3048 = vmatpush1.bf16.msra.mxu0 %v2455
  %3049 = vmatprep.subr.bf16.mxu0 %v2459
  %3050 = vmatpush1.bf16.msra.mxu0 %v2458
  %3051 = vmatprep.subr.bf16.mxu0 %v2462
  %3052 = vmatpush1.bf16.msra.mxu0 %v2461
  %3053 = vmatprep.subr.bf16.mxu0 %v2465
  %3054 = vmatpush1.bf16.msra.mxu0 %v2464
  %3055 = vmatprep.subr.bf16.mxu0 %v2468
  %3056 = vmatpush1.bf16.msra.mxu0 %v2467
  %3057 = vmatprep.subr.bf16.mxu0 0
  %3058 = vmatpush1.bf16.msra.mxu0 0
  %3059 = vmatprep.subr.bf16.mxu0 0
  %3060 = vmatpush1.bf16.msra.mxu0 0
  %3061 = vmatprep.subr.bf16.mxu0 0
  %3062 = vmatpush1.bf16.msra.mxu0 0
  %3063 = vmatprep.subr.bf16.mxu0 0
  %3064 = vmatpush1.bf16.msra.mxu0 0
  %3065 = vmatprep.subr.bf16.mxu0 0
  %3066 = vmatpush1.bf16.msra.mxu0 0
  %3067 = vmatprep.subr.bf16.mxu0 0
  %3068 = vmatpush1.bf16.msra.mxu0 0
  %3069 = vmatprep.subr.bf16.mxu0 0
  %3070 = vmatpush1.bf16.msra.mxu0 0
  %3071 = vmatprep.subr.bf16.mxu0 0
  %3072 = vmatpush1.bf16.msra.mxu0 0
  %3073 = vmatprep.mubr.bf16.mxu0 0
  %3074 = vmatmul.mubr.bf16.gmra.mrb[0].mxu0 %v3040
  %v3075 = vpop.f32.mrb[0].mxu0
  %v3076 = vadd.f32 0.0, %v3075
  %v3077 = vpop.f32.mrb[0].mxu0
  %v3078 = vadd.f32 0.0, %v3077
  %v3079 = vpop.f32.mrb[0].mxu0
  %v3080 = vpop.f32.mrb[0].mxu0
  %3081 = vdwg.mxu0
  %3082 = vmatprep.subr.bf16.mxu0 0
  %3083 = vmatpush1.bf16.msra.mxu0 %v2448
  %3084 = vmatprep.subr.bf16.mxu0 0
  %3085 = vmatpush1.bf16.msra.mxu0 %v2451
  %3086 = vmatprep.subr.bf16.mxu0 0
  %3087 = vmatpush1.bf16.msra.mxu0 %v2454
  %3088 = vmatprep.subr.bf16.mxu0 0
  %3089 = vmatpush1.bf16.msra.mxu0 %v2457
  %3090 = vmatprep.subr.bf16.mxu0 0
  %3091 = vmatpush1.bf16.msra.mxu0 %v2460
  %3092 = vmatprep.subr.bf16.mxu0 0
  %3093 = vmatpush1.bf16.msra.mxu0 %v2463
  %3094 = vmatprep.subr.bf16.mxu0 0
  %3095 = vmatpush1.bf16.msra.mxu0 %v2466
  %3096 = vmatprep.subr.bf16.mxu0 0
  %3097 = vmatpush1.bf16.msra.mxu0 %v2469
  %3098 = vmatprep.subr.bf16.mxu0 0
  %3099 = vmatpush1.bf16.msra.mxu0 0
  %3100 = vmatprep.subr.bf16.mxu0 0
  %3101 = vmatpush1.bf16.msra.mxu0 0
  %3102 = vmatprep.subr.bf16.mxu0 0
  %3103 = vmatpush1.bf16.msra.mxu0 0
  %3104 = vmatprep.subr.bf16.mxu0 0
  %3105 = vmatpush1.bf16.msra.mxu0 0
  %3106 = vmatprep.subr.bf16.mxu0 0
  %3107 = vmatpush1.bf16.msra.mxu0 0
  %3108 = vmatprep.subr.bf16.mxu0 0
  %3109 = vmatpush1.bf16.msra.mxu0 0
  %3110 = vmatprep.subr.bf16.mxu0 0
  %3111 = vmatpush1.bf16.msra.mxu0 0
  %3112 = vmatprep.subr.bf16.mxu0 0
  %3113 = vmatpush1.bf16.msra.mxu0 0
  %3114 = vmatprep.mubr.bf16.mxu0 0
  %3115 = vmatmul.mubr.bf16.gmra.mrb[0].mxu0 %v3040
  %v3116 = vpop.f32.mrb[0].mxu0
  %v3117 = vadd.f32 0.0, %v3116
  %v3118 = vpop.f32.mrb[0].mxu0
  %v3119 = vpop.f32.mrb[0].mxu0
  %v3120 = vpop.f32.mrb[0].mxu0
  %3121 = vdwg.mxu0
  %v3122 = vpack.c.bf16 %v3037, %v3037
  %3123 = vmatprep.subr.bf16.mxu0 %v2656
  %3124 = vmatpush1.bf16.msra.mxu0 %v2655
  %3125 = vmatprep.subr.bf16.mxu0 %v2659
  %3126 = vmatpush1.bf16.msra.mxu0 %v2658
  %3127 = vmatprep.subr.bf16.mxu0 %v2662
  %3128 = vmatpush1.bf16.msra.mxu0 %v2661
  %3129 = vmatprep.subr.bf16.mxu0 %v2665
  %3130 = vmatpush1.bf16.msra.mxu0 %v2664
  %3131 = vmatprep.subr.bf16.mxu0 %v2668
  %3132 = vmatpush1.bf16.msra.mxu0 %v2667
  %3133 = vmatprep.subr.bf16.mxu0 %v2671
  %3134 = vmatpush1.bf16.msra.mxu0 %v2670
  %3135 = vmatprep.subr.bf16.mxu0 %v2674
  %3136 = vmatpush1.bf16.msra.mxu0 %v2673
  %3137 = vmatprep.subr.bf16.mxu0 %v2677
  %3138 = vmatpush1.bf16.msra.mxu0 %v2676
  %3139 = vmatprep.subr.bf16.mxu0 0
  %3140 = vmatpush1.bf16.msra.mxu0 0
  %3141 = vmatprep.subr.bf16.mxu0 0
  %3142 = vmatpush1.bf16.msra.mxu0 0
  %3143 = vmatprep.subr.bf16.mxu0 0
  %3144 = vmatpush1.bf16.msra.mxu0 0
  %3145 = vmatprep.subr.bf16.mxu0 0
  %3146 = vmatpush1.bf16.msra.mxu0 0
  %3147 = vmatprep.subr.bf16.mxu0 0
  %3148 = vmatpush1.bf16.msra.mxu0 0
  %3149 = vmatprep.subr.bf16.mxu0 0
  %3150 = vmatpush1.bf16.msra.mxu0 0
  %3151 = vmatprep.subr.bf16.mxu0 0
  %3152 = vmatpush1.bf16.msra.mxu0 0
  %3153 = vmatprep.subr.bf16.mxu0 0
  %3154 = vmatpush1.bf16.msra.mxu0 0
  %3155 = vmatprep.mubr.bf16.mxu0 0
  %3156 = vmatmul.mubr.bf16.gmra.mrb[0].mxu0 %v3122
  %v3157 = vpop.f32.mrb[0].mxu0
  %v3158 = vadd.f32 0.0, %v3157
  %v3159 = vpop.f32.mrb[0].mxu0
  %v3160 = vadd.f32 0.0, %v3159
  %v3161 = vpop.f32.mrb[0].mxu0
  %v3162 = vpop.f32.mrb[0].mxu0
  %3163 = vdwg.mxu0
  %3164 = vmatprep.subr.bf16.mxu0 0
  %3165 = vmatpush1.bf16.msra.mxu0 %v2657
  %3166 = vmatprep.subr.bf16.mxu0 0
  %3167 = vmatpush1.bf16.msra.mxu0 %v2660
  %3168 = vmatprep.subr.bf16.mxu0 0
  %3169 = vmatpush1.bf16.msra.mxu0 %v2663
  %3170 = vmatprep.subr.bf16.mxu0 0
  %3171 = vmatpush1.bf16.msra.mxu0 %v2666
  %3172 = vmatprep.subr.bf16.mxu0 0
  %3173 = vmatpush1.bf16.msra.mxu0 %v2669
  %3174 = vmatprep.subr.bf16.mxu0 0
  %3175 = vmatpush1.bf16.msra.mxu0 %v2672
  %3176 = vmatprep.subr.bf16.mxu0 0
  %3177 = vmatpush1.bf16.msra.mxu0 %v2675
  %3178 = vmatprep.subr.bf16.mxu0 0
  %3179 = vmatpush1.bf16.msra.mxu0 %v2678
  %3180 = vmatprep.subr.bf16.mxu0 0
  %3181 = vmatpush1.bf16.msra.mxu0 0
  %3182 = vmatprep.subr.bf16.mxu0 0
  %3183 = vmatpush1.bf16.msra.mxu0 0
  %3184 = vmatprep.subr.bf16.mxu0 0
  %3185 = vmatpush1.bf16.msra.mxu0 0
  %3186 = vmatprep.subr.bf16.mxu0 0
  %3187 = vmatpush1.bf16.msra.mxu0 0
  %3188 = vmatprep.subr.bf16.mxu0 0
  %3189 = vmatpush1.bf16.msra.mxu0 0
  %3190 = vmatprep.subr.bf16.mxu0 0
  %3191 = vmatpush1.bf16.msra.mxu0 0
  %3192 = vmatprep.subr.bf16.mxu0 0
  %3193 = vmatpush1.bf16.msra.mxu0 0
  %3194 = vmatprep.subr.bf16.mxu0 0
  %3195 = vmatpush1.bf16.msra.mxu0 0
  %3196 = vmatprep.mubr.bf16.mxu0 0
  %3197 = vmatmul.mubr.bf16.gmra.mrb[0].mxu0 %v3122
  %v3198 = vpop.f32.mrb[0].mxu0
  %v3199 = vadd.f32 0.0, %v3198
  %v3200 = vpop.f32.mrb[0].mxu0
  %v3201 = vpop.f32.mrb[0].mxu0
  %v3202 = vpop.f32.mrb[0].mxu0
  %3203 = vdwg.mxu0
  %v3204 = vadd.f32 %v1846, %v3076
  %v3205 = vxor.u32 %v3204, 2147483648
  %v3206 = vmul.f32 %v3205, 1.442695
  %v3207 = vpow.pop %v3206
  %v3208 = vadd.f32 %v3207, 1.0
  %v3209 = vrcp.pop %v3208
  %v3210 = vmul.f32 1.0, %v3209
  %v3211 = vadd.f32 %v1848, %v3078
  %v3212 = vxor.u32 %v3211, 2147483648
  %v3213 = vmul.f32 %v3212, 1.442695
  %v3214 = vpow.pop %v3213
  %v3215 = vadd.f32 %v3214, 1.0
  %v3216 = vrcp.pop %v3215
  %v3217 = vmul.f32 1.0, %v3216
  %v3218 = vadd.f32 %v3117, %v2356
  %v3219 = vmul.f32 %v3210, %v3218
  %v3220 = vadd.f32 %v1917, %v3219
  %v3221 = vtanh.pop %v3220
  %v3222 = vsub.f32 1.0, %v3217
  %v3223 = vmul.f32 %v3222, %v3221
  %v3224 = vmul.f32 %v3217, %v3015
  %v3225 = vadd.f32 %v3223, %v3224
  %v3226 = vadd.f32 %v2272, %v3158
  %v3227 = vxor.u32 %v3226, 2147483648
  %v3228 = vmul.f32 %v3227, 1.442695
  %v3229 = vpow.pop %v3228
  %v3230 = vadd.f32 %v3229, 1.0
  %v3231 = vrcp.pop %v3230
  %v3232 = vmul.f32 1.0, %v3231
  %v3233 = vadd.f32 %v2274, %v3160
  %v3234 = vxor.u32 %v3233, 2147483648
  %v3235 = vmul.f32 %v3234, 1.442695
  %v3236 = vpow.pop %v3235
  %v3237 = vadd.f32 %v3236, 1.0
  %v3238 = vrcp.pop %v3237
  %v3239 = vmul.f32 1.0, %v3238
  %v3240 = vadd.f32 %v3199, %v2364
  %v3241 = vmul.f32 %v3232, %v3240
  %v3242 = vadd.f32 %v2340, %v3241
  %v3243 = vtanh.pop %v3242
  %v3244 = vsub.f32 1.0, %v3239
  %v3245 = vmul.f32 %v3244, %v3243
  %v3246 = vmul.f32 %v3239, %v3037
  %v3247 = vadd.f32 %v3245, %v3246
  %3248 = vst [vmem:[#allocation2 + $0x20] sm:$0xff] %v3225
  %3249 = vst [vmem:[#allocation2 + $0x58] sm:$0xff] %v3247
  %v3250 = vpack.c.bf16 %v3225, %v3225
  %3251 = vmatprep.subr.bf16.mxu0 %v2447
  %3252 = vmatpush1.bf16.msra.mxu0 %v2446
  %3253 = vmatprep.subr.bf16.mxu0 %v2450
  %3254 = vmatpush1.bf16.msra.mxu0 %v2449
  %3255 = vmatprep.subr.bf16.mxu0 %v2453
  %3256 = vmatpush1.bf16.msra.mxu0 %v2452
  %3257 = vmatprep.subr.bf16.mxu0 %v2456
  %3258 = vmatpush1.bf16.msra.mxu0 %v2455
  %3259 = vmatprep.subr.bf16.mxu0 %v2459
  %3260 = vmatpush1.bf16.msra.mxu0 %v2458
  %3261 = vmatprep.subr.bf16.mxu0 %v2462
  %3262 = vmatpush1.bf16.msra.mxu0 %v2461
  %3263 = vmatprep.subr.bf16.mxu0 %v2465
  %3264 = vmatpush1.bf16.msra.mxu0 %v2464
  %3265 = vmatprep.subr.bf16.mxu0 %v2468
  %3266 = vmatpush1.bf16.msra.mxu0 %v2467
  %3267 = vmatprep.subr.bf16.mxu0 0
  %3268 = vmatpush1.bf16.msra.mxu0 0
  %3269 = vmatprep.subr.bf16.mxu0 0
  %3270 = vmatpush1.bf16.msra.mxu0 0
  %3271 = vmatprep.subr.bf16.mxu0 0
  %3272 = vmatpush1.bf16.msra.mxu0 0
  %3273 = vmatprep.subr.bf16.mxu0 0
  %3274 = vmatpush1.bf16.msra.mxu0 0
  %3275 = vmatprep.subr.bf16.mxu0 0
  %3276 = vmatpush1.bf16.msra.mxu0 0
  %3277 = vmatprep.subr.bf16.mxu0 0
  %3278 = vmatpush1.bf16.msra.mxu0 0
  %3279 = vmatprep.subr.bf16.mxu0 0
  %3280 = vmatpush1.bf16.msra.mxu0 0
  %3281 = vmatprep.subr.bf16.mxu0 0
  %3282 = vmatpush1.bf16.msra.mxu0 0
  %3283 = vmatprep.mubr.bf16.mxu0 0
  %3284 = vmatmul.mubr.bf16.gmra.mrb[0].mxu0 %v3250
  %v3285 = vpop.f32.mrb[0].mxu0
  %v3286 = vadd.f32 0.0, %v3285
  %v3287 = vpop.f32.mrb[0].mxu0
  %v3288 = vadd.f32 0.0, %v3287
  %v3289 = vpop.f32.mrb[0].mxu0
  %v3290 = vpop.f32.mrb[0].mxu0
  %3291 = vdwg.mxu0
  %3292 = vmatprep.subr.bf16.mxu0 0
  %3293 = vmatpush1.bf16.msra.mxu0 %v2448
  %3294 = vmatprep.subr.bf16.mxu0 0
  %3295 = vmatpush1.bf16.msra.mxu0 %v2451
  %3296 = vmatprep.subr.bf16.mxu0 0
  %3297 = vmatpush1.bf16.msra.mxu0 %v2454
  %3298 = vmatprep.subr.bf16.mxu0 0
  %3299 = vmatpush1.bf16.msra.mxu0 %v2457
  %3300 = vmatprep.subr.bf16.mxu0 0
  %3301 = vmatpush1.bf16.msra.mxu0 %v2460
  %3302 = vmatprep.subr.bf16.mxu0 0
  %3303 = vmatpush1.bf16.msra.mxu0 %v2463
  %3304 = vmatprep.subr.bf16.mxu0 0
  %3305 = vmatpush1.bf16.msra.mxu0 %v2466
  %3306 = vmatprep.subr.bf16.mxu0 0
  %3307 = vmatpush1.bf16.msra.mxu0 %v2469
  %3308 = vmatprep.subr.bf16.mxu0 0
  %3309 = vmatpush1.bf16.msra.mxu0 0
  %3310 = vmatprep.subr.bf16.mxu0 0
  %3311 = vmatpush1.bf16.msra.mxu0 0
  %3312 = vmatprep.subr.bf16.mxu0 0
  %3313 = vmatpush1.bf16.msra.mxu0 0
  %3314 = vmatprep.subr.bf16.mxu0 0
  %3315 = vmatpush1.bf16.msra.mxu0 0
  %3316 = vmatprep.subr.bf16.mxu0 0
  %3317 = vmatpush1.bf16.msra.mxu0 0
  %3318 = vmatprep.subr.bf16.mxu0 0
  %3319 = vmatpush1.bf16.msra.mxu0 0
  %3320 = vmatprep.subr.bf16.mxu0 0
  %3321 = vmatpush1.bf16.msra.mxu0 0
  %3322 = vmatprep.subr.bf16.mxu0 0
  %3323 = vmatpush1.bf16.msra.mxu0 0
  %3324 = vmatprep.mubr.bf16.mxu0 0
  %3325 = vmatmul.mubr.bf16.gmra.mrb[0].mxu0 %v3250
  %v3326 = vpop.f32.mrb[0].mxu0
  %v3327 = vadd.f32 0.0, %v3326
  %v3328 = vpop.f32.mrb[0].mxu0
  %v3329 = vpop.f32.mrb[0].mxu0
  %v3330 = vpop.f32.mrb[0].mxu0
  %3331 = vdwg.mxu0
  %v3332 = vpack.c.bf16 %v3247, %v3247
  %3333 = vmatprep.subr.bf16.mxu0 %v2656
  %3334 = vmatpush1.bf16.msra.mxu0 %v2655
  %3335 = vmatprep.subr.bf16.mxu0 %v2659
  %3336 = vmatpush1.bf16.msra.mxu0 %v2658
  %3337 = vmatprep.subr.bf16.mxu0 %v2662
  %3338 = vmatpush1.bf16.msra.mxu0 %v2661
  %3339 = vmatprep.subr.bf16.mxu0 %v2665
  %3340 = vmatpush1.bf16.msra.mxu0 %v2664
  %3341 = vmatprep.subr.bf16.mxu0 %v2668
  %3342 = vmatpush1.bf16.msra.mxu0 %v2667
  %3343 = vmatprep.subr.bf16.mxu0 %v2671
  %3344 = vmatpush1.bf16.msra.mxu0 %v2670
  %3345 = vmatprep.subr.bf16.mxu0 %v2674
  %3346 = vmatpush1.bf16.msra.mxu0 %v2673
  %3347 = vmatprep.subr.bf16.mxu0 %v2677
  %3348 = vmatpush1.bf16.msra.mxu0 %v2676
  %3349 = vmatprep.subr.bf16.mxu0 0
  %3350 = vmatpush1.bf16.msra.mxu0 0
  %3351 = vmatprep.subr.bf16.mxu0 0
  %3352 = vmatpush1.bf16.msra.mxu0 0
  %3353 = vmatprep.subr.bf16.mxu0 0
  %3354 = vmatpush1.bf16.msra.mxu0 0
  %3355 = vmatprep.subr.bf16.mxu0 0
  %3356 = vmatpush1.bf16.msra.mxu0 0
  %3357 = vmatprep.subr.bf16.mxu0 0
  %3358 = vmatpush1.bf16.msra.mxu0 0
  %3359 = vmatprep.subr.bf16.mxu0 0
  %3360 = vmatpush1.bf16.msra.mxu0 0
  %3361 = vmatprep.subr.bf16.mxu0 0
  %3362 = vmatpush1.bf16.msra.mxu0 0
  %3363 = vmatprep.subr.bf16.mxu0 0
  %3364 = vmatpush1.bf16.msra.mxu0 0
  %3365 = vmatprep.mubr.bf16.mxu0 0
  %3366 = vmatmul.mubr.bf16.gmra.mrb[0].mxu0 %v3332
  %v3367 = vpop.f32.mrb[0].mxu0
  %v3368 = vadd.f32 0.0, %v3367
  %v3369 = vpop.f32.mrb[0].mxu0
  %v3370 = vadd.f32 0.0, %v3369
  %v3371 = vpop.f32.mrb[0].mxu0
  %v3372 = vpop.f32.mrb[0].mxu0
  %3373 = vdwg.mxu0
  %3374 = vmatprep.subr.bf16.mxu0 0
  %3375 = vmatpush1.bf16.msra.mxu0 %v2657
  %3376 = vmatprep.subr.bf16.mxu0 0
  %3377 = vmatpush1.bf16.msra.mxu0 %v2660
  %3378 = vmatprep.subr.bf16.mxu0 0
  %3379 = vmatpush1.bf16.msra.mxu0 %v2663
  %3380 = vmatprep.subr.bf16.mxu0 0
  %3381 = vmatpush1.bf16.msra.mxu0 %v2666
  %3382 = vmatprep.subr.bf16.mxu0 0
  %3383 = vmatpush1.bf16.msra.mxu0 %v2669
  %3384 = vmatprep.subr.bf16.mxu0 0
  %3385 = vmatpush1.bf16.msra.mxu0 %v2672
  %3386 = vmatprep.subr.bf16.mxu0 0
  %3387 = vmatpush1.bf16.msra.mxu0 %v2675
  %3388 = vmatprep.subr.bf16.mxu0 0
  %3389 = vmatpush1.bf16.msra.mxu0 %v2678
  %3390 = vmatprep.subr.bf16.mxu0 0
  %3391 = vmatpush1.bf16.msra.mxu0 0
  %3392 = vmatprep.subr.bf16.mxu0 0
  %3393 = vmatpush1.bf16.msra.mxu0 0
  %3394 = vmatprep.subr.bf16.mxu0 0
  %3395 = vmatpush1.bf16.msra.mxu0 0
  %3396 = vmatprep.subr.bf16.mxu0 0
  %3397 = vmatpush1.bf16.msra.mxu0 0
  %3398 = vmatprep.subr.bf16.mxu0 0
  %3399 = vmatpush1.bf16.msra.mxu0 0
  %3400 = vmatprep.subr.bf16.mxu0 0
  %3401 = vmatpush1.bf16.msra.mxu0 0
  %3402 = vmatprep.subr.bf16.mxu0 0
  %3403 = vmatpush1.bf16.msra.mxu0 0
  %3404 = vmatprep.subr.bf16.mxu0 0
  %3405 = vmatpush1.bf16.msra.mxu0 0
  %3406 = vmatprep.mubr.bf16.mxu0 0
  %3407 = vmatmul.mubr.bf16.gmra.mrb[0].mxu0 %v3332
  %v3408 = vpop.f32.mrb[0].mxu0
  %v3409 = vadd.f32 0.0, %v3408
  %v3410 = vpop.f32.mrb[0].mxu0
  %v3411 = vpop.f32.mrb[0].mxu0
  %v3412 = vpop.f32.mrb[0].mxu0
  %3413 = vdwg.mxu0
  %v3414 = vadd.f32 %v1850, %v3286
  %v3415 = vxor.u32 %v3414, 2147483648
  %v3416 = vmul.f32 %v3415, 1.442695
  %v3417 = vpow.pop %v3416
  %v3418 = vadd.f32 %v3417, 1.0
  %v3419 = vrcp.pop %v3418
  %v3420 = vmul.f32 1.0, %v3419
  %v3421 = vadd.f32 %v1852, %v3288
  %v3422 = vxor.u32 %v3421, 2147483648
  %v3423 = vmul.f32 %v3422, 1.442695
  %v3424 = vpow.pop %v3423
  %v3425 = vadd.f32 %v3424, 1.0
  %v3426 = vrcp.pop %v3425
  %v3427 = vmul.f32 1.0, %v3426
  %v3428 = vadd.f32 %v3327, %v2356
  %v3429 = vmul.f32 %v3420, %v3428
  %v3430 = vadd.f32 %v1920, %v3429
  %v3431 = vtanh.pop %v3430
  %v3432 = vsub.f32 1.0, %v3427
  %v3433 = vmul.f32 %v3432, %v3431
  %v3434 = vmul.f32 %v3427, %v3225
  %v3435 = vadd.f32 %v3433, %v3434
  %v3436 = vadd.f32 %v2268, %v3368
  %v3437 = vxor.u32 %v3436, 2147483648
  %v3438 = vmul.f32 %v3437, 1.442695
  %v3439 = vpow.pop %v3438
  %v3440 = vadd.f32 %v3439, 1.0
  %v3441 = vrcp.pop %v3440
  %v3442 = vmul.f32 1.0, %v3441
  %v3443 = vadd.f32 %v2270, %v3370
  %v3444 = vxor.u32 %v3443, 2147483648
  %v3445 = vmul.f32 %v3444, 1.442695
  %v3446 = vpow.pop %v3445
  %v3447 = vadd.f32 %v3446, 1.0
  %v3448 = vrcp.pop %v3447
  %v3449 = vmul.f32 1.0, %v3448
  %v3450 = vadd.f32 %v3409, %v2364
  %v3451 = vmul.f32 %v3442, %v3450
  %v3452 = vadd.f32 %v2337, %v3451
  %v3453 = vtanh.pop %v3452
  %v3454 = vsub.f32 1.0, %v3449
  %v3455 = vmul.f32 %v3454, %v3453
  %v3456 = vmul.f32 %v3449, %v3247
  %v3457 = vadd.f32 %v3455, %v3456
  %3458 = vst [vmem:[#allocation2 + $0x30] sm:$0xff] %v3435
  %3459 = vst [vmem:[#allocation2 + $0x48] sm:$0xff] %v3457
  %v3460 = vpack.c.bf16 %v3435, %v3435
  %3461 = vmatprep.subr.bf16.mxu0 %v2447
  %3462 = vmatpush1.bf16.msra.mxu0 %v2446
  %3463 = vmatprep.subr.bf16.mxu0 %v2450
  %3464 = vmatpush1.bf16.msra.mxu0 %v2449
  %3465 = vmatprep.subr.bf16.mxu0 %v2453
  %3466 = vmatpush1.bf16.msra.mxu0 %v2452
  %3467 = vmatprep.subr.bf16.mxu0 %v2456
  %3468 = vmatpush1.bf16.msra.mxu0 %v2455
  %3469 = vmatprep.subr.bf16.mxu0 %v2459
  %3470 = vmatpush1.bf16.msra.mxu0 %v2458
  %3471 = vmatprep.subr.bf16.mxu0 %v2462
  %3472 = vmatpush1.bf16.msra.mxu0 %v2461
  %3473 = vmatprep.subr.bf16.mxu0 %v2465
  %3474 = vmatpush1.bf16.msra.mxu0 %v2464
  %3475 = vmatprep.subr.bf16.mxu0 %v2468
  %3476 = vmatpush1.bf16.msra.mxu0 %v2467
  %3477 = vmatprep.subr.bf16.mxu0 0
  %3478 = vmatpush1.bf16.msra.mxu0 0
  %3479 = vmatprep.subr.bf16.mxu0 0
  %3480 = vmatpush1.bf16.msra.mxu0 0
  %3481 = vmatprep.subr.bf16.mxu0 0
  %3482 = vmatpush1.bf16.msra.mxu0 0
  %3483 = vmatprep.subr.bf16.mxu0 0
  %3484 = vmatpush1.bf16.msra.mxu0 0
  %3485 = vmatprep.subr.bf16.mxu0 0
  %3486 = vmatpush1.bf16.msra.mxu0 0
  %3487 = vmatprep.subr.bf16.mxu0 0
  %3488 = vmatpush1.bf16.msra.mxu0 0
  %3489 = vmatprep.subr.bf16.mxu0 0
  %3490 = vmatpush1.bf16.msra.mxu0 0
  %3491 = vmatprep.subr.bf16.mxu0 0
  %3492 = vmatpush1.bf16.msra.mxu0 0
  %3493 = vmatprep.mubr.bf16.mxu0 0
  %3494 = vmatmul.mubr.bf16.gmra.mrb[0].mxu0 %v3460
  %v3495 = vpop.f32.mrb[0].mxu0
  %v3496 = vadd.f32 0.0, %v3495
  %v3497 = vpop.f32.mrb[0].mxu0
  %v3498 = vadd.f32 0.0, %v3497
  %v3499 = vpop.f32.mrb[0].mxu0
  %v3500 = vpop.f32.mrb[0].mxu0
  %3501 = vdwg.mxu0
  %3502 = vmatprep.subr.bf16.mxu0 0
  %3503 = vmatpush1.bf16.msra.mxu0 %v2448
  %3504 = vmatprep.subr.bf16.mxu0 0
  %3505 = vmatpush1.bf16.msra.mxu0 %v2451
  %3506 = vmatprep.subr.bf16.mxu0 0
  %3507 = vmatpush1.bf16.msra.mxu0 %v2454
  %3508 = vmatprep.subr.bf16.mxu0 0
  %3509 = vmatpush1.bf16.msra.mxu0 %v2457
  %3510 = vmatprep.subr.bf16.mxu0 0
  %3511 = vmatpush1.bf16.msra.mxu0 %v2460
  %3512 = vmatprep.subr.bf16.mxu0 0
  %3513 = vmatpush1.bf16.msra.mxu0 %v2463
  %3514 = vmatprep.subr.bf16.mxu0 0
  %3515 = vmatpush1.bf16.msra.mxu0 %v2466
  %3516 = vmatprep.subr.bf16.mxu0 0
  %3517 = vmatpush1.bf16.msra.mxu0 %v2469
  %3518 = vmatprep.subr.bf16.mxu0 0
  %3519 = vmatpush1.bf16.msra.mxu0 0
  %3520 = vmatprep.subr.bf16.mxu0 0
  %3521 = vmatpush1.bf16.msra.mxu0 0
  %3522 = vmatprep.subr.bf16.mxu0 0
  %3523 = vmatpush1.bf16.msra.mxu0 0
  %3524 = vmatprep.subr.bf16.mxu0 0
  %3525 = vmatpush1.bf16.msra.mxu0 0
  %3526 = vmatprep.subr.bf16.mxu0 0
  %3527 = vmatpush1.bf16.msra.mxu0 0
  %3528 = vmatprep.subr.bf16.mxu0 0
  %3529 = vmatpush1.bf16.msra.mxu0 0
  %3530 = vmatprep.subr.bf16.mxu0 0
  %3531 = vmatpush1.bf16.msra.mxu0 0
  %3532 = vmatprep.subr.bf16.mxu0 0
  %3533 = vmatpush1.bf16.msra.mxu0 0
  %3534 = vmatprep.mubr.bf16.mxu0 0
  %3535 = vmatmul.mubr.bf16.gmra.mrb[0].mxu0 %v3460
  %v3536 = vpop.f32.mrb[0].mxu0
  %v3537 = vadd.f32 0.0, %v3536
  %v3538 = vpop.f32.mrb[0].mxu0
  %v3539 = vpop.f32.mrb[0].mxu0
  %v3540 = vpop.f32.mrb[0].mxu0
  %3541 = vdwg.mxu0
  %v3542 = vpack.c.bf16 %v3457, %v3457
  %3543 = vmatprep.subr.bf16.mxu0 %v2656
  %3544 = vmatpush1.bf16.msra.mxu0 %v2655
  %3545 = vmatprep.subr.bf16.mxu0 %v2659
  %3546 = vmatpush1.bf16.msra.mxu0 %v2658
  %3547 = vmatprep.subr.bf16.mxu0 %v2662
  %3548 = vmatpush1.bf16.msra.mxu0 %v2661
  %3549 = vmatprep.subr.bf16.mxu0 %v2665
  %3550 = vmatpush1.bf16.msra.mxu0 %v2664
  %3551 = vmatprep.subr.bf16.mxu0 %v2668
  %3552 = vmatpush1.bf16.msra.mxu0 %v2667
  %3553 = vmatprep.subr.bf16.mxu0 %v2671
  %3554 = vmatpush1.bf16.msra.mxu0 %v2670
  %3555 = vmatprep.subr.bf16.mxu0 %v2674
  %3556 = vmatpush1.bf16.msra.mxu0 %v2673
  %3557 = vmatprep.subr.bf16.mxu0 %v2677
  %3558 = vmatpush1.bf16.msra.mxu0 %v2676
  %3559 = vmatprep.subr.bf16.mxu0 0
  %3560 = vmatpush1.bf16.msra.mxu0 0
  %3561 = vmatprep.subr.bf16.mxu0 0
  %3562 = vmatpush1.bf16.msra.mxu0 0
  %3563 = vmatprep.subr.bf16.mxu0 0
  %3564 = vmatpush1.bf16.msra.mxu0 0
  %3565 = vmatprep.subr.bf16.mxu0 0
  %3566 = vmatpush1.bf16.msra.mxu0 0
  %3567 = vmatprep.subr.bf16.mxu0 0
  %3568 = vmatpush1.bf16.msra.mxu0 0
  %3569 = vmatprep.subr.bf16.mxu0 0
  %3570 = vmatpush1.bf16.msra.mxu0 0
  %3571 = vmatprep.subr.bf16.mxu0 0
  %3572 = vmatpush1.bf16.msra.mxu0 0
  %3573 = vmatprep.subr.bf16.mxu0 0
  %3574 = vmatpush1.bf16.msra.mxu0 0
  %3575 = vmatprep.mubr.bf16.mxu0 0
  %3576 = vmatmul.mubr.bf16.gmra.mrb[0].mxu0 %v3542
  %v3577 = vpop.f32.mrb[0].mxu0
  %v3578 = vadd.f32 0.0, %v3577
  %v3579 = vpop.f32.mrb[0].mxu0
  %v3580 = vadd.f32 0.0, %v3579
  %v3581 = vpop.f32.mrb[0].mxu0
  %v3582 = vpop.f32.mrb[0].mxu0
  %3583 = vdwg.mxu0
  %3584 = vmatprep.subr.bf16.mxu0 0
  %3585 = vmatpush1.bf16.msra.mxu0 %v2657
  %3586 = vmatprep.subr.bf16.mxu0 0
  %3587 = vmatpush1.bf16.msra.mxu0 %v2660
  %3588 = vmatprep.subr.bf16.mxu0 0
  %3589 = vmatpush1.bf16.msra.mxu0 %v2663
  %3590 = vmatprep.subr.bf16.mxu0 0
  %3591 = vmatpush1.bf16.msra.mxu0 %v2666
  %3592 = vmatprep.subr.bf16.mxu0 0
  %3593 = vmatpush1.bf16.msra.mxu0 %v2669
  %3594 = vmatprep.subr.bf16.mxu0 0
  %3595 = vmatpush1.bf16.msra.mxu0 %v2672
  %3596 = vmatprep.subr.bf16.mxu0 0
  %3597 = vmatpush1.bf16.msra.mxu0 %v2675
  %3598 = vmatprep.subr.bf16.mxu0 0
  %3599 = vmatpush1.bf16.msra.mxu0 %v2678
  %3600 = vmatprep.subr.bf16.mxu0 0
  %3601 = vmatpush1.bf16.msra.mxu0 0
  %3602 = vmatprep.subr.bf16.mxu0 0
  %3603 = vmatpush1.bf16.msra.mxu0 0
  %3604 = vmatprep.subr.bf16.mxu0 0
  %3605 = vmatpush1.bf16.msra.mxu0 0
  %3606 = vmatprep.subr.bf16.mxu0 0
  %3607 = vmatpush1.bf16.msra.mxu0 0
  %3608 = vmatprep.subr.bf16.mxu0 0
  %3609 = vmatpush1.bf16.msra.mxu0 0
  %3610 = vmatprep.subr.bf16.mxu0 0
  %3611 = vmatpush1.bf16.msra.mxu0 0
  %3612 = vmatprep.subr.bf16.mxu0 0
  %3613 = vmatpush1.bf16.msra.mxu0 0
  %3614 = vmatprep.subr.bf16.mxu0 0
  %3615 = vmatpush1.bf16.msra.mxu0 0
  %3616 = vmatprep.mubr.bf16.mxu0 0
  %3617 = vmatmul.mubr.bf16.gmra.mrb[0].mxu0 %v3542
  %v3618 = vpop.f32.mrb[0].mxu0
  %v3619 = vadd.f32 0.0, %v3618
  %v3620 = vpop.f32.mrb[0].mxu0
  %v3621 = vpop.f32.mrb[0].mxu0
  %v3622 = vpop.f32.mrb[0].mxu0
  %3623 = vdwg.mxu0
  %v3624 = vadd.f32 %v1856, %v3496
  %v3625 = vxor.u32 %v3624, 2147483648
  %v3626 = vmul.f32 %v3625, 1.442695
  %v3627 = vpow.pop %v3626
  %v3628 = vadd.f32 %v3627, 1.0
  %v3629 = vrcp.pop %v3628
  %v3630 = vmul.f32 1.0, %v3629
  %v3631 = vadd.f32 %v1858, %v3498
  %v3632 = vxor.u32 %v3631, 2147483648
  %v3633 = vmul.f32 %v3632, 1.442695
  %v3634 = vpow.pop %v3633
  %v3635 = vadd.f32 %v3634, 1.0
  %v3636 = vrcp.pop %v3635
  %v3637 = vmul.f32 1.0, %v3636
  %v3638 = vadd.f32 %v3537, %v2356
  %v3639 = vmul.f32 %v3630, %v3638
  %v3640 = vadd.f32 %v1925, %v3639
  %v3641 = vtanh.pop %v3640
  %v3642 = vsub.f32 1.0, %v3637
  %v3643 = vmul.f32 %v3642, %v3641
  %v3644 = vmul.f32 %v3637, %v3435
  %v3645 = vadd.f32 %v3643, %v3644
  %v3646 = vadd.f32 %v2262, %v3578
  %v3647 = vxor.u32 %v3646, 2147483648
  %v3648 = vmul.f32 %v3647, 1.442695
  %v3649 = vpow.pop %v3648
  %v3650 = vadd.f32 %v3649, 1.0
  %v3651 = vrcp.pop %v3650
  %v3652 = vmul.f32 1.0, %v3651
  %v3653 = vadd.f32 %v2264, %v3580
  %v3654 = vxor.u32 %v3653, 2147483648
  %v3655 = vmul.f32 %v3654, 1.442695
  %v3656 = vpow.pop %v3655
  %v3657 = vadd.f32 %v3656, 1.0
  %v3658 = vrcp.pop %v3657
  %v3659 = vmul.f32 1.0, %v3658
  %v3660 = vadd.f32 %v3619, %v2364
  %v3661 = vmul.f32 %v3652, %v3660
  %v3662 = vadd.f32 %v2332, %v3661
  %v3663 = vtanh.pop %v3662
  %v3664 = vsub.f32 1.0, %v3659
  %v3665 = vmul.f32 %v3664, %v3663
  %v3666 = vmul.f32 %v3659, %v3457
  %v3667 = vadd.f32 %v3665, %v3666
  %3668 = vst [vmem:[#allocation2 + $0x40] sm:$0xff] %v3645
  %3669 = vst [vmem:[#allocation2 + $0x38] sm:$0xff] %v3667
  %v3670 = vpack.c.bf16 %v3645, %v3645
  %3671 = vmatprep.subr.bf16.mxu0 %v2447
  %3672 = vmatpush1.bf16.msra.mxu0 %v2446
  %3673 = vmatprep.subr.bf16.mxu0 %v2450
  %3674 = vmatpush1.bf16.msra.mxu0 %v2449
  %3675 = vmatprep.subr.bf16.mxu0 %v2453
  %3676 = vmatpush1.bf16.msra.mxu0 %v2452
  %3677 = vmatprep.subr.bf16.mxu0 %v2456
  %3678 = vmatpush1.bf16.msra.mxu0 %v2455
  %3679 = vmatprep.subr.bf16.mxu0 %v2459
  %3680 = vmatpush1.bf16.msra.mxu0 %v2458
  %3681 = vmatprep.subr.bf16.mxu0 %v2462
  %3682 = vmatpush1.bf16.msra.mxu0 %v2461
  %3683 = vmatprep.subr.bf16.mxu0 %v2465
  %3684 = vmatpush1.bf16.msra.mxu0 %v2464
  %3685 = vmatprep.subr.bf16.mxu0 %v2468
  %3686 = vmatpush1.bf16.msra.mxu0 %v2467
  %3687 = vmatprep.subr.bf16.mxu0 0
  %3688 = vmatpush1.bf16.msra.mxu0 0
  %3689 = vmatprep.subr.bf16.mxu0 0
  %3690 = vmatpush1.bf16.msra.mxu0 0
  %3691 = vmatprep.subr.bf16.mxu0 0
  %3692 = vmatpush1.bf16.msra.mxu0 0
  %3693 = vmatprep.subr.bf16.mxu0 0
  %3694 = vmatpush1.bf16.msra.mxu0 0
  %3695 = vmatprep.subr.bf16.mxu0 0
  %3696 = vmatpush1.bf16.msra.mxu0 0
  %3697 = vmatprep.subr.bf16.mxu0 0
  %3698 = vmatpush1.bf16.msra.mxu0 0
  %3699 = vmatprep.subr.bf16.mxu0 0
  %3700 = vmatpush1.bf16.msra.mxu0 0
  %3701 = vmatprep.subr.bf16.mxu0 0
  %3702 = vmatpush1.bf16.msra.mxu0 0
  %3703 = vmatprep.mubr.bf16.mxu0 0
  %3704 = vmatmul.mubr.bf16.gmra.mrb[0].mxu0 %v3670
  %v3705 = vpop.f32.mrb[0].mxu0
  %v3706 = vadd.f32 0.0, %v3705
  %v3707 = vpop.f32.mrb[0].mxu0
  %v3708 = vadd.f32 0.0, %v3707
  %v3709 = vpop.f32.mrb[0].mxu0
  %v3710 = vpop.f32.mrb[0].mxu0
  %3711 = vdwg.mxu0
  %3712 = vmatprep.subr.bf16.mxu0 0
  %3713 = vmatpush1.bf16.msra.mxu0 %v2448
  %3714 = vmatprep.subr.bf16.mxu0 0
  %3715 = vmatpush1.bf16.msra.mxu0 %v2451
  %3716 = vmatprep.subr.bf16.mxu0 0
  %3717 = vmatpush1.bf16.msra.mxu0 %v2454
  %3718 = vmatprep.subr.bf16.mxu0 0
  %3719 = vmatpush1.bf16.msra.mxu0 %v2457
  %3720 = vmatprep.subr.bf16.mxu0 0
  %3721 = vmatpush1.bf16.msra.mxu0 %v2460
  %3722 = vmatprep.subr.bf16.mxu0 0
  %3723 = vmatpush1.bf16.msra.mxu0 %v2463
  %3724 = vmatprep.subr.bf16.mxu0 0
  %3725 = vmatpush1.bf16.msra.mxu0 %v2466
  %3726 = vmatprep.subr.bf16.mxu0 0
  %3727 = vmatpush1.bf16.msra.mxu0 %v2469
  %3728 = vmatprep.subr.bf16.mxu0 0
  %3729 = vmatpush1.bf16.msra.mxu0 0
  %3730 = vmatprep.subr.bf16.mxu0 0
  %3731 = vmatpush1.bf16.msra.mxu0 0
  %3732 = vmatprep.subr.bf16.mxu0 0
  %3733 = vmatpush1.bf16.msra.mxu0 0
  %3734 = vmatprep.subr.bf16.mxu0 0
  %3735 = vmatpush1.bf16.msra.mxu0 0
  %3736 = vmatprep.subr.bf16.mxu0 0
  %3737 = vmatpush1.bf16.msra.mxu0 0
  %3738 = vmatprep.subr.bf16.mxu0 0
  %3739 = vmatpush1.bf16.msra.mxu0 0
  %3740 = vmatprep.subr.bf16.mxu0 0
  %3741 = vmatpush1.bf16.msra.mxu0 0
  %3742 = vmatprep.subr.bf16.mxu0 0
  %3743 = vmatpush1.bf16.msra.mxu0 0
  %3744 = vmatprep.mubr.bf16.mxu0 0
  %3745 = vmatmul.mubr.bf16.gmra.mrb[0].mxu0 %v3670
  %v3746 = vpop.f32.mrb[0].mxu0
  %v3747 = vadd.f32 0.0, %v3746
  %v3748 = vpop.f32.mrb[0].mxu0
  %v3749 = vpop.f32.mrb[0].mxu0
  %v3750 = vpop.f32.mrb[0].mxu0
  %3751 = vdwg.mxu0
  %v3752 = vpack.c.bf16 %v3667, %v3667
  %3753 = vmatprep.subr.bf16.mxu0 %v2656
  %3754 = vmatpush1.bf16.msra.mxu0 %v2655
  %3755 = vmatprep.subr.bf16.mxu0 %v2659
  %3756 = vmatpush1.bf16.msra.mxu0 %v2658
  %3757 = vmatprep.subr.bf16.mxu0 %v2662
  %3758 = vmatpush1.bf16.msra.mxu0 %v2661
  %3759 = vmatprep.subr.bf16.mxu0 %v2665
  %3760 = vmatpush1.bf16.msra.mxu0 %v2664
  %3761 = vmatprep.subr.bf16.mxu0 %v2668
  %3762 = vmatpush1.bf16.msra.mxu0 %v2667
  %3763 = vmatprep.subr.bf16.mxu0 %v2671
  %3764 = vmatpush1.bf16.msra.mxu0 %v2670
  %3765 = vmatprep.subr.bf16.mxu0 %v2674
  %3766 = vmatpush1.bf16.msra.mxu0 %v2673
  %3767 = vmatprep.subr.bf16.mxu0 %v2677
  %3768 = vmatpush1.bf16.msra.mxu0 %v2676
  %3769 = vmatprep.subr.bf16.mxu0 0
  %3770 = vmatpush1.bf16.msra.mxu0 0
  %3771 = vmatprep.subr.bf16.mxu0 0
  %3772 = vmatpush1.bf16.msra.mxu0 0
  %3773 = vmatprep.subr.bf16.mxu0 0
  %3774 = vmatpush1.bf16.msra.mxu0 0
  %3775 = vmatprep.subr.bf16.mxu0 0
  %3776 = vmatpush1.bf16.msra.mxu0 0
  %3777 = vmatprep.subr.bf16.mxu0 0
  %3778 = vmatpush1.bf16.msra.mxu0 0
  %3779 = vmatprep.subr.bf16.mxu0 0
  %3780 = vmatpush1.bf16.msra.mxu0 0
  %3781 = vmatprep.subr.bf16.mxu0 0
  %3782 = vmatpush1.bf16.msra.mxu0 0
  %3783 = vmatprep.subr.bf16.mxu0 0
  %3784 = vmatpush1.bf16.msra.mxu0 0
  %3785 = vmatprep.mubr.bf16.mxu0 0
  %3786 = vmatmul.mubr.bf16.gmra.mrb[0].mxu0 %v3752
  %v3787 = vpop.f32.mrb[0].mxu0
  %v3788 = vadd.f32 0.0, %v3787
  %v3789 = vpop.f32.mrb[0].mxu0
  %v3790 = vadd.f32 0.0, %v3789
  %v3791 = vpop.f32.mrb[0].mxu0
  %v3792 = vpop.f32.mrb[0].mxu0
  %3793 = vdwg.mxu0
  %3794 = vmatprep.subr.bf16.mxu0 0
  %3795 = vmatpush1.bf16.msra.mxu0 %v2657
  %3796 = vmatprep.subr.bf16.mxu0 0
  %3797 = vmatpush1.bf16.msra.mxu0 %v2660
  %3798 = vmatprep.subr.bf16.mxu0 0
  %3799 = vmatpush1.bf16.msra.mxu0 %v2663
  %3800 = vmatprep.subr.bf16.mxu0 0
  %3801 = vmatpush1.bf16.msra.mxu0 %v2666
  %3802 = vmatprep.subr.bf16.mxu0 0
  %3803 = vmatpush1.bf16.msra.mxu0 %v2669
  %3804 = vmatprep.subr.bf16.mxu0 0
  %3805 = vmatpush1.bf16.msra.mxu0 %v2672
  %3806 = vmatprep.subr.bf16.mxu0 0
  %3807 = vmatpush1.bf16.msra.mxu0 %v2675
  %3808 = vmatprep.subr.bf16.mxu0 0
  %3809 = vmatpush1.bf16.msra.mxu0 %v2678
  %3810 = vmatprep.subr.bf16.mxu0 0
  %3811 = vmatpush1.bf16.msra.mxu0 0
  %3812 = vmatprep.subr.bf16.mxu0 0
  %3813 = vmatpush1.bf16.msra.mxu0 0
  %3814 = vmatprep.subr.bf16.mxu0 0
  %3815 = vmatpush1.bf16.msra.mxu0 0
  %3816 = vmatprep.subr.bf16.mxu0 0
  %3817 = vmatpush1.bf16.msra.mxu0 0
  %3818 = vmatprep.subr.bf16.mxu0 0
  %3819 = vmatpush1.bf16.msra.mxu0 0
  %3820 = vmatprep.subr.bf16.mxu0 0
  %3821 = vmatpush1.bf16.msra.mxu0 0
  %3822 = vmatprep.subr.bf16.mxu0 0
  %3823 = vmatpush1.bf16.msra.mxu0 0
  %3824 = vmatprep.subr.bf16.mxu0 0
  %3825 = vmatpush1.bf16.msra.mxu0 0
  %3826 = vmatprep.mubr.bf16.mxu0 0
  %3827 = vmatmul.mubr.bf16.gmra.mrb[0].mxu0 %v3752
  %v3828 = vpop.f32.mrb[0].mxu0
  %v3829 = vadd.f32 0.0, %v3828
  %v3830 = vpop.f32.mrb[0].mxu0
  %v3831 = vpop.f32.mrb[0].mxu0
  %v3832 = vpop.f32.mrb[0].mxu0
  %3833 = vdwg.mxu0
  %v3834 = vadd.f32 %v1860, %v3706
  %v3835 = vxor.u32 %v3834, 2147483648
  %v3836 = vmul.f32 %v3835, 1.442695
  %v3837 = vpow.pop %v3836
  %v3838 = vadd.f32 %v3837, 1.0
  %v3839 = vrcp.pop %v3838
  %v3840 = vmul.f32 1.0, %v3839
  %v3841 = vadd.f32 %v1862, %v3708
  %v3842 = vxor.u32 %v3841, 2147483648
  %v3843 = vmul.f32 %v3842, 1.442695
  %v3844 = vpow.pop %v3843
  %v3845 = vadd.f32 %v3844, 1.0
  %v3846 = vrcp.pop %v3845
  %v3847 = vmul.f32 1.0, %v3846
  %v3848 = vadd.f32 %v3747, %v2356
  %v3849 = vmul.f32 %v3840, %v3848
  %v3850 = vadd.f32 %v1928, %v3849
  %v3851 = vtanh.pop %v3850
  %v3852 = vsub.f32 1.0, %v3847
  %v3853 = vmul.f32 %v3852, %v3851
  %v3854 = vmul.f32 %v3847, %v3645
  %v3855 = vadd.f32 %v3853, %v3854
  %v3856 = vadd.f32 %v2258, %v3788
  %v3857 = vxor.u32 %v3856, 2147483648
  %v3858 = vmul.f32 %v3857, 1.442695
  %v3859 = vpow.pop %v3858
  %v3860 = vadd.f32 %v3859, 1.0
  %v3861 = vrcp.pop %v3860
  %v3862 = vmul.f32 1.0, %v3861
  %v3863 = vadd.f32 %v2260, %v3790
  %v3864 = vxor.u32 %v3863, 2147483648
  %v3865 = vmul.f32 %v3864, 1.442695
  %v3866 = vpow.pop %v3865
  %v3867 = vadd.f32 %v3866, 1.0
  %v3868 = vrcp.pop %v3867
  %v3869 = vmul.f32 1.0, %v3868
  %v3870 = vadd.f32 %v3829, %v2364
  %v3871 = vmul.f32 %v3862, %v3870
  %v3872 = vadd.f32 %v2329, %v3871
  %v3873 = vtanh.pop %v3872
  %v3874 = vsub.f32 1.0, %v3869
  %v3875 = vmul.f32 %v3874, %v3873
  %v3876 = vmul.f32 %v3869, %v3667
  %v3877 = vadd.f32 %v3875, %v3876
  %3878 = vst [vmem:[#allocation2 + $0x50] sm:$0xff] %v3855
  %3879 = vst [vmem:[#allocation2 + $0x28] sm:$0xff] %v3877
  %v3880 = vpack.c.bf16 %v3855, %v3855
  %3881 = vmatprep.subr.bf16.mxu0 %v2447
  %3882 = vmatpush1.bf16.msra.mxu0 %v2446
  %3883 = vmatprep.subr.bf16.mxu0 %v2450
  %3884 = vmatpush1.bf16.msra.mxu0 %v2449
  %3885 = vmatprep.subr.bf16.mxu0 %v2453
  %3886 = vmatpush1.bf16.msra.mxu0 %v2452
  %3887 = vmatprep.subr.bf16.mxu0 %v2456
  %3888 = vmatpush1.bf16.msra.mxu0 %v2455
  %3889 = vmatprep.subr.bf16.mxu0 %v2459
  %3890 = vmatpush1.bf16.msra.mxu0 %v2458
  %3891 = vmatprep.subr.bf16.mxu0 %v2462
  %3892 = vmatpush1.bf16.msra.mxu0 %v2461
  %3893 = vmatprep.subr.bf16.mxu0 %v2465
  %3894 = vmatpush1.bf16.msra.mxu0 %v2464
  %3895 = vmatprep.subr.bf16.mxu0 %v2468
  %3896 = vmatpush1.bf16.msra.mxu0 %v2467
  %3897 = vmatprep.subr.bf16.mxu0 0
  %3898 = vmatpush1.bf16.msra.mxu0 0
  %3899 = vmatprep.subr.bf16.mxu0 0
  %3900 = vmatpush1.bf16.msra.mxu0 0
  %3901 = vmatprep.subr.bf16.mxu0 0
  %3902 = vmatpush1.bf16.msra.mxu0 0
  %3903 = vmatprep.subr.bf16.mxu0 0
  %3904 = vmatpush1.bf16.msra.mxu0 0
  %3905 = vmatprep.subr.bf16.mxu0 0
  %3906 = vmatpush1.bf16.msra.mxu0 0
  %3907 = vmatprep.subr.bf16.mxu0 0
  %3908 = vmatpush1.bf16.msra.mxu0 0
  %3909 = vmatprep.subr.bf16.mxu0 0
  %3910 = vmatpush1.bf16.msra.mxu0 0
  %3911 = vmatprep.subr.bf16.mxu0 0
  %3912 = vmatpush1.bf16.msra.mxu0 0
  %3913 = vmatprep.mubr.bf16.mxu0 0
  %3914 = vmatmul.mubr.bf16.gmra.mrb[0].mxu0 %v3880
  %v3915 = vpop.f32.mrb[0].mxu0
  %v3916 = vadd.f32 0.0, %v3915
  %v3917 = vpop.f32.mrb[0].mxu0
  %v3918 = vadd.f32 0.0, %v3917
  %v3919 = vpop.f32.mrb[0].mxu0
  %v3920 = vpop.f32.mrb[0].mxu0
  %3921 = vdwg.mxu0
  %3922 = vmatprep.subr.bf16.mxu0 0
  %3923 = vmatpush1.bf16.msra.mxu0 %v2448
  %3924 = vmatprep.subr.bf16.mxu0 0
  %3925 = vmatpush1.bf16.msra.mxu0 %v2451
  %3926 = vmatprep.subr.bf16.mxu0 0
  %3927 = vmatpush1.bf16.msra.mxu0 %v2454
  %3928 = vmatprep.subr.bf16.mxu0 0
  %3929 = vmatpush1.bf16.msra.mxu0 %v2457
  %3930 = vmatprep.subr.bf16.mxu0 0
  %3931 = vmatpush1.bf16.msra.mxu0 %v2460
  %3932 = vmatprep.subr.bf16.mxu0 0
  %3933 = vmatpush1.bf16.msra.mxu0 %v2463
  %3934 = vmatprep.subr.bf16.mxu0 0
  %3935 = vmatpush1.bf16.msra.mxu0 %v2466
  %3936 = vmatprep.subr.bf16.mxu0 0
  %3937 = vmatpush1.bf16.msra.mxu0 %v2469
  %3938 = vmatprep.subr.bf16.mxu0 0
  %3939 = vmatpush1.bf16.msra.mxu0 0
  %3940 = vmatprep.subr.bf16.mxu0 0
  %3941 = vmatpush1.bf16.msra.mxu0 0
  %3942 = vmatprep.subr.bf16.mxu0 0
  %3943 = vmatpush1.bf16.msra.mxu0 0
  %3944 = vmatprep.subr.bf16.mxu0 0
  %3945 = vmatpush1.bf16.msra.mxu0 0
  %3946 = vmatprep.subr.bf16.mxu0 0
  %3947 = vmatpush1.bf16.msra.mxu0 0
  %3948 = vmatprep.subr.bf16.mxu0 0
  %3949 = vmatpush1.bf16.msra.mxu0 0
  %3950 = vmatprep.subr.bf16.mxu0 0
  %3951 = vmatpush1.bf16.msra.mxu0 0
  %3952 = vmatprep.subr.bf16.mxu0 0
  %3953 = vmatpush1.bf16.msra.mxu0 0
  %3954 = vmatprep.mubr.bf16.mxu0 0
  %3955 = vmatmul.mubr.bf16.gmra.mrb[0].mxu0 %v3880
  %v3956 = vpop.f32.mrb[0].mxu0
  %v3957 = vadd.f32 0.0, %v3956
  %v3958 = vpop.f32.mrb[0].mxu0
  %v3959 = vpop.f32.mrb[0].mxu0
  %v3960 = vpop.f32.mrb[0].mxu0
  %3961 = vdwg.mxu0
  %v3962 = vpack.c.bf16 %v3877, %v3877
  %3963 = vmatprep.subr.bf16.mxu0 %v2656
  %3964 = vmatpush1.bf16.msra.mxu0 %v2655
  %3965 = vmatprep.subr.bf16.mxu0 %v2659
  %3966 = vmatpush1.bf16.msra.mxu0 %v2658
  %3967 = vmatprep.subr.bf16.mxu0 %v2662
  %3968 = vmatpush1.bf16.msra.mxu0 %v2661
  %3969 = vmatprep.subr.bf16.mxu0 %v2665
  %3970 = vmatpush1.bf16.msra.mxu0 %v2664
  %3971 = vmatprep.subr.bf16.mxu0 %v2668
  %3972 = vmatpush1.bf16.msra.mxu0 %v2667
  %3973 = vmatprep.subr.bf16.mxu0 %v2671
  %3974 = vmatpush1.bf16.msra.mxu0 %v2670
  %3975 = vmatprep.subr.bf16.mxu0 %v2674
  %3976 = vmatpush1.bf16.msra.mxu0 %v2673
  %3977 = vmatprep.subr.bf16.mxu0 %v2677
  %3978 = vmatpush1.bf16.msra.mxu0 %v2676
  %3979 = vmatprep.subr.bf16.mxu0 0
  %3980 = vmatpush1.bf16.msra.mxu0 0
  %3981 = vmatprep.subr.bf16.mxu0 0
  %3982 = vmatpush1.bf16.msra.mxu0 0
  %3983 = vmatprep.subr.bf16.mxu0 0
  %3984 = vmatpush1.bf16.msra.mxu0 0
  %3985 = vmatprep.subr.bf16.mxu0 0
  %3986 = vmatpush1.bf16.msra.mxu0 0
  %3987 = vmatprep.subr.bf16.mxu0 0
  %3988 = vmatpush1.bf16.msra.mxu0 0
  %3989 = vmatprep.subr.bf16.mxu0 0
  %3990 = vmatpush1.bf16.msra.mxu0 0
  %3991 = vmatprep.subr.bf16.mxu0 0
  %3992 = vmatpush1.bf16.msra.mxu0 0
  %3993 = vmatprep.subr.bf16.mxu0 0
  %3994 = vmatpush1.bf16.msra.mxu0 0
  %3995 = vmatprep.mubr.bf16.mxu0 0
  %3996 = vmatmul.mubr.bf16.gmra.mrb[0].mxu0 %v3962
  %v3997 = vpop.f32.mrb[0].mxu0
  %v3998 = vadd.f32 0.0, %v3997
  %v3999 = vpop.f32.mrb[0].mxu0
  %v4000 = vadd.f32 0.0, %v3999
  %v4001 = vpop.f32.mrb[0].mxu0
  %v4002 = vpop.f32.mrb[0].mxu0
  %4003 = vdwg.mxu0
  %4004 = vmatprep.subr.bf16.mxu0 0
  %4005 = vmatpush1.bf16.msra.mxu0 %v2657
  %4006 = vmatprep.subr.bf16.mxu0 0
  %4007 = vmatpush1.bf16.msra.mxu0 %v2660
  %4008 = vmatprep.subr.bf16.mxu0 0
  %4009 = vmatpush1.bf16.msra.mxu0 %v2663
  %4010 = vmatprep.subr.bf16.mxu0 0
  %4011 = vmatpush1.bf16.msra.mxu0 %v2666
  %4012 = vmatprep.subr.bf16.mxu0 0
  %4013 = vmatpush1.bf16.msra.mxu0 %v2669
  %4014 = vmatprep.subr.bf16.mxu0 0
  %4015 = vmatpush1.bf16.msra.mxu0 %v2672
  %4016 = vmatprep.subr.bf16.mxu0 0
  %4017 = vmatpush1.bf16.msra.mxu0 %v2675
  %4018 = vmatprep.subr.bf16.mxu0 0
  %4019 = vmatpush1.bf16.msra.mxu0 %v2678
  %4020 = vmatprep.subr.bf16.mxu0 0
  %4021 = vmatpush1.bf16.msra.mxu0 0
  %4022 = vmatprep.subr.bf16.mxu0 0
  %4023 = vmatpush1.bf16.msra.mxu0 0
  %4024 = vmatprep.subr.bf16.mxu0 0
  %4025 = vmatpush1.bf16.msra.mxu0 0
  %4026 = vmatprep.subr.bf16.mxu0 0
  %4027 = vmatpush1.bf16.msra.mxu0 0
  %4028 = vmatprep.subr.bf16.mxu0 0
  %4029 = vmatpush1.bf16.msra.mxu0 0
  %4030 = vmatprep.subr.bf16.mxu0 0
  %4031 = vmatpush1.bf16.msra.mxu0 0
  %4032 = vmatprep.subr.bf16.mxu0 0
  %4033 = vmatpush1.bf16.msra.mxu0 0
  %4034 = vmatprep.subr.bf16.mxu0 0
  %4035 = vmatpush1.bf16.msra.mxu0 0
  %4036 = vmatprep.mubr.bf16.mxu0 0
  %4037 = vmatmul.mubr.bf16.gmra.mrb[0].mxu0 %v3962
  %v4038 = vpop.f32.mrb[0].mxu0
  %v4039 = vadd.f32 0.0, %v4038
  %v4040 = vpop.f32.mrb[0].mxu0
  %v4041 = vpop.f32.mrb[0].mxu0
  %v4042 = vpop.f32.mrb[0].mxu0
  %4043 = vdwg.mxu0
  %v4044 = vadd.f32 %v1866, %v3916
  %v4045 = vxor.u32 %v4044, 2147483648
  %v4046 = vmul.f32 %v4045, 1.442695
  %v4047 = vpow.pop %v4046
  %v4048 = vadd.f32 %v4047, 1.0
  %v4049 = vrcp.pop %v4048
  %v4050 = vmul.f32 1.0, %v4049
  %v4051 = vadd.f32 %v1868, %v3918
  %v4052 = vxor.u32 %v4051, 2147483648
  %v4053 = vmul.f32 %v4052, 1.442695
  %v4054 = vpow.pop %v4053
  %v4055 = vadd.f32 %v4054, 1.0
  %v4056 = vrcp.pop %v4055
  %v4057 = vmul.f32 1.0, %v4056
  %v4058 = vadd.f32 %v3957, %v2356
  %v4059 = vmul.f32 %v4050, %v4058
  %v4060 = vadd.f32 %v1933, %v4059
  %v4061 = vtanh.pop %v4060
  %v4062 = vsub.f32 1.0, %v4057
  %v4063 = vmul.f32 %v4062, %v4061
  %v4064 = vmul.f32 %v4057, %v3855
  %v4065 = vadd.f32 %v4063, %v4064
  %v4066 = vadd.f32 %v2252, %v3998
  %v4067 = vxor.u32 %v4066, 2147483648
  %v4068 = vmul.f32 %v4067, 1.442695
  %v4069 = vpow.pop %v4068
  %v4070 = vadd.f32 %v4069, 1.0
  %v4071 = vrcp.pop %v4070
  %v4072 = vmul.f32 1.0, %v4071
  %v4073 = vadd.f32 %v2254, %v4000
  %v4074 = vxor.u32 %v4073, 2147483648
  %v4075 = vmul.f32 %v4074, 1.442695
  %v4076 = vpow.pop %v4075
  %v4077 = vadd.f32 %v4076, 1.0
  %v4078 = vrcp.pop %v4077
  %v4079 = vmul.f32 1.0, %v4078
  %v4080 = vadd.f32 %v4039, %v2364
  %v4081 = vmul.f32 %v4072, %v4080
  %v4082 = vadd.f32 %v2324, %v4081
  %v4083 = vtanh.pop %v4082
  %v4084 = vsub.f32 1.0, %v4079
  %v4085 = vmul.f32 %v4084, %v4083
  %v4086 = vmul.f32 %v4079, %v3877
  %v4087 = vadd.f32 %v4085, %v4086
  %4088 = vst [vmem:[#allocation2 + $0x60] sm:$0xff] %v4065
  %4089 = vst [vmem:[#allocation2 + $0x18] sm:$0xff] %v4087
  %v4090 = vpack.c.bf16 %v4065, %v4065
  %4091 = vmatprep.subr.bf16.mxu0 %v2447
  %4092 = vmatpush1.bf16.msra.mxu0 %v2446
  %4093 = vmatprep.subr.bf16.mxu0 %v2450
  %4094 = vmatpush1.bf16.msra.mxu0 %v2449
  %4095 = vmatprep.subr.bf16.mxu0 %v2453
  %4096 = vmatpush1.bf16.msra.mxu0 %v2452
  %4097 = vmatprep.subr.bf16.mxu0 %v2456
  %4098 = vmatpush1.bf16.msra.mxu0 %v2455
  %4099 = vmatprep.subr.bf16.mxu0 %v2459
  %4100 = vmatpush1.bf16.msra.mxu0 %v2458
  %4101 = vmatprep.subr.bf16.mxu0 %v2462
  %4102 = vmatpush1.bf16.msra.mxu0 %v2461
  %4103 = vmatprep.subr.bf16.mxu0 %v2465
  %4104 = vmatpush1.bf16.msra.mxu0 %v2464
  %4105 = vmatprep.subr.bf16.mxu0 %v2468
  %4106 = vmatpush1.bf16.msra.mxu0 %v2467
  %4107 = vmatprep.subr.bf16.mxu0 0
  %4108 = vmatpush1.bf16.msra.mxu0 0
  %4109 = vmatprep.subr.bf16.mxu0 0
  %4110 = vmatpush1.bf16.msra.mxu0 0
  %4111 = vmatprep.subr.bf16.mxu0 0
  %4112 = vmatpush1.bf16.msra.mxu0 0
  %4113 = vmatprep.subr.bf16.mxu0 0
  %4114 = vmatpush1.bf16.msra.mxu0 0
  %4115 = vmatprep.subr.bf16.mxu0 0
  %4116 = vmatpush1.bf16.msra.mxu0 0
  %4117 = vmatprep.subr.bf16.mxu0 0
  %4118 = vmatpush1.bf16.msra.mxu0 0
  %4119 = vmatprep.subr.bf16.mxu0 0
  %4120 = vmatpush1.bf16.msra.mxu0 0
  %4121 = vmatprep.subr.bf16.mxu0 0
  %4122 = vmatpush1.bf16.msra.mxu0 0
  %4123 = vmatprep.mubr.bf16.mxu0 0
  %4124 = vmatmul.mubr.bf16.gmra.mrb[0].mxu0 %v4090
  %v4125 = vpop.f32.mrb[0].mxu0
  %v4126 = vadd.f32 0.0, %v4125
  %v4127 = vpop.f32.mrb[0].mxu0
  %v4128 = vadd.f32 0.0, %v4127
  %v4129 = vpop.f32.mrb[0].mxu0
  %v4130 = vpop.f32.mrb[0].mxu0
  %4131 = vdwg.mxu0
  %4132 = vmatprep.subr.bf16.mxu0 0
  %4133 = vmatpush1.bf16.msra.mxu0 %v2448
  %4134 = vmatprep.subr.bf16.mxu0 0
  %4135 = vmatpush1.bf16.msra.mxu0 %v2451
  %4136 = vmatprep.subr.bf16.mxu0 0
  %4137 = vmatpush1.bf16.msra.mxu0 %v2454
  %4138 = vmatprep.subr.bf16.mxu0 0
  %4139 = vmatpush1.bf16.msra.mxu0 %v2457
  %4140 = vmatprep.subr.bf16.mxu0 0
  %4141 = vmatpush1.bf16.msra.mxu0 %v2460
  %4142 = vmatprep.subr.bf16.mxu0 0
  %4143 = vmatpush1.bf16.msra.mxu0 %v2463
  %4144 = vmatprep.subr.bf16.mxu0 0
  %4145 = vmatpush1.bf16.msra.mxu0 %v2466
  %4146 = vmatprep.subr.bf16.mxu0 0
  %4147 = vmatpush1.bf16.msra.mxu0 %v2469
  %4148 = vmatprep.subr.bf16.mxu0 0
  %4149 = vmatpush1.bf16.msra.mxu0 0
  %4150 = vmatprep.subr.bf16.mxu0 0
  %4151 = vmatpush1.bf16.msra.mxu0 0
  %4152 = vmatprep.subr.bf16.mxu0 0
  %4153 = vmatpush1.bf16.msra.mxu0 0
  %4154 = vmatprep.subr.bf16.mxu0 0
  %4155 = vmatpush1.bf16.msra.mxu0 0
  %4156 = vmatprep.subr.bf16.mxu0 0
  %4157 = vmatpush1.bf16.msra.mxu0 0
  %4158 = vmatprep.subr.bf16.mxu0 0
  %4159 = vmatpush1.bf16.msra.mxu0 0
  %4160 = vmatprep.subr.bf16.mxu0 0
  %4161 = vmatpush1.bf16.msra.mxu0 0
  %4162 = vmatprep.subr.bf16.mxu0 0
  %4163 = vmatpush1.bf16.msra.mxu0 0
  %4164 = vmatprep.mubr.bf16.mxu0 0
  %4165 = vmatmul.mubr.bf16.gmra.mrb[0].mxu0 %v4090
  %v4166 = vpop.f32.mrb[0].mxu0
  %v4167 = vadd.f32 0.0, %v4166
  %v4168 = vpop.f32.mrb[0].mxu0
  %v4169 = vpop.f32.mrb[0].mxu0
  %v4170 = vpop.f32.mrb[0].mxu0
  %4171 = vdwg.mxu0
  %v4172 = vpack.c.bf16 %v4087, %v4087
  %4173 = vmatprep.subr.bf16.mxu0 %v2656
  %4174 = vmatpush1.bf16.msra.mxu0 %v2655
  %4175 = vmatprep.subr.bf16.mxu0 %v2659
  %4176 = vmatpush1.bf16.msra.mxu0 %v2658
  %4177 = vmatprep.subr.bf16.mxu0 %v2662
  %4178 = vmatpush1.bf16.msra.mxu0 %v2661
  %4179 = vmatprep.subr.bf16.mxu0 %v2665
  %4180 = vmatpush1.bf16.msra.mxu0 %v2664
  %4181 = vmatprep.subr.bf16.mxu0 %v2668
  %4182 = vmatpush1.bf16.msra.mxu0 %v2667
  %4183 = vmatprep.subr.bf16.mxu0 %v2671
  %4184 = vmatpush1.bf16.msra.mxu0 %v2670
  %4185 = vmatprep.subr.bf16.mxu0 %v2674
  %4186 = vmatpush1.bf16.msra.mxu0 %v2673
  %4187 = vmatprep.subr.bf16.mxu0 %v2677
  %4188 = vmatpush1.bf16.msra.mxu0 %v2676
  %4189 = vmatprep.subr.bf16.mxu0 0
  %4190 = vmatpush1.bf16.msra.mxu0 0
  %4191 = vmatprep.subr.bf16.mxu0 0
  %4192 = vmatpush1.bf16.msra.mxu0 0
  %4193 = vmatprep.subr.bf16.mxu0 0
  %4194 = vmatpush1.bf16.msra.mxu0 0
  %4195 = vmatprep.subr.bf16.mxu0 0
  %4196 = vmatpush1.bf16.msra.mxu0 0
  %4197 = vmatprep.subr.bf16.mxu0 0
  %4198 = vmatpush1.bf16.msra.mxu0 0
  %4199 = vmatprep.subr.bf16.mxu0 0
  %4200 = vmatpush1.bf16.msra.mxu0 0
  %4201 = vmatprep.subr.bf16.mxu0 0
  %4202 = vmatpush1.bf16.msra.mxu0 0
  %4203 = vmatprep.subr.bf16.mxu0 0
  %4204 = vmatpush1.bf16.msra.mxu0 0
  %4205 = vmatprep.mubr.bf16.mxu0 0
  %4206 = vmatmul.mubr.bf16.gmra.mrb[0].mxu0 %v4172
  %v4207 = vpop.f32.mrb[0].mxu0
  %v4208 = vadd.f32 0.0, %v4207
  %v4209 = vpop.f32.mrb[0].mxu0
  %v4210 = vadd.f32 0.0, %v4209
  %v4211 = vpop.f32.mrb[0].mxu0
  %v4212 = vpop.f32.mrb[0].mxu0
  %4213 = vdwg.mxu0
  %4214 = vmatprep.subr.bf16.mxu0 0
  %4215 = vmatpush1.bf16.msra.mxu0 %v2657
  %4216 = vmatprep.subr.bf16.mxu0 0
  %4217 = vmatpush1.bf16.msra.mxu0 %v2660
  %4218 = vmatprep.subr.bf16.mxu0 0
  %4219 = vmatpush1.bf16.msra.mxu0 %v2663
  %4220 = vmatprep.subr.bf16.mxu0 0
  %4221 = vmatpush1.bf16.msra.mxu0 %v2666
  %4222 = vmatprep.subr.bf16.mxu0 0
  %4223 = vmatpush1.bf16.msra.mxu0 %v2669
  %4224 = vmatprep.subr.bf16.mxu0 0
  %4225 = vmatpush1.bf16.msra.mxu0 %v2672
  %4226 = vmatprep.subr.bf16.mxu0 0
  %4227 = vmatpush1.bf16.msra.mxu0 %v2675
  %4228 = vmatprep.subr.bf16.mxu0 0
  %4229 = vmatpush1.bf16.msra.mxu0 %v2678
  %4230 = vmatprep.subr.bf16.mxu0 0
  %4231 = vmatpush1.bf16.msra.mxu0 0
  %4232 = vmatprep.subr.bf16.mxu0 0
  %4233 = vmatpush1.bf16.msra.mxu0 0
  %4234 = vmatprep.subr.bf16.mxu0 0
  %4235 = vmatpush1.bf16.msra.mxu0 0
  %4236 = vmatprep.subr.bf16.mxu0 0
  %4237 = vmatpush1.bf16.msra.mxu0 0
  %4238 = vmatprep.subr.bf16.mxu0 0
  %4239 = vmatpush1.bf16.msra.mxu0 0
  %4240 = vmatprep.subr.bf16.mxu0 0
  %4241 = vmatpush1.bf16.msra.mxu0 0
  %4242 = vmatprep.subr.bf16.mxu0 0
  %4243 = vmatpush1.bf16.msra.mxu0 0
  %4244 = vmatprep.subr.bf16.mxu0 0
  %4245 = vmatpush1.bf16.msra.mxu0 0
  %4246 = vmatprep.mubr.bf16.mxu0 0
  %4247 = vmatmul.mubr.bf16.gmra.mrb[0].mxu0 %v4172
  %v4248 = vpop.f32.mrb[0].mxu0
  %v4249 = vadd.f32 0.0, %v4248
  %v4250 = vpop.f32.mrb[0].mxu0
  %v4251 = vpop.f32.mrb[0].mxu0
  %v4252 = vpop.f32.mrb[0].mxu0
  %4253 = vdwg.mxu0
  %v4254 = vadd.f32 %v1870, %v4126
  %v4255 = vxor.u32 %v4254, 2147483648
  %v4256 = vmul.f32 %v4255, 1.442695
  %v4257 = vpow.pop %v4256
  %v4258 = vadd.f32 %v4257, 1.0
  %v4259 = vrcp.pop %v4258
  %v4260 = vmul.f32 1.0, %v4259
  %v4261 = vadd.f32 %v1872, %v4128
  %v4262 = vxor.u32 %v4261, 2147483648
  %v4263 = vmul.f32 %v4262, 1.442695
  %v4264 = vpow.pop %v4263
  %v4265 = vadd.f32 %v4264, 1.0
  %v4266 = vrcp.pop %v4265
  %v4267 = vmul.f32 1.0, %v4266
  %v4268 = vadd.f32 %v4167, %v2356
  %v4269 = vmul.f32 %v4260, %v4268
  %v4270 = vadd.f32 %v1936, %v4269
  %v4271 = vtanh.pop %v4270
  %v4272 = vsub.f32 1.0, %v4267
  %v4273 = vmul.f32 %v4272, %v4271
  %v4274 = vmul.f32 %v4267, %v4065
  %v4275 = vadd.f32 %v4273, %v4274
  %v4276 = vadd.f32 %v2248, %v4208
  %v4277 = vxor.u32 %v4276, 2147483648
  %v4278 = vmul.f32 %v4277, 1.442695
  %v4279 = vpow.pop %v4278
  %v4280 = vadd.f32 %v4279, 1.0
  %v4281 = vrcp.pop %v4280
  %v4282 = vmul.f32 1.0, %v4281
  %v4283 = vadd.f32 %v2250, %v4210
  %v4284 = vxor.u32 %v4283, 2147483648
  %v4285 = vmul.f32 %v4284, 1.442695
  %v4286 = vpow.pop %v4285
  %v4287 = vadd.f32 %v4286, 1.0
  %v4288 = vrcp.pop %v4287
  %v4289 = vmul.f32 1.0, %v4288
  %v4290 = vadd.f32 %v4249, %v2364
  %v4291 = vmul.f32 %v4282, %v4290
  %v4292 = vadd.f32 %v2321, %v4291
  %v4293 = vtanh.pop %v4292
  %v4294 = vsub.f32 1.0, %v4289
  %v4295 = vmul.f32 %v4294, %v4293
  %v4296 = vmul.f32 %v4289, %v4087
  %v4297 = vadd.f32 %v4295, %v4296
  %4298 = vst [vmem:[#allocation2 + $0x70] sm:$0xff] %v4275
  %4299 = vst [vmem:[#allocation2 + $0x8] sm:$0xff] %v4297
  %s4300 = smul.u32 4, 2
  %s4301 = smul.u32 %s4300, 32
  %s4302 = smul.u32 %s4301, 3
  %s4303 = sshll.u32 %s4302, 4
  %4304 = dma.done [#allocation5], %s4303
  %s4305 = smul.u32 %s4300, 16
  %s4306 = smul.u32 %s4305, 3
  %s4307 = sshll.u32 %s4306, 4
  %4308 = dma.done %s853, %s4307
  %v4309 = vld [vmem:[#allocation2] sm:$0xff]
  %v4310 = vld [vmem:[#allocation2 + $0x8] sm:$0xff]
  %v4311 = vld [vmem:[#allocation2 + $0x10] sm:$0xff]
  %v4312 = vld [vmem:[#allocation2 + $0x18] sm:$0xff]
  %v4313 = vld [vmem:[#allocation2 + $0x20] sm:$0xff]
  %v4314 = vld [vmem:[#allocation2 + $0x28] sm:$0xff]
  %v4315 = vld [vmem:[#allocation2 + $0x30] sm:$0xff]
  %v4316 = vld [vmem:[#allocation2 + $0x38] sm:$0xff]
  %v4317 = vld [vmem:[#allocation2 + $0x40] sm:$0xff]
  %v4318 = vld [vmem:[#allocation2 + $0x48] sm:$0xff]
  %v4319 = vld [vmem:[#allocation2 + $0x50] sm:$0xff]
  %v4320 = vld [vmem:[#allocation2 + $0x58] sm:$0xff]
  %v4321 = vld [vmem:[#allocation2 + $0x60] sm:$0xff]
  %v4322 = vld [vmem:[#allocation2 + $0x68] sm:$0xff]
  %v4323 = vld [vmem:[#allocation2 + $0x70] sm:$0xff]
  %v4324 = vld [vmem:[#allocation2 + $0x78] sm:$0xff]
  %v4325 = vpack.c.bf16 %v4311, %v4309
  %v4326 = vpack.c.bf16 %v4312, %v4310
  %v4327 = vpack.c.bf16 %v4315, %v4313
  %v4328 = vpack.c.bf16 %v4316, %v4314
  %v4329 = vpack.c.bf16 %v4319, %v4317
  %v4330 = vpack.c.bf16 %v4320, %v4318
  %v4331 = vpack.c.bf16 %v4323, %v4321
  %v4332 = vpack.c.bf16 %v4324, %v4322
  %v4333 = vld [vmem:[#allocation3] sm:$0xff]
  %v4334 = vld [vmem:[#allocation3 + $0x8] sm:$0xff]
  %v4335 = vld [vmem:[#allocation3 + $0x10] sm:$0xff]
  %v4336 = vld [vmem:[#allocation3 + $0x18] sm:$0xff]
  %v4337 = vld [vmem:[#allocation3 + $0x20] sm:$0xff]
  %v4338 = vld [vmem:[#allocation3 + $0x28] sm:$0xff]
  %v4339 = vld [vmem:[#allocation3 + $0x30] sm:$0xff]
  %v4340 = vld [vmem:[#allocation3 + $0x38] sm:$0xff]
  %v4341 = vld [vmem:[#allocation3 + $0x40] sm:$0xff]
  %v4342 = vld [vmem:[#allocation3 + $0x48] sm:$0xff]
  %v4343 = vld [vmem:[#allocation3 + $0x50] sm:$0xff]
  %v4344 = vld [vmem:[#allocation3 + $0x58] sm:$0xff]
  %v4345 = vld [vmem:[#allocation3 + $0x60] sm:$0xff]
  %v4346 = vld [vmem:[#allocation3 + $0x68] sm:$0xff]
  %v4347 = vld [vmem:[#allocation3 + $0x70] sm:$0xff]
  %v4348 = vld [vmem:[#allocation3 + $0x78] sm:$0xff]
  %v4349 = vld [vmem:[#allocation3 + $0x80] sm:$0xff]
  %v4350 = vld [vmem:[#allocation3 + $0x88] sm:$0xff]
  %v4351 = vld [vmem:[#allocation3 + $0x90] sm:$0xff]
  %v4352 = vld [vmem:[#allocation3 + $0x98] sm:$0xff]
  %v4353 = vld [vmem:[#allocation3 + $0xa0] sm:$0xff]
  %v4354 = vld [vmem:[#allocation3 + $0xa8] sm:$0xff]
  %v4355 = vld [vmem:[#allocation3 + $0xb0] sm:$0xff]
  %v4356 = vld [vmem:[#allocation3 + $0xb8] sm:$0xff]
  %v4357 = vld [vmem:[#allocation3 + $0xc0] sm:$0xff]
  %v4358 = vld [vmem:[#allocation3 + $0xc8] sm:$0xff]
  %v4359 = vld [vmem:[#allocation3 + $0xd0] sm:$0xff]
  %v4360 = vld [vmem:[#allocation3 + $0xd8] sm:$0xff]
  %v4361 = vld [vmem:[#allocation3 + $0xe0] sm:$0xff]
  %v4362 = vld [vmem:[#allocation3 + $0xe8] sm:$0xff]
  %v4363 = vld [vmem:[#allocation3 + $0xf0] sm:$0xff]
  %v4364 = vld [vmem:[#allocation3 + $0xf8] sm:$0xff]
  %v4365 = vld [vmem:[#allocation3 + $0x100] sm:$0xff]
  %v4366 = vld [vmem:[#allocation3 + $0x108] sm:$0xff]
  %v4367 = vld [vmem:[#allocation3 + $0x110] sm:$0xff]
  %v4368 = vld [vmem:[#allocation3 + $0x118] sm:$0xff]
  %v4369 = vld [vmem:[#allocation3 + $0x120] sm:$0xff]
  %v4370 = vld [vmem:[#allocation3 + $0x128] sm:$0xff]
  %v4371 = vld [vmem:[#allocation3 + $0x130] sm:$0xff]
  %v4372 = vld [vmem:[#allocation3 + $0x138] sm:$0xff]
  %v4373 = vld [vmem:[#allocation3 + $0x140] sm:$0xff]
  %v4374 = vld [vmem:[#allocation3 + $0x148] sm:$0xff]
  %v4375 = vld [vmem:[#allocation3 + $0x150] sm:$0xff]
  %v4376 = vld [vmem:[#allocation3 + $0x158] sm:$0xff]
  %v4377 = vld [vmem:[#allocation3 + $0x160] sm:$0xff]
  %v4378 = vld [vmem:[#allocation3 + $0x168] sm:$0xff]
  %v4379 = vld [vmem:[#allocation3 + $0x170] sm:$0xff]
  %v4380 = vld [vmem:[#allocation3 + $0x178] sm:$0xff]
  %s4381 = scalar_lea.vmem [#allocation3], 384
  %v4382 = vld [vmem:[%s4381] sm:$0xff]
  %v4383 = vld [vmem:[%s4381 + $0x8] sm:$0xff]
  %v4384 = vld [vmem:[%s4381 + $0x10] sm:$0xff]
  %v4385 = vld [vmem:[%s4381 + $0x18] sm:$0xff]
  %v4386 = vld [vmem:[%s4381 + $0x20] sm:$0xff]
  %v4387 = vld [vmem:[%s4381 + $0x28] sm:$0xff]
  %v4388 = vld [vmem:[%s4381 + $0x30] sm:$0xff]
  %v4389 = vld [vmem:[%s4381 + $0x38] sm:$0xff]
  %v4390 = vld [vmem:[%s4381 + $0x40] sm:$0xff]
  %v4391 = vld [vmem:[%s4381 + $0x48] sm:$0xff]
  %v4392 = vld [vmem:[%s4381 + $0x50] sm:$0xff]
  %v4393 = vld [vmem:[%s4381 + $0x58] sm:$0xff]
  %v4394 = vld [vmem:[%s4381 + $0x60] sm:$0xff]
  %v4395 = vld [vmem:[%s4381 + $0x68] sm:$0xff]
  %v4396 = vld [vmem:[%s4381 + $0x70] sm:$0xff]
  %v4397 = vld [vmem:[%s4381 + $0x78] sm:$0xff]
  %v4398 = vld [vmem:[%s4381 + $0x80] sm:$0xff]
  %v4399 = vld [vmem:[%s4381 + $0x88] sm:$0xff]
  %v4400 = vld [vmem:[%s4381 + $0x90] sm:$0xff]
  %v4401 = vld [vmem:[%s4381 + $0x98] sm:$0xff]
  %v4402 = vld [vmem:[%s4381 + $0xa0] sm:$0xff]
  %v4403 = vld [vmem:[%s4381 + $0xa8] sm:$0xff]
  %v4404 = vld [vmem:[%s4381 + $0xb0] sm:$0xff]
  %v4405 = vld [vmem:[%s4381 + $0xb8] sm:$0xff]
  %v4406 = vld [vmem:[%s4381 + $0xc0] sm:$0xff]
  %v4407 = vld [vmem:[%s4381 + $0xc8] sm:$0xff]
  %v4408 = vld [vmem:[%s4381 + $0xd0] sm:$0xff]
  %v4409 = vld [vmem:[%s4381 + $0xd8] sm:$0xff]
  %v4410 = vld [vmem:[%s4381 + $0xe0] sm:$0xff]
  %v4411 = vld [vmem:[%s4381 + $0xe8] sm:$0xff]
  %v4412 = vld [vmem:[%s4381 + $0xf0] sm:$0xff]
  %v4413 = vld [vmem:[%s4381 + $0xf8] sm:$0xff]
  %v4414 = vld [vmem:[%s4381 + $0x100] sm:$0xff]
  %v4415 = vld [vmem:[%s4381 + $0x108] sm:$0xff]
  %v4416 = vld [vmem:[%s4381 + $0x110] sm:$0xff]
  %v4417 = vld [vmem:[%s4381 + $0x118] sm:$0xff]
  %v4418 = vld [vmem:[%s4381 + $0x120] sm:$0xff]
  %v4419 = vld [vmem:[%s4381 + $0x128] sm:$0xff]
  %v4420 = vld [vmem:[%s4381 + $0x130] sm:$0xff]
  %v4421 = vld [vmem:[%s4381 + $0x138] sm:$0xff]
  %v4422 = vld [vmem:[%s4381 + $0x140] sm:$0xff]
  %v4423 = vld [vmem:[%s4381 + $0x148] sm:$0xff]
  %v4424 = vld [vmem:[%s4381 + $0x150] sm:$0xff]
  %v4425 = vld [vmem:[%s4381 + $0x158] sm:$0xff]
  %v4426 = vld [vmem:[%s4381 + $0x160] sm:$0xff]
  %v4427 = vld [vmem:[%s4381 + $0x168] sm:$0xff]
  %v4428 = vld [vmem:[%s4381 + $0x170] sm:$0xff]
  %v4429 = vld [vmem:[%s4381 + $0x178] sm:$0xff]
  %v4430 = vld [vmem:[#allocation4] sm:$0xff]
  %v4431 = vld [vmem:[#allocation4 + $0x8] sm:$0xff]
  %v4432 = vld [vmem:[#allocation4 + $0x10] sm:$0xff]
  %v4433 = vld [vmem:[#allocation4 + $0x18] sm:$0xff]
  %v4434 = vld [vmem:[#allocation4 + $0x20] sm:$0xff]
  %v4435 = vld [vmem:[#allocation4 + $0x28] sm:$0xff]
  %v4436 = vld [vmem:[#allocation4 + $0x30] sm:$0xff]
  %v4437 = vld [vmem:[#allocation4 + $0x38] sm:$0xff]
  %v4438 = vld [vmem:[#allocation4 + $0x40] sm:$0xff]
  %v4439 = vld [vmem:[#allocation4 + $0x48] sm:$0xff]
  %v4440 = vld [vmem:[#allocation4 + $0x50] sm:$0xff]
  %v4441 = vld [vmem:[#allocation4 + $0x58] sm:$0xff]
  %v4442 = vld [vmem:[#allocation4 + $0x60] sm:$0xff]
  %v4443 = vld [vmem:[#allocation4 + $0x68] sm:$0xff]
  %v4444 = vld [vmem:[#allocation4 + $0x70] sm:$0xff]
  %v4445 = vld [vmem:[#allocation4 + $0x78] sm:$0xff]
  %v4446 = vld [vmem:[#allocation4 + $0x80] sm:$0xff]
  %v4447 = vld [vmem:[#allocation4 + $0x88] sm:$0xff]
  %v4448 = vld [vmem:[#allocation4 + $0x90] sm:$0xff]
  %v4449 = vld [vmem:[#allocation4 + $0x98] sm:$0xff]
  %v4450 = vld [vmem:[#allocation4 + $0xa0] sm:$0xff]
  %v4451 = vld [vmem:[#allocation4 + $0xa8] sm:$0xff]
  %v4452 = vld [vmem:[#allocation4 + $0xb0] sm:$0xff]
  %v4453 = vld [vmem:[#allocation4 + $0xb8] sm:$0xff]
  %s4454 = scalar_lea.vmem [#allocation4], 192
  %v4455 = vld [vmem:[%s4454] sm:$0xff]
  %v4456 = vld [vmem:[%s4454 + $0x8] sm:$0xff]
  %v4457 = vld [vmem:[%s4454 + $0x10] sm:$0xff]
  %v4458 = vld [vmem:[%s4454 + $0x18] sm:$0xff]
  %v4459 = vld [vmem:[%s4454 + $0x20] sm:$0xff]
  %v4460 = vld [vmem:[%s4454 + $0x28] sm:$0xff]
  %v4461 = vld [vmem:[%s4454 + $0x30] sm:$0xff]
  %v4462 = vld [vmem:[%s4454 + $0x38] sm:$0xff]
  %v4463 = vld [vmem:[%s4454 + $0x40] sm:$0xff]
  %v4464 = vld [vmem:[%s4454 + $0x48] sm:$0xff]
  %v4465 = vld [vmem:[%s4454 + $0x50] sm:$0xff]
  %v4466 = vld [vmem:[%s4454 + $0x58] sm:$0xff]
  %v4467 = vld [vmem:[%s4454 + $0x60] sm:$0xff]
  %v4468 = vld [vmem:[%s4454 + $0x68] sm:$0xff]
  %v4469 = vld [vmem:[%s4454 + $0x70] sm:$0xff]
  %v4470 = vld [vmem:[%s4454 + $0x78] sm:$0xff]
  %v4471 = vld [vmem:[%s4454 + $0x80] sm:$0xff]
  %v4472 = vld [vmem:[%s4454 + $0x88] sm:$0xff]
  %v4473 = vld [vmem:[%s4454 + $0x90] sm:$0xff]
  %v4474 = vld [vmem:[%s4454 + $0x98] sm:$0xff]
  %v4475 = vld [vmem:[%s4454 + $0xa0] sm:$0xff]
  %v4476 = vld [vmem:[%s4454 + $0xa8] sm:$0xff]
  %v4477 = vld [vmem:[%s4454 + $0xb0] sm:$0xff]
  %v4478 = vld [vmem:[%s4454 + $0xb8] sm:$0xff]
  %v4479 = vld [vmem:[%s7] sm:$0x7]
  %v4481 = vlaneseq
  %v4482 = vshrl.u32 %v4481, 7
  %v4483 = vsub.s32 0, %v4482
  %v4484 = vrot.slane %v4479, %v4483
  %v4485 = vlaneseq
  %v4486 = vshrl.u32 %v4485, 7
  %v4487 = vsub.s32 1, %v4486
  %v4488 = vrot.slane %v4479, %v4487
  %v4489 = vlaneseq
  %v4490 = vshrl.u32 %v4489, 7
  %v4491 = vsub.s32 2, %v4490
  %v4492 = vrot.slane %v4479, %v4491
  %4496 = vmatprep.subr.bf16.mxu0 %v4334
  %4497 = vmatpush1.bf16.msra.mxu0 %v4333
  %4498 = vmatprep.subr.bf16.mxu0 %v4337
  %4499 = vmatpush1.bf16.msra.mxu0 %v4336
  %4500 = vmatprep.subr.bf16.mxu0 %v4340
  %4501 = vmatpush1.bf16.msra.mxu0 %v4339
  %4502 = vmatprep.subr.bf16.mxu0 %v4343
  %4503 = vmatpush1.bf16.msra.mxu0 %v4342
  %4504 = vmatprep.subr.bf16.mxu0 %v4346
  %4505 = vmatpush1.bf16.msra.mxu0 %v4345
  %4506 = vmatprep.subr.bf16.mxu0 %v4349
  %4507 = vmatpush1.bf16.msra.mxu0 %v4348
  %4508 = vmatprep.subr.bf16.mxu0 %v4352
  %4509 = vmatpush1.bf16.msra.mxu0 %v4351
  %4510 = vmatprep.subr.bf16.mxu0 %v4355
  %4511 = vmatpush1.bf16.msra.mxu0 %v4354
  %4512 = vmatprep.subr.bf16.mxu0 %v4358
  %4513 = vmatpush1.bf16.msra.mxu0 %v4357
  %4514 = vmatprep.subr.bf16.mxu0 %v4361
  %4515 = vmatpush1.bf16.msra.mxu0 %v4360
  %4516 = vmatprep.subr.bf16.mxu0 %v4364
  %4517 = vmatpush1.bf16.msra.mxu0 %v4363
  %4518 = vmatprep.subr.bf16.mxu0 %v4367
  %4519 = vmatpush1.bf16.msra.mxu0 %v4366
  %4520 = vmatprep.subr.bf16.mxu0 %v4370
  %4521 = vmatpush1.bf16.msra.mxu0 %v4369
  %4522 = vmatprep.subr.bf16.mxu0 %v4373
  %4523 = vmatpush1.bf16.msra.mxu0 %v4372
  %4524 = vmatprep.subr.bf16.mxu0 %v4376
  %4525 = vmatpush1.bf16.msra.mxu0 %v4375
  %4526 = vmatprep.subr.bf16.mxu0 %v4379
  %4527 = vmatpush1.bf16.msra.mxu0 %v4378
  %4528 = vmatprep.mubr.bf16.mxu0 %v4326
  %4529 = vmatmul.mubr.bf16.gmra.mrb[0].mxu0 %v4325
  %v4530 = vpop.f32.mrb[0].mxu0
  %v4531 = vadd.f32 %v4484, %v4530
  %v4532 = vpop.f32.mrb[0].mxu0
  %v4533 = vadd.f32 %v4488, %v4532
  %v4534 = vpop.f32.mrb[0].mxu0
  %v4535 = vadd.f32 %v4484, %v4534
  %v4536 = vpop.f32.mrb[0].mxu0
  %v4537 = vadd.f32 %v4488, %v4536
  %4538 = vmatprep.mubr.bf16.mxu0 %v4328
  %4539 = vmatmul.mubr.bf16.gmra.mrb[0].mxu0 %v4327
  %v4540 = vpop.f32.mrb[0].mxu0
  %v4541 = vadd.f32 %v4484, %v4540
  %v4542 = vpop.f32.mrb[0].mxu0
  %v4543 = vadd.f32 %v4488, %v4542
  %v4544 = vpop.f32.mrb[0].mxu0
  %v4545 = vadd.f32 %v4484, %v4544
  %v4546 = vpop.f32.mrb[0].mxu0
  %v4547 = vadd.f32 %v4488, %v4546
  %4548 = vmatprep.mubr.bf16.mxu0 %v4330
  %4549 = vmatmul.mubr.bf16.gmra.mrb[0].mxu0 %v4329
  %v4550 = vpop.f32.mrb[0].mxu0
  %v4551 = vadd.f32 %v4484, %v4550
  %v4552 = vpop.f32.mrb[0].mxu0
  %v4553 = vadd.f32 %v4488, %v4552
  %v4554 = vpop.f32.mrb[0].mxu0
  %v4555 = vadd.f32 %v4484, %v4554
  %v4556 = vpop.f32.mrb[0].mxu0
  %v4557 = vadd.f32 %v4488, %v4556
  %4558 = vmatprep.mubr.bf16.mxu0 %v4332
  %4559 = vmatmul.mubr.bf16.gmra.mrb[0].mxu0 %v4331
  %v4560 = vpop.f32.mrb[0].mxu0
  %v4561 = vadd.f32 %v4484, %v4560
  %v4562 = vpop.f32.mrb[0].mxu0
  %v4563 = vadd.f32 %v4488, %v4562
  %v4564 = vpop.f32.mrb[0].mxu0
  %v4565 = vadd.f32 %v4484, %v4564
  %v4566 = vpop.f32.mrb[0].mxu0
  %v4567 = vadd.f32 %v4488, %v4566
  %4568 = vdwg.mxu0
  %4569 = vmatprep.subr.bf16.mxu0 0
  %4570 = vmatpush1.bf16.msra.mxu0 %v4335
  %4571 = vmatprep.subr.bf16.mxu0 0
  %4572 = vmatpush1.bf16.msra.mxu0 %v4338
  %4573 = vmatprep.subr.bf16.mxu0 0
  %4574 = vmatpush1.bf16.msra.mxu0 %v4341
  %4575 = vmatprep.subr.bf16.mxu0 0
  %4576 = vmatpush1.bf16.msra.mxu0 %v4344
  %4577 = vmatprep.subr.bf16.mxu0 0
  %4578 = vmatpush1.bf16.msra.mxu0 %v4347
  %4579 = vmatprep.subr.bf16.mxu0 0
  %4580 = vmatpush1.bf16.msra.mxu0 %v4350
  %4581 = vmatprep.subr.bf16.mxu0 0
  %4582 = vmatpush1.bf16.msra.mxu0 %v4353
  %4583 = vmatprep.subr.bf16.mxu0 0
  %4584 = vmatpush1.bf16.msra.mxu0 %v4356
  %4585 = vmatprep.subr.bf16.mxu0 0
  %4586 = vmatpush1.bf16.msra.mxu0 %v4359
  %4587 = vmatprep.subr.bf16.mxu0 0
  %4588 = vmatpush1.bf16.msra.mxu0 %v4362
  %4589 = vmatprep.subr.bf16.mxu0 0
  %4590 = vmatpush1.bf16.msra.mxu0 %v4365
  %4591 = vmatprep.subr.bf16.mxu0 0
  %4592 = vmatpush1.bf16.msra.mxu0 %v4368
  %4593 = vmatprep.subr.bf16.mxu0 0
  %4594 = vmatpush1.bf16.msra.mxu0 %v4371
  %4595 = vmatprep.subr.bf16.mxu0 0
  %4596 = vmatpush1.bf16.msra.mxu0 %v4374
  %4597 = vmatprep.subr.bf16.mxu0 0
  %4598 = vmatpush1.bf16.msra.mxu0 %v4377
  %4599 = vmatprep.subr.bf16.mxu0 0
  %4600 = vmatpush1.bf16.msra.mxu0 %v4380
  %4601 = vmatprep.mubr.bf16.mxu0 %v4326
  %4602 = vmatmul.mubr.bf16.gmra.mrb[0].mxu0 %v4325
  %v4603 = vpop.f32.mrb[0].mxu0
  %v4604 = vadd.f32 %v4492, %v4603
  %v4605 = vpop.f32.mrb[0].mxu0
  %v4606 = vpop.f32.mrb[0].mxu0
  %v4607 = vadd.f32 %v4492, %v4606
  %v4608 = vpop.f32.mrb[0].mxu0
  %4609 = vmatprep.mubr.bf16.mxu0 %v4328
  %4610 = vmatmul.mubr.bf16.gmra.mrb[0].mxu0 %v4327
  %v4611 = vpop.f32.mrb[0].mxu0
  %v4612 = vadd.f32 %v4492, %v4611
  %v4613 = vpop.f32.mrb[0].mxu0
  %v4614 = vpop.f32.mrb[0].mxu0
  %v4615 = vadd.f32 %v4492, %v4614
  %v4616 = vpop.f32.mrb[0].mxu0
  %4617 = vmatprep.mubr.bf16.mxu0 %v4330
  %4618 = vmatmul.mubr.bf16.gmra.mrb[0].mxu0 %v4329
  %v4619 = vpop.f32.mrb[0].mxu0
  %v4620 = vadd.f32 %v4492, %v4619
  %v4621 = vpop.f32.mrb[0].mxu0
  %v4622 = vpop.f32.mrb[0].mxu0
  %v4623 = vadd.f32 %v4492, %v4622
  %v4624 = vpop.f32.mrb[0].mxu0
  %4625 = vmatprep.mubr.bf16.mxu0 %v4332
  %4626 = vmatmul.mubr.bf16.gmra.mrb[0].mxu0 %v4331
  %v4627 = vpop.f32.mrb[0].mxu0
  %v4628 = vadd.f32 %v4492, %v4627
  %v4629 = vpop.f32.mrb[0].mxu0
  %v4630 = vpop.f32.mrb[0].mxu0
  %v4631 = vadd.f32 %v4492, %v4630
  %v4632 = vpop.f32.mrb[0].mxu0
  %4633 = vdwg.mxu0
  %s4634 = scalar_lea.vmem %s7, 3
  %v4635 = vld [vmem:[%s4634] sm:$0x7]
  %v4637 = vlaneseq
  %v4638 = vshrl.u32 %v4637, 7
  %v4639 = vsub.s32 0, %v4638
  %v4640 = vrot.slane %v4635, %v4639
  %v4641 = vlaneseq
  %v4642 = vshrl.u32 %v4641, 7
  %v4643 = vsub.s32 1, %v4642
  %v4644 = vrot.slane %v4635, %v4643
  %v4645 = vlaneseq
  %v4646 = vshrl.u32 %v4645, 7
  %v4647 = vsub.s32 2, %v4646
  %v4648 = vrot.slane %v4635, %v4647
  %4652 = vmatprep.subr.bf16.mxu0 %v4383
  %4653 = vmatpush1.bf16.msra.mxu0 %v4382
  %4654 = vmatprep.subr.bf16.mxu0 %v4386
  %4655 = vmatpush1.bf16.msra.mxu0 %v4385
  %4656 = vmatprep.subr.bf16.mxu0 %v4389
  %4657 = vmatpush1.bf16.msra.mxu0 %v4388
  %4658 = vmatprep.subr.bf16.mxu0 %v4392
  %4659 = vmatpush1.bf16.msra.mxu0 %v4391
  %4660 = vmatprep.subr.bf16.mxu0 %v4395
  %4661 = vmatpush1.bf16.msra.mxu0 %v4394
  %4662 = vmatprep.subr.bf16.mxu0 %v4398
  %4663 = vmatpush1.bf16.msra.mxu0 %v4397
  %4664 = vmatprep.subr.bf16.mxu0 %v4401
  %4665 = vmatpush1.bf16.msra.mxu0 %v4400
  %4666 = vmatprep.subr.bf16.mxu0 %v4404
  %4667 = vmatpush1.bf16.msra.mxu0 %v4403
  %4668 = vmatprep.subr.bf16.mxu0 %v4407
  %4669 = vmatpush1.bf16.msra.mxu0 %v4406
  %4670 = vmatprep.subr.bf16.mxu0 %v4410
  %4671 = vmatpush1.bf16.msra.mxu0 %v4409
  %4672 = vmatprep.subr.bf16.mxu0 %v4413
  %4673 = vmatpush1.bf16.msra.mxu0 %v4412
  %4674 = vmatprep.subr.bf16.mxu0 %v4416
  %4675 = vmatpush1.bf16.msra.mxu0 %v4415
  %4676 = vmatprep.subr.bf16.mxu0 %v4419
  %4677 = vmatpush1.bf16.msra.mxu0 %v4418
  %4678 = vmatprep.subr.bf16.mxu0 %v4422
  %4679 = vmatpush1.bf16.msra.mxu0 %v4421
  %4680 = vmatprep.subr.bf16.mxu0 %v4425
  %4681 = vmatpush1.bf16.msra.mxu0 %v4424
  %4682 = vmatprep.subr.bf16.mxu0 %v4428
  %4683 = vmatpush1.bf16.msra.mxu0 %v4427
  %4684 = vmatprep.mubr.bf16.mxu0 %v4326
  %4685 = vmatmul.mubr.bf16.gmra.mrb[0].mxu0 %v4325
  %v4686 = vpop.f32.mrb[0].mxu0
  %v4687 = vadd.f32 %v4640, %v4686
  %v4688 = vpop.f32.mrb[0].mxu0
  %v4689 = vadd.f32 %v4644, %v4688
  %v4690 = vpop.f32.mrb[0].mxu0
  %v4691 = vadd.f32 %v4640, %v4690
  %v4692 = vpop.f32.mrb[0].mxu0
  %v4693 = vadd.f32 %v4644, %v4692
  %4694 = vmatprep.mubr.bf16.mxu0 %v4328
  %4695 = vmatmul.mubr.bf16.gmra.mrb[0].mxu0 %v4327
  %v4696 = vpop.f32.mrb[0].mxu0
  %v4697 = vadd.f32 %v4640, %v4696
  %v4698 = vpop.f32.mrb[0].mxu0
  %v4699 = vadd.f32 %v4644, %v4698
  %v4700 = vpop.f32.mrb[0].mxu0
  %v4701 = vadd.f32 %v4640, %v4700
  %v4702 = vpop.f32.mrb[0].mxu0
  %v4703 = vadd.f32 %v4644, %v4702
  %4704 = vmatprep.mubr.bf16.mxu0 %v4330
  %4705 = vmatmul.mubr.bf16.gmra.mrb[0].mxu0 %v4329
  %v4706 = vpop.f32.mrb[0].mxu0
  %v4707 = vadd.f32 %v4640, %v4706
  %v4708 = vpop.f32.mrb[0].mxu0
  %v4709 = vadd.f32 %v4644, %v4708
  %v4710 = vpop.f32.mrb[0].mxu0
  %v4711 = vadd.f32 %v4640, %v4710
  %v4712 = vpop.f32.mrb[0].mxu0
  %v4713 = vadd.f32 %v4644, %v4712
  %4714 = vmatprep.mubr.bf16.mxu0 %v4332
  %4715 = vmatmul.mubr.bf16.gmra.mrb[0].mxu0 %v4331
  %v4716 = vpop.f32.mrb[0].mxu0
  %v4717 = vadd.f32 %v4640, %v4716
  %v4718 = vpop.f32.mrb[0].mxu0
  %v4719 = vadd.f32 %v4644, %v4718
  %v4720 = vpop.f32.mrb[0].mxu0
  %v4721 = vadd.f32 %v4640, %v4720
  %v4722 = vpop.f32.mrb[0].mxu0
  %v4723 = vadd.f32 %v4644, %v4722
  %4724 = vdwg.mxu0
  %4725 = vmatprep.subr.bf16.mxu0 0
  %4726 = vmatpush1.bf16.msra.mxu0 %v4384
  %4727 = vmatprep.subr.bf16.mxu0 0
  %4728 = vmatpush1.bf16.msra.mxu0 %v4387
  %4729 = vmatprep.subr.bf16.mxu0 0
  %4730 = vmatpush1.bf16.msra.mxu0 %v4390
  %4731 = vmatprep.subr.bf16.mxu0 0
  %4732 = vmatpush1.bf16.msra.mxu0 %v4393
  %4733 = vmatprep.subr.bf16.mxu0 0
  %4734 = vmatpush1.bf16.msra.mxu0 %v4396
  %4735 = vmatprep.subr.bf16.mxu0 0
  %4736 = vmatpush1.bf16.msra.mxu0 %v4399
  %4737 = vmatprep.subr.bf16.mxu0 0
  %4738 = vmatpush1.bf16.msra.mxu0 %v4402
  %4739 = vmatprep.subr.bf16.mxu0 0
  %4740 = vmatpush1.bf16.msra.mxu0 %v4405
  %4741 = vmatprep.subr.bf16.mxu0 0
  %4742 = vmatpush1.bf16.msra.mxu0 %v4408
  %4743 = vmatprep.subr.bf16.mxu0 0
  %4744 = vmatpush1.bf16.msra.mxu0 %v4411
  %4745 = vmatprep.subr.bf16.mxu0 0
  %4746 = vmatpush1.bf16.msra.mxu0 %v4414
  %4747 = vmatprep.subr.bf16.mxu0 0
  %4748 = vmatpush1.bf16.msra.mxu0 %v4417
  %4749 = vmatprep.subr.bf16.mxu0 0
  %4750 = vmatpush1.bf16.msra.mxu0 %v4420
  %4751 = vmatprep.subr.bf16.mxu0 0
  %4752 = vmatpush1.bf16.msra.mxu0 %v4423
  %4753 = vmatprep.subr.bf16.mxu0 0
  %4754 = vmatpush1.bf16.msra.mxu0 %v4426
  %4755 = vmatprep.subr.bf16.mxu0 0
  %4756 = vmatpush1.bf16.msra.mxu0 %v4429
  %4757 = vmatprep.mubr.bf16.mxu0 %v4326
  %4758 = vmatmul.mubr.bf16.gmra.mrb[0].mxu0 %v4325
  %v4759 = vpop.f32.mrb[0].mxu0
  %v4760 = vadd.f32 %v4648, %v4759
  %v4761 = vpop.f32.mrb[0].mxu0
  %v4762 = vpop.f32.mrb[0].mxu0
  %v4763 = vadd.f32 %v4648, %v4762
  %v4764 = vpop.f32.mrb[0].mxu0
  %4765 = vmatprep.mubr.bf16.mxu0 %v4328
  %4766 = vmatmul.mubr.bf16.gmra.mrb[0].mxu0 %v4327
  %v4767 = vpop.f32.mrb[0].mxu0
  %v4768 = vadd.f32 %v4648, %v4767
  %v4769 = vpop.f32.mrb[0].mxu0
  %v4770 = vpop.f32.mrb[0].mxu0
  %v4771 = vadd.f32 %v4648, %v4770
  %v4772 = vpop.f32.mrb[0].mxu0
  %4773 = vmatprep.mubr.bf16.mxu0 %v4330
  %4774 = vmatmul.mubr.bf16.gmra.mrb[0].mxu0 %v4329
  %v4775 = vpop.f32.mrb[0].mxu0
  %v4776 = vadd.f32 %v4648, %v4775
  %v4777 = vpop.f32.mrb[0].mxu0
  %v4778 = vpop.f32.mrb[0].mxu0
  %v4779 = vadd.f32 %v4648, %v4778
  %v4780 = vpop.f32.mrb[0].mxu0
  %4781 = vmatprep.mubr.bf16.mxu0 %v4332
  %4782 = vmatmul.mubr.bf16.gmra.mrb[0].mxu0 %v4331
  %v4783 = vpop.f32.mrb[0].mxu0
  %v4784 = vadd.f32 %v4648, %v4783
  %v4785 = vpop.f32.mrb[0].mxu0
  %v4786 = vpop.f32.mrb[0].mxu0
  %v4787 = vadd.f32 %v4648, %v4786
  %v4788 = vpop.f32.mrb[0].mxu0
  %4789 = vdwg.mxu0
  %v4790 = vld [vmem:[%s8] sm:$0x1]
  %v4792 = vlaneseq
  %v4793 = vshrl.u32 %v4792, 7
  %v4794 = vsub.s32 0, %v4793
  %v4795 = vrot.slane %v4790, %v4794
  %s4797 = scalar_lea.vmem %s8, 1
  %v4798 = vld [vmem:[%s4797] sm:$0x1]
  %v4800 = vlaneseq
  %v4801 = vshrl.u32 %v4800, 7
  %v4802 = vsub.s32 0, %v4801
  %v4803 = vrot.slane %v4798, %v4802
  %4805 = vmatprep.subr.bf16.mxu0 %v4431
  %4806 = vmatpush1.bf16.msra.mxu0 %v4430
  %4807 = vmatprep.subr.bf16.mxu0 %v4434
  %4808 = vmatpush1.bf16.msra.mxu0 %v4433
  %4809 = vmatprep.subr.bf16.mxu0 %v4437
  %4810 = vmatpush1.bf16.msra.mxu0 %v4436
  %4811 = vmatprep.subr.bf16.mxu0 %v4440
  %4812 = vmatpush1.bf16.msra.mxu0 %v4439
  %4813 = vmatprep.subr.bf16.mxu0 %v4443
  %4814 = vmatpush1.bf16.msra.mxu0 %v4442
  %4815 = vmatprep.subr.bf16.mxu0 %v4446
  %4816 = vmatpush1.bf16.msra.mxu0 %v4445
  %4817 = vmatprep.subr.bf16.mxu0 %v4449
  %4818 = vmatpush1.bf16.msra.mxu0 %v4448
  %4819 = vmatprep.subr.bf16.mxu0 %v4452
  %4820 = vmatpush1.bf16.msra.mxu0 %v4451
  %4821 = vmatprep.subr.bf16.mxu0 0
  %4822 = vmatpush1.bf16.msra.mxu0 0
  %4823 = vmatprep.subr.bf16.mxu0 0
  %4824 = vmatpush1.bf16.msra.mxu0 0
  %4825 = vmatprep.subr.bf16.mxu0 0
  %4826 = vmatpush1.bf16.msra.mxu0 0
  %4827 = vmatprep.subr.bf16.mxu0 0
  %4828 = vmatpush1.bf16.msra.mxu0 0
  %4829 = vmatprep.subr.bf16.mxu0 0
  %4830 = vmatpush1.bf16.msra.mxu0 0
  %4831 = vmatprep.subr.bf16.mxu0 0
  %4832 = vmatpush1.bf16.msra.mxu0 0
  %4833 = vmatprep.subr.bf16.mxu0 0
  %4834 = vmatpush1.bf16.msra.mxu0 0
  %4835 = vmatprep.subr.bf16.mxu0 0
  %4836 = vmatpush1.bf16.msra.mxu0 0
  %4837 = vmatprep.mubr.bf16.mxu0 0
  %4838 = vmatmul.mubr.bf16.gmra.mrb[0].mxu0 0
  %v4839 = vpop.f32.mrb[0].mxu0
  %v4840 = vadd.f32 0.0, %v4839
  %v4841 = vpop.f32.mrb[0].mxu0
  %v4842 = vadd.f32 0.0, %v4841
  %v4843 = vpop.f32.mrb[0].mxu0
  %v4844 = vpop.f32.mrb[0].mxu0
  %4845 = vdwg.mxu0
  %4846 = vmatprep.subr.bf16.mxu0 0
  %4847 = vmatpush1.bf16.msra.mxu0 %v4432
  %4848 = vmatprep.subr.bf16.mxu0 0
  %4849 = vmatpush1.bf16.msra.mxu0 %v4435
  %4850 = vmatprep.subr.bf16.mxu0 0
  %4851 = vmatpush1.bf16.msra.mxu0 %v4438
  %4852 = vmatprep.subr.bf16.mxu0 0
  %4853 = vmatpush1.bf16.msra.mxu0 %v4441
  %4854 = vmatprep.subr.bf16.mxu0 0
  %4855 = vmatpush1.bf16.msra.mxu0 %v4444
  %4856 = vmatprep.subr.bf16.mxu0 0
  %4857 = vmatpush1.bf16.msra.mxu0 %v4447
  %4858 = vmatprep.subr.bf16.mxu0 0
  %4859 = vmatpush1.bf16.msra.mxu0 %v4450
  %4860 = vmatprep.subr.bf16.mxu0 0
  %4861 = vmatpush1.bf16.msra.mxu0 %v4453
  %4862 = vmatprep.subr.bf16.mxu0 0
  %4863 = vmatpush1.bf16.msra.mxu0 0
  %4864 = vmatprep.subr.bf16.mxu0 0
  %4865 = vmatpush1.bf16.msra.mxu0 0
  %4866 = vmatprep.subr.bf16.mxu0 0
  %4867 = vmatpush1.bf16.msra.mxu0 0
  %4868 = vmatprep.subr.bf16.mxu0 0
  %4869 = vmatpush1.bf16.msra.mxu0 0
  %4870 = vmatprep.subr.bf16.mxu0 0
  %4871 = vmatpush1.bf16.msra.mxu0 0
  %4872 = vmatprep.subr.bf16.mxu0 0
  %4873 = vmatpush1.bf16.msra.mxu0 0
  %4874 = vmatprep.subr.bf16.mxu0 0
  %4875 = vmatpush1.bf16.msra.mxu0 0
  %4876 = vmatprep.subr.bf16.mxu0 0
  %4877 = vmatpush1.bf16.msra.mxu0 0
  %4878 = vmatprep.mubr.bf16.mxu0 0
  %4879 = vmatmul.mubr.bf16.gmra.mrb[0].mxu0 0
  %v4880 = vpop.f32.mrb[0].mxu0
  %v4881 = vadd.f32 0.0, %v4880
  %v4882 = vpop.f32.mrb[0].mxu0
  %v4883 = vpop.f32.mrb[0].mxu0
  %v4884 = vpop.f32.mrb[0].mxu0
  %4885 = vdwg.mxu0
  %4886 = vmatprep.subr.bf16.mxu0 %v4456
  %4887 = vmatpush1.bf16.msra.mxu0 %v4455
  %4888 = vmatprep.subr.bf16.mxu0 %v4459
  %4889 = vmatpush1.bf16.msra.mxu0 %v4458
  %4890 = vmatprep.subr.bf16.mxu0 %v4462
  %4891 = vmatpush1.bf16.msra.mxu0 %v4461
  %4892 = vmatprep.subr.bf16.mxu0 %v4465
  %4893 = vmatpush1.bf16.msra.mxu0 %v4464
  %4894 = vmatprep.subr.bf16.mxu0 %v4468
  %4895 = vmatpush1.bf16.msra.mxu0 %v4467
  %4896 = vmatprep.subr.bf16.mxu0 %v4471
  %4897 = vmatpush1.bf16.msra.mxu0 %v4470
  %4898 = vmatprep.subr.bf16.mxu0 %v4474
  %4899 = vmatpush1.bf16.msra.mxu0 %v4473
  %4900 = vmatprep.subr.bf16.mxu0 %v4477
  %4901 = vmatpush1.bf16.msra.mxu0 %v4476
  %4902 = vmatprep.subr.bf16.mxu0 0
  %4903 = vmatpush1.bf16.msra.mxu0 0
  %4904 = vmatprep.subr.bf16.mxu0 0
  %4905 = vmatpush1.bf16.msra.mxu0 0
  %4906 = vmatprep.subr.bf16.mxu0 0
  %4907 = vmatpush1.bf16.msra.mxu0 0
  %4908 = vmatprep.subr.bf16.mxu0 0
  %4909 = vmatpush1.bf16.msra.mxu0 0
  %4910 = vmatprep.subr.bf16.mxu0 0
  %4911 = vmatpush1.bf16.msra.mxu0 0
  %4912 = vmatprep.subr.bf16.mxu0 0
  %4913 = vmatpush1.bf16.msra.mxu0 0
  %4914 = vmatprep.subr.bf16.mxu0 0
  %4915 = vmatpush1.bf16.msra.mxu0 0
  %4916 = vmatprep.subr.bf16.mxu0 0
  %4917 = vmatpush1.bf16.msra.mxu0 0
  %4918 = vmatprep.mubr.bf16.mxu0 0
  %4919 = vmatmul.mubr.bf16.gmra.mrb[0].mxu0 0
  %v4920 = vpop.f32.mrb[0].mxu0
  %v4921 = vadd.f32 0.0, %v4920
  %v4922 = vpop.f32.mrb[0].mxu0
  %v4923 = vadd.f32 0.0, %v4922
  %v4924 = vpop.f32.mrb[0].mxu0
  %v4925 = vpop.f32.mrb[0].mxu0
  %4926 = vdwg.mxu0
  %4927 = vmatprep.subr.bf16.mxu0 0
  %4928 = vmatpush1.bf16.msra.mxu0 %v4457
  %4929 = vmatprep.subr.bf16.mxu0 0
  %4930 = vmatpush1.bf16.msra.mxu0 %v4460
  %4931 = vmatprep.subr.bf16.mxu0 0
  %4932 = vmatpush1.bf16.msra.mxu0 %v4463
  %4933 = vmatprep.subr.bf16.mxu0 0
  %4934 = vmatpush1.bf16.msra.mxu0 %v4466
  %4935 = vmatprep.subr.bf16.mxu0 0
  %4936 = vmatpush1.bf16.msra.mxu0 %v4469
  %4937 = vmatprep.subr.bf16.mxu0 0
  %4938 = vmatpush1.bf16.msra.mxu0 %v4472
  %4939 = vmatprep.subr.bf16.mxu0 0
  %4940 = vmatpush1.bf16.msra.mxu0 %v4475
  %4941 = vmatprep.subr.bf16.mxu0 0
  %4942 = vmatpush1.bf16.msra.mxu0 %v4478
  %4943 = vmatprep.subr.bf16.mxu0 0
  %4944 = vmatpush1.bf16.msra.mxu0 0
  %4945 = vmatprep.subr.bf16.mxu0 0
  %4946 = vmatpush1.bf16.msra.mxu0 0
  %4947 = vmatprep.subr.bf16.mxu0 0
  %4948 = vmatpush1.bf16.msra.mxu0 0
  %4949 = vmatprep.subr.bf16.mxu0 0
  %4950 = vmatpush1.bf16.msra.mxu0 0
  %4951 = vmatprep.subr.bf16.mxu0 0
  %4952 = vmatpush1.bf16.msra.mxu0 0
  %4953 = vmatprep.subr.bf16.mxu0 0
  %4954 = vmatpush1.bf16.msra.mxu0 0
  %4955 = vmatprep.subr.bf16.mxu0 0
  %4956 = vmatpush1.bf16.msra.mxu0 0
  %4957 = vmatprep.subr.bf16.mxu0 0
  %4958 = vmatpush1.bf16.msra.mxu0 0
  %4959 = vmatprep.mubr.bf16.mxu0 0
  %4960 = vmatmul.mubr.bf16.gmra.mrb[0].mxu0 0
  %v4961 = vpop.f32.mrb[0].mxu0
  %v4962 = vadd.f32 0.0, %v4961
  %v4963 = vpop.f32.mrb[0].mxu0
  %v4964 = vpop.f32.mrb[0].mxu0
  %v4965 = vpop.f32.mrb[0].mxu0
  %4966 = vdwg.mxu0
  %v4967 = vadd.f32 %v4531, %v4840
  %v4968 = vxor.u32 %v4967, 2147483648
  %v4969 = vmul.f32 %v4968, 1.442695
  %v4970 = vpow.pop %v4969
  %v4971 = vadd.f32 %v4970, 1.0
  %v4972 = vrcp.pop %v4971
  %v4973 = vmul.f32 1.0, %v4972
  %v4974 = vadd.f32 %v4533, %v4842
  %v4975 = vxor.u32 %v4974, 2147483648
  %v4976 = vmul.f32 %v4975, 1.442695
  %v4977 = vpow.pop %v4976
  %v4978 = vadd.f32 %v4977, 1.0
  %v4979 = vrcp.pop %v4978
  %v4980 = vmul.f32 1.0, %v4979
  %v4981 = vadd.f32 %v4881, %v4795
  %v4982 = vmul.f32 %v4973, %v4981
  %v4983 = vadd.f32 %v4604, %v4982
  %v4984 = vtanh.pop %v4983
  %v4985 = vsub.f32 1.0, %v4980
  %v4986 = vmul.f32 %v4985, %v4984
  %v4987 = vmul.f32 %v4980, 0.0
  %v4988 = vadd.f32 %v4986, %v4987
  %v4989 = vadd.f32 %v4721, %v4921
  %v4990 = vxor.u32 %v4989, 2147483648
  %v4991 = vmul.f32 %v4990, 1.442695
  %v4992 = vpow.pop %v4991
  %v4993 = vadd.f32 %v4992, 1.0
  %v4994 = vrcp.pop %v4993
  %v4995 = vmul.f32 1.0, %v4994
  %v4996 = vadd.f32 %v4723, %v4923
  %v4997 = vxor.u32 %v4996, 2147483648
  %v4998 = vmul.f32 %v4997, 1.442695
  %v4999 = vpow.pop %v4998
  %v5000 = vadd.f32 %v4999, 1.0
  %v5001 = vrcp.pop %v5000
  %v5002 = vmul.f32 1.0, %v5001
  %v5003 = vadd.f32 %v4962, %v4803
  %v5004 = vmul.f32 %v4995, %v5003
  %v5005 = vadd.f32 %v4787, %v5004
  %v5006 = vtanh.pop %v5005
  %v5007 = vsub.f32 1.0, %v5002
  %v5008 = vmul.f32 %v5007, %v5006
  %v5009 = vmul.f32 %v5002, 0.0
  %v5010 = vadd.f32 %v5008, %v5009
  %v5011 = vpack.c.bf16 %v4988, %v4988
  %5012 = vmatprep.subr.bf16.mxu0 %v4431
  %5013 = vmatpush1.bf16.msra.mxu0 %v4430
  %5014 = vmatprep.subr.bf16.mxu0 %v4434
  %5015 = vmatpush1.bf16.msra.mxu0 %v4433
  %5016 = vmatprep.subr.bf16.mxu0 %v4437
  %5017 = vmatpush1.bf16.msra.mxu0 %v4436
  %5018 = vmatprep.subr.bf16.mxu0 %v4440
  %5019 = vmatpush1.bf16.msra.mxu0 %v4439
  %5020 = vmatprep.subr.bf16.mxu0 %v4443
  %5021 = vmatpush1.bf16.msra.mxu0 %v4442
  %5022 = vmatprep.subr.bf16.mxu0 %v4446
  %5023 = vmatpush1.bf16.msra.mxu0 %v4445
  %5024 = vmatprep.subr.bf16.mxu0 %v4449
  %5025 = vmatpush1.bf16.msra.mxu0 %v4448
  %5026 = vmatprep.subr.bf16.mxu0 %v4452
  %5027 = vmatpush1.bf16.msra.mxu0 %v4451
  %5028 = vmatprep.subr.bf16.mxu0 0
  %5029 = vmatpush1.bf16.msra.mxu0 0
  %5030 = vmatprep.subr.bf16.mxu0 0
  %5031 = vmatpush1.bf16.msra.mxu0 0
  %5032 = vmatprep.subr.bf16.mxu0 0
  %5033 = vmatpush1.bf16.msra.mxu0 0
  %5034 = vmatprep.subr.bf16.mxu0 0
  %5035 = vmatpush1.bf16.msra.mxu0 0
  %5036 = vmatprep.subr.bf16.mxu0 0
  %5037 = vmatpush1.bf16.msra.mxu0 0
  %5038 = vmatprep.subr.bf16.mxu0 0
  %5039 = vmatpush1.bf16.msra.mxu0 0
  %5040 = vmatprep.subr.bf16.mxu0 0
  %5041 = vmatpush1.bf16.msra.mxu0 0
  %5042 = vmatprep.subr.bf16.mxu0 0
  %5043 = vmatpush1.bf16.msra.mxu0 0
  %5044 = vmatprep.mubr.bf16.mxu0 0
  %5045 = vmatmul.mubr.bf16.gmra.mrb[0].mxu0 %v5011
  %v5046 = vpop.f32.mrb[0].mxu0
  %v5047 = vadd.f32 0.0, %v5046
  %v5048 = vpop.f32.mrb[0].mxu0
  %v5049 = vadd.f32 0.0, %v5048
  %v5050 = vpop.f32.mrb[0].mxu0
  %v5051 = vpop.f32.mrb[0].mxu0
  %5052 = vdwg.mxu0
  %5053 = vmatprep.subr.bf16.mxu0 0
  %5054 = vmatpush1.bf16.msra.mxu0 %v4432
  %5055 = vmatprep.subr.bf16.mxu0 0
  %5056 = vmatpush1.bf16.msra.mxu0 %v4435
  %5057 = vmatprep.subr.bf16.mxu0 0
  %5058 = vmatpush1.bf16.msra.mxu0 %v4438
  %5059 = vmatprep.subr.bf16.mxu0 0
  %5060 = vmatpush1.bf16.msra.mxu0 %v4441
  %5061 = vmatprep.subr.bf16.mxu0 0
  %5062 = vmatpush1.bf16.msra.mxu0 %v4444
  %5063 = vmatprep.subr.bf16.mxu0 0
  %5064 = vmatpush1.bf16.msra.mxu0 %v4447
  %5065 = vmatprep.subr.bf16.mxu0 0
  %5066 = vmatpush1.bf16.msra.mxu0 %v4450
  %5067 = vmatprep.subr.bf16.mxu0 0
  %5068 = vmatpush1.bf16.msra.mxu0 %v4453
  %5069 = vmatprep.subr.bf16.mxu0 0
  %5070 = vmatpush1.bf16.msra.mxu0 0
  %5071 = vmatprep.subr.bf16.mxu0 0
  %5072 = vmatpush1.bf16.msra.mxu0 0
  %5073 = vmatprep.subr.bf16.mxu0 0
  %5074 = vmatpush1.bf16.msra.mxu0 0
  %5075 = vmatprep.subr.bf16.mxu0 0
  %5076 = vmatpush1.bf16.msra.mxu0 0
  %5077 = vmatprep.subr.bf16.mxu0 0
  %5078 = vmatpush1.bf16.msra.mxu0 0
  %5079 = vmatprep.subr.bf16.mxu0 0
  %5080 = vmatpush1.bf16.msra.mxu0 0
  %5081 = vmatprep.subr.bf16.mxu0 0
  %5082 = vmatpush1.bf16.msra.mxu0 0
  %5083 = vmatprep.subr.bf16.mxu0 0
  %5084 = vmatpush1.bf16.msra.mxu0 0
  %5085 = vmatprep.mubr.bf16.mxu0 0
  %5086 = vmatmul.mubr.bf16.gmra.mrb[0].mxu0 %v5011
  %v5087 = vpop.f32.mrb[0].mxu0
  %v5088 = vadd.f32 0.0, %v5087
  %v5089 = vpop.f32.mrb[0].mxu0
  %v5090 = vpop.f32.mrb[0].mxu0
  %v5091 = vpop.f32.mrb[0].mxu0
  %5092 = vdwg.mxu0
  %v5093 = vpack.c.bf16 %v5010, %v5010
  %5094 = vmatprep.subr.bf16.mxu0 %v4456
  %5095 = vmatpush1.bf16.msra.mxu0 %v4455
  %5096 = vmatprep.subr.bf16.mxu0 %v4459
  %5097 = vmatpush1.bf16.msra.mxu0 %v4458
  %5098 = vmatprep.subr.bf16.mxu0 %v4462
  %5099 = vmatpush1.bf16.msra.mxu0 %v4461
  %5100 = vmatprep.subr.bf16.mxu0 %v4465
  %5101 = vmatpush1.bf16.msra.mxu0 %v4464
  %5102 = vmatprep.subr.bf16.mxu0 %v4468
  %5103 = vmatpush1.bf16.msra.mxu0 %v4467
  %5104 = vmatprep.subr.bf16.mxu0 %v4471
  %5105 = vmatpush1.bf16.msra.mxu0 %v4470
  %5106 = vmatprep.subr.bf16.mxu0 %v4474
  %5107 = vmatpush1.bf16.msra.mxu0 %v4473
  %5108 = vmatprep.subr.bf16.mxu0 %v4477
  %5109 = vmatpush1.bf16.msra.mxu0 %v4476
  %5110 = vmatprep.subr.bf16.mxu0 0
  %5111 = vmatpush1.bf16.msra.mxu0 0
  %5112 = vmatprep.subr.bf16.mxu0 0
  %5113 = vmatpush1.bf16.msra.mxu0 0
  %5114 = vmatprep.subr.bf16.mxu0 0
  %5115 = vmatpush1.bf16.msra.mxu0 0
  %5116 = vmatprep.subr.bf16.mxu0 0
  %5117 = vmatpush1.bf16.msra.mxu0 0
  %5118 = vmatprep.subr.bf16.mxu0 0
  %5119 = vmatpush1.bf16.msra.mxu0 0
  %5120 = vmatprep.subr.bf16.mxu0 0
  %5121 = vmatpush1.bf16.msra.mxu0 0
  %5122 = vmatprep.subr.bf16.mxu0 0
  %5123 = vmatpush1.bf16.msra.mxu0 0
  %5124 = vmatprep.subr.bf16.mxu0 0
  %5125 = vmatpush1.bf16.msra.mxu0 0
  %5126 = vmatprep.mubr.bf16.mxu0 0
  %5127 = vmatmul.mubr.bf16.gmra.mrb[0].mxu0 %v5093
  %v5128 = vpop.f32.mrb[0].mxu0
  %v5129 = vadd.f32 0.0, %v5128
  %v5130 = vpop.f32.mrb[0].mxu0
  %v5131 = vadd.f32 0.0, %v5130
  %v5132 = vpop.f32.mrb[0].mxu0
  %v5133 = vpop.f32.mrb[0].mxu0
  %5134 = vdwg.mxu0
  %5135 = vmatprep.subr.bf16.mxu0 0
  %5136 = vmatpush1.bf16.msra.mxu0 %v4457
  %5137 = vmatprep.subr.bf16.mxu0 0
  %5138 = vmatpush1.bf16.msra.mxu0 %v4460
  %5139 = vmatprep.subr.bf16.mxu0 0
  %5140 = vmatpush1.bf16.msra.mxu0 %v4463
  %5141 = vmatprep.subr.bf16.mxu0 0
  %5142 = vmatpush1.bf16.msra.mxu0 %v4466
  %5143 = vmatprep.subr.bf16.mxu0 0
  %5144 = vmatpush1.bf16.msra.mxu0 %v4469
  %5145 = vmatprep.subr.bf16.mxu0 0
  %5146 = vmatpush1.bf16.msra.mxu0 %v4472
  %5147 = vmatprep.subr.bf16.mxu0 0
  %5148 = vmatpush1.bf16.msra.mxu0 %v4475
  %5149 = vmatprep.subr.bf16.mxu0 0
  %5150 = vmatpush1.bf16.msra.mxu0 %v4478
  %5151 = vmatprep.subr.bf16.mxu0 0
  %5152 = vmatpush1.bf16.msra.mxu0 0
  %5153 = vmatprep.subr.bf16.mxu0 0
  %5154 = vmatpush1.bf16.msra.mxu0 0
  %5155 = vmatprep.subr.bf16.mxu0 0
  %5156 = vmatpush1.bf16.msra.mxu0 0
  %5157 = vmatprep.subr.bf16.mxu0 0
  %5158 = vmatpush1.bf16.msra.mxu0 0
  %5159 = vmatprep.subr.bf16.mxu0 0
  %5160 = vmatpush1.bf16.msra.mxu0 0
  %5161 = vmatprep.subr.bf16.mxu0 0
  %5162 = vmatpush1.bf16.msra.mxu0 0
  %5163 = vmatprep.subr.bf16.mxu0 0
  %5164 = vmatpush1.bf16.msra.mxu0 0
  %5165 = vmatprep.subr.bf16.mxu0 0
  %5166 = vmatpush1.bf16.msra.mxu0 0
  %5167 = vmatprep.mubr.bf16.mxu0 0
  %5168 = vmatmul.mubr.bf16.gmra.mrb[0].mxu0 %v5093
  %v5169 = vpop.f32.mrb[0].mxu0
  %v5170 = vadd.f32 0.0, %v5169
  %v5171 = vpop.f32.mrb[0].mxu0
  %v5172 = vpop.f32.mrb[0].mxu0
  %v5173 = vpop.f32.mrb[0].mxu0
  %5174 = vdwg.mxu0
  %v5175 = vadd.f32 %v4535, %v5047
  %v5176 = vxor.u32 %v5175, 2147483648
  %v5177 = vmul.f32 %v5176, 1.442695
  %v5178 = vpow.pop %v5177
  %v5179 = vadd.f32 %v5178, 1.0
  %v5180 = vrcp.pop %v5179
  %v5181 = vmul.f32 1.0, %v5180
  %v5182 = vadd.f32 %v4537, %v5049
  %v5183 = vxor.u32 %v5182, 2147483648
  %v5184 = vmul.f32 %v5183, 1.442695
  %v5185 = vpow.pop %v5184
  %v5186 = vadd.f32 %v5185, 1.0
  %v5187 = vrcp.pop %v5186
  %v5188 = vmul.f32 1.0, %v5187
  %v5189 = vadd.f32 %v5088, %v4795
  %v5190 = vmul.f32 %v5181, %v5189
  %v5191 = vadd.f32 %v4607, %v5190
  %v5192 = vtanh.pop %v5191
  %v5193 = vsub.f32 1.0, %v5188
  %v5194 = vmul.f32 %v5193, %v5192
  %v5195 = vmul.f32 %v5188, %v4988
  %v5196 = vadd.f32 %v5194, %v5195
  %v5197 = vadd.f32 %v4717, %v5129
  %v5198 = vxor.u32 %v5197, 2147483648
  %v5199 = vmul.f32 %v5198, 1.442695
  %v5200 = vpow.pop %v5199
  %v5201 = vadd.f32 %v5200, 1.0
  %v5202 = vrcp.pop %v5201
  %v5203 = vmul.f32 1.0, %v5202
  %v5204 = vadd.f32 %v4719, %v5131
  %v5205 = vxor.u32 %v5204, 2147483648
  %v5206 = vmul.f32 %v5205, 1.442695
  %v5207 = vpow.pop %v5206
  %v5208 = vadd.f32 %v5207, 1.0
  %v5209 = vrcp.pop %v5208
  %v5210 = vmul.f32 1.0, %v5209
  %v5211 = vadd.f32 %v5170, %v4803
  %v5212 = vmul.f32 %v5203, %v5211
  %v5213 = vadd.f32 %v4784, %v5212
  %v5214 = vtanh.pop %v5213
  %v5215 = vsub.f32 1.0, %v5210
  %v5216 = vmul.f32 %v5215, %v5214
  %v5217 = vmul.f32 %v5210, %v5010
  %v5218 = vadd.f32 %v5216, %v5217
  %v5219 = vpack.c.bf16 %v5196, %v5196
  %5220 = vmatprep.subr.bf16.mxu0 %v4431
  %5221 = vmatpush1.bf16.msra.mxu0 %v4430
  %5222 = vmatprep.subr.bf16.mxu0 %v4434
  %5223 = vmatpush1.bf16.msra.mxu0 %v4433
  %5224 = vmatprep.subr.bf16.mxu0 %v4437
  %5225 = vmatpush1.bf16.msra.mxu0 %v4436
  %5226 = vmatprep.subr.bf16.mxu0 %v4440
  %5227 = vmatpush1.bf16.msra.mxu0 %v4439
  %5228 = vmatprep.subr.bf16.mxu0 %v4443
  %5229 = vmatpush1.bf16.msra.mxu0 %v4442
  %5230 = vmatprep.subr.bf16.mxu0 %v4446
  %5231 = vmatpush1.bf16.msra.mxu0 %v4445
  %5232 = vmatprep.subr.bf16.mxu0 %v4449
  %5233 = vmatpush1.bf16.msra.mxu0 %v4448
  %5234 = vmatprep.subr.bf16.mxu0 %v4452
  %5235 = vmatpush1.bf16.msra.mxu0 %v4451
  %5236 = vmatprep.subr.bf16.mxu0 0
  %5237 = vmatpush1.bf16.msra.mxu0 0
  %5238 = vmatprep.subr.bf16.mxu0 0
  %5239 = vmatpush1.bf16.msra.mxu0 0
  %5240 = vmatprep.subr.bf16.mxu0 0
  %5241 = vmatpush1.bf16.msra.mxu0 0
  %5242 = vmatprep.subr.bf16.mxu0 0
  %5243 = vmatpush1.bf16.msra.mxu0 0
  %5244 = vmatprep.subr.bf16.mxu0 0
  %5245 = vmatpush1.bf16.msra.mxu0 0
  %5246 = vmatprep.subr.bf16.mxu0 0
  %5247 = vmatpush1.bf16.msra.mxu0 0
  %5248 = vmatprep.subr.bf16.mxu0 0
  %5249 = vmatpush1.bf16.msra.mxu0 0
  %5250 = vmatprep.subr.bf16.mxu0 0
  %5251 = vmatpush1.bf16.msra.mxu0 0
  %5252 = vmatprep.mubr.bf16.mxu0 0
  %5253 = vmatmul.mubr.bf16.gmra.mrb[0].mxu0 %v5219
  %v5254 = vpop.f32.mrb[0].mxu0
  %v5255 = vadd.f32 0.0, %v5254
  %v5256 = vpop.f32.mrb[0].mxu0
  %v5257 = vadd.f32 0.0, %v5256
  %v5258 = vpop.f32.mrb[0].mxu0
  %v5259 = vpop.f32.mrb[0].mxu0
  %5260 = vdwg.mxu0
  %5261 = vmatprep.subr.bf16.mxu0 0
  %5262 = vmatpush1.bf16.msra.mxu0 %v4432
  %5263 = vmatprep.subr.bf16.mxu0 0
  %5264 = vmatpush1.bf16.msra.mxu0 %v4435
  %5265 = vmatprep.subr.bf16.mxu0 0
  %5266 = vmatpush1.bf16.msra.mxu0 %v4438
  %5267 = vmatprep.subr.bf16.mxu0 0
  %5268 = vmatpush1.bf16.msra.mxu0 %v4441
  %5269 = vmatprep.subr.bf16.mxu0 0
  %5270 = vmatpush1.bf16.msra.mxu0 %v4444
  %5271 = vmatprep.subr.bf16.mxu0 0
  %5272 = vmatpush1.bf16.msra.mxu0 %v4447
  %5273 = vmatprep.subr.bf16.mxu0 0
  %5274 = vmatpush1.bf16.msra.mxu0 %v4450
  %5275 = vmatprep.subr.bf16.mxu0 0
  %5276 = vmatpush1.bf16.msra.mxu0 %v4453
  %5277 = vmatprep.subr.bf16.mxu0 0
  %5278 = vmatpush1.bf16.msra.mxu0 0
  %5279 = vmatprep.subr.bf16.mxu0 0
  %5280 = vmatpush1.bf16.msra.mxu0 0
  %5281 = vmatprep.subr.bf16.mxu0 0
  %5282 = vmatpush1.bf16.msra.mxu0 0
  %5283 = vmatprep.subr.bf16.mxu0 0
  %5284 = vmatpush1.bf16.msra.mxu0 0
  %5285 = vmatprep.subr.bf16.mxu0 0
  %5286 = vmatpush1.bf16.msra.mxu0 0
  %5287 = vmatprep.subr.bf16.mxu0 0
  %5288 = vmatpush1.bf16.msra.mxu0 0
  %5289 = vmatprep.subr.bf16.mxu0 0
  %5290 = vmatpush1.bf16.msra.mxu0 0
  %5291 = vmatprep.subr.bf16.mxu0 0
  %5292 = vmatpush1.bf16.msra.mxu0 0
  %5293 = vmatprep.mubr.bf16.mxu0 0
  %5294 = vmatmul.mubr.bf16.gmra.mrb[0].mxu0 %v5219
  %v5295 = vpop.f32.mrb[0].mxu0
  %v5296 = vadd.f32 0.0, %v5295
  %v5297 = vpop.f32.mrb[0].mxu0
  %v5298 = vpop.f32.mrb[0].mxu0
  %v5299 = vpop.f32.mrb[0].mxu0
  %5300 = vdwg.mxu0
  %v5301 = vpack.c.bf16 %v5218, %v5218
  %5302 = vmatprep.subr.bf16.mxu0 %v4456
  %5303 = vmatpush1.bf16.msra.mxu0 %v4455
  %5304 = vmatprep.subr.bf16.mxu0 %v4459
  %5305 = vmatpush1.bf16.msra.mxu0 %v4458
  %5306 = vmatprep.subr.bf16.mxu0 %v4462
  %5307 = vmatpush1.bf16.msra.mxu0 %v4461
  %5308 = vmatprep.subr.bf16.mxu0 %v4465
  %5309 = vmatpush1.bf16.msra.mxu0 %v4464
  %5310 = vmatprep.subr.bf16.mxu0 %v4468
  %5311 = vmatpush1.bf16.msra.mxu0 %v4467
  %5312 = vmatprep.subr.bf16.mxu0 %v4471
  %5313 = vmatpush1.bf16.msra.mxu0 %v4470
  %5314 = vmatprep.subr.bf16.mxu0 %v4474
  %5315 = vmatpush1.bf16.msra.mxu0 %v4473
  %5316 = vmatprep.subr.bf16.mxu0 %v4477
  %5317 = vmatpush1.bf16.msra.mxu0 %v4476
  %5318 = vmatprep.subr.bf16.mxu0 0
  %5319 = vmatpush1.bf16.msra.mxu0 0
  %5320 = vmatprep.subr.bf16.mxu0 0
  %5321 = vmatpush1.bf16.msra.mxu0 0
  %5322 = vmatprep.subr.bf16.mxu0 0
  %5323 = vmatpush1.bf16.msra.mxu0 0
  %5324 = vmatprep.subr.bf16.mxu0 0
  %5325 = vmatpush1.bf16.msra.mxu0 0
  %5326 = vmatprep.subr.bf16.mxu0 0
  %5327 = vmatpush1.bf16.msra.mxu0 0
  %5328 = vmatprep.subr.bf16.mxu0 0
  %5329 = vmatpush1.bf16.msra.mxu0 0
  %5330 = vmatprep.subr.bf16.mxu0 0
  %5331 = vmatpush1.bf16.msra.mxu0 0
  %5332 = vmatprep.subr.bf16.mxu0 0
  %5333 = vmatpush1.bf16.msra.mxu0 0
  %5334 = vmatprep.mubr.bf16.mxu0 0
  %5335 = vmatmul.mubr.bf16.gmra.mrb[0].mxu0 %v5301
  %v5336 = vpop.f32.mrb[0].mxu0
  %v5337 = vadd.f32 0.0, %v5336
  %v5338 = vpop.f32.mrb[0].mxu0
  %v5339 = vadd.f32 0.0, %v5338
  %v5340 = vpop.f32.mrb[0].mxu0
  %v5341 = vpop.f32.mrb[0].mxu0
  %5342 = vdwg.mxu0
  %5343 = vmatprep.subr.bf16.mxu0 0
  %5344 = vmatpush1.bf16.msra.mxu0 %v4457
  %5345 = vmatprep.subr.bf16.mxu0 0
  %5346 = vmatpush1.bf16.msra.mxu0 %v4460
  %5347 = vmatprep.subr.bf16.mxu0 0
  %5348 = vmatpush1.bf16.msra.mxu0 %v4463
  %5349 = vmatprep.subr.bf16.mxu0 0
  %5350 = vmatpush1.bf16.msra.mxu0 %v4466
  %5351 = vmatprep.subr.bf16.mxu0 0
  %5352 = vmatpush1.bf16.msra.mxu0 %v4469
  %5353 = vmatprep.subr.bf16.mxu0 0
  %5354 = vmatpush1.bf16.msra.mxu0 %v4472
  %5355 = vmatprep.subr.bf16.mxu0 0
  %5356 = vmatpush1.bf16.msra.mxu0 %v4475
  %5357 = vmatprep.subr.bf16.mxu0 0
  %5358 = vmatpush1.bf16.msra.mxu0 %v4478
  %5359 = vmatprep.subr.bf16.mxu0 0
  %5360 = vmatpush1.bf16.msra.mxu0 0
  %5361 = vmatprep.subr.bf16.mxu0 0
  %5362 = vmatpush1.bf16.msra.mxu0 0
  %5363 = vmatprep.subr.bf16.mxu0 0
  %5364 = vmatpush1.bf16.msra.mxu0 0
  %5365 = vmatprep.subr.bf16.mxu0 0
  %5366 = vmatpush1.bf16.msra.mxu0 0
  %5367 = vmatprep.subr.bf16.mxu0 0
  %5368 = vmatpush1.bf16.msra.mxu0 0
  %5369 = vmatprep.subr.bf16.mxu0 0
  %5370 = vmatpush1.bf16.msra.mxu0 0
  %5371 = vmatprep.subr.bf16.mxu0 0
  %5372 = vmatpush1.bf16.msra.mxu0 0
  %5373 = vmatprep.subr.bf16.mxu0 0
  %5374 = vmatpush1.bf16.msra.mxu0 0
  %5375 = vmatprep.mubr.bf16.mxu0 0
  %5376 = vmatmul.mubr.bf16.gmra.mrb[0].mxu0 %v5301
  %v5377 = vpop.f32.mrb[0].mxu0
  %v5378 = vadd.f32 0.0, %v5377
  %v5379 = vpop.f32.mrb[0].mxu0
  %v5380 = vpop.f32.mrb[0].mxu0
  %v5381 = vpop.f32.mrb[0].mxu0
  %5382 = vdwg.mxu0
  %v5383 = vadd.f32 %v4541, %v5255
  %v5384 = vxor.u32 %v5383, 2147483648
  %v5385 = vmul.f32 %v5384, 1.442695
  %v5386 = vpow.pop %v5385
  %v5387 = vadd.f32 %v5386, 1.0
  %v5388 = vrcp.pop %v5387
  %v5389 = vmul.f32 1.0, %v5388
  %v5390 = vadd.f32 %v4543, %v5257
  %v5391 = vxor.u32 %v5390, 2147483648
  %v5392 = vmul.f32 %v5391, 1.442695
  %v5393 = vpow.pop %v5392
  %v5394 = vadd.f32 %v5393, 1.0
  %v5395 = vrcp.pop %v5394
  %v5396 = vmul.f32 1.0, %v5395
  %v5397 = vadd.f32 %v5296, %v4795
  %v5398 = vmul.f32 %v5389, %v5397
  %v5399 = vadd.f32 %v4612, %v5398
  %v5400 = vtanh.pop %v5399
  %v5401 = vsub.f32 1.0, %v5396
  %v5402 = vmul.f32 %v5401, %v5400
  %v5403 = vmul.f32 %v5396, %v5196
  %v5404 = vadd.f32 %v5402, %v5403
  %v5405 = vadd.f32 %v4711, %v5337
  %v5406 = vxor.u32 %v5405, 2147483648
  %v5407 = vmul.f32 %v5406, 1.442695
  %v5408 = vpow.pop %v5407
  %v5409 = vadd.f32 %v5408, 1.0
  %v5410 = vrcp.pop %v5409
  %v5411 = vmul.f32 1.0, %v5410
  %v5412 = vadd.f32 %v4713, %v5339
  %v5413 = vxor.u32 %v5412, 2147483648
  %v5414 = vmul.f32 %v5413, 1.442695
  %v5415 = vpow.pop %v5414
  %v5416 = vadd.f32 %v5415, 1.0
  %v5417 = vrcp.pop %v5416
  %v5418 = vmul.f32 1.0, %v5417
  %v5419 = vadd.f32 %v5378, %v4803
  %v5420 = vmul.f32 %v5411, %v5419
  %v5421 = vadd.f32 %v4779, %v5420
  %v5422 = vtanh.pop %v5421
  %v5423 = vsub.f32 1.0, %v5418
  %v5424 = vmul.f32 %v5423, %v5422
  %v5425 = vmul.f32 %v5418, %v5218
  %v5426 = vadd.f32 %v5424, %v5425
  %v5427 = vpack.c.bf16 %v5404, %v5404
  %5428 = vmatprep.subr.bf16.mxu0 %v4431
  %5429 = vmatpush1.bf16.msra.mxu0 %v4430
  %5430 = vmatprep.subr.bf16.mxu0 %v4434
  %5431 = vmatpush1.bf16.msra.mxu0 %v4433
  %5432 = vmatprep.subr.bf16.mxu0 %v4437
  %5433 = vmatpush1.bf16.msra.mxu0 %v4436
  %5434 = vmatprep.subr.bf16.mxu0 %v4440
  %5435 = vmatpush1.bf16.msra.mxu0 %v4439
  %5436 = vmatprep.subr.bf16.mxu0 %v4443
  %5437 = vmatpush1.bf16.msra.mxu0 %v4442
  %5438 = vmatprep.subr.bf16.mxu0 %v4446
  %5439 = vmatpush1.bf16.msra.mxu0 %v4445
  %5440 = vmatprep.subr.bf16.mxu0 %v4449
  %5441 = vmatpush1.bf16.msra.mxu0 %v4448
  %5442 = vmatprep.subr.bf16.mxu0 %v4452
  %5443 = vmatpush1.bf16.msra.mxu0 %v4451
  %5444 = vmatprep.subr.bf16.mxu0 0
  %5445 = vmatpush1.bf16.msra.mxu0 0
  %5446 = vmatprep.subr.bf16.mxu0 0
  %5447 = vmatpush1.bf16.msra.mxu0 0
  %5448 = vmatprep.subr.bf16.mxu0 0
  %5449 = vmatpush1.bf16.msra.mxu0 0
  %5450 = vmatprep.subr.bf16.mxu0 0
  %5451 = vmatpush1.bf16.msra.mxu0 0
  %5452 = vmatprep.subr.bf16.mxu0 0
  %5453 = vmatpush1.bf16.msra.mxu0 0
  %5454 = vmatprep.subr.bf16.mxu0 0
  %5455 = vmatpush1.bf16.msra.mxu0 0
  %5456 = vmatprep.subr.bf16.mxu0 0
  %5457 = vmatpush1.bf16.msra.mxu0 0
  %5458 = vmatprep.subr.bf16.mxu0 0
  %5459 = vmatpush1.bf16.msra.mxu0 0
  %5460 = vmatprep.mubr.bf16.mxu0 0
  %5461 = vmatmul.mubr.bf16.gmra.mrb[0].mxu0 %v5427
  %v5462 = vpop.f32.mrb[0].mxu0
  %v5463 = vadd.f32 0.0, %v5462
  %v5464 = vpop.f32.mrb[0].mxu0
  %v5465 = vadd.f32 0.0, %v5464
  %v5466 = vpop.f32.mrb[0].mxu0
  %v5467 = vpop.f32.mrb[0].mxu0
  %5468 = vdwg.mxu0
  %5469 = vmatprep.subr.bf16.mxu0 0
  %5470 = vmatpush1.bf16.msra.mxu0 %v4432
  %5471 = vmatprep.subr.bf16.mxu0 0
  %5472 = vmatpush1.bf16.msra.mxu0 %v4435
  %5473 = vmatprep.subr.bf16.mxu0 0
  %5474 = vmatpush1.bf16.msra.mxu0 %v4438
  %5475 = vmatprep.subr.bf16.mxu0 0
  %5476 = vmatpush1.bf16.msra.mxu0 %v4441
  %5477 = vmatprep.subr.bf16.mxu0 0
  %5478 = vmatpush1.bf16.msra.mxu0 %v4444
  %5479 = vmatprep.subr.bf16.mxu0 0
  %5480 = vmatpush1.bf16.msra.mxu0 %v4447
  %5481 = vmatprep.subr.bf16.mxu0 0
  %5482 = vmatpush1.bf16.msra.mxu0 %v4450
  %5483 = vmatprep.subr.bf16.mxu0 0
  %5484 = vmatpush1.bf16.msra.mxu0 %v4453
  %5485 = vmatprep.subr.bf16.mxu0 0
  %5486 = vmatpush1.bf16.msra.mxu0 0
  %5487 = vmatprep.subr.bf16.mxu0 0
  %5488 = vmatpush1.bf16.msra.mxu0 0
  %5489 = vmatprep.subr.bf16.mxu0 0
  %5490 = vmatpush1.bf16.msra.mxu0 0
  %5491 = vmatprep.subr.bf16.mxu0 0
  %5492 = vmatpush1.bf16.msra.mxu0 0
  %5493 = vmatprep.subr.bf16.mxu0 0
  %5494 = vmatpush1.bf16.msra.mxu0 0
  %5495 = vmatprep.subr.bf16.mxu0 0
  %5496 = vmatpush1.bf16.msra.mxu0 0
  %5497 = vmatprep.subr.bf16.mxu0 0
  %5498 = vmatpush1.bf16.msra.mxu0 0
  %5499 = vmatprep.subr.bf16.mxu0 0
  %5500 = vmatpush1.bf16.msra.mxu0 0
  %5501 = vmatprep.mubr.bf16.mxu0 0
  %5502 = vmatmul.mubr.bf16.gmra.mrb[0].mxu0 %v5427
  %v5503 = vpop.f32.mrb[0].mxu0
  %v5504 = vadd.f32 0.0, %v5503
  %v5505 = vpop.f32.mrb[0].mxu0
  %v5506 = vpop.f32.mrb[0].mxu0
  %v5507 = vpop.f32.mrb[0].mxu0
  %5508 = vdwg.mxu0
  %v5509 = vpack.c.bf16 %v5426, %v5426
  %5510 = vmatprep.subr.bf16.mxu0 %v4456
  %5511 = vmatpush1.bf16.msra.mxu0 %v4455
  %5512 = vmatprep.subr.bf16.mxu0 %v4459
  %5513 = vmatpush1.bf16.msra.mxu0 %v4458
  %5514 = vmatprep.subr.bf16.mxu0 %v4462
  %5515 = vmatpush1.bf16.msra.mxu0 %v4461
  %5516 = vmatprep.subr.bf16.mxu0 %v4465
  %5517 = vmatpush1.bf16.msra.mxu0 %v4464
  %5518 = vmatprep.subr.bf16.mxu0 %v4468
  %5519 = vmatpush1.bf16.msra.mxu0 %v4467
  %5520 = vmatprep.subr.bf16.mxu0 %v4471
  %5521 = vmatpush1.bf16.msra.mxu0 %v4470
  %5522 = vmatprep.subr.bf16.mxu0 %v4474
  %5523 = vmatpush1.bf16.msra.mxu0 %v4473
  %5524 = vmatprep.subr.bf16.mxu0 %v4477
  %5525 = vmatpush1.bf16.msra.mxu0 %v4476
  %5526 = vmatprep.subr.bf16.mxu0 0
  %5527 = vmatpush1.bf16.msra.mxu0 0
  %5528 = vmatprep.subr.bf16.mxu0 0
  %5529 = vmatpush1.bf16.msra.mxu0 0
  %5530 = vmatprep.subr.bf16.mxu0 0
  %5531 = vmatpush1.bf16.msra.mxu0 0
  %5532 = vmatprep.subr.bf16.mxu0 0
  %5533 = vmatpush1.bf16.msra.mxu0 0
  %5534 = vmatprep.subr.bf16.mxu0 0
  %5535 = vmatpush1.bf16.msra.mxu0 0
  %5536 = vmatprep.subr.bf16.mxu0 0
  %5537 = vmatpush1.bf16.msra.mxu0 0
  %5538 = vmatprep.subr.bf16.mxu0 0
  %5539 = vmatpush1.bf16.msra.mxu0 0
  %5540 = vmatprep.subr.bf16.mxu0 0
  %5541 = vmatpush1.bf16.msra.mxu0 0
  %5542 = vmatprep.mubr.bf16.mxu0 0
  %5543 = vmatmul.mubr.bf16.gmra.mrb[0].mxu0 %v5509
  %v5544 = vpop.f32.mrb[0].mxu0
  %v5545 = vadd.f32 0.0, %v5544
  %v5546 = vpop.f32.mrb[0].mxu0
  %v5547 = vadd.f32 0.0, %v5546
  %v5548 = vpop.f32.mrb[0].mxu0
  %v5549 = vpop.f32.mrb[0].mxu0
  %5550 = vdwg.mxu0
  %5551 = vmatprep.subr.bf16.mxu0 0
  %5552 = vmatpush1.bf16.msra.mxu0 %v4457
  %5553 = vmatprep.subr.bf16.mxu0 0
  %5554 = vmatpush1.bf16.msra.mxu0 %v4460
  %5555 = vmatprep.subr.bf16.mxu0 0
  %5556 = vmatpush1.bf16.msra.mxu0 %v4463
  %5557 = vmatprep.subr.bf16.mxu0 0
  %5558 = vmatpush1.bf16.msra.mxu0 %v4466
  %5559 = vmatprep.subr.bf16.mxu0 0
  %5560 = vmatpush1.bf16.msra.mxu0 %v4469
  %5561 = vmatprep.subr.bf16.mxu0 0
  %5562 = vmatpush1.bf16.msra.mxu0 %v4472
  %5563 = vmatprep.subr.bf16.mxu0 0
  %5564 = vmatpush1.bf16.msra.mxu0 %v4475
  %5565 = vmatprep.subr.bf16.mxu0 0
  %5566 = vmatpush1.bf16.msra.mxu0 %v4478
  %5567 = vmatprep.subr.bf16.mxu0 0
  %5568 = vmatpush1.bf16.msra.mxu0 0
  %5569 = vmatprep.subr.bf16.mxu0 0
  %5570 = vmatpush1.bf16.msra.mxu0 0
  %5571 = vmatprep.subr.bf16.mxu0 0
  %5572 = vmatpush1.bf16.msra.mxu0 0
  %5573 = vmatprep.subr.bf16.mxu0 0
  %5574 = vmatpush1.bf16.msra.mxu0 0
  %5575 = vmatprep.subr.bf16.mxu0 0
  %5576 = vmatpush1.bf16.msra.mxu0 0
  %5577 = vmatprep.subr.bf16.mxu0 0
  %5578 = vmatpush1.bf16.msra.mxu0 0
  %5579 = vmatprep.subr.bf16.mxu0 0
  %5580 = vmatpush1.bf16.msra.mxu0 0
  %5581 = vmatprep.subr.bf16.mxu0 0
  %5582 = vmatpush1.bf16.msra.mxu0 0
  %5583 = vmatprep.mubr.bf16.mxu0 0
  %5584 = vmatmul.mubr.bf16.gmra.mrb[0].mxu0 %v5509
  %v5585 = vpop.f32.mrb[0].mxu0
  %v5586 = vadd.f32 0.0, %v5585
  %v5587 = vpop.f32.mrb[0].mxu0
  %v5588 = vpop.f32.mrb[0].mxu0
  %v5589 = vpop.f32.mrb[0].mxu0
  %5590 = vdwg.mxu0
  %v5591 = vadd.f32 %v4545, %v5463
  %v5592 = vxor.u32 %v5591, 2147483648
  %v5593 = vmul.f32 %v5592, 1.442695
  %v5594 = vpow.pop %v5593
  %v5595 = vadd.f32 %v5594, 1.0
  %v5596 = vrcp.pop %v5595
  %v5597 = vmul.f32 1.0, %v5596
  %v5598 = vadd.f32 %v4547, %v5465
  %v5599 = vxor.u32 %v5598, 2147483648
  %v5600 = vmul.f32 %v5599, 1.442695
  %v5601 = vpow.pop %v5600
  %v5602 = vadd.f32 %v5601, 1.0
  %v5603 = vrcp.pop %v5602
  %v5604 = vmul.f32 1.0, %v5603
  %v5605 = vadd.f32 %v5504, %v4795
  %v5606 = vmul.f32 %v5597, %v5605
  %v5607 = vadd.f32 %v4615, %v5606
  %v5608 = vtanh.pop %v5607
  %v5609 = vsub.f32 1.0, %v5604
  %v5610 = vmul.f32 %v5609, %v5608
  %v5611 = vmul.f32 %v5604, %v5404
  %v5612 = vadd.f32 %v5610, %v5611
  %v5613 = vadd.f32 %v4707, %v5545
  %v5614 = vxor.u32 %v5613, 2147483648
  %v5615 = vmul.f32 %v5614, 1.442695
  %v5616 = vpow.pop %v5615
  %v5617 = vadd.f32 %v5616, 1.0
  %v5618 = vrcp.pop %v5617
  %v5619 = vmul.f32 1.0, %v5618
  %v5620 = vadd.f32 %v4709, %v5547
  %v5621 = vxor.u32 %v5620, 2147483648
  %v5622 = vmul.f32 %v5621, 1.442695
  %v5623 = vpow.pop %v5622
  %v5624 = vadd.f32 %v5623, 1.0
  %v5625 = vrcp.pop %v5624
  %v5626 = vmul.f32 1.0, %v5625
  %v5627 = vadd.f32 %v5586, %v4803
  %v5628 = vmul.f32 %v5619, %v5627
  %v5629 = vadd.f32 %v4776, %v5628
  %v5630 = vtanh.pop %v5629
  %v5631 = vsub.f32 1.0, %v5626
  %v5632 = vmul.f32 %v5631, %v5630
  %v5633 = vmul.f32 %v5626, %v5426
  %v5634 = vadd.f32 %v5632, %v5633
  %v5635 = vpack.c.bf16 %v5612, %v5612
  %5636 = vmatprep.subr.bf16.mxu0 %v4431
  %5637 = vmatpush1.bf16.msra.mxu0 %v4430
  %5638 = vmatprep.subr.bf16.mxu0 %v4434
  %5639 = vmatpush1.bf16.msra.mxu0 %v4433
  %5640 = vmatprep.subr.bf16.mxu0 %v4437
  %5641 = vmatpush1.bf16.msra.mxu0 %v4436
  %5642 = vmatprep.subr.bf16.mxu0 %v4440
  %5643 = vmatpush1.bf16.msra.mxu0 %v4439
  %5644 = vmatprep.subr.bf16.mxu0 %v4443
  %5645 = vmatpush1.bf16.msra.mxu0 %v4442
  %5646 = vmatprep.subr.bf16.mxu0 %v4446
  %5647 = vmatpush1.bf16.msra.mxu0 %v4445
  %5648 = vmatprep.subr.bf16.mxu0 %v4449
  %5649 = vmatpush1.bf16.msra.mxu0 %v4448
  %5650 = vmatprep.subr.bf16.mxu0 %v4452
  %5651 = vmatpush1.bf16.msra.mxu0 %v4451
  %5652 = vmatprep.subr.bf16.mxu0 0
  %5653 = vmatpush1.bf16.msra.mxu0 0
  %5654 = vmatprep.subr.bf16.mxu0 0
  %5655 = vmatpush1.bf16.msra.mxu0 0
  %5656 = vmatprep.subr.bf16.mxu0 0
  %5657 = vmatpush1.bf16.msra.mxu0 0
  %5658 = vmatprep.subr.bf16.mxu0 0
  %5659 = vmatpush1.bf16.msra.mxu0 0
  %5660 = vmatprep.subr.bf16.mxu0 0
  %5661 = vmatpush1.bf16.msra.mxu0 0
  %5662 = vmatprep.subr.bf16.mxu0 0
  %5663 = vmatpush1.bf16.msra.mxu0 0
  %5664 = vmatprep.subr.bf16.mxu0 0
  %5665 = vmatpush1.bf16.msra.mxu0 0
  %5666 = vmatprep.subr.bf16.mxu0 0
  %5667 = vmatpush1.bf16.msra.mxu0 0
  %5668 = vmatprep.mubr.bf16.mxu0 0
  %5669 = vmatmul.mubr.bf16.gmra.mrb[0].mxu0 %v5635
  %v5670 = vpop.f32.mrb[0].mxu0
  %v5671 = vadd.f32 0.0, %v5670
  %v5672 = vpop.f32.mrb[0].mxu0
  %v5673 = vadd.f32 0.0, %v5672
  %v5674 = vpop.f32.mrb[0].mxu0
  %v5675 = vpop.f32.mrb[0].mxu0
  %5676 = vdwg.mxu0
  %5677 = vmatprep.subr.bf16.mxu0 0
  %5678 = vmatpush1.bf16.msra.mxu0 %v4432
  %5679 = vmatprep.subr.bf16.mxu0 0
  %5680 = vmatpush1.bf16.msra.mxu0 %v4435
  %5681 = vmatprep.subr.bf16.mxu0 0
  %5682 = vmatpush1.bf16.msra.mxu0 %v4438
  %5683 = vmatprep.subr.bf16.mxu0 0
  %5684 = vmatpush1.bf16.msra.mxu0 %v4441
  %5685 = vmatprep.subr.bf16.mxu0 0
  %5686 = vmatpush1.bf16.msra.mxu0 %v4444
  %5687 = vmatprep.subr.bf16.mxu0 0
  %5688 = vmatpush1.bf16.msra.mxu0 %v4447
  %5689 = vmatprep.subr.bf16.mxu0 0
  %5690 = vmatpush1.bf16.msra.mxu0 %v4450
  %5691 = vmatprep.subr.bf16.mxu0 0
  %5692 = vmatpush1.bf16.msra.mxu0 %v4453
  %5693 = vmatprep.subr.bf16.mxu0 0
  %5694 = vmatpush1.bf16.msra.mxu0 0
  %5695 = vmatprep.subr.bf16.mxu0 0
  %5696 = vmatpush1.bf16.msra.mxu0 0
  %5697 = vmatprep.subr.bf16.mxu0 0
  %5698 = vmatpush1.bf16.msra.mxu0 0
  %5699 = vmatprep.subr.bf16.mxu0 0
  %5700 = vmatpush1.bf16.msra.mxu0 0
  %5701 = vmatprep.subr.bf16.mxu0 0
  %5702 = vmatpush1.bf16.msra.mxu0 0
  %5703 = vmatprep.subr.bf16.mxu0 0
  %5704 = vmatpush1.bf16.msra.mxu0 0
  %5705 = vmatprep.subr.bf16.mxu0 0
  %5706 = vmatpush1.bf16.msra.mxu0 0
  %5707 = vmatprep.subr.bf16.mxu0 0
  %5708 = vmatpush1.bf16.msra.mxu0 0
  %5709 = vmatprep.mubr.bf16.mxu0 0
  %5710 = vmatmul.mubr.bf16.gmra.mrb[0].mxu0 %v5635
  %v5711 = vpop.f32.mrb[0].mxu0
  %v5712 = vadd.f32 0.0, %v5711
  %v5713 = vpop.f32.mrb[0].mxu0
  %v5714 = vpop.f32.mrb[0].mxu0
  %v5715 = vpop.f32.mrb[0].mxu0
  %5716 = vdwg.mxu0
  %v5717 = vpack.c.bf16 %v5634, %v5634
  %5718 = vmatprep.subr.bf16.mxu0 %v4456
  %5719 = vmatpush1.bf16.msra.mxu0 %v4455
  %5720 = vmatprep.subr.bf16.mxu0 %v4459
  %5721 = vmatpush1.bf16.msra.mxu0 %v4458
  %5722 = vmatprep.subr.bf16.mxu0 %v4462
  %5723 = vmatpush1.bf16.msra.mxu0 %v4461
  %5724 = vmatprep.subr.bf16.mxu0 %v4465
  %5725 = vmatpush1.bf16.msra.mxu0 %v4464
  %5726 = vmatprep.subr.bf16.mxu0 %v4468
  %5727 = vmatpush1.bf16.msra.mxu0 %v4467
  %5728 = vmatprep.subr.bf16.mxu0 %v4471
  %5729 = vmatpush1.bf16.msra.mxu0 %v4470
  %5730 = vmatprep.subr.bf16.mxu0 %v4474
  %5731 = vmatpush1.bf16.msra.mxu0 %v4473
  %5732 = vmatprep.subr.bf16.mxu0 %v4477
  %5733 = vmatpush1.bf16.msra.mxu0 %v4476
  %5734 = vmatprep.subr.bf16.mxu0 0
  %5735 = vmatpush1.bf16.msra.mxu0 0
  %5736 = vmatprep.subr.bf16.mxu0 0
  %5737 = vmatpush1.bf16.msra.mxu0 0
  %5738 = vmatprep.subr.bf16.mxu0 0
  %5739 = vmatpush1.bf16.msra.mxu0 0
  %5740 = vmatprep.subr.bf16.mxu0 0
  %5741 = vmatpush1.bf16.msra.mxu0 0
  %5742 = vmatprep.subr.bf16.mxu0 0
  %5743 = vmatpush1.bf16.msra.mxu0 0
  %5744 = vmatprep.subr.bf16.mxu0 0
  %5745 = vmatpush1.bf16.msra.mxu0 0
  %5746 = vmatprep.subr.bf16.mxu0 0
  %5747 = vmatpush1.bf16.msra.mxu0 0
  %5748 = vmatprep.subr.bf16.mxu0 0
  %5749 = vmatpush1.bf16.msra.mxu0 0
  %5750 = vmatprep.mubr.bf16.mxu0 0
  %5751 = vmatmul.mubr.bf16.gmra.mrb[0].mxu0 %v5717
  %v5752 = vpop.f32.mrb[0].mxu0
  %v5753 = vadd.f32 0.0, %v5752
  %v5754 = vpop.f32.mrb[0].mxu0
  %v5755 = vadd.f32 0.0, %v5754
  %v5756 = vpop.f32.mrb[0].mxu0
  %v5757 = vpop.f32.mrb[0].mxu0
  %5758 = vdwg.mxu0
  %5759 = vmatprep.subr.bf16.mxu0 0
  %5760 = vmatpush1.bf16.msra.mxu0 %v4457
  %5761 = vmatprep.subr.bf16.mxu0 0
  %5762 = vmatpush1.bf16.msra.mxu0 %v4460
  %5763 = vmatprep.subr.bf16.mxu0 0
  %5764 = vmatpush1.bf16.msra.mxu0 %v4463
  %5765 = vmatprep.subr.bf16.mxu0 0
  %5766 = vmatpush1.bf16.msra.mxu0 %v4466
  %5767 = vmatprep.subr.bf16.mxu0 0
  %5768 = vmatpush1.bf16.msra.mxu0 %v4469
  %5769 = vmatprep.subr.bf16.mxu0 0
  %5770 = vmatpush1.bf16.msra.mxu0 %v4472
  %5771 = vmatprep.subr.bf16.mxu0 0
  %5772 = vmatpush1.bf16.msra.mxu0 %v4475
  %5773 = vmatprep.subr.bf16.mxu0 0
  %5774 = vmatpush1.bf16.msra.mxu0 %v4478
  %5775 = vmatprep.subr.bf16.mxu0 0
  %5776 = vmatpush1.bf16.msra.mxu0 0
  %5777 = vmatprep.subr.bf16.mxu0 0
  %5778 = vmatpush1.bf16.msra.mxu0 0
  %5779 = vmatprep.subr.bf16.mxu0 0
  %5780 = vmatpush1.bf16.msra.mxu0 0
  %5781 = vmatprep.subr.bf16.mxu0 0
  %5782 = vmatpush1.bf16.msra.mxu0 0
  %5783 = vmatprep.subr.bf16.mxu0 0
  %5784 = vmatpush1.bf16.msra.mxu0 0
  %5785 = vmatprep.subr.bf16.mxu0 0
  %5786 = vmatpush1.bf16.msra.mxu0 0
  %5787 = vmatprep.subr.bf16.mxu0 0
  %5788 = vmatpush1.bf16.msra.mxu0 0
  %5789 = vmatprep.subr.bf16.mxu0 0
  %5790 = vmatpush1.bf16.msra.mxu0 0
  %5791 = vmatprep.mubr.bf16.mxu0 0
  %5792 = vmatmul.mubr.bf16.gmra.mrb[0].mxu0 %v5717
  %v5793 = vpop.f32.mrb[0].mxu0
  %v5794 = vadd.f32 0.0, %v5793
  %v5795 = vpop.f32.mrb[0].mxu0
  %v5796 = vpop.f32.mrb[0].mxu0
  %v5797 = vpop.f32.mrb[0].mxu0
  %5798 = vdwg.mxu0
  %v5799 = vadd.f32 %v4551, %v5671
  %v5800 = vxor.u32 %v5799, 2147483648
  %v5801 = vmul.f32 %v5800, 1.442695
  %v5802 = vpow.pop %v5801
  %v5803 = vadd.f32 %v5802, 1.0
  %v5804 = vrcp.pop %v5803
  %v5805 = vmul.f32 1.0, %v5804
  %v5806 = vadd.f32 %v4553, %v5673
  %v5807 = vxor.u32 %v5806, 2147483648
  %v5808 = vmul.f32 %v5807, 1.442695
  %v5809 = vpow.pop %v5808
  %v5810 = vadd.f32 %v5809, 1.0
  %v5811 = vrcp.pop %v5810
  %v5812 = vmul.f32 1.0, %v5811
  %v5813 = vadd.f32 %v5712, %v4795
  %v5814 = vmul.f32 %v5805, %v5813
  %v5815 = vadd.f32 %v4620, %v5814
  %v5816 = vtanh.pop %v5815
  %v5817 = vsub.f32 1.0, %v5812
  %v5818 = vmul.f32 %v5817, %v5816
  %v5819 = vmul.f32 %v5812, %v5612
  %v5820 = vadd.f32 %v5818, %v5819
  %v5821 = vadd.f32 %v4701, %v5753
  %v5822 = vxor.u32 %v5821, 2147483648
  %v5823 = vmul.f32 %v5822, 1.442695
  %v5824 = vpow.pop %v5823
  %v5825 = vadd.f32 %v5824, 1.0
  %v5826 = vrcp.pop %v5825
  %v5827 = vmul.f32 1.0, %v5826
  %v5828 = vadd.f32 %v4703, %v5755
  %v5829 = vxor.u32 %v5828, 2147483648
  %v5830 = vmul.f32 %v5829, 1.442695
  %v5831 = vpow.pop %v5830
  %v5832 = vadd.f32 %v5831, 1.0
  %v5833 = vrcp.pop %v5832
  %v5834 = vmul.f32 1.0, %v5833
  %v5835 = vadd.f32 %v5794, %v4803
  %v5836 = vmul.f32 %v5827, %v5835
  %v5837 = vadd.f32 %v4771, %v5836
  %v5838 = vtanh.pop %v5837
  %v5839 = vsub.f32 1.0, %v5834
  %v5840 = vmul.f32 %v5839, %v5838
  %v5841 = vmul.f32 %v5834, %v5634
  %v5842 = vadd.f32 %v5840, %v5841
  %v5843 = vpack.c.bf16 %v5820, %v5820
  %5844 = vmatprep.subr.bf16.mxu0 %v4431
  %5845 = vmatpush1.bf16.msra.mxu0 %v4430
  %5846 = vmatprep.subr.bf16.mxu0 %v4434
  %5847 = vmatpush1.bf16.msra.mxu0 %v4433
  %5848 = vmatprep.subr.bf16.mxu0 %v4437
  %5849 = vmatpush1.bf16.msra.mxu0 %v4436
  %5850 = vmatprep.subr.bf16.mxu0 %v4440
  %5851 = vmatpush1.bf16.msra.mxu0 %v4439
  %5852 = vmatprep.subr.bf16.mxu0 %v4443
  %5853 = vmatpush1.bf16.msra.mxu0 %v4442
  %5854 = vmatprep.subr.bf16.mxu0 %v4446
  %5855 = vmatpush1.bf16.msra.mxu0 %v4445
  %5856 = vmatprep.subr.bf16.mxu0 %v4449
  %5857 = vmatpush1.bf16.msra.mxu0 %v4448
  %5858 = vmatprep.subr.bf16.mxu0 %v4452
  %5859 = vmatpush1.bf16.msra.mxu0 %v4451
  %5860 = vmatprep.subr.bf16.mxu0 0
  %5861 = vmatpush1.bf16.msra.mxu0 0
  %5862 = vmatprep.subr.bf16.mxu0 0
  %5863 = vmatpush1.bf16.msra.mxu0 0
  %5864 = vmatprep.subr.bf16.mxu0 0
  %5865 = vmatpush1.bf16.msra.mxu0 0
  %5866 = vmatprep.subr.bf16.mxu0 0
  %5867 = vmatpush1.bf16.msra.mxu0 0
  %5868 = vmatprep.subr.bf16.mxu0 0
  %5869 = vmatpush1.bf16.msra.mxu0 0
  %5870 = vmatprep.subr.bf16.mxu0 0
  %5871 = vmatpush1.bf16.msra.mxu0 0
  %5872 = vmatprep.subr.bf16.mxu0 0
  %5873 = vmatpush1.bf16.msra.mxu0 0
  %5874 = vmatprep.subr.bf16.mxu0 0
  %5875 = vmatpush1.bf16.msra.mxu0 0
  %5876 = vmatprep.mubr.bf16.mxu0 0
  %5877 = vmatmul.mubr.bf16.gmra.mrb[0].mxu0 %v5843
  %v5878 = vpop.f32.mrb[0].mxu0
  %v5879 = vadd.f32 0.0, %v5878
  %v5880 = vpop.f32.mrb[0].mxu0
  %v5881 = vadd.f32 0.0, %v5880
  %v5882 = vpop.f32.mrb[0].mxu0
  %v5883 = vpop.f32.mrb[0].mxu0
  %5884 = vdwg.mxu0
  %5885 = vmatprep.subr.bf16.mxu0 0
  %5886 = vmatpush1.bf16.msra.mxu0 %v4432
  %5887 = vmatprep.subr.bf16.mxu0 0
  %5888 = vmatpush1.bf16.msra.mxu0 %v4435
  %5889 = vmatprep.subr.bf16.mxu0 0
  %5890 = vmatpush1.bf16.msra.mxu0 %v4438
  %5891 = vmatprep.subr.bf16.mxu0 0
  %5892 = vmatpush1.bf16.msra.mxu0 %v4441
  %5893 = vmatprep.subr.bf16.mxu0 0
  %5894 = vmatpush1.bf16.msra.mxu0 %v4444
  %5895 = vmatprep.subr.bf16.mxu0 0
  %5896 = vmatpush1.bf16.msra.mxu0 %v4447
  %5897 = vmatprep.subr.bf16.mxu0 0
  %5898 = vmatpush1.bf16.msra.mxu0 %v4450
  %5899 = vmatprep.subr.bf16.mxu0 0
  %5900 = vmatpush1.bf16.msra.mxu0 %v4453
  %5901 = vmatprep.subr.bf16.mxu0 0
  %5902 = vmatpush1.bf16.msra.mxu0 0
  %5903 = vmatprep.subr.bf16.mxu0 0
  %5904 = vmatpush1.bf16.msra.mxu0 0
  %5905 = vmatprep.subr.bf16.mxu0 0
  %5906 = vmatpush1.bf16.msra.mxu0 0
  %5907 = vmatprep.subr.bf16.mxu0 0
  %5908 = vmatpush1.bf16.msra.mxu0 0
  %5909 = vmatprep.subr.bf16.mxu0 0
  %5910 = vmatpush1.bf16.msra.mxu0 0
  %5911 = vmatprep.subr.bf16.mxu0 0
  %5912 = vmatpush1.bf16.msra.mxu0 0
  %5913 = vmatprep.subr.bf16.mxu0 0
  %5914 = vmatpush1.bf16.msra.mxu0 0
  %5915 = vmatprep.subr.bf16.mxu0 0
  %5916 = vmatpush1.bf16.msra.mxu0 0
  %5917 = vmatprep.mubr.bf16.mxu0 0
  %5918 = vmatmul.mubr.bf16.gmra.mrb[0].mxu0 %v5843
  %v5919 = vpop.f32.mrb[0].mxu0
  %v5920 = vadd.f32 0.0, %v5919
  %v5921 = vpop.f32.mrb[0].mxu0
  %v5922 = vpop.f32.mrb[0].mxu0
  %v5923 = vpop.f32.mrb[0].mxu0
  %5924 = vdwg.mxu0
  %v5925 = vpack.c.bf16 %v5842, %v5842
  %5926 = vmatprep.subr.bf16.mxu0 %v4456
  %5927 = vmatpush1.bf16.msra.mxu0 %v4455
  %5928 = vmatprep.subr.bf16.mxu0 %v4459
  %5929 = vmatpush1.bf16.msra.mxu0 %v4458
  %5930 = vmatprep.subr.bf16.mxu0 %v4462
  %5931 = vmatpush1.bf16.msra.mxu0 %v4461
  %5932 = vmatprep.subr.bf16.mxu0 %v4465
  %5933 = vmatpush1.bf16.msra.mxu0 %v4464
  %5934 = vmatprep.subr.bf16.mxu0 %v4468
  %5935 = vmatpush1.bf16.msra.mxu0 %v4467
  %5936 = vmatprep.subr.bf16.mxu0 %v4471
  %5937 = vmatpush1.bf16.msra.mxu0 %v4470
  %5938 = vmatprep.subr.bf16.mxu0 %v4474
  %5939 = vmatpush1.bf16.msra.mxu0 %v4473
  %5940 = vmatprep.subr.bf16.mxu0 %v4477
  %5941 = vmatpush1.bf16.msra.mxu0 %v4476
  %5942 = vmatprep.subr.bf16.mxu0 0
  %5943 = vmatpush1.bf16.msra.mxu0 0
  %5944 = vmatprep.subr.bf16.mxu0 0
  %5945 = vmatpush1.bf16.msra.mxu0 0
  %5946 = vmatprep.subr.bf16.mxu0 0
  %5947 = vmatpush1.bf16.msra.mxu0 0
  %5948 = vmatprep.subr.bf16.mxu0 0
  %5949 = vmatpush1.bf16.msra.mxu0 0
  %5950 = vmatprep.subr.bf16.mxu0 0
  %5951 = vmatpush1.bf16.msra.mxu0 0
  %5952 = vmatprep.subr.bf16.mxu0 0
  %5953 = vmatpush1.bf16.msra.mxu0 0
  %5954 = vmatprep.subr.bf16.mxu0 0
  %5955 = vmatpush1.bf16.msra.mxu0 0
  %5956 = vmatprep.subr.bf16.mxu0 0
  %5957 = vmatpush1.bf16.msra.mxu0 0
  %5958 = vmatprep.mubr.bf16.mxu0 0
  %5959 = vmatmul.mubr.bf16.gmra.mrb[0].mxu0 %v5925
  %v5960 = vpop.f32.mrb[0].mxu0
  %v5961 = vadd.f32 0.0, %v5960
  %v5962 = vpop.f32.mrb[0].mxu0
  %v5963 = vadd.f32 0.0, %v5962
  %v5964 = vpop.f32.mrb[0].mxu0
  %v5965 = vpop.f32.mrb[0].mxu0
  %5966 = vdwg.mxu0
  %5967 = vmatprep.subr.bf16.mxu0 0
  %5968 = vmatpush1.bf16.msra.mxu0 %v4457
  %5969 = vmatprep.subr.bf16.mxu0 0
  %5970 = vmatpush1.bf16.msra.mxu0 %v4460
  %5971 = vmatprep.subr.bf16.mxu0 0
  %5972 = vmatpush1.bf16.msra.mxu0 %v4463
  %5973 = vmatprep.subr.bf16.mxu0 0
  %5974 = vmatpush1.bf16.msra.mxu0 %v4466
  %5975 = vmatprep.subr.bf16.mxu0 0
  %5976 = vmatpush1.bf16.msra.mxu0 %v4469
  %5977 = vmatprep.subr.bf16.mxu0 0
  %5978 = vmatpush1.bf16.msra.mxu0 %v4472
  %5979 = vmatprep.subr.bf16.mxu0 0
  %5980 = vmatpush1.bf16.msra.mxu0 %v4475
  %5981 = vmatprep.subr.bf16.mxu0 0
  %5982 = vmatpush1.bf16.msra.mxu0 %v4478
  %5983 = vmatprep.subr.bf16.mxu0 0
  %5984 = vmatpush1.bf16.msra.mxu0 0
  %5985 = vmatprep.subr.bf16.mxu0 0
  %5986 = vmatpush1.bf16.msra.mxu0 0
  %5987 = vmatprep.subr.bf16.mxu0 0
  %5988 = vmatpush1.bf16.msra.mxu0 0
  %5989 = vmatprep.subr.bf16.mxu0 0
  %5990 = vmatpush1.bf16.msra.mxu0 0
  %5991 = vmatprep.subr.bf16.mxu0 0
  %5992 = vmatpush1.bf16.msra.mxu0 0
  %5993 = vmatprep.subr.bf16.mxu0 0
  %5994 = vmatpush1.bf16.msra.mxu0 0
  %5995 = vmatprep.subr.bf16.mxu0 0
  %5996 = vmatpush1.bf16.msra.mxu0 0
  %5997 = vmatprep.subr.bf16.mxu0 0
  %5998 = vmatpush1.bf16.msra.mxu0 0
  %5999 = vmatprep.mubr.bf16.mxu0 0
  %6000 = vmatmul.mubr.bf16.gmra.mrb[0].mxu0 %v5925
  %v6001 = vpop.f32.mrb[0].mxu0
  %v6002 = vadd.f32 0.0, %v6001
  %v6003 = vpop.f32.mrb[0].mxu0
  %v6004 = vpop.f32.mrb[0].mxu0
  %v6005 = vpop.f32.mrb[0].mxu0
  %6006 = vdwg.mxu0
  %v6007 = vadd.f32 %v4555, %v5879
  %v6008 = vxor.u32 %v6007, 2147483648
  %v6009 = vmul.f32 %v6008, 1.442695
  %v6010 = vpow.pop %v6009
  %v6011 = vadd.f32 %v6010, 1.0
  %v6012 = vrcp.pop %v6011
  %v6013 = vmul.f32 1.0, %v6012
  %v6014 = vadd.f32 %v4557, %v5881
  %v6015 = vxor.u32 %v6014, 2147483648
  %v6016 = vmul.f32 %v6015, 1.442695
  %v6017 = vpow.pop %v6016
  %v6018 = vadd.f32 %v6017, 1.0
  %v6019 = vrcp.pop %v6018
  %v6020 = vmul.f32 1.0, %v6019
  %v6021 = vadd.f32 %v5920, %v4795
  %v6022 = vmul.f32 %v6013, %v6021
  %v6023 = vadd.f32 %v4623, %v6022
  %v6024 = vtanh.pop %v6023
  %v6025 = vsub.f32 1.0, %v6020
  %v6026 = vmul.f32 %v6025, %v6024
  %v6027 = vmul.f32 %v6020, %v5820
  %v6028 = vadd.f32 %v6026, %v6027
  %v6029 = vadd.f32 %v4697, %v5961
  %v6030 = vxor.u32 %v6029, 2147483648
  %v6031 = vmul.f32 %v6030, 1.442695
  %v6032 = vpow.pop %v6031
  %v6033 = vadd.f32 %v6032, 1.0
  %v6034 = vrcp.pop %v6033
  %v6035 = vmul.f32 1.0, %v6034
  %v6036 = vadd.f32 %v4699, %v5963
  %v6037 = vxor.u32 %v6036, 2147483648
  %v6038 = vmul.f32 %v6037, 1.442695
  %v6039 = vpow.pop %v6038
  %v6040 = vadd.f32 %v6039, 1.0
  %v6041 = vrcp.pop %v6040
  %v6042 = vmul.f32 1.0, %v6041
  %v6043 = vadd.f32 %v6002, %v4803
  %v6044 = vmul.f32 %v6035, %v6043
  %v6045 = vadd.f32 %v4768, %v6044
  %v6046 = vtanh.pop %v6045
  %v6047 = vsub.f32 1.0, %v6042
  %v6048 = vmul.f32 %v6047, %v6046
  %v6049 = vmul.f32 %v6042, %v5842
  %v6050 = vadd.f32 %v6048, %v6049
  %v6051 = vpack.c.bf16 %v6028, %v6028
  %6052 = vmatprep.subr.bf16.mxu0 %v4431
  %6053 = vmatpush1.bf16.msra.mxu0 %v4430
  %6054 = vmatprep.subr.bf16.mxu0 %v4434
  %6055 = vmatpush1.bf16.msra.mxu0 %v4433
  %6056 = vmatprep.subr.bf16.mxu0 %v4437
  %6057 = vmatpush1.bf16.msra.mxu0 %v4436
  %6058 = vmatprep.subr.bf16.mxu0 %v4440
  %6059 = vmatpush1.bf16.msra.mxu0 %v4439
  %6060 = vmatprep.subr.bf16.mxu0 %v4443
  %6061 = vmatpush1.bf16.msra.mxu0 %v4442
  %6062 = vmatprep.subr.bf16.mxu0 %v4446
  %6063 = vmatpush1.bf16.msra.mxu0 %v4445
  %6064 = vmatprep.subr.bf16.mxu0 %v4449
  %6065 = vmatpush1.bf16.msra.mxu0 %v4448
  %6066 = vmatprep.subr.bf16.mxu0 %v4452
  %6067 = vmatpush1.bf16.msra.mxu0 %v4451
  %6068 = vmatprep.subr.bf16.mxu0 0
  %6069 = vmatpush1.bf16.msra.mxu0 0
  %6070 = vmatprep.subr.bf16.mxu0 0
  %6071 = vmatpush1.bf16.msra.mxu0 0
  %6072 = vmatprep.subr.bf16.mxu0 0
  %6073 = vmatpush1.bf16.msra.mxu0 0
  %6074 = vmatprep.subr.bf16.mxu0 0
  %6075 = vmatpush1.bf16.msra.mxu0 0
  %6076 = vmatprep.subr.bf16.mxu0 0
  %6077 = vmatpush1.bf16.msra.mxu0 0
  %6078 = vmatprep.subr.bf16.mxu0 0
  %6079 = vmatpush1.bf16.msra.mxu0 0
  %6080 = vmatprep.subr.bf16.mxu0 0
  %6081 = vmatpush1.bf16.msra.mxu0 0
  %6082 = vmatprep.subr.bf16.mxu0 0
  %6083 = vmatpush1.bf16.msra.mxu0 0
  %6084 = vmatprep.mubr.bf16.mxu0 0
  %6085 = vmatmul.mubr.bf16.gmra.mrb[0].mxu0 %v6051
  %v6086 = vpop.f32.mrb[0].mxu0
  %v6087 = vadd.f32 0.0, %v6086
  %v6088 = vpop.f32.mrb[0].mxu0
  %v6089 = vadd.f32 0.0, %v6088
  %v6090 = vpop.f32.mrb[0].mxu0
  %v6091 = vpop.f32.mrb[0].mxu0
  %6092 = vdwg.mxu0
  %6093 = vmatprep.subr.bf16.mxu0 0
  %6094 = vmatpush1.bf16.msra.mxu0 %v4432
  %6095 = vmatprep.subr.bf16.mxu0 0
  %6096 = vmatpush1.bf16.msra.mxu0 %v4435
  %6097 = vmatprep.subr.bf16.mxu0 0
  %6098 = vmatpush1.bf16.msra.mxu0 %v4438
  %6099 = vmatprep.subr.bf16.mxu0 0
  %6100 = vmatpush1.bf16.msra.mxu0 %v4441
  %6101 = vmatprep.subr.bf16.mxu0 0
  %6102 = vmatpush1.bf16.msra.mxu0 %v4444
  %6103 = vmatprep.subr.bf16.mxu0 0
  %6104 = vmatpush1.bf16.msra.mxu0 %v4447
  %6105 = vmatprep.subr.bf16.mxu0 0
  %6106 = vmatpush1.bf16.msra.mxu0 %v4450
  %6107 = vmatprep.subr.bf16.mxu0 0
  %6108 = vmatpush1.bf16.msra.mxu0 %v4453
  %6109 = vmatprep.subr.bf16.mxu0 0
  %6110 = vmatpush1.bf16.msra.mxu0 0
  %6111 = vmatprep.subr.bf16.mxu0 0
  %6112 = vmatpush1.bf16.msra.mxu0 0
  %6113 = vmatprep.subr.bf16.mxu0 0
  %6114 = vmatpush1.bf16.msra.mxu0 0
  %6115 = vmatprep.subr.bf16.mxu0 0
  %6116 = vmatpush1.bf16.msra.mxu0 0
  %6117 = vmatprep.subr.bf16.mxu0 0
  %6118 = vmatpush1.bf16.msra.mxu0 0
  %6119 = vmatprep.subr.bf16.mxu0 0
  %6120 = vmatpush1.bf16.msra.mxu0 0
  %6121 = vmatprep.subr.bf16.mxu0 0
  %6122 = vmatpush1.bf16.msra.mxu0 0
  %6123 = vmatprep.subr.bf16.mxu0 0
  %6124 = vmatpush1.bf16.msra.mxu0 0
  %6125 = vmatprep.mubr.bf16.mxu0 0
  %6126 = vmatmul.mubr.bf16.gmra.mrb[0].mxu0 %v6051
  %v6127 = vpop.f32.mrb[0].mxu0
  %v6128 = vadd.f32 0.0, %v6127
  %v6129 = vpop.f32.mrb[0].mxu0
  %v6130 = vpop.f32.mrb[0].mxu0
  %v6131 = vpop.f32.mrb[0].mxu0
  %6132 = vdwg.mxu0
  %v6133 = vpack.c.bf16 %v6050, %v6050
  %6134 = vmatprep.subr.bf16.mxu0 %v4456
  %6135 = vmatpush1.bf16.msra.mxu0 %v4455
  %6136 = vmatprep.subr.bf16.mxu0 %v4459
  %6137 = vmatpush1.bf16.msra.mxu0 %v4458
  %6138 = vmatprep.subr.bf16.mxu0 %v4462
  %6139 = vmatpush1.bf16.msra.mxu0 %v4461
  %6140 = vmatprep.subr.bf16.mxu0 %v4465
  %6141 = vmatpush1.bf16.msra.mxu0 %v4464
  %6142 = vmatprep.subr.bf16.mxu0 %v4468
  %6143 = vmatpush1.bf16.msra.mxu0 %v4467
  %6144 = vmatprep.subr.bf16.mxu0 %v4471
  %6145 = vmatpush1.bf16.msra.mxu0 %v4470
  %6146 = vmatprep.subr.bf16.mxu0 %v4474
  %6147 = vmatpush1.bf16.msra.mxu0 %v4473
  %6148 = vmatprep.subr.bf16.mxu0 %v4477
  %6149 = vmatpush1.bf16.msra.mxu0 %v4476
  %6150 = vmatprep.subr.bf16.mxu0 0
  %6151 = vmatpush1.bf16.msra.mxu0 0
  %6152 = vmatprep.subr.bf16.mxu0 0
  %6153 = vmatpush1.bf16.msra.mxu0 0
  %6154 = vmatprep.subr.bf16.mxu0 0
  %6155 = vmatpush1.bf16.msra.mxu0 0
  %6156 = vmatprep.subr.bf16.mxu0 0
  %6157 = vmatpush1.bf16.msra.mxu0 0
  %6158 = vmatprep.subr.bf16.mxu0 0
  %6159 = vmatpush1.bf16.msra.mxu0 0
  %6160 = vmatprep.subr.bf16.mxu0 0
  %6161 = vmatpush1.bf16.msra.mxu0 0
  %6162 = vmatprep.subr.bf16.mxu0 0
  %6163 = vmatpush1.bf16.msra.mxu0 0
  %6164 = vmatprep.subr.bf16.mxu0 0
  %6165 = vmatpush1.bf16.msra.mxu0 0
  %6166 = vmatprep.mubr.bf16.mxu0 0
  %6167 = vmatmul.mubr.bf16.gmra.mrb[0].mxu0 %v6133
  %v6168 = vpop.f32.mrb[0].mxu0
  %v6169 = vadd.f32 0.0, %v6168
  %v6170 = vpop.f32.mrb[0].mxu0
  %v6171 = vadd.f32 0.0, %v6170
  %v6172 = vpop.f32.mrb[0].mxu0
  %v6173 = vpop.f32.mrb[0].mxu0
  %6174 = vdwg.mxu0
  %6175 = vmatprep.subr.bf16.mxu0 0
  %6176 = vmatpush1.bf16.msra.mxu0 %v4457
  %6177 = vmatprep.subr.bf16.mxu0 0
  %6178 = vmatpush1.bf16.msra.mxu0 %v4460
  %6179 = vmatprep.subr.bf16.mxu0 0
  %6180 = vmatpush1.bf16.msra.mxu0 %v4463
  %6181 = vmatprep.subr.bf16.mxu0 0
  %6182 = vmatpush1.bf16.msra.mxu0 %v4466
  %6183 = vmatprep.subr.bf16.mxu0 0
  %6184 = vmatpush1.bf16.msra.mxu0 %v4469
  %6185 = vmatprep.subr.bf16.mxu0 0
  %6186 = vmatpush1.bf16.msra.mxu0 %v4472
  %6187 = vmatprep.subr.bf16.mxu0 0
  %6188 = vmatpush1.bf16.msra.mxu0 %v4475
  %6189 = vmatprep.subr.bf16.mxu0 0
  %6190 = vmatpush1.bf16.msra.mxu0 %v4478
  %6191 = vmatprep.subr.bf16.mxu0 0
  %6192 = vmatpush1.bf16.msra.mxu0 0
  %6193 = vmatprep.subr.bf16.mxu0 0
  %6194 = vmatpush1.bf16.msra.mxu0 0
  %6195 = vmatprep.subr.bf16.mxu0 0
  %6196 = vmatpush1.bf16.msra.mxu0 0
  %6197 = vmatprep.subr.bf16.mxu0 0
  %6198 = vmatpush1.bf16.msra.mxu0 0
  %6199 = vmatprep.subr.bf16.mxu0 0
  %6200 = vmatpush1.bf16.msra.mxu0 0
  %6201 = vmatprep.subr.bf16.mxu0 0
  %6202 = vmatpush1.bf16.msra.mxu0 0
  %6203 = vmatprep.subr.bf16.mxu0 0
  %6204 = vmatpush1.bf16.msra.mxu0 0
  %6205 = vmatprep.subr.bf16.mxu0 0
  %6206 = vmatpush1.bf16.msra.mxu0 0
  %6207 = vmatprep.mubr.bf16.mxu0 0
  %6208 = vmatmul.mubr.bf16.gmra.mrb[0].mxu0 %v6133
  %v6209 = vpop.f32.mrb[0].mxu0
  %v6210 = vadd.f32 0.0, %v6209
  %v6211 = vpop.f32.mrb[0].mxu0
  %v6212 = vpop.f32.mrb[0].mxu0
  %v6213 = vpop.f32.mrb[0].mxu0
  %6214 = vdwg.mxu0
  %v6215 = vadd.f32 %v4561, %v6087
  %v6216 = vxor.u32 %v6215, 2147483648
  %v6217 = vmul.f32 %v6216, 1.442695
  %v6218 = vpow.pop %v6217
  %v6219 = vadd.f32 %v6218, 1.0
  %v6220 = vrcp.pop %v6219
  %v6221 = vmul.f32 1.0, %v6220
  %v6222 = vadd.f32 %v4563, %v6089
  %v6223 = vxor.u32 %v6222, 2147483648
  %v6224 = vmul.f32 %v6223, 1.442695
  %v6225 = vpow.pop %v6224
  %v6226 = vadd.f32 %v6225, 1.0
  %v6227 = vrcp.pop %v6226
  %v6228 = vmul.f32 1.0, %v6227
  %v6229 = vadd.f32 %v6128, %v4795
  %v6230 = vmul.f32 %v6221, %v6229
  %v6231 = vadd.f32 %v4628, %v6230
  %v6232 = vtanh.pop %v6231
  %v6233 = vsub.f32 1.0, %v6228
  %v6234 = vmul.f32 %v6233, %v6232
  %v6235 = vmul.f32 %v6228, %v6028
  %v6236 = vadd.f32 %v6234, %v6235
  %v6237 = vadd.f32 %v4691, %v6169
  %v6238 = vxor.u32 %v6237, 2147483648
  %v6239 = vmul.f32 %v6238, 1.442695
  %v6240 = vpow.pop %v6239
  %v6241 = vadd.f32 %v6240, 1.0
  %v6242 = vrcp.pop %v6241
  %v6243 = vmul.f32 1.0, %v6242
  %v6244 = vadd.f32 %v4693, %v6171
  %v6245 = vxor.u32 %v6244, 2147483648
  %v6246 = vmul.f32 %v6245, 1.442695
  %v6247 = vpow.pop %v6246
  %v6248 = vadd.f32 %v6247, 1.0
  %v6249 = vrcp.pop %v6248
  %v6250 = vmul.f32 1.0, %v6249
  %v6251 = vadd.f32 %v6210, %v4803
  %v6252 = vmul.f32 %v6243, %v6251
  %v6253 = vadd.f32 %v4763, %v6252
  %v6254 = vtanh.pop %v6253
  %v6255 = vsub.f32 1.0, %v6250
  %v6256 = vmul.f32 %v6255, %v6254
  %v6257 = vmul.f32 %v6250, %v6050
  %v6258 = vadd.f32 %v6256, %v6257
  %v6259 = vpack.c.bf16 %v6236, %v6236
  %6260 = vmatprep.subr.bf16.mxu0 %v4431
  %6261 = vmatpush1.bf16.msra.mxu0 %v4430
  %6262 = vmatprep.subr.bf16.mxu0 %v4434
  %6263 = vmatpush1.bf16.msra.mxu0 %v4433
  %6264 = vmatprep.subr.bf16.mxu0 %v4437
  %6265 = vmatpush1.bf16.msra.mxu0 %v4436
  %6266 = vmatprep.subr.bf16.mxu0 %v4440
  %6267 = vmatpush1.bf16.msra.mxu0 %v4439
  %6268 = vmatprep.subr.bf16.mxu0 %v4443
  %6269 = vmatpush1.bf16.msra.mxu0 %v4442
  %6270 = vmatprep.subr.bf16.mxu0 %v4446
  %6271 = vmatpush1.bf16.msra.mxu0 %v4445
  %6272 = vmatprep.subr.bf16.mxu0 %v4449
  %6273 = vmatpush1.bf16.msra.mxu0 %v4448
  %6274 = vmatprep.subr.bf16.mxu0 %v4452
  %6275 = vmatpush1.bf16.msra.mxu0 %v4451
  %6276 = vmatprep.subr.bf16.mxu0 0
  %6277 = vmatpush1.bf16.msra.mxu0 0
  %6278 = vmatprep.subr.bf16.mxu0 0
  %6279 = vmatpush1.bf16.msra.mxu0 0
  %6280 = vmatprep.subr.bf16.mxu0 0
  %6281 = vmatpush1.bf16.msra.mxu0 0
  %6282 = vmatprep.subr.bf16.mxu0 0
  %6283 = vmatpush1.bf16.msra.mxu0 0
  %6284 = vmatprep.subr.bf16.mxu0 0
  %6285 = vmatpush1.bf16.msra.mxu0 0
  %6286 = vmatprep.subr.bf16.mxu0 0
  %6287 = vmatpush1.bf16.msra.mxu0 0
  %6288 = vmatprep.subr.bf16.mxu0 0
  %6289 = vmatpush1.bf16.msra.mxu0 0
  %6290 = vmatprep.subr.bf16.mxu0 0
  %6291 = vmatpush1.bf16.msra.mxu0 0
  %6292 = vmatprep.mubr.bf16.mxu0 0
  %6293 = vmatmul.mubr.bf16.gmra.mrb[0].mxu0 %v6259
  %v6294 = vpop.f32.mrb[0].mxu0
  %v6295 = vadd.f32 0.0, %v6294
  %v6296 = vpop.f32.mrb[0].mxu0
  %v6297 = vadd.f32 0.0, %v6296
  %v6298 = vpop.f32.mrb[0].mxu0
  %v6299 = vpop.f32.mrb[0].mxu0
  %6300 = vdwg.mxu0
  %6301 = vmatprep.subr.bf16.mxu0 0
  %6302 = vmatpush1.bf16.msra.mxu0 %v4432
  %6303 = vmatprep.subr.bf16.mxu0 0
  %6304 = vmatpush1.bf16.msra.mxu0 %v4435
  %6305 = vmatprep.subr.bf16.mxu0 0
  %6306 = vmatpush1.bf16.msra.mxu0 %v4438
  %6307 = vmatprep.subr.bf16.mxu0 0
  %6308 = vmatpush1.bf16.msra.mxu0 %v4441
  %6309 = vmatprep.subr.bf16.mxu0 0
  %6310 = vmatpush1.bf16.msra.mxu0 %v4444
  %6311 = vmatprep.subr.bf16.mxu0 0
  %6312 = vmatpush1.bf16.msra.mxu0 %v4447
  %6313 = vmatprep.subr.bf16.mxu0 0
  %6314 = vmatpush1.bf16.msra.mxu0 %v4450
  %6315 = vmatprep.subr.bf16.mxu0 0
  %6316 = vmatpush1.bf16.msra.mxu0 %v4453
  %6317 = vmatprep.subr.bf16.mxu0 0
  %6318 = vmatpush1.bf16.msra.mxu0 0
  %6319 = vmatprep.subr.bf16.mxu0 0
  %6320 = vmatpush1.bf16.msra.mxu0 0
  %6321 = vmatprep.subr.bf16.mxu0 0
  %6322 = vmatpush1.bf16.msra.mxu0 0
  %6323 = vmatprep.subr.bf16.mxu0 0
  %6324 = vmatpush1.bf16.msra.mxu0 0
  %6325 = vmatprep.subr.bf16.mxu0 0
  %6326 = vmatpush1.bf16.msra.mxu0 0
  %6327 = vmatprep.subr.bf16.mxu0 0
  %6328 = vmatpush1.bf16.msra.mxu0 0
  %6329 = vmatprep.subr.bf16.mxu0 0
  %6330 = vmatpush1.bf16.msra.mxu0 0
  %6331 = vmatprep.subr.bf16.mxu0 0
  %6332 = vmatpush1.bf16.msra.mxu0 0
  %6333 = vmatprep.mubr.bf16.mxu0 0
  %6334 = vmatmul.mubr.bf16.gmra.mrb[0].mxu0 %v6259
  %v6335 = vpop.f32.mrb[0].mxu0
  %v6336 = vadd.f32 0.0, %v6335
  %v6337 = vpop.f32.mrb[0].mxu0
  %v6338 = vpop.f32.mrb[0].mxu0
  %v6339 = vpop.f32.mrb[0].mxu0
  %6340 = vdwg.mxu0
  %v6341 = vpack.c.bf16 %v6258, %v6258
  %6342 = vmatprep.subr.bf16.mxu0 %v4456
  %6343 = vmatpush1.bf16.msra.mxu0 %v4455
  %6344 = vmatprep.subr.bf16.mxu0 %v4459
  %6345 = vmatpush1.bf16.msra.mxu0 %v4458
  %6346 = vmatprep.subr.bf16.mxu0 %v4462
  %6347 = vmatpush1.bf16.msra.mxu0 %v4461
  %6348 = vmatprep.subr.bf16.mxu0 %v4465
  %6349 = vmatpush1.bf16.msra.mxu0 %v4464
  %6350 = vmatprep.subr.bf16.mxu0 %v4468
  %6351 = vmatpush1.bf16.msra.mxu0 %v4467
  %6352 = vmatprep.subr.bf16.mxu0 %v4471
  %6353 = vmatpush1.bf16.msra.mxu0 %v4470
  %6354 = vmatprep.subr.bf16.mxu0 %v4474
  %6355 = vmatpush1.bf16.msra.mxu0 %v4473
  %6356 = vmatprep.subr.bf16.mxu0 %v4477
  %6357 = vmatpush1.bf16.msra.mxu0 %v4476
  %6358 = vmatprep.subr.bf16.mxu0 0
  %6359 = vmatpush1.bf16.msra.mxu0 0
  %6360 = vmatprep.subr.bf16.mxu0 0
  %6361 = vmatpush1.bf16.msra.mxu0 0
  %6362 = vmatprep.subr.bf16.mxu0 0
  %6363 = vmatpush1.bf16.msra.mxu0 0
  %6364 = vmatprep.subr.bf16.mxu0 0
  %6365 = vmatpush1.bf16.msra.mxu0 0
  %6366 = vmatprep.subr.bf16.mxu0 0
  %6367 = vmatpush1.bf16.msra.mxu0 0
  %6368 = vmatprep.subr.bf16.mxu0 0
  %6369 = vmatpush1.bf16.msra.mxu0 0
  %6370 = vmatprep.subr.bf16.mxu0 0
  %6371 = vmatpush1.bf16.msra.mxu0 0
  %6372 = vmatprep.subr.bf16.mxu0 0
  %6373 = vmatpush1.bf16.msra.mxu0 0
  %6374 = vmatprep.mubr.bf16.mxu0 0
  %6375 = vmatmul.mubr.bf16.gmra.mrb[0].mxu0 %v6341
  %v6376 = vpop.f32.mrb[0].mxu0
  %v6377 = vadd.f32 0.0, %v6376
  %v6378 = vpop.f32.mrb[0].mxu0
  %v6379 = vadd.f32 0.0, %v6378
  %v6380 = vpop.f32.mrb[0].mxu0
  %v6381 = vpop.f32.mrb[0].mxu0
  %6382 = vdwg.mxu0
  %6383 = vmatprep.subr.bf16.mxu0 0
  %6384 = vmatpush1.bf16.msra.mxu0 %v4457
  %6385 = vmatprep.subr.bf16.mxu0 0
  %6386 = vmatpush1.bf16.msra.mxu0 %v4460
  %6387 = vmatprep.subr.bf16.mxu0 0
  %6388 = vmatpush1.bf16.msra.mxu0 %v4463
  %6389 = vmatprep.subr.bf16.mxu0 0
  %6390 = vmatpush1.bf16.msra.mxu0 %v4466
  %6391 = vmatprep.subr.bf16.mxu0 0
  %6392 = vmatpush1.bf16.msra.mxu0 %v4469
  %6393 = vmatprep.subr.bf16.mxu0 0
  %6394 = vmatpush1.bf16.msra.mxu0 %v4472
  %6395 = vmatprep.subr.bf16.mxu0 0
  %6396 = vmatpush1.bf16.msra.mxu0 %v4475
  %6397 = vmatprep.subr.bf16.mxu0 0
  %6398 = vmatpush1.bf16.msra.mxu0 %v4478
  %6399 = vmatprep.subr.bf16.mxu0 0
  %6400 = vmatpush1.bf16.msra.mxu0 0
  %6401 = vmatprep.subr.bf16.mxu0 0
  %6402 = vmatpush1.bf16.msra.mxu0 0
  %6403 = vmatprep.subr.bf16.mxu0 0
  %6404 = vmatpush1.bf16.msra.mxu0 0
  %6405 = vmatprep.subr.bf16.mxu0 0
  %6406 = vmatpush1.bf16.msra.mxu0 0
  %6407 = vmatprep.subr.bf16.mxu0 0
  %6408 = vmatpush1.bf16.msra.mxu0 0
  %6409 = vmatprep.subr.bf16.mxu0 0
  %6410 = vmatpush1.bf16.msra.mxu0 0
  %6411 = vmatprep.subr.bf16.mxu0 0
  %6412 = vmatpush1.bf16.msra.mxu0 0
  %6413 = vmatprep.subr.bf16.mxu0 0
  %6414 = vmatpush1.bf16.msra.mxu0 0
  %6415 = vmatprep.mubr.bf16.mxu0 0
  %6416 = vmatmul.mubr.bf16.gmra.mrb[0].mxu0 %v6341
  %v6417 = vpop.f32.mrb[0].mxu0
  %v6418 = vadd.f32 0.0, %v6417
  %v6419 = vpop.f32.mrb[0].mxu0
  %v6420 = vpop.f32.mrb[0].mxu0
  %v6421 = vpop.f32.mrb[0].mxu0
  %6422 = vdwg.mxu0
  %v6423 = vadd.f32 %v4565, %v6295
  %v6424 = vxor.u32 %v6423, 2147483648
  %v6425 = vmul.f32 %v6424, 1.442695
  %v6426 = vpow.pop %v6425
  %v6427 = vadd.f32 %v6426, 1.0
  %v6428 = vrcp.pop %v6427
  %v6429 = vmul.f32 1.0, %v6428
  %v6430 = vadd.f32 %v4567, %v6297
  %v6431 = vxor.u32 %v6430, 2147483648
  %v6432 = vmul.f32 %v6431, 1.442695
  %v6433 = vpow.pop %v6432
  %v6434 = vadd.f32 %v6433, 1.0
  %v6435 = vrcp.pop %v6434
  %v6436 = vmul.f32 1.0, %v6435
  %v6437 = vadd.f32 %v6336, %v4795
  %v6438 = vmul.f32 %v6429, %v6437
  %v6439 = vadd.f32 %v4631, %v6438
  %v6440 = vtanh.pop %v6439
  %v6441 = vsub.f32 1.0, %v6436
  %v6442 = vmul.f32 %v6441, %v6440
  %v6443 = vmul.f32 %v6436, %v6236
  %v6444 = vadd.f32 %v6442, %v6443
  %v6445 = vadd.f32 %v4687, %v6377
  %v6446 = vxor.u32 %v6445, 2147483648
  %v6447 = vmul.f32 %v6446, 1.442695
  %v6448 = vpow.pop %v6447
  %v6449 = vadd.f32 %v6448, 1.0
  %v6450 = vrcp.pop %v6449
  %v6451 = vmul.f32 1.0, %v6450
  %v6452 = vadd.f32 %v4689, %v6379
  %v6453 = vxor.u32 %v6452, 2147483648
  %v6454 = vmul.f32 %v6453, 1.442695
  %v6455 = vpow.pop %v6454
  %v6456 = vadd.f32 %v6455, 1.0
  %v6457 = vrcp.pop %v6456
  %v6458 = vmul.f32 1.0, %v6457
  %v6459 = vadd.f32 %v6418, %v4803
  %v6460 = vmul.f32 %v6451, %v6459
  %v6461 = vadd.f32 %v4760, %v6460
  %v6462 = vtanh.pop %v6461
  %v6463 = vsub.f32 1.0, %v6458
  %v6464 = vmul.f32 %v6463, %v6462
  %v6465 = vmul.f32 %v6458, %v6258
  %v6466 = vadd.f32 %v6464, %v6465
  %v6467 = vld [vmem:[%s9] sm:$0x1]
  %v6469 = vlaneseq
  %v6470 = vshrl.u32 %v6469, 7
  %v6471 = vsub.s32 0, %v6470
  %v6472 = vrot.slane %v6467, %v6471
  %v6474 = vmul.f32 %v6444, %v6472
  %6475 = vadd.xlane.f32.xlu0 %v6474
  %v6476 = vpop.xlane.xlu0 %6475
  %v6477 = vld [vmem:[%s9 + $0x1] sm:$0x1]
  %v6479 = vlaneseq
  %v6480 = vshrl.u32 %v6479, 7
  %v6481 = vsub.s32 0, %v6480
  %v6482 = vrot.slane %v6477, %v6481
  %v6484 = vmul.f32 %v6466, %v6482
  %6485 = vadd.xlane.f32.xlu0 %v6484
  %v6486 = vpop.xlane.xlu0 %6485
  %v6487 = vadd.f32 %v6476, %v6486
  %v6488 = vld [vmem:[#allocation6] sm:$0x1]
  %v6490 = vlaneseq
  %v6491 = vshrl.u32 %v6490, 7
  %v6492 = vsub.s32 0, %v6491
  %v6493 = vrot.slane %v6488, %v6492
  %v6495 = vadd.f32 %v6487, %v6493
  %6497 = vset.pattern.permute.xlu0 0
  %6498 = vperm.xlu0 %6497, %v6495
  %v6499 = vpop.permute.xlu0 %6498
  %6501 = vst [vmem:[%s11] sm:$0xff] %v6499
  // Predicated region
  $region112: #{forward.1} parent=0 // pred_check
    _
  $region113: #{forward.1} parent=0 // pred_check_branch
    %6503 = sbr.rel (0) target = $region115
  $region114: #{forward.1} parent=0 // pred_region
    _
  $region115: #{forward.1} parent=0 // pred_fallthru
    _
  // Predicated region
  $region116: #{forward.1} parent=0 // pred_check
    _
  $region117: #{forward.1} parent=0 // pred_check_branch
    %6505 = sbr.rel (0) target = $region119
  $region118: #{forward.1} parent=0 // pred_region
    _
  $region119: #{forward.1} parent=0 // pred_fallthru
    _
  %6506 = vsyncmov [#allocation5]
  %s6507 = vpop.sfrf %6506
  %p6508 = scmp.eq.s32.totalorder %s6507, 0
  %p6509 = pneg %p6508
  %6511 = shalt.err (%p6509)
  %s6512 = scalar_lea.sflag [#allocation5], 1
  %6513 = vsyncmov %s6512
  %s6514 = vpop.sfrf %6513
  %p6515 = scmp.eq.s32.totalorder %s6514, 0
  %p6516 = pneg %p6515
  %6518 = shalt.err (%p6516)

</llo_original>
